<compile_context>
chip_gen: v5e
topology: v5e:2x2
jax: 0.10.0
libtpu: 0.0.40
codegen_flags: <defaults>
</compile_context>

<pallas_src>
import functools

import jax
import jax.numpy as jnp
from jax.experimental import pallas as pl
from jax.experimental.pallas import tpu as pltpu

# Real (un-padded) channel counts of the regnet_x_400mf nodes returned by the module.
C3_REAL, C4_REAL, C5_REAL = 64, 160, 400

_LANE = 128
# Scoped-VMEM limit: above v5e's 16 MiB default, safe on v7x (64 MiB physical).
_VMEM_LIMIT_BYTES = 32 * 1024 * 1024
# Per-step operand budget used by the tile picker (double-buffered inputs + acc +
# output); leaves pipelining headroom on every generation, including v7x.
_TILE_VMEM_BUDGET = 12 * 1024 * 1024


def _round_up(x, m):
    return (x + m - 1) // m * m


# ---------------------------------------------------------------------------
# Kernel 1: tiled matmul + bias  (backbone patchify convs and FPN lateral convs)
# ---------------------------------------------------------------------------
def _matmul_bias_single_kernel(x_ref, w_ref, b_ref, o_ref):
    # Whole reduction in one step: no scratch, single lane-dense store.
    acc = jnp.dot(x_ref[...], w_ref[...], preferred_element_type=jnp.float32)
    o_ref[...] = (acc + b_ref[...]).astype(o_ref.dtype)


def _matmul_bias_acc_kernel(x_ref, w_ref, b_ref, o_ref, acc_ref):
    # K is tiled: f32 accumulator resident across the innermost "arbitrary" axis.
    @pl.when(pl.program_id(2) == 0)
    def _init():
        acc_ref[...] = jnp.zeros_like(acc_ref)

    acc_ref[...] += jnp.dot(
        x_ref[...], w_ref[...], preferred_element_type=jnp.float32
    )

    @pl.when(pl.program_id(2) == pl.num_programs(2) - 1)
    def _finalize():
        o_ref[...] = (acc_ref[...] + b_ref[...]).astype(o_ref.dtype)


def _pick_tiles(M, K, N):
    """Tile selection: collapse the grid for small problems, feed the wide MXU."""
    # Row tile: multiple of 16 (bf16 packs 16 rows/vreg).  Split into >=2 blocks
    # when there is enough work so both v7x TensorCores get a "parallel" block.
    if M >= 64:
        TM = min(512, _round_up(-(-M // 2), 16))
    else:
        TM = _round_up(max(M, 16), 16)
    # Lane tile: whole N when small (collapses the N grid); otherwise 256-wide for
    # the 256x256 MXU on v6e/v7x, falling back to 128 lanes.
    if N <= 512:
        TN = N
    elif N % 256 == 0:
        TN = 256
    else:
        TN = _LANE

    def fits(tk):
        per_step = 2 * (TM * tk + tk * TN) * 2 + 2 * TM * TN * 4
        return per_step <= _TILE_VMEM_BUDGET

    # K tile: keep the whole reduction in one step when it fits the VMEM budget
    # (grid collapses and the accumulator never leaves vregs); otherwise tile it.
    TK = K
    if not fits(K):
        for cand in (2048, 1024, 512, 256, 128):
            if K % cand == 0 and fits(cand):
                TK = cand
                break
    return TM, TN, TK


def _pallas_matmul_bias(x, w, b, out_dtype):
    """(M, K) @ (K, N) + b with bf16 operands and f32 accumulation.  N % 128 == 0."""
    M, K = x.shape
    Kw, N = w.shape
    assert K == Kw and N % _LANE == 0, (x.shape, w.shape)

    TM, TN, TK = _pick_tiles(M, K, N)

    xb = x.astype(jnp.bfloat16)
    wb = w.astype(jnp.bfloat16)
    bf = b.astype(jnp.float32).reshape(1, N)

    Mp = _round_up(M, TM)
    if Mp != M:
        xb = jnp.pad(xb, ((0, Mp - M), (0, 0)))
    grid = (Mp // TM, N // TN, K // TK)

    if grid[2] == 1:
        kernel = _matmul_bias_single_kernel
        scratch = []
    else:
        kernel = _matmul_bias_acc_kernel
        scratch = [pltpu.VMEM((TM, TN), jnp.float32)]

    grid_spec = pltpu.PrefetchScalarGridSpec(
        num_scalar_prefetch=0,
        grid=grid,
        in_specs=[
            pl.BlockSpec((TM, TK), lambda i, j, k: (i, k)),
            pl.BlockSpec((TK, TN), lambda i, j, k: (k, j)),
            pl.BlockSpec((1, TN), lambda i, j, k: (0, j)),
        ],
        out_specs=pl.BlockSpec((TM, TN), lambda i, j, k: (i, j)),
        scratch_shapes=scratch,
    )
    out = pl.pallas_call(
        kernel,
        out_shape=jax.ShapeDtypeStruct((Mp, N), out_dtype),
        grid_spec=grid_spec,
        compiler_params=pltpu.CompilerParams(
            dimension_semantics=("parallel", "parallel", "arbitrary"),
            vmem_limit_bytes=_VMEM_LIMIT_BYTES,
        ),
        cost_estimate=pl.CostEstimate(
            flops=2 * Mp * K * N,
            transcendentals=0,
            bytes_accessed=Mp * K * 2 + K * N * 2 + N * 4
            + Mp * N * jnp.dtype(out_dtype).itemsize,
        ),
    )(xb, wb, bf)
    return out[:M] if Mp != M else out


# ---------------------------------------------------------------------------
# Kernel 2: fused 3x3 conv (stride 1, pad 1) with width-only im2col
# ---------------------------------------------------------------------------
def _make_conv3x3_kernel(L, Wp):
    # Input block: width-im2col'ed, height-padded image flattened to (Hp*Wp, 3C).
    # The three remaining dy taps are row slices starting at 0, Wp, 2*Wp — all
    # multiples of 16, so the bf16 loads are sublane-aligned (no relayout copies).
    # Accumulate in a local value; single lane-dense store.
    def kernel(x_ref, w_ref, b_ref, o_ref):
        acc = jnp.dot(x_ref[0, 0:L, :], w_ref[0],
                      preferred_element_type=jnp.float32)
        acc = acc + jnp.dot(x_ref[0, Wp:Wp + L, :], w_ref[1],
                            preferred_element_type=jnp.float32)
        acc = acc + jnp.dot(x_ref[0, 2 * Wp:2 * Wp + L, :], w_ref[2],
                            preferred_element_type=jnp.float32)
        o_ref[0] = (acc + b_ref[...]).astype(o_ref.dtype)

    return kernel


def _pallas_conv3x3(x, w33, bias, out_dtype):
    """3x3 conv, stride 1, padding 1, NHWC input.

    The wrapper builds a width-only im2col (K = 3C) with the row stride Wp padded
    to a multiple of 16; the kernel then only needs the 3 dy taps, whose shifts are
    exact (aligned) multiples of Wp, so there is no row wrap-around and no in-kernel
    relayout.  Output columns [W, Wp) are junk and are trimmed with a slice that
    starts at 0 (fused by XLA into the consumer).

    TODO(synk): for large per-level spatial extents, add row-block tiling with halo
    rows (generation-aware block size: v7x has 64 MiB VMEM vs 128 MiB on v5e/v6e).
    TODO(synk): fold the 1x1 lateral conv and the nearest-upsample residual add into
    this kernel to remove the remaining fine-tensor HBM pass per level.
    """
    B, H, W, C = x.shape
    Cout = w33.shape[-1]
    Wp = _round_up(W, 16)          # aligned row stride for the dy shifts
    Hp = H + 2                     # 1 zero row of padding top and bottom
    L = H * Wp
    K3 = 3 * C

    xb = x.astype(jnp.bfloat16)
    # Height pad 1/1; width pad 1 on the left (dx=-1) and Wp - W + 1 on the right
    # (dx=+1 plus the alignment columns).  Padded columns are zero, so the junk
    # output columns never corrupt valid ones.
    xpad = jnp.pad(xb, ((0, 0), (1, 1), (1, Wp - W + 1), (0, 0)))
    # Width-only im2col: channels become [x[.., w-1], x[.., w], x[.., w+1]].
    x_w = jnp.concatenate([xpad[:, :, dx:dx + Wp, :] for dx in range(3)], axis=-1)
    xf = x_w.reshape(B, Hp * Wp, K3)

    # (3, 3, Cin, Cout) -> (3, 3*Cin, Cout): dx folded into K in the same order as
    # the im2col channel concatenation.
    w3 = w33.astype(jnp.bfloat16).reshape(3, K3, Cout)
    bf = bias.astype(jnp.float32).reshape(1, Cout)

    out = pl.pallas_call(
        _make_conv3x3_kernel(L, Wp),
        out_shape=jax.ShapeDtypeStruct((B, L, Cout), out_dtype),
        grid_spec=pltpu.PrefetchScalarGridSpec(
            num_scalar_prefetch=0,
            grid=(B,),
            in_specs=[
                pl.BlockSpec((1, Hp * Wp, K3), lambda b: (b, 0, 0)),
                pl.BlockSpec((3, K3, Cout), lambda b: (0, 0, 0)),
                pl.BlockSpec((1, Cout), lambda b: (0, 0)),
            ],
            out_specs=pl.BlockSpec((1, L, Cout), lambda b: (b, 0, 0)),
        ),
        compiler_params=pltpu.CompilerParams(
            dimension_semantics=("parallel",),
            vmem_limit_bytes=_VMEM_LIMIT_BYTES,
        ),
        cost_estimate=pl.CostEstimate(
            flops=2 * 3 * B * L * K3 * Cout,
            transcendentals=0,
            bytes_accessed=B * Hp * Wp * K3 * 2 + 3 * K3 * Cout * 2
            + B * L * Cout * jnp.dtype(out_dtype).itemsize,
        ),
    )(xf, w3, bf)

    # Valid pixels are columns [0, W); the slice starts at 0 (aligned) and fuses
    # into the consumer (upsample/add producer or the final NCHW transpose).
    return out.reshape(B, H, Wp, Cout)[:, :, :W, :]


# ---------------------------------------------------------------------------
# JAX glue (pure data movement) shared by the Pallas path and the reference path
# ---------------------------------------------------------------------------
def _space_to_depth(x, s):
    B, H, W, C = x.shape
    x = x.reshape(B, H // s, s, W // s, s, C)
    x = jnp.transpose(x, (0, 1, 3, 2, 4, 5))
    return x.reshape(B, H // s, W // s, s * s * C)


def _upsample2x_nearest(x):
    return jnp.repeat(jnp.repeat(x, 2, axis=1), 2, axis=2)


def _conv1x1(x, w, b, out_dtype, matmul_fn):
    B, H, W, K = x.shape
    N = w.shape[1]
    y = matmul_fn(x.reshape(B * H * W, K), w, b, out_dtype)
    return y.reshape(B, H, W, N)


def _to_nchw(x, channels):
    return jnp.transpose(x[..., :channels], (0, 3, 1, 2)).astype(jnp.float32)


def _forward_impl(params, images_nchw, *, matmul_fn, conv3x3_fn, out_channels):
    bf16 = jnp.bfloat16

    # NCHW -> NHWC once; the full-resolution image is read/transposed a single time.
    x = jnp.transpose(images_nchw, (0, 2, 3, 1))

    # --- backbone stand-in: shared patchify pyramid (strides 8 / 16 / 32) ---
    p8 = _space_to_depth(x, 8).astype(bf16)   # (B, H/8,  W/8,  192)
    p16 = _space_to_depth(p8, 2)              # (B, H/16, W/16, 768)
    p32 = _space_to_depth(p16, 2)             # (B, H/32, W/32, 3072)

    c3 = _conv1x1(p8, params["bb_c3_w"], params["bb_c3_b"], bf16, matmul_fn)
    c4 = _conv1x1(p16, params["bb_c4_w"], params["bb_c4_b"], bf16, matmul_fn)
    c5 = _conv1x1(p32, params["bb_c5_w"], params["bb_c5_b"], bf16, matmul_fn)

    # --- FPN top-down pathway (matches DetectorBackboneWithFPN.forward) ---
    # All intermediates stay bf16 (halves HBM traffic on the memory-bound FPN head);
    # f32 only appears at the final NCHW outputs.
    lat5 = _conv1x1(c5, params["lateral_c5_w"], params["lateral_c5_b"], bf16, matmul_fn)
    p5 = conv3x3_fn(lat5, params["output_p5_w"], params["output_p5_b"], bf16)

    lat4 = _conv1x1(c4, params["lateral_c4_w"], params["lateral_c4_b"], bf16, matmul_fn)
    # Nearest 2x upsample + residual add; XLA fuses repeat+add with the conv3x3
    # wrapper's pad/concat pass that builds the im2col buffer.
    p4 = conv3x3_fn(lat4 + _upsample2x_nearest(p5),
                    params["output_p4_w"], params["output_p4_b"], bf16)

    lat3 = _conv1x1(c3, params["lateral_c3_w"], params["lateral_c3_b"], bf16, matmul_fn)
    p3 = conv3x3_fn(lat3 + _upsample2x_nearest(p4),
                    params["output_p3_w"], params["output_p3_b"], bf16)

    return {
        "p3": _to_nchw(p3, out_channels),
        "p4": _to_nchw(p4, out_channels),
        "p5": _to_nchw(p5, out_channels),
    }


@functools.partial(jax.jit, static_argnames=("out_channels",))
def detector_backbone_with_fpn_forward(params, images_nchw, out_channels):
    return _forward_impl(params, images_nchw, matmul_fn=_pallas_matmul_bias,
                         conv3x3_fn=_pallas_conv3x3, out_channels=out_channels)


# ---------------------------------------------------------------------------
# Pure-JAX reference (same math, same bf16 rounding points) for correctness check
# ---------------------------------------------------------------------------
def _ref_matmul_bias(x, w, b, out_dtype):
    xf = x.astype(jnp.bfloat16).astype(jnp.float32)
    wf = w.astype(jnp.bfloat16).astype(jnp.float32)
    y = xf @ wf + b.astype(jnp.float32).reshape(1, -1)
    return y.astype(out_dtype)


def _ref_conv3x3(x, w33, bias, out_dtype):
    B, H, W, C = x.shape
    Cout = w33.shape[-1]
    xf = x.astype(jnp.bfloat16).astype(jnp.float32)
    wf = w33.astype(jnp.bfloat16).astype(jnp.float32)
    xp = jnp.pad(xf, ((0, 0), (1, 1), (1, 1), (0, 0)))
    acc = jnp.zeros((B, H, W, Cout), jnp.float32)
    for ky in range(3):
        for kx in range(3):
            acc = acc + jnp.einsum("bhwc,cn->bhwn",
                                   xp[:, ky:ky + H, kx:kx + W, :], wf[ky, kx])
    acc = acc + bias.astype(jnp.float32).reshape(1, 1, 1, Cout)
    return acc.astype(out_dtype)


def _ref_forward(params, images_nchw, out_channels):
    return _forward_impl(params, images_nchw, matmul_fn=_ref_matmul_bias,
                         conv3x3_fn=_ref_conv3x3, out_channels=out_channels)


# ---------------------------------------------------------------------------
# Parameters (deterministic synthetic init; channel dims pre-padded to 128 lanes)
# ---------------------------------------------------------------------------
def init_params(key, out_channels, in_channels=3):
    keys = jax.random.split(key, 9)
    cp = _round_up(out_channels, _LANE)
    c3p = _round_up(C3_REAL, _LANE)
    c4p = _round_up(C4_REAL, _LANE)
    c5p = _round_up(C5_REAL, _LANE)
    k3 = in_channels * 8 * 8       # 192
    k4 = k3 * 4                    # 768
    k5 = k4 * 4                    # 3072

    def _pad_to(a, shape):
        return jnp.pad(a, [(0, s - d) for d, s in zip(a.shape, shape)])

    def dense(k, fin, fout, fin_pad, fout_pad):
        w = jax.random.normal(k, (fin, fout), jnp.float32) / jnp.sqrt(float(fin))
        return _pad_to(w, (fin_pad, fout_pad))

    def conv33(k):
        w = jax.random.normal(k, (3, 3, out_channels, out_channels), jnp.float32)
        w = w / jnp.sqrt(9.0 * out_channels)
        return _pad_to(w, (3, 3, cp, cp))

    def bias01(n, npad):
        return _pad_to(jnp.full((1, n), 0.01, jnp.float32), (1, npad))

    return {
        # backbone stand-in (patchify convs); padded weight columns / biases are zero.
        "bb_c3_w": dense(keys[0], k3, C3_REAL, k3, c3p),
        "bb_c3_b": jnp.zeros((1, c3p), jnp.float32),
        "bb_c4_w": dense(keys[1], k4, C4_REAL, k4, c4p),
        "bb_c4_b": jnp.zeros((1, c4p), jnp.float32),
        "bb_c5_w": dense(keys[2], k5, C5_REAL, k5, c5p),
        "bb_c5_b": jnp.zeros((1, c5p), jnp.float32),
        # FPN lateral 1x1 convs
        "lateral_c3_w": dense(keys[3], C3_REAL, out_channels, c3p, cp),
        "lateral_c3_b": bias01(out_channels, cp),
        "lateral_c4_w": dense(keys[4], C4_REAL, out_channels, c4p, cp),
        "lateral_c4_b": bias01(out_channels, cp),
        "lateral_c5_w": dense(keys[5], C5_REAL, out_channels, c5p, cp),
        "lateral_c5_b": bias01(out_channels, cp),
        # FPN output 3x3 convs, layout (ky, kx, Cin, Cout)
        "output_p3_w": conv33(keys[6]),
        "output_p3_b": jnp.zeros((1, cp), jnp.float32),
        "output_p4_w": conv33(keys[7]),
        "output_p4_b": jnp.zeros((1, cp), jnp.float32),
        "output_p5_w": conv33(keys[8]),
        "output_p5_b": jnp.zeros((1, cp), jnp.float32),
    }


if __name__ == "__main__":
    B, H, W = 2, 64, 64
    OUT_CHANNELS = 64

    key = jax.random.PRNGKey(0)
    k_img, k_par = jax.random.split(key)
    images = jax.random.normal(k_img, (B, 3, H, W), jnp.float32)  # NCHW like PyTorch
    params = init_params(k_par, OUT_CHANNELS)

    feats = detector_backbone_with_fpn_forward(params, images, out_channels=OUT_CHANNELS)
    jax.block_until_ready(feats)

    assert feats["p3"].shape == (B, OUT_CHANNELS, H // 8, W // 8)
    assert feats["p4"].shape == (B, OUT_CHANNELS, H // 16, W // 16)
    assert feats["p5"].shape == (B, OUT_CHANNELS, H // 32, W // 32)

    ref = _ref_forward(params, images, OUT_CHANNELS)
    for lvl in ("p3", "p4", "p5"):
        diff = jnp.abs(feats[lvl] - ref[lvl])
        # bf16 intermediates in both paths round at identical points; remaining
        # discrepancy is f32 accumulation-order noise around bf16 rounding edges.
        tol = 5e-2 * jnp.abs(ref[lvl]) + 5e-2
        ok = bool(jnp.all(diff <= tol))
        assert ok, f"{lvl} mismatch: max abs err {float(jnp.max(diff))}"

    print("KERNEL_OK")
</pallas_src>

<mosaic_0001>
module attributes {stable_mosaic.version = 11 : i64} {
  func.func @_matmul_bias_single_kernel(%arg0: i32, %arg1: i32, %arg2: i32, %arg3: memref<64x192xbf16, #tpu.memory_space<vmem>>, %arg4: memref<192x128xbf16, #tpu.memory_space<vmem>>, %arg5: memref<1x128xf32, #tpu.memory_space<vmem>>, %arg6: memref<64x128xbf16, #tpu.memory_space<vmem>>) attributes {dimension_semantics = [#tpu.dimension_semantics<parallel>, #tpu.dimension_semantics<parallel>, #tpu.dimension_semantics<arbitrary>], iteration_bounds = array<i64: 2, 1, 1>, scalar_prefetch = 0 : i64, scratch_operands = 0 : i64, tpu.core_type = #tpu.core_type<tc>, window_params = [{transform_indices = @transform_0, window_bounds = array<i64: 64, 192>}, {transform_indices = @transform_1, window_bounds = array<i64: 192, 128>}, {transform_indices = @transform_2, window_bounds = array<i64: 1, 128>}, {transform_indices = @transform_3, window_bounds = array<i64: 64, 128>}]} {
    %c0 = arith.constant 0 : index
    %c0_0 = arith.constant 0 : index
    %0 = vector.load %arg3[%c0, %c0_0] : memref<64x192xbf16, #tpu.memory_space<vmem>>, vector<64x192xbf16>
    %c0_1 = arith.constant 0 : index
    %c0_2 = arith.constant 0 : index
    %1 = vector.load %arg4[%c0_1, %c0_2] : memref<192x128xbf16, #tpu.memory_space<vmem>>, vector<192x128xbf16>
    %cst = arith.constant dense<0.000000e+00> : vector<64x128xf32>
    %2 = tpu.matmul %0, %1, %cst {dimension_numbers = #tpu.dot_dimension_numbers<[1], [0], [0], [1], [0, 0, 1, 1], [], []>} : vector<64x192xbf16>, vector<192x128xbf16>, vector<64x128xf32> -> vector<64x128xf32>
    %c0_3 = arith.constant 0 : index
    %c0_4 = arith.constant 0 : index
    %3 = vector.load %arg5[%c0_3, %c0_4] : memref<1x128xf32, #tpu.memory_space<vmem>>, vector<1x128xf32>
    %4 = vector.broadcast %3 : vector<1x128xf32> to vector<64x128xf32>
    %5 = arith.addf %2, %4 : vector<64x128xf32>
    %6 = arith.truncf %5 : vector<64x128xf32> to vector<64x128xbf16>
    %c0_5 = arith.constant 0 : index
    %c0_6 = arith.constant 0 : index
    %7 = vector.load %arg6[%c0_5, %c0_6] : memref<64x128xbf16, #tpu.memory_space<vmem>>, vector<64x128xbf16>
    tpu.vector_store %arg6[%c0_5, %c0_6], %6 {strides = array<i32>} : memref<64x128xbf16, #tpu.memory_space<vmem>>, vector<64x128xbf16>,
    return
  }
  func.func @transform_0(%arg0: i32, %arg1: i32, %arg2: i32) -> (i32, i32) {
    %c0_i32 = arith.constant 0 : i32
    return %arg0, %arg2 : i32, i32
  }
  func.func @transform_1(%arg0: i32, %arg1: i32, %arg2: i32) -> (i32, i32) {
    %c0_i32 = arith.constant 0 : i32
    return %arg2, %arg1 : i32, i32
  }
  func.func @transform_2(%arg0: i32, %arg1: i32, %arg2: i32) -> (i32, i32) {
    %c0_i32 = arith.constant 0 : i32
    %c0_i32_0 = arith.constant 0 : i32
    return %c0_i32, %arg1 : i32, i32
  }
  func.func @transform_3(%arg0: i32, %arg1: i32, %arg2: i32) -> (i32, i32) {
    %c0_i32 = arith.constant 0 : i32
    return %arg0, %arg1 : i32, i32
  }
}

module attributes {stable_mosaic.version = 11 : i64} {
  func.func @_matmul_bias_single_kernel(%arg0: i32, %arg1: i32, %arg2: i32, %arg3: memref<64x128xbf16, #tpu.memory_space<vmem>>, %arg4: memref<128x128xbf16, #tpu.memory_space<vmem>>, %arg5: memref<1x128xf32, #tpu.memory_space<vmem>>, %arg6: memref<64x128xbf16, #tpu.memory_space<vmem>>) attributes {dimension_semantics = [#tpu.dimension_semantics<parallel>, #tpu.dimension_semantics<parallel>, #tpu.dimension_semantics<arbitrary>], iteration_bounds = array<i64: 2, 1, 1>, scalar_prefetch = 0 : i64, scratch_operands = 0 : i64, tpu.core_type = #tpu.core_type<tc>, window_params = [{transform_indices = @transform_0, window_bounds = array<i64: 64, 128>}, {transform_indices = @transform_1, window_bounds = array<i64: 128, 128>}, {transform_indices = @transform_2, window_bounds = array<i64: 1, 128>}, {transform_indices = @transform_3, window_bounds = array<i64: 64, 128>}]} {
    %c0 = arith.constant 0 : index
    %c0_0 = arith.constant 0 : index
    %0 = vector.load %arg3[%c0, %c0_0] : memref<64x128xbf16, #tpu.memory_space<vmem>>, vector<64x128xbf16>
    %c0_1 = arith.constant 0 : index
    %c0_2 = arith.constant 0 : index
    %1 = vector.load %arg4[%c0_1, %c0_2] : memref<128x128xbf16, #tpu.memory_space<vmem>>, vector<128x128xbf16>
    %cst = arith.constant dense<0.000000e+00> : vector<64x128xf32>
    %2 = tpu.matmul %0, %1, %cst {dimension_numbers = #tpu.dot_dimension_numbers<[1], [0], [0], [1], [0, 0, 1, 1], [], []>} : vector<64x128xbf16>, vector<128x128xbf16>, vector<64x128xf32> -> vector<64x128xf32>
    %c0_3 = arith.constant 0 : index
    %c0_4 = arith.constant 0 : index
    %3 = vector.load %arg5[%c0_3, %c0_4] : memref<1x128xf32, #tpu.memory_space<vmem>>, vector<1x128xf32>
    %4 = vector.broadcast %3 : vector<1x128xf32> to vector<64x128xf32>
    %5 = arith.addf %2, %4 : vector<64x128xf32>
    %6 = arith.truncf %5 : vector<64x128xf32> to vector<64x128xbf16>
    %c0_5 = arith.constant 0 : index
    %c0_6 = arith.constant 0 : index
    %7 = vector.load %arg6[%c0_5, %c0_6] : memref<64x128xbf16, #tpu.memory_space<vmem>>, vector<64x128xbf16>
    tpu.vector_store %arg6[%c0_5, %c0_6], %6 {strides = array<i32>} : memref<64x128xbf16, #tpu.memory_space<vmem>>, vector<64x128xbf16>,
    return
  }
  func.func @transform_0(%arg0: i32, %arg1: i32, %arg2: i32) -> (i32, i32) {
    %c0_i32 = arith.constant 0 : i32
    return %arg0, %arg2 : i32, i32
  }
  func.func @transform_1(%arg0: i32, %arg1: i32, %arg2: i32) -> (i32, i32) {
    %c0_i32 = arith.constant 0 : i32
    return %arg2, %arg1 : i32, i32
  }
  func.func @transform_2(%arg0: i32, %arg1: i32, %arg2: i32) -> (i32, i32) {
    %c0_i32 = arith.constant 0 : i32
    %c0_i32_0 = arith.constant 0 : i32
    return %c0_i32, %arg1 : i32, i32
  }
  func.func @transform_3(%arg0: i32, %arg1: i32, %arg2: i32) -> (i32, i32) {
    %c0_i32 = arith.constant 0 : i32
    return %arg0, %arg1 : i32, i32
  }
}

module attributes {stable_mosaic.version = 11 : i64} {
  func.func @_matmul_bias_single_kernel(%arg0: i32, %arg1: i32, %arg2: i32, %arg3: memref<32x768xbf16, #tpu.memory_space<vmem>>, %arg4: memref<768x256xbf16, #tpu.memory_space<vmem>>, %arg5: memref<1x256xf32, #tpu.memory_space<vmem>>, %arg6: memref<32x256xbf16, #tpu.memory_space<vmem>>) attributes {dimension_semantics = [#tpu.dimension_semantics<parallel>, #tpu.dimension_semantics<parallel>, #tpu.dimension_semantics<arbitrary>], iteration_bounds = array<i64: 1, 1, 1>, scalar_prefetch = 0 : i64, scratch_operands = 0 : i64, tpu.core_type = #tpu.core_type<tc>, window_params = [{transform_indices = @transform_0, window_bounds = array<i64: 32, 768>}, {transform_indices = @transform_1, window_bounds = array<i64: 768, 256>}, {transform_indices = @transform_2, window_bounds = array<i64: 1, 256>}, {transform_indices = @transform_3, window_bounds = array<i64: 32, 256>}]} {
    %c0 = arith.constant 0 : index
    %c0_0 = arith.constant 0 : index
    %0 = vector.load %arg3[%c0, %c0_0] : memref<32x768xbf16, #tpu.memory_space<vmem>>, vector<32x768xbf16>
    %c0_1 = arith.constant 0 : index
    %c0_2 = arith.constant 0 : index
    %1 = vector.load %arg4[%c0_1, %c0_2] : memref<768x256xbf16, #tpu.memory_space<vmem>>, vector<768x256xbf16>
    %cst = arith.constant dense<0.000000e+00> : vector<32x256xf32>
    %2 = tpu.matmul %0, %1, %cst {dimension_numbers = #tpu.dot_dimension_numbers<[1], [0], [0], [1], [0, 0, 1, 1], [], []>} : vector<32x768xbf16>, vector<768x256xbf16>, vector<32x256xf32> -> vector<32x256xf32>
    %c0_3 = arith.constant 0 : index
    %c0_4 = arith.constant 0 : index
    %3 = vector.load %arg5[%c0_3, %c0_4] : memref<1x256xf32, #tpu.memory_space<vmem>>, vector<1x256xf32>
    %4 = vector.broadcast %3 : vector<1x256xf32> to vector<32x256xf32>
    %5 = arith.addf %2, %4 : vector<32x256xf32>
    %6 = arith.truncf %5 : vector<32x256xf32> to vector<32x256xbf16>
    %c0_5 = arith.constant 0 : index
    %c0_6 = arith.constant 0 : index
    %7 = vector.load %arg6[%c0_5, %c0_6] : memref<32x256xbf16, #tpu.memory_space<vmem>>, vector<32x256xbf16>
    tpu.vector_store %arg6[%c0_5, %c0_6], %6 {strides = array<i32>} : memref<32x256xbf16, #tpu.memory_space<vmem>>, vector<32x256xbf16>,
    return
  }
  func.func @transform_0(%arg0: i32, %arg1: i32, %arg2: i32) -> (i32, i32) {
    %c0_i32 = arith.constant 0 : i32
    return %arg0, %arg2 : i32, i32
  }
  func.func @transform_1(%arg0: i32, %arg1: i32, %arg2: i32) -> (i32, i32) {
    %c0_i32 = arith.constant 0 : i32
    return %arg2, %arg1 : i32, i32
  }
  func.func @transform_2(%arg0: i32, %arg1: i32, %arg2: i32) -> (i32, i32) {
    %c0_i32 = arith.constant 0 : i32
    %c0_i32_0 = arith.constant 0 : i32
    return %c0_i32, %arg1 : i32, i32
  }
  func.func @transform_3(%arg0: i32, %arg1: i32, %arg2: i32) -> (i32, i32) {
    %c0_i32 = arith.constant 0 : i32
    return %arg0, %arg1 : i32, i32
  }
}

module attributes {stable_mosaic.version = 11 : i64} {
  func.func @_matmul_bias_single_kernel(%arg0: i32, %arg1: i32, %arg2: i32, %arg3: memref<32x256xbf16, #tpu.memory_space<vmem>>, %arg4: memref<256x128xbf16, #tpu.memory_space<vmem>>, %arg5: memref<1x128xf32, #tpu.memory_space<vmem>>, %arg6: memref<32x128xbf16, #tpu.memory_space<vmem>>) attributes {dimension_semantics = [#tpu.dimension_semantics<parallel>, #tpu.dimension_semantics<parallel>, #tpu.dimension_semantics<arbitrary>], iteration_bounds = array<i64: 1, 1, 1>, scalar_prefetch = 0 : i64, scratch_operands = 0 : i64, tpu.core_type = #tpu.core_type<tc>, window_params = [{transform_indices = @transform_0, window_bounds = array<i64: 32, 256>}, {transform_indices = @transform_1, window_bounds = array<i64: 256, 128>}, {transform_indices = @transform_2, window_bounds = array<i64: 1, 128>}, {transform_indices = @transform_3, window_bounds = array<i64: 32, 128>}]} {
    %c0 = arith.constant 0 : index
    %c0_0 = arith.constant 0 : index
    %0 = vector.load %arg3[%c0, %c0_0] : memref<32x256xbf16, #tpu.memory_space<vmem>>, vector<32x256xbf16>
    %c0_1 = arith.constant 0 : index
    %c0_2 = arith.constant 0 : index
    %1 = vector.load %arg4[%c0_1, %c0_2] : memref<256x128xbf16, #tpu.memory_space<vmem>>, vector<256x128xbf16>
    %cst = arith.constant dense<0.000000e+00> : vector<32x128xf32>
    %2 = tpu.matmul %0, %1, %cst {dimension_numbers = #tpu.dot_dimension_numbers<[1], [0], [0], [1], [0, 0, 1, 1], [], []>} : vector<32x256xbf16>, vector<256x128xbf16>, vector<32x128xf32> -> vector<32x128xf32>
    %c0_3 = arith.constant 0 : index
    %c0_4 = arith.constant 0 : index
    %3 = vector.load %arg5[%c0_3, %c0_4] : memref<1x128xf32, #tpu.memory_space<vmem>>, vector<1x128xf32>
    %4 = vector.broadcast %3 : vector<1x128xf32> to vector<32x128xf32>
    %5 = arith.addf %2, %4 : vector<32x128xf32>
    %6 = arith.truncf %5 : vector<32x128xf32> to vector<32x128xbf16>
    %c0_5 = arith.constant 0 : index
    %c0_6 = arith.constant 0 : index
    %7 = vector.load %arg6[%c0_5, %c0_6] : memref<32x128xbf16, #tpu.memory_space<vmem>>, vector<32x128xbf16>
    tpu.vector_store %arg6[%c0_5, %c0_6], %6 {strides = array<i32>} : memref<32x128xbf16, #tpu.memory_space<vmem>>, vector<32x128xbf16>,
    return
  }
  func.func @transform_0(%arg0: i32, %arg1: i32, %arg2: i32) -> (i32, i32) {
    %c0_i32 = arith.constant 0 : i32
    return %arg0, %arg2 : i32, i32
  }
  func.func @transform_1(%arg0: i32, %arg1: i32, %arg2: i32) -> (i32, i32) {
    %c0_i32 = arith.constant 0 : i32
    return %arg2, %arg1 : i32, i32
  }
  func.func @transform_2(%arg0: i32, %arg1: i32, %arg2: i32) -> (i32, i32) {
    %c0_i32 = arith.constant 0 : i32
    %c0_i32_0 = arith.constant 0 : i32
    return %c0_i32, %arg1 : i32, i32
  }
  func.func @transform_3(%arg0: i32, %arg1: i32, %arg2: i32) -> (i32, i32) {
    %c0_i32 = arith.constant 0 : i32
    return %arg0, %arg1 : i32, i32
  }
}

module attributes {stable_mosaic.version = 11 : i64} {
  func.func @_matmul_bias_single_kernel(%arg0: i32, %arg1: i32, %arg2: i32, %arg3: memref<16x3072xbf16, #tpu.memory_space<vmem>>, %arg4: memref<3072x512xbf16, #tpu.memory_space<vmem>>, %arg5: memref<1x512xf32, #tpu.memory_space<vmem>>, %arg6: memref<16x512xbf16, #tpu.memory_space<vmem>>) attributes {dimension_semantics = [#tpu.dimension_semantics<parallel>, #tpu.dimension_semantics<parallel>, #tpu.dimension_semantics<arbitrary>], iteration_bounds = array<i64: 1, 1, 1>, scalar_prefetch = 0 : i64, scratch_operands = 0 : i64, tpu.core_type = #tpu.core_type<tc>, window_params = [{transform_indices = @transform_0, window_bounds = array<i64: 16, 3072>}, {transform_indices = @transform_1, window_bounds = array<i64: 3072, 512>}, {transform_indices = @transform_2, window_bounds = array<i64: 1, 512>}, {transform_indices = @transform_3, window_bounds = array<i64: 16, 512>}]} {
    %c0 = arith.constant 0 : index
    %c0_0 = arith.constant 0 : index
    %0 = vector.load %arg3[%c0, %c0_0] : memref<16x3072xbf16, #tpu.memory_space<vmem>>, vector<16x3072xbf16>
    %c0_1 = arith.constant 0 : index
    %c0_2 = arith.constant 0 : index
    %1 = vector.load %arg4[%c0_1, %c0_2] : memref<3072x512xbf16, #tpu.memory_space<vmem>>, vector<3072x512xbf16>
    %cst = arith.constant dense<0.000000e+00> : vector<16x512xf32>
    %2 = tpu.matmul %0, %1, %cst {dimension_numbers = #tpu.dot_dimension_numbers<[1], [0], [0], [1], [0, 0, 1, 1], [], []>} : vector<16x3072xbf16>, vector<3072x512xbf16>, vector<16x512xf32> -> vector<16x512xf32>
    %c0_3 = arith.constant 0 : index
    %c0_4 = arith.constant 0 : index
    %3 = vector.load %arg5[%c0_3, %c0_4] : memref<1x512xf32, #tpu.memory_space<vmem>>, vector<1x512xf32>
    %4 = vector.broadcast %3 : vector<1x512xf32> to vector<16x512xf32>
    %5 = arith.addf %2, %4 : vector<16x512xf32>
    %6 = arith.truncf %5 : vector<16x512xf32> to vector<16x512xbf16>
    %c0_5 = arith.constant 0 : index
    %c0_6 = arith.constant 0 : index
    %7 = vector.load %arg6[%c0_5, %c0_6] : memref<16x512xbf16, #tpu.memory_space<vmem>>, vector<16x512xbf16>
    tpu.vector_store %arg6[%c0_5, %c0_6], %6 {strides = array<i32>} : memref<16x512xbf16, #tpu.memory_space<vmem>>, vector<16x512xbf16>,
    return
  }
  func.func @transform_0(%arg0: i32, %arg1: i32, %arg2: i32) -> (i32, i32) {
    %c0_i32 = arith.constant 0 : i32
    return %arg0, %arg2 : i32, i32
  }
  func.func @transform_1(%arg0: i32, %arg1: i32, %arg2: i32) -> (i32, i32) {
    %c0_i32 = arith.constant 0 : i32
    return %arg2, %arg1 : i32, i32
  }
  func.func @transform_2(%arg0: i32, %arg1: i32, %arg2: i32) -> (i32, i32) {
    %c0_i32 = arith.constant 0 : i32
    %c0_i32_0 = arith.constant 0 : i32
    return %c0_i32, %arg1 : i32, i32
  }
  func.func @transform_3(%arg0: i32, %arg1: i32, %arg2: i32) -> (i32, i32) {
    %c0_i32 = arith.constant 0 : i32
    return %arg0, %arg1 : i32, i32
  }
}

module attributes {stable_mosaic.version = 11 : i64} {
  func.func @_matmul_bias_single_kernel(%arg0: i32, %arg1: i32, %arg2: i32, %arg3: memref<16x512xbf16, #tpu.memory_space<vmem>>, %arg4: memref<512x128xbf16, #tpu.memory_space<vmem>>, %arg5: memref<1x128xf32, #tpu.memory_space<vmem>>, %arg6: memref<16x128xbf16, #tpu.memory_space<vmem>>) attributes {dimension_semantics = [#tpu.dimension_semantics<parallel>, #tpu.dimension_semantics<parallel>, #tpu.dimension_semantics<arbitrary>], iteration_bounds = array<i64: 1, 1, 1>, scalar_prefetch = 0 : i64, scratch_operands = 0 : i64, tpu.core_type = #tpu.core_type<tc>, window_params = [{transform_indices = @transform_0, window_bounds = array<i64: 16, 512>}, {transform_indices = @transform_1, window_bounds = array<i64: 512, 128>}, {transform_indices = @transform_2, window_bounds = array<i64: 1, 128>}, {transform_indices = @transform_3, window_bounds = array<i64: 16, 128>}]} {
    %c0 = arith.constant 0 : index
    %c0_0 = arith.constant 0 : index
    %0 = vector.load %arg3[%c0, %c0_0] : memref<16x512xbf16, #tpu.memory_space<vmem>>, vector<16x512xbf16>
    %c0_1 = arith.constant 0 : index
    %c0_2 = arith.constant 0 : index
    %1 = vector.load %arg4[%c0_1, %c0_2] : memref<512x128xbf16, #tpu.memory_space<vmem>>, vector<512x128xbf16>
    %cst = arith.constant dense<0.000000e+00> : vector<16x128xf32>
    %2 = tpu.matmul %0, %1, %cst {dimension_numbers = #tpu.dot_dimension_numbers<[1], [0], [0], [1], [0, 0, 1, 1], [], []>} : vector<16x512xbf16>, vector<512x128xbf16>, vector<16x128xf32> -> vector<16x128xf32>
    %c0_3 = arith.constant 0 : index
    %c0_4 = arith.constant 0 : index
    %3 = vector.load %arg5[%c0_3, %c0_4] : memref<1x128xf32, #tpu.memory_space<vmem>>, vector<1x128xf32>
    %4 = vector.broadcast %3 : vector<1x128xf32> to vector<16x128xf32>
    %5 = arith.addf %2, %4 : vector<16x128xf32>
    %6 = arith.truncf %5 : vector<16x128xf32> to vector<16x128xbf16>
    %c0_5 = arith.constant 0 : index
    %c0_6 = arith.constant 0 : index
    %7 = vector.load %arg6[%c0_5, %c0_6] : memref<16x128xbf16, #tpu.memory_space<vmem>>, vector<16x128xbf16>
    tpu.vector_store %arg6[%c0_5, %c0_6], %6 {strides = array<i32>} : memref<16x128xbf16, #tpu.memory_space<vmem>>, vector<16x128xbf16>,
    return
  }
  func.func @transform_0(%arg0: i32, %arg1: i32, %arg2: i32) -> (i32, i32) {
    %c0_i32 = arith.constant 0 : i32
    return %arg0, %arg2 : i32, i32
  }
  func.func @transform_1(%arg0: i32, %arg1: i32, %arg2: i32) -> (i32, i32) {
    %c0_i32 = arith.constant 0 : i32
    return %arg2, %arg1 : i32, i32
  }
  func.func @transform_2(%arg0: i32, %arg1: i32, %arg2: i32) -> (i32, i32) {
    %c0_i32 = arith.constant 0 : i32
    %c0_i32_0 = arith.constant 0 : i32
    return %c0_i32, %arg1 : i32, i32
  }
  func.func @transform_3(%arg0: i32, %arg1: i32, %arg2: i32) -> (i32, i32) {
    %c0_i32 = arith.constant 0 : i32
    return %arg0, %arg1 : i32, i32
  }
}

module attributes {stable_mosaic.version = 11 : i64} {
  func.func @kernel(%arg0: i32, %arg1: memref<1x64x384xbf16, #tpu.memory_space<vmem>>, %arg2: memref<3x384x128xbf16, #tpu.memory_space<vmem>>, %arg3: memref<1x128xf32, #tpu.memory_space<vmem>>, %arg4: memref<1x32x128xbf16, #tpu.memory_space<vmem>>) attributes {dimension_semantics = [#tpu.dimension_semantics<parallel>], iteration_bounds = array<i64: 2>, scalar_prefetch = 0 : i64, scratch_operands = 0 : i64, tpu.core_type = #tpu.core_type<tc>, window_params = [{transform_indices = @transform_0, window_bounds = array<i64: 1, 64, 384>}, {pipeline_mode = #tpu.pipeline_mode<synchronous>, transform_indices = @transform_1, window_bounds = array<i64: 3, 384, 128>}, {pipeline_mode = #tpu.pipeline_mode<synchronous>, transform_indices = @transform_2, window_bounds = array<i64: 1, 128>}, {transform_indices = @transform_3, window_bounds = array<i64: 1, 32, 128>}]} {
    %c0 = arith.constant 0 : index
    %c0_0 = arith.constant 0 : index
    %c0_1 = arith.constant 0 : index
    %0 = vector.load %arg1[%c0, %c0_0, %c0_1] : memref<1x64x384xbf16, #tpu.memory_space<vmem>>, vector<1x32x384xbf16>
    %1 = vector.shape_cast %0 : vector<1x32x384xbf16> to vector<32x384xbf16>
    %c0_2 = arith.constant 0 : index
    %c0_3 = arith.constant 0 : index
    %c0_4 = arith.constant 0 : index
    %2 = vector.load %arg2[%c0_2, %c0_3, %c0_4] : memref<3x384x128xbf16, #tpu.memory_space<vmem>>, vector<1x384x128xbf16>
    %3 = vector.shape_cast %2 : vector<1x384x128xbf16> to vector<384x128xbf16>
    %cst = arith.constant dense<0.000000e+00> : vector<32x128xf32>
    %4 = tpu.matmul %1, %3, %cst {dimension_numbers = #tpu.dot_dimension_numbers<[1], [0], [0], [1], [0, 0, 1, 1], [], []>} : vector<32x384xbf16>, vector<384x128xbf16>, vector<32x128xf32> -> vector<32x128xf32>
    %c0_5 = arith.constant 0 : index
    %c16 = arith.constant 16 : index
    %c0_6 = arith.constant 0 : index
    %5 = vector.load %arg1[%c0_5, %c16, %c0_6] : memref<1x64x384xbf16, #tpu.memory_space<vmem>>, vector<1x32x384xbf16>
    %6 = vector.shape_cast %5 : vector<1x32x384xbf16> to vector<32x384xbf16>
    %c1 = arith.constant 1 : index
    %c0_7 = arith.constant 0 : index
    %c0_8 = arith.constant 0 : index
    %7 = vector.load %arg2[%c1, %c0_7, %c0_8] : memref<3x384x128xbf16, #tpu.memory_space<vmem>>, vector<1x384x128xbf16>
    %8 = vector.shape_cast %7 : vector<1x384x128xbf16> to vector<384x128xbf16>
    %cst_9 = arith.constant dense<0.000000e+00> : vector<32x128xf32>
    %9 = tpu.matmul %6, %8, %cst_9 {dimension_numbers = #tpu.dot_dimension_numbers<[1], [0], [0], [1], [0, 0, 1, 1], [], []>} : vector<32x384xbf16>, vector<384x128xbf16>, vector<32x128xf32> -> vector<32x128xf32>
    %10 = arith.addf %4, %9 : vector<32x128xf32>
    %c0_10 = arith.constant 0 : index
    %c32 = arith.constant 32 : index
    %c0_11 = arith.constant 0 : index
    %11 = vector.load %arg1[%c0_10, %c32, %c0_11] : memref<1x64x384xbf16, #tpu.memory_space<vmem>>, vector<1x32x384xbf16>
    %12 = vector.shape_cast %11 : vector<1x32x384xbf16> to vector<32x384xbf16>
    %c2 = arith.constant 2 : index
    %c0_12 = arith.constant 0 : index
    %c0_13 = arith.constant 0 : index
    %13 = vector.load %arg2[%c2, %c0_12, %c0_13] : memref<3x384x128xbf16, #tpu.memory_space<vmem>>, vector<1x384x128xbf16>
    %14 = vector.shape_cast %13 : vector<1x384x128xbf16> to vector<384x128xbf16>
    %cst_14 = arith.constant dense<0.000000e+00> : vector<32x128xf32>
    %15 = tpu.matmul %12, %14, %cst_14 {dimension_numbers = #tpu.dot_dimension_numbers<[1], [0], [0], [1], [0, 0, 1, 1], [], []>} : vector<32x384xbf16>, vector<384x128xbf16>, vector<32x128xf32> -> vector<32x128xf32>
    %16 = arith.addf %10, %15 : vector<32x128xf32>
    %c0_15 = arith.constant 0 : index
    %c0_16 = arith.constant 0 : index
    %17 = vector.load %arg3[%c0_15, %c0_16] : memref<1x128xf32, #tpu.memory_space<vmem>>, vector<1x128xf32>
    %18 = vector.broadcast %17 : vector<1x128xf32> to vector<32x128xf32>
    %19 = arith.addf %16, %18 : vector<32x128xf32>
    %20 = arith.truncf %19 : vector<32x128xf32> to vector<32x128xbf16>
    %c0_17 = arith.constant 0 : index
    %c0_18 = arith.constant 0 : index
    %c0_19 = arith.constant 0 : index
    %21 = vector.load %arg4[%c0_17, %c0_18, %c0_19] : memref<1x32x128xbf16, #tpu.memory_space<vmem>>, vector<1x32x128xbf16>
    %22 = vector.shape_cast %21 : vector<1x32x128xbf16> to vector<32x128xbf16>
    %23 = vector.shape_cast %20 : vector<32x128xbf16> to vector<1x32x128xbf16>
    tpu.vector_store %arg4[%c0_17, %c0_18, %c0_19], %23 {strides = array<i32>} : memref<1x32x128xbf16, #tpu.memory_space<vmem>>, vector<1x32x128xbf16>,
    return
  }
  func.func @transform_0(%arg0: i32) -> (i32, i32, i32) {
    %c0_i32 = arith.constant 0 : i32
    %c0_i32_0 = arith.constant 0 : i32
    %c0_i32_1 = arith.constant 0 : i32
    return %arg0, %c0_i32, %c0_i32_0 : i32, i32, i32
  }
  func.func @transform_1(%arg0: i32) -> (i32, i32, i32) {
    %c0_i32 = arith.constant 0 : i32
    %c0_i32_0 = arith.constant 0 : i32
    %c0_i32_1 = arith.constant 0 : i32
    %c0_i32_2 = arith.constant 0 : i32
    return %c0_i32, %c0_i32_0, %c0_i32_1 : i32, i32, i32
  }
  func.func @transform_2(%arg0: i32) -> (i32, i32) {
    %c0_i32 = arith.constant 0 : i32
    %c0_i32_0 = arith.constant 0 : i32
    %c0_i32_1 = arith.constant 0 : i32
    return %c0_i32, %c0_i32_0 : i32, i32
  }
  func.func @transform_3(%arg0: i32) -> (i32, i32, i32) {
    %c0_i32 = arith.constant 0 : i32
    %c0_i32_0 = arith.constant 0 : i32
    %c0_i32_1 = arith.constant 0 : i32
    return %arg0, %c0_i32, %c0_i32_0 : i32, i32, i32
  }
}

module attributes {stable_mosaic.version = 11 : i64} {
  func.func @kernel(%arg0: i32, %arg1: memref<1x96x384xbf16, #tpu.memory_space<vmem>>, %arg2: memref<3x384x128xbf16, #tpu.memory_space<vmem>>, %arg3: memref<1x128xf32, #tpu.memory_space<vmem>>, %arg4: memref<1x64x128xbf16, #tpu.memory_space<vmem>>) attributes {dimension_semantics = [#tpu.dimension_semantics<parallel>], iteration_bounds = array<i64: 2>, scalar_prefetch = 0 : i64, scratch_operands = 0 : i64, tpu.core_type = #tpu.core_type<tc>, window_params = [{transform_indices = @transform_0, window_bounds = array<i64: 1, 96, 384>}, {pipeline_mode = #tpu.pipeline_mode<synchronous>, transform_indices = @transform_1, window_bounds = array<i64: 3, 384, 128>}, {pipeline_mode = #tpu.pipeline_mode<synchronous>, transform_indices = @transform_2, window_bounds = array<i64: 1, 128>}, {transform_indices = @transform_3, window_bounds = array<i64: 1, 64, 128>}]} {
    %c0 = arith.constant 0 : index
    %c0_0 = arith.constant 0 : index
    %c0_1 = arith.constant 0 : index
    %0 = vector.load %arg1[%c0, %c0_0, %c0_1] : memref<1x96x384xbf16, #tpu.memory_space<vmem>>, vector<1x64x384xbf16>
    %1 = vector.shape_cast %0 : vector<1x64x384xbf16> to vector<64x384xbf16>
    %c0_2 = arith.constant 0 : index
    %c0_3 = arith.constant 0 : index
    %c0_4 = arith.constant 0 : index
    %2 = vector.load %arg2[%c0_2, %c0_3, %c0_4] : memref<3x384x128xbf16, #tpu.memory_space<vmem>>, vector<1x384x128xbf16>
    %3 = vector.shape_cast %2 : vector<1x384x128xbf16> to vector<384x128xbf16>
    %cst = arith.constant dense<0.000000e+00> : vector<64x128xf32>
    %4 = tpu.matmul %1, %3, %cst {dimension_numbers = #tpu.dot_dimension_numbers<[1], [0], [0], [1], [0, 0, 1, 1], [], []>} : vector<64x384xbf16>, vector<384x128xbf16>, vector<64x128xf32> -> vector<64x128xf32>
    %c0_5 = arith.constant 0 : index
    %c16 = arith.constant 16 : index
    %c0_6 = arith.constant 0 : index
    %5 = vector.load %arg1[%c0_5, %c16, %c0_6] : memref<1x96x384xbf16, #tpu.memory_space<vmem>>, vector<1x64x384xbf16>
    %6 = vector.shape_cast %5 : vector<1x64x384xbf16> to vector<64x384xbf16>
    %c1 = arith.constant 1 : index
    %c0_7 = arith.constant 0 : index
    %c0_8 = arith.constant 0 : index
    %7 = vector.load %arg2[%c1, %c0_7, %c0_8] : memref<3x384x128xbf16, #tpu.memory_space<vmem>>, vector<1x384x128xbf16>
    %8 = vector.shape_cast %7 : vector<1x384x128xbf16> to vector<384x128xbf16>
    %cst_9 = arith.constant dense<0.000000e+00> : vector<64x128xf32>
    %9 = tpu.matmul %6, %8, %cst_9 {dimension_numbers = #tpu.dot_dimension_numbers<[1], [0], [0], [1], [0, 0, 1, 1], [], []>} : vector<64x384xbf16>, vector<384x128xbf16>, vector<64x128xf32> -> vector<64x128xf32>
    %10 = arith.addf %4, %9 : vector<64x128xf32>
    %c0_10 = arith.constant 0 : index
    %c32 = arith.constant 32 : index
    %c0_11 = arith.constant 0 : index
    %11 = vector.load %arg1[%c0_10, %c32, %c0_11] : memref<1x96x384xbf16, #tpu.memory_space<vmem>>, vector<1x64x384xbf16>
    %12 = vector.shape_cast %11 : vector<1x64x384xbf16> to vector<64x384xbf16>
    %c2 = arith.constant 2 : index
    %c0_12 = arith.constant 0 : index
    %c0_13 = arith.constant 0 : index
    %13 = vector.load %arg2[%c2, %c0_12, %c0_13] : memref<3x384x128xbf16, #tpu.memory_space<vmem>>, vector<1x384x128xbf16>
    %14 = vector.shape_cast %13 : vector<1x384x128xbf16> to vector<384x128xbf16>
    %cst_14 = arith.constant dense<0.000000e+00> : vector<64x128xf32>
    %15 = tpu.matmul %12, %14, %cst_14 {dimension_numbers = #tpu.dot_dimension_numbers<[1], [0], [0], [1], [0, 0, 1, 1], [], []>} : vector<64x384xbf16>, vector<384x128xbf16>, vector<64x128xf32> -> vector<64x128xf32>
    %16 = arith.addf %10, %15 : vector<64x128xf32>
    %c0_15 = arith.constant 0 : index
    %c0_16 = arith.constant 0 : index
    %17 = vector.load %arg3[%c0_15, %c0_16] : memref<1x128xf32, #tpu.memory_space<vmem>>, vector<1x128xf32>
    %18 = vector.broadcast %17 : vector<1x128xf32> to vector<64x128xf32>
    %19 = arith.addf %16, %18 : vector<64x128xf32>
    %20 = arith.truncf %19 : vector<64x128xf32> to vector<64x128xbf16>
    %c0_17 = arith.constant 0 : index
    %c0_18 = arith.constant 0 : index
    %c0_19 = arith.constant 0 : index
    %21 = vector.load %arg4[%c0_17, %c0_18, %c0_19] : memref<1x64x128xbf16, #tpu.memory_space<vmem>>, vector<1x64x128xbf16>
    %22 = vector.shape_cast %21 : vector<1x64x128xbf16> to vector<64x128xbf16>
    %23 = vector.shape_cast %20 : vector<64x128xbf16> to vector<1x64x128xbf16>
    tpu.vector_store %arg4[%c0_17, %c0_18, %c0_19], %23 {strides = array<i32>} : memref<1x64x128xbf16, #tpu.memory_space<vmem>>, vector<1x64x128xbf16>,
    return
  }
  func.func @transform_0(%arg0: i32) -> (i32, i32, i32) {
    %c0_i32 = arith.constant 0 : i32
    %c0_i32_0 = arith.constant 0 : i32
    %c0_i32_1 = arith.constant 0 : i32
    return %arg0, %c0_i32, %c0_i32_0 : i32, i32, i32
  }
  func.func @transform_1(%arg0: i32) -> (i32, i32, i32) {
    %c0_i32 = arith.constant 0 : i32
    %c0_i32_0 = arith.constant 0 : i32
    %c0_i32_1 = arith.constant 0 : i32
    %c0_i32_2 = arith.constant 0 : i32
    return %c0_i32, %c0_i32_0, %c0_i32_1 : i32, i32, i32
  }
  func.func @transform_2(%arg0: i32) -> (i32, i32) {
    %c0_i32 = arith.constant 0 : i32
    %c0_i32_0 = arith.constant 0 : i32
    %c0_i32_1 = arith.constant 0 : i32
    return %c0_i32, %c0_i32_0 : i32, i32
  }
  func.func @transform_3(%arg0: i32) -> (i32, i32, i32) {
    %c0_i32 = arith.constant 0 : i32
    %c0_i32_0 = arith.constant 0 : i32
    %c0_i32_1 = arith.constant 0 : i32
    return %arg0, %c0_i32, %c0_i32_0 : i32, i32, i32
  }
}

module attributes {stable_mosaic.version = 11 : i64} {
  func.func @kernel(%arg0: i32, %arg1: memref<1x160x384xbf16, #tpu.memory_space<vmem>>, %arg2: memref<3x384x128xbf16, #tpu.memory_space<vmem>>, %arg3: memref<1x128xf32, #tpu.memory_space<vmem>>, %arg4: memref<1x128x128xbf16, #tpu.memory_space<vmem>>) attributes {dimension_semantics = [#tpu.dimension_semantics<parallel>], iteration_bounds = array<i64: 2>, scalar_prefetch = 0 : i64, scratch_operands = 0 : i64, tpu.core_type = #tpu.core_type<tc>, window_params = [{transform_indices = @transform_0, window_bounds = array<i64: 1, 160, 384>}, {pipeline_mode = #tpu.pipeline_mode<synchronous>, transform_indices = @transform_1, window_bounds = array<i64: 3, 384, 128>}, {pipeline_mode = #tpu.pipeline_mode<synchronous>, transform_indices = @transform_2, window_bounds = array<i64: 1, 128>}, {transform_indices = @transform_3, window_bounds = array<i64: 1, 128, 128>}]} {
    %c0 = arith.constant 0 : index
    %c0_0 = arith.constant 0 : index
    %c0_1 = arith.constant 0 : index
    %0 = vector.load %arg1[%c0, %c0_0, %c0_1] : memref<1x160x384xbf16, #tpu.memory_space<vmem>>, vector<1x128x384xbf16>
    %1 = vector.shape_cast %0 : vector<1x128x384xbf16> to vector<128x384xbf16>
    %c0_2 = arith.constant 0 : index
    %c0_3 = arith.constant 0 : index
    %c0_4 = arith.constant 0 : index
    %2 = vector.load %arg2[%c0_2, %c0_3, %c0_4] : memref<3x384x128xbf16, #tpu.memory_space<vmem>>, vector<1x384x128xbf16>
    %3 = vector.shape_cast %2 : vector<1x384x128xbf16> to vector<384x128xbf16>
    %cst = arith.constant dense<0.000000e+00> : vector<128x128xf32>
    %4 = tpu.matmul %1, %3, %cst {dimension_numbers = #tpu.dot_dimension_numbers<[1], [0], [0], [1], [0, 0, 1, 1], [], []>} : vector<128x384xbf16>, vector<384x128xbf16>, vector<128x128xf32> -> vector<128x128xf32>
    %c0_5 = arith.constant 0 : index
    %c16 = arith.constant 16 : index
    %c0_6 = arith.constant 0 : index
    %5 = vector.load %arg1[%c0_5, %c16, %c0_6] : memref<1x160x384xbf16, #tpu.memory_space<vmem>>, vector<1x128x384xbf16>
    %6 = vector.shape_cast %5 : vector<1x128x384xbf16> to vector<128x384xbf16>
    %c1 = arith.constant 1 : index
    %c0_7 = arith.constant 0 : index
    %c0_8 = arith.constant 0 : index
    %7 = vector.load %arg2[%c1, %c0_7, %c0_8] : memref<3x384x128xbf16, #tpu.memory_space<vmem>>, vector<1x384x128xbf16>
    %8 = vector.shape_cast %7 : vector<1x384x128xbf16> to vector<384x128xbf16>
    %cst_9 = arith.constant dense<0.000000e+00> : vector<128x128xf32>
    %9 = tpu.matmul %6, %8, %cst_9 {dimension_numbers = #tpu.dot_dimension_numbers<[1], [0], [0], [1], [0, 0, 1, 1], [], []>} : vector<128x384xbf16>, vector<384x128xbf16>, vector<128x128xf32> -> vector<128x128xf32>
    %10 = arith.addf %4, %9 : vector<128x128xf32>
    %c0_10 = arith.constant 0 : index
    %c32 = arith.constant 32 : index
    %c0_11 = arith.constant 0 : index
    %11 = vector.load %arg1[%c0_10, %c32, %c0_11] : memref<1x160x384xbf16, #tpu.memory_space<vmem>>, vector<1x128x384xbf16>
    %12 = vector.shape_cast %11 : vector<1x128x384xbf16> to vector<128x384xbf16>
    %c2 = arith.constant 2 : index
    %c0_12 = arith.constant 0 : index
    %c0_13 = arith.constant 0 : index
    %13 = vector.load %arg2[%c2, %c0_12, %c0_13] : memref<3x384x128xbf16, #tpu.memory_space<vmem>>, vector<1x384x128xbf16>
    %14 = vector.shape_cast %13 : vector<1x384x128xbf16> to vector<384x128xbf16>
    %cst_14 = arith.constant dense<0.000000e+00> : vector<128x128xf32>
    %15 = tpu.matmul %12, %14, %cst_14 {dimension_numbers = #tpu.dot_dimension_numbers<[1], [0], [0], [1], [0, 0, 1, 1], [], []>} : vector<128x384xbf16>, vector<384x128xbf16>, vector<128x128xf32> -> vector<128x128xf32>
    %16 = arith.addf %10, %15 : vector<128x128xf32>
    %c0_15 = arith.constant 0 : index
    %c0_16 = arith.constant 0 : index
    %17 = vector.load %arg3[%c0_15, %c0_16] : memref<1x128xf32, #tpu.memory_space<vmem>>, vector<1x128xf32>
    %18 = vector.broadcast %17 : vector<1x128xf32> to vector<128x128xf32>
    %19 = arith.addf %16, %18 : vector<128x128xf32>
    %20 = arith.truncf %19 : vector<128x128xf32> to vector<128x128xbf16>
    %c0_17 = arith.constant 0 : index
    %c0_18 = arith.constant 0 : index
    %c0_19 = arith.constant 0 : index
    %21 = vector.load %arg4[%c0_17, %c0_18, %c0_19] : memref<1x128x128xbf16, #tpu.memory_space<vmem>>, vector<1x128x128xbf16>
    %22 = vector.shape_cast %21 : vector<1x128x128xbf16> to vector<128x128xbf16>
    %23 = vector.shape_cast %20 : vector<128x128xbf16> to vector<1x128x128xbf16>
    tpu.vector_store %arg4[%c0_17, %c0_18, %c0_19], %23 {strides = array<i32>} : memref<1x128x128xbf16, #tpu.memory_space<vmem>>, vector<1x128x128xbf16>,
    return
  }
  func.func @transform_0(%arg0: i32) -> (i32, i32, i32) {
    %c0_i32 = arith.constant 0 : i32
    %c0_i32_0 = arith.constant 0 : i32
    %c0_i32_1 = arith.constant 0 : i32
    return %arg0, %c0_i32, %c0_i32_0 : i32, i32, i32
  }
  func.func @transform_1(%arg0: i32) -> (i32, i32, i32) {
    %c0_i32 = arith.constant 0 : i32
    %c0_i32_0 = arith.constant 0 : i32
    %c0_i32_1 = arith.constant 0 : i32
    %c0_i32_2 = arith.constant 0 : i32
    return %c0_i32, %c0_i32_0, %c0_i32_1 : i32, i32, i32
  }
  func.func @transform_2(%arg0: i32) -> (i32, i32) {
    %c0_i32 = arith.constant 0 : i32
    %c0_i32_0 = arith.constant 0 : i32
    %c0_i32_1 = arith.constant 0 : i32
    return %c0_i32, %c0_i32_0 : i32, i32
  }
  func.func @transform_3(%arg0: i32) -> (i32, i32, i32) {
    %c0_i32 = arith.constant 0 : i32
    %c0_i32_0 = arith.constant 0 : i32
    %c0_i32_1 = arith.constant 0 : i32
    return %arg0, %c0_i32, %c0_i32_0 : i32, i32, i32
  }
}

</mosaic_0001>

<llo_original>
// kernel: detector_backbone_with_fpn_forward.9
$region0: #{detector_backbone_with_fpn_forward.9}
  #allocation0 [shape = 'u32[]', space=smem, size = 0x4, offset = 0x4, fixed_abs, tag = 'smem constant byte address 0x4 - core index']
  #allocation1 [shape = 'u32[72,128]{1,0:T(1,128)}', space=vmem, size = 0x9000, scoped, tag = 'internal scratch']
  %s0 = inlined_call_operand.vmem [shape: bf16[128,192], index: 0, kind: input, shape index: {}]
  %s1 = inlined_call_operand.vmem [shape: bf16[192,128], index: 1, kind: input, shape index: {}]
  %s2 = inlined_call_operand.vmem [shape: f32[1,128], index: 2, kind: input, shape index: {}]
  %s3 = inlined_call_operand.vmem [shape: bf16[128,128], index: 3, kind: output, shape index: {}]
  %s4 = sld [smem:[#allocation0]]
  $region45: #{detector_backbone_with_fpn_forward.9} parent=0
    _
  %s6 = ssub.s32 1, %s4
  %s7 = scalar_select 0, %s6, %s4
  loop: start=0, step=1, limit=4
  $region2: #{detector_backbone_with_fpn_forward.9} parent=0 // loop_pre_header
    _
  $region3: #{detector_backbone_with_fpn_forward.9} parent=0 // loop_header
    %s9 = sphi 0, %s13
    %p10 = scmp.ge.s32.totalorder %s9, 4
    %s16 = sphi 0, %s35
    %s17 = sphi 0, %s31
    %s18 = sphi 0, %s27
    %s19 = sphi 0, %s16
    %s20 = sphi 0, %s17
    %s21 = sphi 0, %s18
    %s22 = sphi 0, %s19
    %s23 = sphi 0, %s20
    %s24 = sphi 0, %s21
    %s40 = sphi 0, %s42
    %s43 = sphi 0, %s40
    %s44 = sphi 0, %s43
    %s60 = sphi 0, %s44
    %s68 = sphi 0, %s70
    %s71 = sphi 0, %s68
    %s72 = sphi 0, %s71
    %s88 = sphi 0, %s72
    %s94 = sphi 0, %s96
    %s97 = sphi 0, %s94
    %s98 = sphi 0, %s97
    %s114 = sphi 0, %s98
    %s122 = sphi 0, %s124
    %s125 = sphi 0, %s122
    %s126 = sphi 0, %s125
    %s142 = sphi 0, %s126
  $region4: #{detector_backbone_with_fpn_forward.9} parent=0 // loop_header_branch
    %12 = sbr.rel (%p10) target = $region8
  $region5: #{detector_backbone_with_fpn_forward.9} parent=0 // loop_body
    %s14 = ssub.s32 %s9, 1
    %s15 = ssub.s32 %s9, 2
    %s25 = sadd.s32 1, %s18
    %p26 = scmp.ge.s32.totalorder %s25, 1
    %s27 = scalar_select %p26, 0, %s25
    %s28 = sadd.s32 1, %s17
    %s29 = scalar_select %p26, %s28, %s17
    %p30 = scmp.ge.s32.totalorder %s29, 1
    %s31 = scalar_select %p30, 0, %s29
    %s32 = sadd.s32 1, %s16
    %s33 = scalar_select %p30, %s32, %s16
    %p34 = scmp.ge.s32.totalorder %s33, 2
    %s35 = scalar_select %p34, 0, %s33
    %s36 = ssub.s32 %s16, %s35
    %s37 = ssub.s32 %s18, %s27
    %s38 = sor.u32 %s36, %s37
    %p39 = scmp.eq.s32.totalorder %s38, 0
    %s41 = sadd.s32 %s40, 1
    %s42 = scalar_select %p39, %s40, %s41
    %p45 = pneg %p39
    %p46 = scmp.eq.s32.totalorder %s9, 1
    %p47 = por %p45, %p46
    %p48 = scmp.ne.s32.totalorder %s40, %s43
    %p49 = scmp.eq.s32.totalorder %s9, 0
    %p50 = por %p48, %p49
    %p51 = scmp.ne.s32.totalorder %s40, %s43
    %p52 = scmp.eq.s32.totalorder %s14, 1
    %p53 = por %p51, %p52
    %p54 = scmp.ne.s32.totalorder %s43, %s44
    %p55 = scmp.eq.s32.totalorder %s14, 0
    %p56 = por %p54, %p55
    %p57 = scmp.ne.s32.totalorder %s43, %s44
    %p58 = scmp.eq.s32.totalorder %s15, 1
    %p59 = por %p57, %p58
    %p61 = scmp.ne.s32.totalorder %s44, %s60
    %p62 = scmp.eq.s32.totalorder %s15, 0
    %p63 = por %p61, %p62
    %s64 = ssub.s32 %s18, %s27
    %s65 = ssub.s32 %s17, %s31
    %s66 = sor.u32 %s64, %s65
    %p67 = scmp.eq.s32.totalorder %s66, 0
    %s69 = sadd.s32 %s68, 1
    %s70 = scalar_select %p67, %s68, %s69
    %p73 = pneg %p67
    %p74 = scmp.eq.s32.totalorder %s9, 1
    %p75 = por %p73, %p74
    %p76 = scmp.ne.s32.totalorder %s68, %s71
    %p77 = scmp.eq.s32.totalorder %s9, 0
    %p78 = por %p76, %p77
    %p79 = scmp.ne.s32.totalorder %s68, %s71
    %p80 = scmp.eq.s32.totalorder %s14, 1
    %p81 = por %p79, %p80
    %p82 = scmp.ne.s32.totalorder %s71, %s72
    %p83 = scmp.eq.s32.totalorder %s14, 0
    %p84 = por %p82, %p83
    %p85 = scmp.ne.s32.totalorder %s71, %s72
    %p86 = scmp.eq.s32.totalorder %s15, 1
    %p87 = por %p85, %p86
    %p89 = scmp.ne.s32.totalorder %s72, %s88
    %p90 = scmp.eq.s32.totalorder %s15, 0
    %p91 = por %p89, %p90
    %s92 = ssub.s32 %s17, %s31
    %p93 = scmp.eq.s32.totalorder %s92, 0
    %s95 = sadd.s32 %s94, 1
    %s96 = scalar_select %p93, %s94, %s95
    %p99 = pneg %p93
    %p100 = scmp.eq.s32.totalorder %s9, 1
    %p101 = por %p99, %p100
    %p102 = scmp.ne.s32.totalorder %s94, %s97
    %p103 = scmp.eq.s32.totalorder %s9, 0
    %p104 = por %p102, %p103
    %p105 = scmp.ne.s32.totalorder %s94, %s97
    %p106 = scmp.eq.s32.totalorder %s14, 1
    %p107 = por %p105, %p106
    %p108 = scmp.ne.s32.totalorder %s97, %s98
    %p109 = scmp.eq.s32.totalorder %s14, 0
    %p110 = por %p108, %p109
    %p111 = scmp.ne.s32.totalorder %s97, %s98
    %p112 = scmp.eq.s32.totalorder %s15, 1
    %p113 = por %p111, %p112
    %p115 = scmp.ne.s32.totalorder %s98, %s114
    %p116 = scmp.eq.s32.totalorder %s15, 0
    %p117 = por %p115, %p116
    %s118 = ssub.s32 %s16, %s35
    %s119 = ssub.s32 %s17, %s31
    %s120 = sor.u32 %s118, %s119
    %p121 = scmp.eq.s32.totalorder %s120, 0
    %s123 = sadd.s32 %s122, 1
    %s124 = scalar_select %p121, %s122, %s123
    %p127 = pneg %p121
    %p128 = scmp.eq.s32.totalorder %s9, 1
    %p129 = por %p127, %p128
    %p130 = scmp.ne.s32.totalorder %s122, %s125
    %p131 = scmp.eq.s32.totalorder %s9, 0
    %p132 = por %p130, %p131
    %p133 = scmp.ne.s32.totalorder %s122, %s125
    %p134 = scmp.eq.s32.totalorder %s14, 1
    %p135 = por %p133, %p134
    %p136 = scmp.ne.s32.totalorder %s125, %s126
    %p137 = scmp.eq.s32.totalorder %s14, 0
    %p138 = por %p136, %p137
    %p139 = scmp.ne.s32.totalorder %s125, %s126
    %p140 = scmp.eq.s32.totalorder %s15, 1
    %p141 = por %p139, %p140
    %p143 = scmp.ne.s32.totalorder %s126, %s142
    %p144 = scmp.eq.s32.totalorder %s15, 0
    %p145 = por %p143, %p144
    %p146 = scmp.le.s32.totalorder 1, %s9
    %p147 = scmp.lt.s32.totalorder %s9, 3
    %p148 = pnand %p146, %p147
    %p149 = pneg %p148
    // Predicated region
    $region9: #{detector_backbone_with_fpn_forward.9} parent=5 // pred_check
      _
    $region10: #{detector_backbone_with_fpn_forward.9} parent=5 // pred_check_branch
      %151 = sbr.rel (%p148) target = $region12
    $region11: #{detector_backbone_with_fpn_forward.9} parent=5 // pred_region
      %s152 = ssub.s32 %s9, 1
      // Predicated region
      $region13: #{detector_backbone_with_fpn_forward.9} parent=11 // pred_check
        %p153 = pneg %p84
      $region14: #{detector_backbone_with_fpn_forward.9} parent=11 // pred_check_branch
        %155 = sbr.rel (%p153) target = $region16
      $region15: #{detector_backbone_with_fpn_forward.9} parent=11 // pred_region
        %s156 = smul.u32 24, %s21
        %p157 = scmp.lt.s32.totalorder %s156, 23
        %s158 = scalar_select %p157, %s156, 23
        %p159 = scmp.lt.s32.totalorder %s20, 0
        %s160 = scalar_select %p159, %s20, 0
        %s161 = sadd.s32 %s160, %s158
        %s162 = smul.addr %s161, 4
        %s163 = scalar_lea.vmem %s1, %s162
        %s164 = smul.u32 24, %s21
      $region16: #{detector_backbone_with_fpn_forward.9} parent=11 // pred_fallthru
        _
      // Predicated region
      $region17: #{detector_backbone_with_fpn_forward.9} parent=11 // pred_check
        %p165 = pneg %p110
      $region18: #{detector_backbone_with_fpn_forward.9} parent=11 // pred_check_branch
        %167 = sbr.rel (%p165) target = $region20
      $region19: #{detector_backbone_with_fpn_forward.9} parent=11 // pred_region
        %p168 = scmp.lt.s32.totalorder %s20, 0
        %s169 = scalar_select %p168, %s20, 0
        %s170 = scalar_lea.vmem %s2, %s169
      $region20: #{detector_backbone_with_fpn_forward.9} parent=11 // pred_fallthru
        _
    $region12: #{detector_backbone_with_fpn_forward.9} parent=5 // pred_fallthru
      _
    %p171 = scmp.lt.s32.totalorder %s9, 2
    // Predicated region
    $region21: #{detector_backbone_with_fpn_forward.9} parent=5 // pred_check
      %p172 = pneg %p171
    $region22: #{detector_backbone_with_fpn_forward.9} parent=5 // pred_check_branch
      %174 = sbr.rel (%p172) target = $region24
    $region23: #{detector_backbone_with_fpn_forward.9} parent=5 // pred_region
      // Predicated region
      $region25: #{detector_backbone_with_fpn_forward.9} parent=23 // pred_check
        %p175 = pneg %p50
      $region26: #{detector_backbone_with_fpn_forward.9} parent=23 // pred_check_branch
        %177 = sbr.rel (%p175) target = $region28
      $region27: #{detector_backbone_with_fpn_forward.9} parent=23 // pred_region
        %s178 = smul.u32 8, %s16
        %s179 = smul.u32 2, %s18
        %p180 = scmp.lt.s32.totalorder %s178, 15
        %s181 = scalar_select %p180, %s178, 15
        %p182 = scmp.lt.s32.totalorder %s179, 1
        %s183 = scalar_select %p182, %s179, 1
        %s184 = smul.addr %s181, 2
        %s185 = sadd.s32 %s183, %s184
        %s186 = smul.addr %s185, 4
        %s187 = scalar_lea.vmem %s0, %s186
        %s188 = smul.u32 8, %s16
        %s189 = smul.u32 2, %s18
      $region28: #{detector_backbone_with_fpn_forward.9} parent=23 // pred_fallthru
        _
    $region24: #{detector_backbone_with_fpn_forward.9} parent=5 // pred_fallthru
      _
    %p190 = scmp.le.s32.totalorder 1, %s9
    %p191 = scmp.lt.s32.totalorder %s9, 3
    %p192 = pnand %p190, %p191
    %p193 = pneg %p192
    // Predicated region
    $region29: #{detector_backbone_with_fpn_forward.9} parent=5 // pred_check
      _
    $region30: #{detector_backbone_with_fpn_forward.9} parent=5 // pred_check_branch
      %195 = sbr.rel (%p192) target = $region32
    $region31: #{detector_backbone_with_fpn_forward.9} parent=5 // pred_region
      %s196 = ssub.s32 %s9, 1
      %s197 = smul.u32 8, %s19
      %s198 = smul.u32 2, %s21
      %p199 = scmp.lt.s32.totalorder %s197, 15
      %s200 = scalar_select %p199, %s197, 15
      %p201 = scmp.lt.s32.totalorder %s198, 1
      %s202 = scalar_select %p201, %s198, 1
      %s203 = smul.addr %s200, 2
      %s204 = sadd.s32 %s202, %s203
      %s205 = smul.addr %s204, 4
      %s206 = scalar_lea.vmem %s0, %s205
      %p207 = pneg %p56
      %p208 = pneg %p53
      %s209 = smul.u32 24, %s21
      %p210 = scmp.lt.s32.totalorder %s209, 23
      %s211 = scalar_select %p210, %s209, 23
      %p212 = scmp.lt.s32.totalorder %s20, 0
      %s213 = scalar_select %p212, %s20, 0
      %s214 = sadd.s32 %s213, %s211
      %s215 = smul.addr %s214, 4
      %s216 = scalar_lea.vmem %s1, %s215
      %p217 = pneg %p84
      %p218 = pneg %p81
      %p219 = scmp.lt.s32.totalorder %s20, 0
      %s220 = scalar_select %p219, %s20, 0
      %s221 = scalar_lea.vmem %s2, %s220
      %p222 = pneg %p110
      %p223 = pneg %p107
      %p224 = pneg %p138
      %p225 = pneg %p135
      %s226 = smul.u32 8, %s19
      %p227 = scmp.lt.s32.totalorder %s226, 15
      %s228 = scalar_select %p227, %s226, 15
      %p229 = scmp.lt.s32.totalorder %s20, 0
      %s230 = scalar_select %p229, %s20, 0
      %s231 = sadd.s32 %s230, %s228
      %s232 = smul.addr %s231, 4
      %s233 = scalar_lea.vmem %s3, %s232
      %s234 = smul.u32 8, %s19
      %s235 = smul.u32 2, %s21
      %p236 = scmp.lt.s32.totalorder %s234, 15
      %s237 = scalar_select %p236, %s234, 15
      %p238 = scmp.lt.s32.totalorder %s235, 1
      %s239 = scalar_select %p238, %s235, 1
      %s240 = smul.addr %s237, 2
      %s241 = sadd.s32 %s239, %s240
      %s242 = smul.addr %s241, 4
      %s243 = scalar_lea.vmem %s0, %s242
      %s244 = smul.u32 8, %s19
      %s245 = smul.u32 2, %s21
      %s246 = smul.u32 24, %s21
      %p247 = scmp.lt.s32.totalorder %s246, 23
      %s248 = scalar_select %p247, %s246, 23
      %p249 = scmp.lt.s32.totalorder %s20, 0
      %s250 = scalar_select %p249, %s20, 0
      %s251 = sadd.s32 %s250, %s248
      %s252 = smul.addr %s251, 4
      %s253 = scalar_lea.vmem %s1, %s252
      %s254 = smul.u32 24, %s21
      %p255 = scmp.lt.s32.totalorder %s20, 0
      %s256 = scalar_select %p255, %s20, 0
      %s257 = scalar_lea.vmem %s2, %s256
      %s258 = smul.u32 8, %s19
      %p259 = scmp.lt.s32.totalorder %s258, 15
      %s260 = scalar_select %p259, %s258, 15
      %p261 = scmp.lt.s32.totalorder %s20, 0
      %s262 = scalar_select %p261, %s20, 0
      %s263 = sadd.s32 %s262, %s260
      %s264 = smul.addr %s263, 4
      %s265 = scalar_lea.vmem %s3, %s264
      %s266 = smul.u32 8, %s19
      %v268 = vld [vmem:[%s243] sm:$0xff]
      %v269 = vld [vmem:[%s243 + $0x8] sm:$0xff]
      %v270 = vld [vmem:[%s243 + $0x10] sm:$0xff]
      %v271 = vld [vmem:[%s243 + $0x18] sm:$0xff]
      %v272 = vld [vmem:[%s243 + $0x20] sm:$0xff]
      %v273 = vld [vmem:[%s243 + $0x28] sm:$0xff]
      %v274 = vld [vmem:[%s243 + $0x30] sm:$0xff]
      %v275 = vld [vmem:[%s243 + $0x38] sm:$0xff]
      %v276 = vld [vmem:[%s253] sm:$0xf]
      %v277 = vld [vmem:[%s253 + $0x4] sm:$0xf]
      %v278 = vld [vmem:[%s253 + $0x8] sm:$0xf]
      %v279 = vld [vmem:[%s253 + $0xc] sm:$0xf]
      %v280 = vld [vmem:[%s253 + $0x10] sm:$0xf]
      %v281 = vld [vmem:[%s253 + $0x14] sm:$0xf]
      %v282 = vld [vmem:[%s253 + $0x18] sm:$0xf]
      %v283 = vld [vmem:[%s253 + $0x1c] sm:$0xf]
      %v284 = vld [vmem:[%s253 + $0x20] sm:$0xf]
      %v285 = vld [vmem:[%s253 + $0x24] sm:$0xf]
      %v286 = vld [vmem:[%s253 + $0x28] sm:$0xf]
      %v287 = vld [vmem:[%s253 + $0x2c] sm:$0xf]
      %v288 = vld [vmem:[%s253 + $0x30] sm:$0xf]
      %v289 = vld [vmem:[%s253 + $0x34] sm:$0xf]
      %v290 = vld [vmem:[%s253 + $0x38] sm:$0xf]
      %v291 = vld [vmem:[%s253 + $0x3c] sm:$0xf]
      %v292 = vld [vmem:[%s253 + $0x40] sm:$0xf]
      %v293 = vld [vmem:[%s253 + $0x44] sm:$0xf]
      %v294 = vld [vmem:[%s253 + $0x48] sm:$0xf]
      %v295 = vld [vmem:[%s253 + $0x4c] sm:$0xf]
      %v296 = vld [vmem:[%s253 + $0x50] sm:$0xf]
      %v297 = vld [vmem:[%s253 + $0x54] sm:$0xf]
      %v298 = vld [vmem:[%s253 + $0x58] sm:$0xf]
      %v299 = vld [vmem:[%s253 + $0x5c] sm:$0xf]
      %v300 = vld [vmem:[%s257] sm:$0x1]
      %v302 = vperm.slane %v300, 0
      %v312 = vunpack.c.l.b16 %v268
      %v313 = vunpack.c.h.b16 %v268
      %v314 = vunpack.c.l.b16 %v269
      %v315 = vunpack.c.h.b16 %v269
      %v316 = vunpack.c.l.b16 %v270
      %v317 = vunpack.c.h.b16 %v270
      %v318 = vunpack.c.l.b16 %v271
      %v319 = vunpack.c.h.b16 %v271
      %v320 = vunpack.c.l.b16 %v272
      %v321 = vunpack.c.h.b16 %v272
      %v322 = vunpack.c.l.b16 %v273
      %v323 = vunpack.c.h.b16 %v273
      %v324 = vunpack.c.l.b16 %v274
      %v325 = vunpack.c.h.b16 %v274
      %v326 = vunpack.c.l.b16 %v275
      %v327 = vunpack.c.h.b16 %v275
      %v328 = vpack.c.b16 %v314, %v312
      %v329 = vpack.c.b16 %v315, %v313
      %v330 = vpack.c.b16 %v318, %v316
      %v331 = vpack.c.b16 %v319, %v317
      %v332 = vpack.c.b16 %v322, %v320
      %v333 = vpack.c.b16 %v323, %v321
      %v334 = vpack.c.b16 %v326, %v324
      %v335 = vpack.c.b16 %v327, %v325
      %v364 = vunpack.c.l.b16 %v276
      %v365 = vunpack.c.l.b16 %v277
      %v366 = vunpack.c.l.b16 %v278
      %v367 = vunpack.c.l.b16 %v279
      %v368 = vunpack.c.l.b16 %v280
      %v369 = vunpack.c.l.b16 %v281
      %v370 = vunpack.c.l.b16 %v282
      %v371 = vunpack.c.l.b16 %v283
      %v372 = vunpack.c.l.b16 %v284
      %v373 = vunpack.c.l.b16 %v285
      %v374 = vunpack.c.l.b16 %v286
      %v375 = vunpack.c.l.b16 %v287
      %v376 = vunpack.c.l.b16 %v288
      %v377 = vunpack.c.l.b16 %v289
      %v378 = vunpack.c.l.b16 %v290
      %v379 = vunpack.c.l.b16 %v291
      %v380 = vunpack.c.l.b16 %v292
      %v381 = vunpack.c.l.b16 %v293
      %v382 = vunpack.c.l.b16 %v294
      %v383 = vunpack.c.l.b16 %v295
      %v384 = vunpack.c.l.b16 %v296
      %v385 = vunpack.c.l.b16 %v297
      %v386 = vunpack.c.l.b16 %v298
      %v387 = vunpack.c.l.b16 %v299
      %v388 = vpack.c.b16 %v365, %v364
      %v389 = vpack.c.b16 %v367, %v366
      %v390 = vpack.c.b16 %v369, %v368
      %v391 = vpack.c.b16 %v371, %v370
      %v392 = vpack.c.b16 %v373, %v372
      %v393 = vpack.c.b16 %v375, %v374
      %v394 = vpack.c.b16 %v377, %v376
      %v395 = vpack.c.b16 %v379, %v378
      %v396 = vpack.c.b16 %v381, %v380
      %v397 = vpack.c.b16 %v383, %v382
      %v398 = vpack.c.b16 %v385, %v384
      %v399 = vpack.c.b16 %v387, %v386
      %vm412 = vcmask 523264
      %v414 = vsel %vm412, %v329, 0
      %v417 = vsel %vm412, %v331, 0
      %v420 = vsel %vm412, %v333, 0
      %v423 = vsel %vm412, %v335, 0
      %425 = vmatpush.bf16.msra.mxu0 %v395
      %426 = vmatpush.bf16.msra.mxu0 %v394
      %427 = vmatpush.bf16.msra.mxu0 %v393
      %428 = vmatpush.bf16.msra.mxu0 %v392
      %429 = vmatpush.bf16.msra.mxu0 %v391
      %430 = vmatpush.bf16.msra.mxu0 %v390
      %431 = vmatpush.bf16.msra.mxu0 %v389
      %432 = vmatpush.bf16.msra.mxu0 %v388
      %433 = vmatmul.bf16.gmra.mxu0 %v328
      %v434 = vpop.f32.mrf.mxu0
      %v435 = vadd.f32 %v302, %v434
      %v436 = vpop.f32.mrf.mxu0
      %v437 = vadd.f32 %v302, %v436
      %438 = vmatmul.bf16.gmra.mxu0 %v330
      %v439 = vpop.f32.mrf.mxu0
      %v440 = vadd.f32 %v302, %v439
      %v441 = vpop.f32.mrf.mxu0
      %v442 = vadd.f32 %v302, %v441
      %443 = vmatmul.bf16.gmra.mxu0 %v332
      %v444 = vpop.f32.mrf.mxu0
      %v445 = vadd.f32 %v302, %v444
      %v446 = vpop.f32.mrf.mxu0
      %v447 = vadd.f32 %v302, %v446
      %448 = vmatmul.bf16.gmra.mxu0 %v334
      %v449 = vpop.f32.mrf.mxu0
      %v450 = vadd.f32 %v302, %v449
      %v451 = vpop.f32.mrf.mxu0
      %v452 = vadd.f32 %v302, %v451
      %453 = vdwg.mxu0
      %454 = vmatpush.bf16.msra.mxu0 0
      %455 = vmatpush.bf16.msra.mxu0 0
      %456 = vmatpush.bf16.msra.mxu0 0
      %457 = vmatpush.bf16.msra.mxu0 0
      %458 = vmatpush.bf16.msra.mxu0 %v399
      %459 = vmatpush.bf16.msra.mxu0 %v398
      %460 = vmatpush.bf16.msra.mxu0 %v397
      %461 = vmatpush.bf16.msra.mxu0 %v396
      %462 = vmatmul.bf16.gmra.mxu0 %v414
      %v463 = vpop.f32.mrf.mxu0
      %v464 = vadd.f32 %v435, %v463
      %v465 = vpop.f32.mrf.mxu0
      %v466 = vadd.f32 %v437, %v465
      %467 = vmatmul.bf16.gmra.mxu0 %v417
      %v468 = vpop.f32.mrf.mxu0
      %v469 = vadd.f32 %v440, %v468
      %v470 = vpop.f32.mrf.mxu0
      %v471 = vadd.f32 %v442, %v470
      %472 = vmatmul.bf16.gmra.mxu0 %v420
      %v473 = vpop.f32.mrf.mxu0
      %v474 = vadd.f32 %v445, %v473
      %v475 = vpop.f32.mrf.mxu0
      %v476 = vadd.f32 %v447, %v475
      %477 = vmatmul.bf16.gmra.mxu0 %v423
      %v478 = vpop.f32.mrf.mxu0
      %v479 = vadd.f32 %v450, %v478
      %v480 = vpop.f32.mrf.mxu0
      %v481 = vadd.f32 %v452, %v480
      %482 = vdwg.mxu0
      %v483 = vpack.c.bf16 %v464, %v464
      %v484 = vpack.c.bf16 %v466, %v466
      %v485 = vpack.c.bf16 %v469, %v469
      %v486 = vpack.c.bf16 %v471, %v471
      %v487 = vpack.c.bf16 %v474, %v474
      %v488 = vpack.c.bf16 %v476, %v476
      %v489 = vpack.c.bf16 %v479, %v479
      %v490 = vpack.c.bf16 %v481, %v481
      %491 = vst [vmem:[%s265] sm:$0xf] %v483
      %492 = vst [vmem:[%s265 + $0x4] sm:$0xf] %v484
      %493 = vst [vmem:[%s265 + $0x8] sm:$0xf] %v485
      %494 = vst [vmem:[%s265 + $0xc] sm:$0xf] %v486
      %495 = vst [vmem:[%s265 + $0x10] sm:$0xf] %v487
      %496 = vst [vmem:[%s265 + $0x14] sm:$0xf] %v488
      %497 = vst [vmem:[%s265 + $0x18] sm:$0xf] %v489
      %498 = vst [vmem:[%s265 + $0x1c] sm:$0xf] %v490
      %s499 = smul.u32 8, %s19
      %p500 = scmp.lt.s32.totalorder %s499, 15
      %s501 = scalar_select %p500, %s499, 15
      %p502 = scmp.lt.s32.totalorder %s20, 0
      %s503 = scalar_select %p502, %s20, 0
      %s504 = sadd.s32 %s503, %s501
      %s505 = smul.addr %s504, 4
      %s506 = scalar_lea.vmem %s3, %s505
      // Predicated region
      $region33: #{detector_backbone_with_fpn_forward.9} parent=31 // pred_check
        %p507 = pneg %p135
      $region34: #{detector_backbone_with_fpn_forward.9} parent=31 // pred_check_branch
        %509 = sbr.rel (%p507) target = $region36
      $region35: #{detector_backbone_with_fpn_forward.9} parent=31 // pred_region
        %s510 = smul.u32 8, %s19
      $region36: #{detector_backbone_with_fpn_forward.9} parent=31 // pred_fallthru
        _
    $region32: #{detector_backbone_with_fpn_forward.9} parent=5 // pred_fallthru
      _
    %p511 = scmp.le.s32.totalorder 2, %s9
    // Predicated region
    $region37: #{detector_backbone_with_fpn_forward.9} parent=5 // pred_check
      %p512 = pneg %p511
    $region38: #{detector_backbone_with_fpn_forward.9} parent=5 // pred_check_branch
      %514 = sbr.rel (%p512) target = $region40
    $region39: #{detector_backbone_with_fpn_forward.9} parent=5 // pred_region
      %s515 = ssub.s32 %s9, 2
      // Predicated region
      $region41: #{detector_backbone_with_fpn_forward.9} parent=39 // pred_check
        %p516 = pneg %p141
      $region42: #{detector_backbone_with_fpn_forward.9} parent=39 // pred_check_branch
        %518 = sbr.rel (%p516) target = $region44
      $region43: #{detector_backbone_with_fpn_forward.9} parent=39 // pred_region
        %s519 = smul.u32 8, %s22
        %p520 = scmp.lt.s32.totalorder %s519, 15
        %s521 = scalar_select %p520, %s519, 15
        %p522 = scmp.lt.s32.totalorder %s23, 0
        %s523 = scalar_select %p522, %s23, 0
        %s524 = sadd.s32 %s523, %s521
        %s525 = smul.addr %s524, 4
        %s526 = scalar_lea.vmem %s3, %s525
      $region44: #{detector_backbone_with_fpn_forward.9} parent=39 // pred_fallthru
        _
    $region40: #{detector_backbone_with_fpn_forward.9} parent=5 // pred_fallthru
      _
  $region6: #{detector_backbone_with_fpn_forward.9} parent=0 // loop_footer
    %s13 = sadd.s32 1, %s9
  $region7: #{detector_backbone_with_fpn_forward.9} parent=0 // loop_footer_branch
    %8 = sbr.rel target = $region3
  $region8: #{detector_backbone_with_fpn_forward.9} parent=0 // loop_exit
    _

// kernel: detector_backbone_with_fpn_forward.16
$region0: #{detector_backbone_with_fpn_forward.16}
  #allocation0 [shape = 'u32[]', space=smem, size = 0x4, offset = 0x4, fixed_abs, tag = 'smem constant byte address 0x4 - core index']
  #allocation1 [shape = 'u32[72,128]{1,0:T(1,128)}', space=vmem, size = 0x9000, scoped, tag = 'internal scratch']
  %s0 = inlined_call_operand.vmem [shape: bf16[128,128], index: 0, kind: input, shape index: {}]
  %s1 = inlined_call_operand.vmem [shape: bf16[128,128], index: 1, kind: input, shape index: {}]
  %s2 = inlined_call_operand.vmem [shape: f32[1,128], index: 2, kind: input, shape index: {}]
  %s3 = inlined_call_operand.vmem [shape: bf16[128,128], index: 3, kind: output, shape index: {}]
  %s4 = sld [smem:[#allocation0]]
  $region45: #{detector_backbone_with_fpn_forward.16} parent=0
    _
  %s6 = ssub.s32 1, %s4
  %s7 = scalar_select 0, %s6, %s4
  loop: start=0, step=1, limit=4
  $region2: #{detector_backbone_with_fpn_forward.16} parent=0 // loop_pre_header
    _
  $region3: #{detector_backbone_with_fpn_forward.16} parent=0 // loop_header
    %s9 = sphi 0, %s13
    %p10 = scmp.ge.s32.totalorder %s9, 4
    %s16 = sphi 0, %s35
    %s17 = sphi 0, %s31
    %s18 = sphi 0, %s27
    %s19 = sphi 0, %s16
    %s20 = sphi 0, %s17
    %s21 = sphi 0, %s18
    %s22 = sphi 0, %s19
    %s23 = sphi 0, %s20
    %s24 = sphi 0, %s21
    %s40 = sphi 0, %s42
    %s43 = sphi 0, %s40
    %s44 = sphi 0, %s43
    %s60 = sphi 0, %s44
    %s68 = sphi 0, %s70
    %s71 = sphi 0, %s68
    %s72 = sphi 0, %s71
    %s88 = sphi 0, %s72
    %s94 = sphi 0, %s96
    %s97 = sphi 0, %s94
    %s98 = sphi 0, %s97
    %s114 = sphi 0, %s98
    %s122 = sphi 0, %s124
    %s125 = sphi 0, %s122
    %s126 = sphi 0, %s125
    %s142 = sphi 0, %s126
  $region4: #{detector_backbone_with_fpn_forward.16} parent=0 // loop_header_branch
    %12 = sbr.rel (%p10) target = $region8
  $region5: #{detector_backbone_with_fpn_forward.16} parent=0 // loop_body
    %s14 = ssub.s32 %s9, 1
    %s15 = ssub.s32 %s9, 2
    %s25 = sadd.s32 1, %s18
    %p26 = scmp.ge.s32.totalorder %s25, 1
    %s27 = scalar_select %p26, 0, %s25
    %s28 = sadd.s32 1, %s17
    %s29 = scalar_select %p26, %s28, %s17
    %p30 = scmp.ge.s32.totalorder %s29, 1
    %s31 = scalar_select %p30, 0, %s29
    %s32 = sadd.s32 1, %s16
    %s33 = scalar_select %p30, %s32, %s16
    %p34 = scmp.ge.s32.totalorder %s33, 2
    %s35 = scalar_select %p34, 0, %s33
    %s36 = ssub.s32 %s16, %s35
    %s37 = ssub.s32 %s18, %s27
    %s38 = sor.u32 %s36, %s37
    %p39 = scmp.eq.s32.totalorder %s38, 0
    %s41 = sadd.s32 %s40, 1
    %s42 = scalar_select %p39, %s40, %s41
    %p45 = pneg %p39
    %p46 = scmp.eq.s32.totalorder %s9, 1
    %p47 = por %p45, %p46
    %p48 = scmp.ne.s32.totalorder %s40, %s43
    %p49 = scmp.eq.s32.totalorder %s9, 0
    %p50 = por %p48, %p49
    %p51 = scmp.ne.s32.totalorder %s40, %s43
    %p52 = scmp.eq.s32.totalorder %s14, 1
    %p53 = por %p51, %p52
    %p54 = scmp.ne.s32.totalorder %s43, %s44
    %p55 = scmp.eq.s32.totalorder %s14, 0
    %p56 = por %p54, %p55
    %p57 = scmp.ne.s32.totalorder %s43, %s44
    %p58 = scmp.eq.s32.totalorder %s15, 1
    %p59 = por %p57, %p58
    %p61 = scmp.ne.s32.totalorder %s44, %s60
    %p62 = scmp.eq.s32.totalorder %s15, 0
    %p63 = por %p61, %p62
    %s64 = ssub.s32 %s18, %s27
    %s65 = ssub.s32 %s17, %s31
    %s66 = sor.u32 %s64, %s65
    %p67 = scmp.eq.s32.totalorder %s66, 0
    %s69 = sadd.s32 %s68, 1
    %s70 = scalar_select %p67, %s68, %s69
    %p73 = pneg %p67
    %p74 = scmp.eq.s32.totalorder %s9, 1
    %p75 = por %p73, %p74
    %p76 = scmp.ne.s32.totalorder %s68, %s71
    %p77 = scmp.eq.s32.totalorder %s9, 0
    %p78 = por %p76, %p77
    %p79 = scmp.ne.s32.totalorder %s68, %s71
    %p80 = scmp.eq.s32.totalorder %s14, 1
    %p81 = por %p79, %p80
    %p82 = scmp.ne.s32.totalorder %s71, %s72
    %p83 = scmp.eq.s32.totalorder %s14, 0
    %p84 = por %p82, %p83
    %p85 = scmp.ne.s32.totalorder %s71, %s72
    %p86 = scmp.eq.s32.totalorder %s15, 1
    %p87 = por %p85, %p86
    %p89 = scmp.ne.s32.totalorder %s72, %s88
    %p90 = scmp.eq.s32.totalorder %s15, 0
    %p91 = por %p89, %p90
    %s92 = ssub.s32 %s17, %s31
    %p93 = scmp.eq.s32.totalorder %s92, 0
    %s95 = sadd.s32 %s94, 1
    %s96 = scalar_select %p93, %s94, %s95
    %p99 = pneg %p93
    %p100 = scmp.eq.s32.totalorder %s9, 1
    %p101 = por %p99, %p100
    %p102 = scmp.ne.s32.totalorder %s94, %s97
    %p103 = scmp.eq.s32.totalorder %s9, 0
    %p104 = por %p102, %p103
    %p105 = scmp.ne.s32.totalorder %s94, %s97
    %p106 = scmp.eq.s32.totalorder %s14, 1
    %p107 = por %p105, %p106
    %p108 = scmp.ne.s32.totalorder %s97, %s98
    %p109 = scmp.eq.s32.totalorder %s14, 0
    %p110 = por %p108, %p109
    %p111 = scmp.ne.s32.totalorder %s97, %s98
    %p112 = scmp.eq.s32.totalorder %s15, 1
    %p113 = por %p111, %p112
    %p115 = scmp.ne.s32.totalorder %s98, %s114
    %p116 = scmp.eq.s32.totalorder %s15, 0
    %p117 = por %p115, %p116
    %s118 = ssub.s32 %s16, %s35
    %s119 = ssub.s32 %s17, %s31
    %s120 = sor.u32 %s118, %s119
    %p121 = scmp.eq.s32.totalorder %s120, 0
    %s123 = sadd.s32 %s122, 1
    %s124 = scalar_select %p121, %s122, %s123
    %p127 = pneg %p121
    %p128 = scmp.eq.s32.totalorder %s9, 1
    %p129 = por %p127, %p128
    %p130 = scmp.ne.s32.totalorder %s122, %s125
    %p131 = scmp.eq.s32.totalorder %s9, 0
    %p132 = por %p130, %p131
    %p133 = scmp.ne.s32.totalorder %s122, %s125
    %p134 = scmp.eq.s32.totalorder %s14, 1
    %p135 = por %p133, %p134
    %p136 = scmp.ne.s32.totalorder %s125, %s126
    %p137 = scmp.eq.s32.totalorder %s14, 0
    %p138 = por %p136, %p137
    %p139 = scmp.ne.s32.totalorder %s125, %s126
    %p140 = scmp.eq.s32.totalorder %s15, 1
    %p141 = por %p139, %p140
    %p143 = scmp.ne.s32.totalorder %s126, %s142
    %p144 = scmp.eq.s32.totalorder %s15, 0
    %p145 = por %p143, %p144
    %p146 = scmp.le.s32.totalorder 1, %s9
    %p147 = scmp.lt.s32.totalorder %s9, 3
    %p148 = pnand %p146, %p147
    %p149 = pneg %p148
    // Predicated region
    $region9: #{detector_backbone_with_fpn_forward.16} parent=5 // pred_check
      _
    $region10: #{detector_backbone_with_fpn_forward.16} parent=5 // pred_check_branch
      %151 = sbr.rel (%p148) target = $region12
    $region11: #{detector_backbone_with_fpn_forward.16} parent=5 // pred_region
      %s152 = ssub.s32 %s9, 1
      // Predicated region
      $region13: #{detector_backbone_with_fpn_forward.16} parent=11 // pred_check
        %p153 = pneg %p84
      $region14: #{detector_backbone_with_fpn_forward.16} parent=11 // pred_check_branch
        %155 = sbr.rel (%p153) target = $region16
      $region15: #{detector_backbone_with_fpn_forward.16} parent=11 // pred_region
        %s156 = smul.u32 16, %s21
        %p157 = scmp.lt.s32.totalorder %s156, 15
        %s158 = scalar_select %p157, %s156, 15
        %p159 = scmp.lt.s32.totalorder %s20, 0
        %s160 = scalar_select %p159, %s20, 0
        %s161 = sadd.s32 %s160, %s158
        %s162 = smul.addr %s161, 4
        %s163 = scalar_lea.vmem %s1, %s162
        %s164 = smul.u32 16, %s21
      $region16: #{detector_backbone_with_fpn_forward.16} parent=11 // pred_fallthru
        _
      // Predicated region
      $region17: #{detector_backbone_with_fpn_forward.16} parent=11 // pred_check
        %p165 = pneg %p110
      $region18: #{detector_backbone_with_fpn_forward.16} parent=11 // pred_check_branch
        %167 = sbr.rel (%p165) target = $region20
      $region19: #{detector_backbone_with_fpn_forward.16} parent=11 // pred_region
        %p168 = scmp.lt.s32.totalorder %s20, 0
        %s169 = scalar_select %p168, %s20, 0
        %s170 = scalar_lea.vmem %s2, %s169
      $region20: #{detector_backbone_with_fpn_forward.16} parent=11 // pred_fallthru
        _
    $region12: #{detector_backbone_with_fpn_forward.16} parent=5 // pred_fallthru
      _
    %p171 = scmp.lt.s32.totalorder %s9, 2
    // Predicated region
    $region21: #{detector_backbone_with_fpn_forward.16} parent=5 // pred_check
      %p172 = pneg %p171
    $region22: #{detector_backbone_with_fpn_forward.16} parent=5 // pred_check_branch
      %174 = sbr.rel (%p172) target = $region24
    $region23: #{detector_backbone_with_fpn_forward.16} parent=5 // pred_region
      // Predicated region
      $region25: #{detector_backbone_with_fpn_forward.16} parent=23 // pred_check
        %p175 = pneg %p50
      $region26: #{detector_backbone_with_fpn_forward.16} parent=23 // pred_check_branch
        %177 = sbr.rel (%p175) target = $region28
      $region27: #{detector_backbone_with_fpn_forward.16} parent=23 // pred_region
        %s178 = smul.u32 8, %s16
        %p179 = scmp.lt.s32.totalorder %s178, 15
        %s180 = scalar_select %p179, %s178, 15
        %p181 = scmp.lt.s32.totalorder %s18, 0
        %s182 = scalar_select %p181, %s18, 0
        %s183 = sadd.s32 %s182, %s180
        %s184 = smul.addr %s183, 4
        %s185 = scalar_lea.vmem %s0, %s184
        %s186 = smul.u32 8, %s16
      $region28: #{detector_backbone_with_fpn_forward.16} parent=23 // pred_fallthru
        _
    $region24: #{detector_backbone_with_fpn_forward.16} parent=5 // pred_fallthru
      _
    %p187 = scmp.le.s32.totalorder 1, %s9
    %p188 = scmp.lt.s32.totalorder %s9, 3
    %p189 = pnand %p187, %p188
    %p190 = pneg %p189
    // Predicated region
    $region29: #{detector_backbone_with_fpn_forward.16} parent=5 // pred_check
      _
    $region30: #{detector_backbone_with_fpn_forward.16} parent=5 // pred_check_branch
      %192 = sbr.rel (%p189) target = $region32
    $region31: #{detector_backbone_with_fpn_forward.16} parent=5 // pred_region
      %s193 = ssub.s32 %s9, 1
      %s194 = smul.u32 8, %s19
      %p195 = scmp.lt.s32.totalorder %s194, 15
      %s196 = scalar_select %p195, %s194, 15
      %p197 = scmp.lt.s32.totalorder %s21, 0
      %s198 = scalar_select %p197, %s21, 0
      %s199 = sadd.s32 %s198, %s196
      %s200 = smul.addr %s199, 4
      %s201 = scalar_lea.vmem %s0, %s200
      %p202 = pneg %p56
      %p203 = pneg %p53
      %s204 = smul.u32 16, %s21
      %p205 = scmp.lt.s32.totalorder %s204, 15
      %s206 = scalar_select %p205, %s204, 15
      %p207 = scmp.lt.s32.totalorder %s20, 0
      %s208 = scalar_select %p207, %s20, 0
      %s209 = sadd.s32 %s208, %s206
      %s210 = smul.addr %s209, 4
      %s211 = scalar_lea.vmem %s1, %s210
      %p212 = pneg %p84
      %p213 = pneg %p81
      %p214 = scmp.lt.s32.totalorder %s20, 0
      %s215 = scalar_select %p214, %s20, 0
      %s216 = scalar_lea.vmem %s2, %s215
      %p217 = pneg %p110
      %p218 = pneg %p107
      %p219 = pneg %p138
      %p220 = pneg %p135
      %s221 = smul.u32 8, %s19
      %p222 = scmp.lt.s32.totalorder %s221, 15
      %s223 = scalar_select %p222, %s221, 15
      %p224 = scmp.lt.s32.totalorder %s20, 0
      %s225 = scalar_select %p224, %s20, 0
      %s226 = sadd.s32 %s225, %s223
      %s227 = smul.addr %s226, 4
      %s228 = scalar_lea.vmem %s3, %s227
      %s229 = smul.u32 8, %s19
      %p230 = scmp.lt.s32.totalorder %s229, 15
      %s231 = scalar_select %p230, %s229, 15
      %p232 = scmp.lt.s32.totalorder %s21, 0
      %s233 = scalar_select %p232, %s21, 0
      %s234 = sadd.s32 %s233, %s231
      %s235 = smul.addr %s234, 4
      %s236 = scalar_lea.vmem %s0, %s235
      %s237 = smul.u32 8, %s19
      %s238 = smul.u32 16, %s21
      %p239 = scmp.lt.s32.totalorder %s238, 15
      %s240 = scalar_select %p239, %s238, 15
      %p241 = scmp.lt.s32.totalorder %s20, 0
      %s242 = scalar_select %p241, %s20, 0
      %s243 = sadd.s32 %s242, %s240
      %s244 = smul.addr %s243, 4
      %s245 = scalar_lea.vmem %s1, %s244
      %s246 = smul.u32 16, %s21
      %p247 = scmp.lt.s32.totalorder %s20, 0
      %s248 = scalar_select %p247, %s20, 0
      %s249 = scalar_lea.vmem %s2, %s248
      %s250 = smul.u32 8, %s19
      %p251 = scmp.lt.s32.totalorder %s250, 15
      %s252 = scalar_select %p251, %s250, 15
      %p253 = scmp.lt.s32.totalorder %s20, 0
      %s254 = scalar_select %p253, %s20, 0
      %s255 = sadd.s32 %s254, %s252
      %s256 = smul.addr %s255, 4
      %s257 = scalar_lea.vmem %s3, %s256
      %s258 = smul.u32 8, %s19
      %v259 = vld [vmem:[%s236] sm:$0xf]
      %v260 = vld [vmem:[%s236 + $0x4] sm:$0xf]
      %v261 = vld [vmem:[%s236 + $0x8] sm:$0xf]
      %v262 = vld [vmem:[%s236 + $0xc] sm:$0xf]
      %v263 = vld [vmem:[%s236 + $0x10] sm:$0xf]
      %v264 = vld [vmem:[%s236 + $0x14] sm:$0xf]
      %v265 = vld [vmem:[%s236 + $0x18] sm:$0xf]
      %v266 = vld [vmem:[%s236 + $0x1c] sm:$0xf]
      %v267 = vld [vmem:[%s245] sm:$0xf]
      %v268 = vld [vmem:[%s245 + $0x4] sm:$0xf]
      %v269 = vld [vmem:[%s245 + $0x8] sm:$0xf]
      %v270 = vld [vmem:[%s245 + $0xc] sm:$0xf]
      %v271 = vld [vmem:[%s245 + $0x10] sm:$0xf]
      %v272 = vld [vmem:[%s245 + $0x14] sm:$0xf]
      %v273 = vld [vmem:[%s245 + $0x18] sm:$0xf]
      %v274 = vld [vmem:[%s245 + $0x1c] sm:$0xf]
      %v275 = vld [vmem:[%s245 + $0x20] sm:$0xf]
      %v276 = vld [vmem:[%s245 + $0x24] sm:$0xf]
      %v277 = vld [vmem:[%s245 + $0x28] sm:$0xf]
      %v278 = vld [vmem:[%s245 + $0x2c] sm:$0xf]
      %v279 = vld [vmem:[%s245 + $0x30] sm:$0xf]
      %v280 = vld [vmem:[%s245 + $0x34] sm:$0xf]
      %v281 = vld [vmem:[%s245 + $0x38] sm:$0xf]
      %v282 = vld [vmem:[%s245 + $0x3c] sm:$0xf]
      %v283 = vld [vmem:[%s249] sm:$0x1]
      %v285 = vperm.slane %v283, 0
      %v295 = vunpack.c.l.b16 %v259
      %v296 = vunpack.c.l.b16 %v260
      %v297 = vunpack.c.l.b16 %v261
      %v298 = vunpack.c.l.b16 %v262
      %v299 = vunpack.c.l.b16 %v263
      %v300 = vunpack.c.l.b16 %v264
      %v301 = vunpack.c.l.b16 %v265
      %v302 = vunpack.c.l.b16 %v266
      %v303 = vpack.c.b16 %v296, %v295
      %v304 = vpack.c.b16 %v298, %v297
      %v305 = vpack.c.b16 %v300, %v299
      %v306 = vpack.c.b16 %v302, %v301
      %v327 = vunpack.c.l.b16 %v267
      %v328 = vunpack.c.l.b16 %v268
      %v329 = vunpack.c.l.b16 %v269
      %v330 = vunpack.c.l.b16 %v270
      %v331 = vunpack.c.l.b16 %v271
      %v332 = vunpack.c.l.b16 %v272
      %v333 = vunpack.c.l.b16 %v273
      %v334 = vunpack.c.l.b16 %v274
      %v335 = vunpack.c.l.b16 %v275
      %v336 = vunpack.c.l.b16 %v276
      %v337 = vunpack.c.l.b16 %v277
      %v338 = vunpack.c.l.b16 %v278
      %v339 = vunpack.c.l.b16 %v279
      %v340 = vunpack.c.l.b16 %v280
      %v341 = vunpack.c.l.b16 %v281
      %v342 = vunpack.c.l.b16 %v282
      %v343 = vpack.c.b16 %v328, %v327
      %v344 = vpack.c.b16 %v330, %v329
      %v345 = vpack.c.b16 %v332, %v331
      %v346 = vpack.c.b16 %v334, %v333
      %v347 = vpack.c.b16 %v336, %v335
      %v348 = vpack.c.b16 %v338, %v337
      %v349 = vpack.c.b16 %v340, %v339
      %v350 = vpack.c.b16 %v342, %v341
      %359 = vmatpush.bf16.msra.mxu0 %v350
      %360 = vmatpush.bf16.msra.mxu0 %v349
      %361 = vmatpush.bf16.msra.mxu0 %v348
      %362 = vmatpush.bf16.msra.mxu0 %v347
      %363 = vmatpush.bf16.msra.mxu0 %v346
      %364 = vmatpush.bf16.msra.mxu0 %v345
      %365 = vmatpush.bf16.msra.mxu0 %v344
      %366 = vmatpush.bf16.msra.mxu0 %v343
      %367 = vmatmul.bf16.gmra.mxu0 %v303
      %v368 = vpop.f32.mrf.mxu0
      %v369 = vadd.f32 %v285, %v368
      %v370 = vpop.f32.mrf.mxu0
      %v371 = vadd.f32 %v285, %v370
      %372 = vmatmul.bf16.gmra.mxu0 %v304
      %v373 = vpop.f32.mrf.mxu0
      %v374 = vadd.f32 %v285, %v373
      %v375 = vpop.f32.mrf.mxu0
      %v376 = vadd.f32 %v285, %v375
      %377 = vmatmul.bf16.gmra.mxu0 %v305
      %v378 = vpop.f32.mrf.mxu0
      %v379 = vadd.f32 %v285, %v378
      %v380 = vpop.f32.mrf.mxu0
      %v381 = vadd.f32 %v285, %v380
      %382 = vmatmul.bf16.gmra.mxu0 %v306
      %v383 = vpop.f32.mrf.mxu0
      %v384 = vadd.f32 %v285, %v383
      %v385 = vpop.f32.mrf.mxu0
      %v386 = vadd.f32 %v285, %v385
      %387 = vdwg.mxu0
      %v388 = vpack.c.bf16 %v369, %v369
      %v389 = vpack.c.bf16 %v371, %v371
      %v390 = vpack.c.bf16 %v374, %v374
      %v391 = vpack.c.bf16 %v376, %v376
      %v392 = vpack.c.bf16 %v379, %v379
      %v393 = vpack.c.bf16 %v381, %v381
      %v394 = vpack.c.bf16 %v384, %v384
      %v395 = vpack.c.bf16 %v386, %v386
      %396 = vst [vmem:[%s257] sm:$0xf] %v388
      %397 = vst [vmem:[%s257 + $0x4] sm:$0xf] %v389
      %398 = vst [vmem:[%s257 + $0x8] sm:$0xf] %v390
      %399 = vst [vmem:[%s257 + $0xc] sm:$0xf] %v391
      %400 = vst [vmem:[%s257 + $0x10] sm:$0xf] %v392
      %401 = vst [vmem:[%s257 + $0x14] sm:$0xf] %v393
      %402 = vst [vmem:[%s257 + $0x18] sm:$0xf] %v394
      %403 = vst [vmem:[%s257 + $0x1c] sm:$0xf] %v395
      %s404 = smul.u32 8, %s19
      %p405 = scmp.lt.s32.totalorder %s404, 15
      %s406 = scalar_select %p405, %s404, 15
      %p407 = scmp.lt.s32.totalorder %s20, 0
      %s408 = scalar_select %p407, %s20, 0
      %s409 = sadd.s32 %s408, %s406
      %s410 = smul.addr %s409, 4
      %s411 = scalar_lea.vmem %s3, %s410
      // Predicated region
      $region33: #{detector_backbone_with_fpn_forward.16} parent=31 // pred_check
        %p412 = pneg %p135
      $region34: #{detector_backbone_with_fpn_forward.16} parent=31 // pred_check_branch
        %414 = sbr.rel (%p412) target = $region36
      $region35: #{detector_backbone_with_fpn_forward.16} parent=31 // pred_region
        %s415 = smul.u32 8, %s19
      $region36: #{detector_backbone_with_fpn_forward.16} parent=31 // pred_fallthru
        _
    $region32: #{detector_backbone_with_fpn_forward.16} parent=5 // pred_fallthru
      _
    %p416 = scmp.le.s32.totalorder 2, %s9
    // Predicated region
    $region37: #{detector_backbone_with_fpn_forward.16} parent=5 // pred_check
      %p417 = pneg %p416
    $region38: #{detector_backbone_with_fpn_forward.16} parent=5 // pred_check_branch
      %419 = sbr.rel (%p417) target = $region40
    $region39: #{detector_backbone_with_fpn_forward.16} parent=5 // pred_region
      %s420 = ssub.s32 %s9, 2
      // Predicated region
      $region41: #{detector_backbone_with_fpn_forward.16} parent=39 // pred_check
        %p421 = pneg %p141
      $region42: #{detector_backbone_with_fpn_forward.16} parent=39 // pred_check_branch
        %423 = sbr.rel (%p421) target = $region44
      $region43: #{detector_backbone_with_fpn_forward.16} parent=39 // pred_region
        %s424 = smul.u32 8, %s22
        %p425 = scmp.lt.s32.totalorder %s424, 15
        %s426 = scalar_select %p425, %s424, 15
        %p427 = scmp.lt.s32.totalorder %s23, 0
        %s428 = scalar_select %p427, %s23, 0
        %s429 = sadd.s32 %s428, %s426
        %s430 = smul.addr %s429, 4
        %s431 = scalar_lea.vmem %s3, %s430
      $region44: #{detector_backbone_with_fpn_forward.16} parent=39 // pred_fallthru
        _
    $region40: #{detector_backbone_with_fpn_forward.16} parent=5 // pred_fallthru
      _
  $region6: #{detector_backbone_with_fpn_forward.16} parent=0 // loop_footer
    %s13 = sadd.s32 1, %s9
  $region7: #{detector_backbone_with_fpn_forward.16} parent=0 // loop_footer_branch
    %8 = sbr.rel target = $region3
  $region8: #{detector_backbone_with_fpn_forward.16} parent=0 // loop_exit
    _

// kernel: detector_backbone_with_fpn_forward.14
$region0: #{detector_backbone_with_fpn_forward.14}
  #allocation0 [shape = 'u32[]', space=smem, size = 0x4, offset = 0x4, fixed_abs, tag = 'smem constant byte address 0x4 - core index']
  #allocation1 [shape = 'u32[72,128]{1,0:T(1,128)}', space=vmem, size = 0x9000, scoped, tag = 'internal scratch']
  %s0 = inlined_call_operand.vmem [shape: bf16[32,256], index: 0, kind: input, shape index: {}]
  %s1 = inlined_call_operand.vmem [shape: bf16[256,128], index: 1, kind: input, shape index: {}]
  %s2 = inlined_call_operand.vmem [shape: f32[1,128], index: 2, kind: input, shape index: {}]
  %s3 = inlined_call_operand.vmem [shape: bf16[32,128], index: 3, kind: output, shape index: {}]
  %s4 = sld [smem:[#allocation0]]
  $region22: #{detector_backbone_with_fpn_forward.14} parent=0
    _
  %s6 = ssub.s32 1, %s4
  %s7 = scalar_select 0, %s6, %s4
  // Predicated region
  $region2: #{detector_backbone_with_fpn_forward.14} parent=0 // pred_check
    _
  $region3: #{detector_backbone_with_fpn_forward.14} parent=0 // pred_check_branch
    %9 = sbr.rel (0) target = $region5
  $region4: #{detector_backbone_with_fpn_forward.14} parent=0 // pred_region
    _
  $region5: #{detector_backbone_with_fpn_forward.14} parent=0 // pred_fallthru
    _
  // Predicated region
  $region6: #{detector_backbone_with_fpn_forward.14} parent=0 // pred_check
    _
  $region7: #{detector_backbone_with_fpn_forward.14} parent=0 // pred_check_branch
    %11 = sbr.rel (0) target = $region9
  $region8: #{detector_backbone_with_fpn_forward.14} parent=0 // pred_region
    _
  $region9: #{detector_backbone_with_fpn_forward.14} parent=0 // pred_fallthru
    _
  // Predicated region
  $region10: #{detector_backbone_with_fpn_forward.14} parent=0 // pred_check
    _
  $region11: #{detector_backbone_with_fpn_forward.14} parent=0 // pred_check_branch
    %13 = sbr.rel (0) target = $region13
  $region12: #{detector_backbone_with_fpn_forward.14} parent=0 // pred_region
    _
  $region13: #{detector_backbone_with_fpn_forward.14} parent=0 // pred_fallthru
    _
  %v14 = vld [vmem:[%s0] sm:$0xff]
  %v15 = vld [vmem:[%s0 + $0x8] sm:$0xff]
  %v16 = vld [vmem:[%s0 + $0x10] sm:$0xff]
  %v17 = vld [vmem:[%s0 + $0x18] sm:$0xff]
  %v18 = vld [vmem:[%s1] sm:$0xf]
  %v19 = vld [vmem:[%s1 + $0x4] sm:$0xf]
  %v20 = vld [vmem:[%s1 + $0x8] sm:$0xf]
  %v21 = vld [vmem:[%s1 + $0xc] sm:$0xf]
  %v22 = vld [vmem:[%s1 + $0x10] sm:$0xf]
  %v23 = vld [vmem:[%s1 + $0x14] sm:$0xf]
  %v24 = vld [vmem:[%s1 + $0x18] sm:$0xf]
  %v25 = vld [vmem:[%s1 + $0x1c] sm:$0xf]
  %v26 = vld [vmem:[%s1 + $0x20] sm:$0xf]
  %v27 = vld [vmem:[%s1 + $0x24] sm:$0xf]
  %v28 = vld [vmem:[%s1 + $0x28] sm:$0xf]
  %v29 = vld [vmem:[%s1 + $0x2c] sm:$0xf]
  %v30 = vld [vmem:[%s1 + $0x30] sm:$0xf]
  %v31 = vld [vmem:[%s1 + $0x34] sm:$0xf]
  %v32 = vld [vmem:[%s1 + $0x38] sm:$0xf]
  %v33 = vld [vmem:[%s1 + $0x3c] sm:$0xf]
  %v34 = vld [vmem:[%s1 + $0x40] sm:$0xf]
  %v35 = vld [vmem:[%s1 + $0x44] sm:$0xf]
  %v36 = vld [vmem:[%s1 + $0x48] sm:$0xf]
  %v37 = vld [vmem:[%s1 + $0x4c] sm:$0xf]
  %v38 = vld [vmem:[%s1 + $0x50] sm:$0xf]
  %v39 = vld [vmem:[%s1 + $0x54] sm:$0xf]
  %v40 = vld [vmem:[%s1 + $0x58] sm:$0xf]
  %v41 = vld [vmem:[%s1 + $0x5c] sm:$0xf]
  %v42 = vld [vmem:[%s1 + $0x60] sm:$0xf]
  %v43 = vld [vmem:[%s1 + $0x64] sm:$0xf]
  %v44 = vld [vmem:[%s1 + $0x68] sm:$0xf]
  %v45 = vld [vmem:[%s1 + $0x6c] sm:$0xf]
  %v46 = vld [vmem:[%s1 + $0x70] sm:$0xf]
  %v47 = vld [vmem:[%s1 + $0x74] sm:$0xf]
  %v48 = vld [vmem:[%s1 + $0x78] sm:$0xf]
  %v49 = vld [vmem:[%s1 + $0x7c] sm:$0xf]
  %v50 = vld [vmem:[%s2] sm:$0x1]
  %v52 = vperm.slane %v50, 0
  %v58 = vunpack.c.l.b16 %v14
  %v59 = vunpack.c.h.b16 %v14
  %v60 = vunpack.c.l.b16 %v15
  %v61 = vunpack.c.h.b16 %v15
  %v62 = vunpack.c.l.b16 %v16
  %v63 = vunpack.c.h.b16 %v16
  %v64 = vunpack.c.l.b16 %v17
  %v65 = vunpack.c.h.b16 %v17
  %v66 = vpack.c.b16 %v60, %v58
  %v67 = vpack.c.b16 %v61, %v59
  %v68 = vpack.c.b16 %v64, %v62
  %v69 = vpack.c.b16 %v65, %v63
  %v106 = vunpack.c.l.b16 %v18
  %v107 = vunpack.c.l.b16 %v19
  %v108 = vunpack.c.l.b16 %v20
  %v109 = vunpack.c.l.b16 %v21
  %v110 = vunpack.c.l.b16 %v22
  %v111 = vunpack.c.l.b16 %v23
  %v112 = vunpack.c.l.b16 %v24
  %v113 = vunpack.c.l.b16 %v25
  %v114 = vunpack.c.l.b16 %v26
  %v115 = vunpack.c.l.b16 %v27
  %v116 = vunpack.c.l.b16 %v28
  %v117 = vunpack.c.l.b16 %v29
  %v118 = vunpack.c.l.b16 %v30
  %v119 = vunpack.c.l.b16 %v31
  %v120 = vunpack.c.l.b16 %v32
  %v121 = vunpack.c.l.b16 %v33
  %v122 = vunpack.c.l.b16 %v34
  %v123 = vunpack.c.l.b16 %v35
  %v124 = vunpack.c.l.b16 %v36
  %v125 = vunpack.c.l.b16 %v37
  %v126 = vunpack.c.l.b16 %v38
  %v127 = vunpack.c.l.b16 %v39
  %v128 = vunpack.c.l.b16 %v40
  %v129 = vunpack.c.l.b16 %v41
  %v130 = vunpack.c.l.b16 %v42
  %v131 = vunpack.c.l.b16 %v43
  %v132 = vunpack.c.l.b16 %v44
  %v133 = vunpack.c.l.b16 %v45
  %v134 = vunpack.c.l.b16 %v46
  %v135 = vunpack.c.l.b16 %v47
  %v136 = vunpack.c.l.b16 %v48
  %v137 = vunpack.c.l.b16 %v49
  %v138 = vpack.c.b16 %v107, %v106
  %v139 = vpack.c.b16 %v109, %v108
  %v140 = vpack.c.b16 %v111, %v110
  %v141 = vpack.c.b16 %v113, %v112
  %v142 = vpack.c.b16 %v115, %v114
  %v143 = vpack.c.b16 %v117, %v116
  %v144 = vpack.c.b16 %v119, %v118
  %v145 = vpack.c.b16 %v121, %v120
  %v146 = vpack.c.b16 %v123, %v122
  %v147 = vpack.c.b16 %v125, %v124
  %v148 = vpack.c.b16 %v127, %v126
  %v149 = vpack.c.b16 %v129, %v128
  %v150 = vpack.c.b16 %v131, %v130
  %v151 = vpack.c.b16 %v133, %v132
  %v152 = vpack.c.b16 %v135, %v134
  %v153 = vpack.c.b16 %v137, %v136
  %170 = vmatpush.bf16.msra.mxu0 %v145
  %171 = vmatpush.bf16.msra.mxu0 %v144
  %172 = vmatpush.bf16.msra.mxu0 %v143
  %173 = vmatpush.bf16.msra.mxu0 %v142
  %174 = vmatpush.bf16.msra.mxu0 %v141
  %175 = vmatpush.bf16.msra.mxu0 %v140
  %176 = vmatpush.bf16.msra.mxu0 %v139
  %177 = vmatpush.bf16.msra.mxu0 %v138
  %178 = vmatmul.bf16.gmra.mxu0 %v66
  %v179 = vpop.f32.mrf.mxu0
  %v180 = vadd.f32 %v52, %v179
  %v181 = vpop.f32.mrf.mxu0
  %v182 = vadd.f32 %v52, %v181
  %183 = vmatmul.bf16.gmra.mxu0 %v68
  %v184 = vpop.f32.mrf.mxu0
  %v185 = vadd.f32 %v52, %v184
  %v186 = vpop.f32.mrf.mxu0
  %v187 = vadd.f32 %v52, %v186
  %188 = vdwg.mxu0
  %189 = vmatpush.bf16.msra.mxu0 %v153
  %190 = vmatpush.bf16.msra.mxu0 %v152
  %191 = vmatpush.bf16.msra.mxu0 %v151
  %192 = vmatpush.bf16.msra.mxu0 %v150
  %193 = vmatpush.bf16.msra.mxu0 %v149
  %194 = vmatpush.bf16.msra.mxu0 %v148
  %195 = vmatpush.bf16.msra.mxu0 %v147
  %196 = vmatpush.bf16.msra.mxu0 %v146
  %197 = vmatmul.bf16.gmra.mxu0 %v67
  %v198 = vpop.f32.mrf.mxu0
  %v199 = vadd.f32 %v180, %v198
  %v200 = vpop.f32.mrf.mxu0
  %v201 = vadd.f32 %v182, %v200
  %202 = vmatmul.bf16.gmra.mxu0 %v69
  %v203 = vpop.f32.mrf.mxu0
  %v204 = vadd.f32 %v185, %v203
  %v205 = vpop.f32.mrf.mxu0
  %v206 = vadd.f32 %v187, %v205
  %207 = vdwg.mxu0
  %v208 = vpack.c.bf16 %v199, %v199
  %v209 = vpack.c.bf16 %v201, %v201
  %v210 = vpack.c.bf16 %v204, %v204
  %v211 = vpack.c.bf16 %v206, %v206
  %212 = vst [vmem:[%s3] sm:$0xf] %v208
  %213 = vst [vmem:[%s3 + $0x4] sm:$0xf] %v209
  %214 = vst [vmem:[%s3 + $0x8] sm:$0xf] %v210
  %215 = vst [vmem:[%s3 + $0xc] sm:$0xf] %v211
  // Predicated region
  $region14: #{detector_backbone_with_fpn_forward.14} parent=0 // pred_check
    _
  $region15: #{detector_backbone_with_fpn_forward.14} parent=0 // pred_check_branch
    %217 = sbr.rel (0) target = $region17
  $region16: #{detector_backbone_with_fpn_forward.14} parent=0 // pred_region
    _
  $region17: #{detector_backbone_with_fpn_forward.14} parent=0 // pred_fallthru
    _
  // Predicated region
  $region18: #{detector_backbone_with_fpn_forward.14} parent=0 // pred_check
    _
  $region19: #{detector_backbone_with_fpn_forward.14} parent=0 // pred_check_branch
    %219 = sbr.rel (0) target = $region21
  $region20: #{detector_backbone_with_fpn_forward.14} parent=0 // pred_region
    _
  $region21: #{detector_backbone_with_fpn_forward.14} parent=0 // pred_fallthru
    _

// kernel: detector_backbone_with_fpn_forward.10
$region0: #{detector_backbone_with_fpn_forward.10}
  #allocation0 [shape = 'u32[]', space=smem, size = 0x4, offset = 0x4, fixed_abs, tag = 'smem constant byte address 0x4 - core index']
  #allocation1 [shape = 'u32[72,128]{1,0:T(1,128)}', space=vmem, size = 0x9000, scoped, tag = 'internal scratch']
  %s0 = inlined_call_operand.vmem [shape: bf16[32,768], index: 0, kind: input, shape index: {}]
  %s1 = inlined_call_operand.vmem [shape: bf16[768,256], index: 1, kind: input, shape index: {}]
  %s2 = inlined_call_operand.vmem [shape: f32[1,256], index: 2, kind: input, shape index: {}]
  %s3 = inlined_call_operand.vmem [shape: bf16[32,256], index: 3, kind: output, shape index: {}]
  %s4 = sld [smem:[#allocation0]]
  $region22: #{detector_backbone_with_fpn_forward.10} parent=0
    _
  %s6 = ssub.s32 1, %s4
  %s7 = scalar_select 0, %s6, %s4
  // Predicated region
  $region2: #{detector_backbone_with_fpn_forward.10} parent=0 // pred_check
    _
  $region3: #{detector_backbone_with_fpn_forward.10} parent=0 // pred_check_branch
    %9 = sbr.rel (0) target = $region5
  $region4: #{detector_backbone_with_fpn_forward.10} parent=0 // pred_region
    _
  $region5: #{detector_backbone_with_fpn_forward.10} parent=0 // pred_fallthru
    _
  // Predicated region
  $region6: #{detector_backbone_with_fpn_forward.10} parent=0 // pred_check
    _
  $region7: #{detector_backbone_with_fpn_forward.10} parent=0 // pred_check_branch
    %11 = sbr.rel (0) target = $region9
  $region8: #{detector_backbone_with_fpn_forward.10} parent=0 // pred_region
    _
  $region9: #{detector_backbone_with_fpn_forward.10} parent=0 // pred_fallthru
    _
  // Predicated region
  $region10: #{detector_backbone_with_fpn_forward.10} parent=0 // pred_check
    _
  $region11: #{detector_backbone_with_fpn_forward.10} parent=0 // pred_check_branch
    %13 = sbr.rel (0) target = $region13
  $region12: #{detector_backbone_with_fpn_forward.10} parent=0 // pred_region
    _
  $region13: #{detector_backbone_with_fpn_forward.10} parent=0 // pred_fallthru
    _
  %v14 = vld [vmem:[%s0] sm:$0xff]
  %v15 = vld [vmem:[%s0 + $0x8] sm:$0xff]
  %v16 = vld [vmem:[%s0 + $0x10] sm:$0xff]
  %v17 = vld [vmem:[%s0 + $0x18] sm:$0xff]
  %v18 = vld [vmem:[%s0 + $0x20] sm:$0xff]
  %v19 = vld [vmem:[%s0 + $0x28] sm:$0xff]
  %v20 = vld [vmem:[%s0 + $0x30] sm:$0xff]
  %v21 = vld [vmem:[%s0 + $0x38] sm:$0xff]
  %v22 = vld [vmem:[%s0 + $0x40] sm:$0xff]
  %v23 = vld [vmem:[%s0 + $0x48] sm:$0xff]
  %v24 = vld [vmem:[%s0 + $0x50] sm:$0xff]
  %v25 = vld [vmem:[%s0 + $0x58] sm:$0xff]
  %v26 = vld [vmem:[%s1] sm:$0xff]
  %v27 = vld [vmem:[%s1 + $0x8] sm:$0xff]
  %v28 = vld [vmem:[%s1 + $0x10] sm:$0xff]
  %v29 = vld [vmem:[%s1 + $0x18] sm:$0xff]
  %v30 = vld [vmem:[%s1 + $0x20] sm:$0xff]
  %v31 = vld [vmem:[%s1 + $0x28] sm:$0xff]
  %v32 = vld [vmem:[%s1 + $0x30] sm:$0xff]
  %v33 = vld [vmem:[%s1 + $0x38] sm:$0xff]
  %v34 = vld [vmem:[%s1 + $0x40] sm:$0xff]
  %v35 = vld [vmem:[%s1 + $0x48] sm:$0xff]
  %v36 = vld [vmem:[%s1 + $0x50] sm:$0xff]
  %v37 = vld [vmem:[%s1 + $0x58] sm:$0xff]
  %v38 = vld [vmem:[%s1 + $0x60] sm:$0xff]
  %v39 = vld [vmem:[%s1 + $0x68] sm:$0xff]
  %v40 = vld [vmem:[%s1 + $0x70] sm:$0xff]
  %v41 = vld [vmem:[%s1 + $0x78] sm:$0xff]
  %v42 = vld [vmem:[%s1 + $0x80] sm:$0xff]
  %v43 = vld [vmem:[%s1 + $0x88] sm:$0xff]
  %v44 = vld [vmem:[%s1 + $0x90] sm:$0xff]
  %v45 = vld [vmem:[%s1 + $0x98] sm:$0xff]
  %v46 = vld [vmem:[%s1 + $0xa0] sm:$0xff]
  %v47 = vld [vmem:[%s1 + $0xa8] sm:$0xff]
  %v48 = vld [vmem:[%s1 + $0xb0] sm:$0xff]
  %v49 = vld [vmem:[%s1 + $0xb8] sm:$0xff]
  %v50 = vld [vmem:[%s1 + $0xc0] sm:$0xff]
  %v51 = vld [vmem:[%s1 + $0xc8] sm:$0xff]
  %v52 = vld [vmem:[%s1 + $0xd0] sm:$0xff]
  %v53 = vld [vmem:[%s1 + $0xd8] sm:$0xff]
  %v54 = vld [vmem:[%s1 + $0xe0] sm:$0xff]
  %v55 = vld [vmem:[%s1 + $0xe8] sm:$0xff]
  %v56 = vld [vmem:[%s1 + $0xf0] sm:$0xff]
  %v57 = vld [vmem:[%s1 + $0xf8] sm:$0xff]
  %v58 = vld [vmem:[%s1 + $0x100] sm:$0xff]
  %v59 = vld [vmem:[%s1 + $0x108] sm:$0xff]
  %v60 = vld [vmem:[%s1 + $0x110] sm:$0xff]
  %v61 = vld [vmem:[%s1 + $0x118] sm:$0xff]
  %v62 = vld [vmem:[%s1 + $0x120] sm:$0xff]
  %v63 = vld [vmem:[%s1 + $0x128] sm:$0xff]
  %v64 = vld [vmem:[%s1 + $0x130] sm:$0xff]
  %v65 = vld [vmem:[%s1 + $0x138] sm:$0xff]
  %v66 = vld [vmem:[%s1 + $0x140] sm:$0xff]
  %v67 = vld [vmem:[%s1 + $0x148] sm:$0xff]
  %v68 = vld [vmem:[%s1 + $0x150] sm:$0xff]
  %v69 = vld [vmem:[%s1 + $0x158] sm:$0xff]
  %v70 = vld [vmem:[%s1 + $0x160] sm:$0xff]
  %v71 = vld [vmem:[%s1 + $0x168] sm:$0xff]
  %v72 = vld [vmem:[%s1 + $0x170] sm:$0xff]
  %v73 = vld [vmem:[%s1 + $0x178] sm:$0xff]
  %v74 = vld [vmem:[%s1 + $0x180] sm:$0xff]
  %v75 = vld [vmem:[%s1 + $0x188] sm:$0xff]
  %v76 = vld [vmem:[%s1 + $0x190] sm:$0xff]
  %v77 = vld [vmem:[%s1 + $0x198] sm:$0xff]
  %v78 = vld [vmem:[%s1 + $0x1a0] sm:$0xff]
  %v79 = vld [vmem:[%s1 + $0x1a8] sm:$0xff]
  %v80 = vld [vmem:[%s1 + $0x1b0] sm:$0xff]
  %v81 = vld [vmem:[%s1 + $0x1b8] sm:$0xff]
  %v82 = vld [vmem:[%s1 + $0x1c0] sm:$0xff]
  %v83 = vld [vmem:[%s1 + $0x1c8] sm:$0xff]
  %v84 = vld [vmem:[%s1 + $0x1d0] sm:$0xff]
  %v85 = vld [vmem:[%s1 + $0x1d8] sm:$0xff]
  %v86 = vld [vmem:[%s1 + $0x1e0] sm:$0xff]
  %v87 = vld [vmem:[%s1 + $0x1e8] sm:$0xff]
  %v88 = vld [vmem:[%s1 + $0x1f0] sm:$0xff]
  %v89 = vld [vmem:[%s1 + $0x1f8] sm:$0xff]
  %v90 = vld [vmem:[%s1 + $0x200] sm:$0xff]
  %v91 = vld [vmem:[%s1 + $0x208] sm:$0xff]
  %v92 = vld [vmem:[%s1 + $0x210] sm:$0xff]
  %v93 = vld [vmem:[%s1 + $0x218] sm:$0xff]
  %v94 = vld [vmem:[%s1 + $0x220] sm:$0xff]
  %v95 = vld [vmem:[%s1 + $0x228] sm:$0xff]
  %v96 = vld [vmem:[%s1 + $0x230] sm:$0xff]
  %v97 = vld [vmem:[%s1 + $0x238] sm:$0xff]
  %v98 = vld [vmem:[%s1 + $0x240] sm:$0xff]
  %v99 = vld [vmem:[%s1 + $0x248] sm:$0xff]
  %v100 = vld [vmem:[%s1 + $0x250] sm:$0xff]
  %v101 = vld [vmem:[%s1 + $0x258] sm:$0xff]
  %v102 = vld [vmem:[%s1 + $0x260] sm:$0xff]
  %v103 = vld [vmem:[%s1 + $0x268] sm:$0xff]
  %v104 = vld [vmem:[%s1 + $0x270] sm:$0xff]
  %v105 = vld [vmem:[%s1 + $0x278] sm:$0xff]
  %v106 = vld [vmem:[%s1 + $0x280] sm:$0xff]
  %v107 = vld [vmem:[%s1 + $0x288] sm:$0xff]
  %v108 = vld [vmem:[%s1 + $0x290] sm:$0xff]
  %v109 = vld [vmem:[%s1 + $0x298] sm:$0xff]
  %v110 = vld [vmem:[%s1 + $0x2a0] sm:$0xff]
  %v111 = vld [vmem:[%s1 + $0x2a8] sm:$0xff]
  %v112 = vld [vmem:[%s1 + $0x2b0] sm:$0xff]
  %v113 = vld [vmem:[%s1 + $0x2b8] sm:$0xff]
  %v114 = vld [vmem:[%s1 + $0x2c0] sm:$0xff]
  %v115 = vld [vmem:[%s1 + $0x2c8] sm:$0xff]
  %v116 = vld [vmem:[%s1 + $0x2d0] sm:$0xff]
  %v117 = vld [vmem:[%s1 + $0x2d8] sm:$0xff]
  %v118 = vld [vmem:[%s1 + $0x2e0] sm:$0xff]
  %v119 = vld [vmem:[%s1 + $0x2e8] sm:$0xff]
  %v120 = vld [vmem:[%s1 + $0x2f0] sm:$0xff]
  %v121 = vld [vmem:[%s1 + $0x2f8] sm:$0xff]
  %v122 = vld [vmem:[%s2] sm:$0x3]
  %v124 = vperm.slane %v122, 0
  %v125 = vperm.slane %v122, 1
  %v140 = vunpack.c.l.b16 %v14
  %v141 = vunpack.c.h.b16 %v14
  %v142 = vunpack.c.l.b16 %v15
  %v143 = vunpack.c.h.b16 %v15
  %v144 = vunpack.c.l.b16 %v16
  %v145 = vunpack.c.h.b16 %v16
  %v146 = vunpack.c.l.b16 %v17
  %v147 = vunpack.c.h.b16 %v17
  %v148 = vunpack.c.l.b16 %v18
  %v149 = vunpack.c.h.b16 %v18
  %v150 = vunpack.c.l.b16 %v19
  %v151 = vunpack.c.h.b16 %v19
  %v152 = vunpack.c.l.b16 %v20
  %v153 = vunpack.c.h.b16 %v20
  %v154 = vunpack.c.l.b16 %v21
  %v155 = vunpack.c.h.b16 %v21
  %v156 = vunpack.c.l.b16 %v22
  %v157 = vunpack.c.h.b16 %v22
  %v158 = vunpack.c.l.b16 %v23
  %v159 = vunpack.c.h.b16 %v23
  %v160 = vunpack.c.l.b16 %v24
  %v161 = vunpack.c.h.b16 %v24
  %v162 = vunpack.c.l.b16 %v25
  %v163 = vunpack.c.h.b16 %v25
  %v164 = vpack.c.b16 %v146, %v140
  %v165 = vpack.c.b16 %v147, %v141
  %v166 = vpack.c.b16 %v148, %v142
  %v167 = vpack.c.b16 %v149, %v143
  %v168 = vpack.c.b16 %v150, %v144
  %v169 = vpack.c.b16 %v151, %v145
  %v170 = vpack.c.b16 %v158, %v152
  %v171 = vpack.c.b16 %v159, %v153
  %v172 = vpack.c.b16 %v160, %v154
  %v173 = vpack.c.b16 %v161, %v155
  %v174 = vpack.c.b16 %v162, %v156
  %v175 = vpack.c.b16 %v163, %v157
  %v284 = vunpack.c.l.b16 %v26
  %v285 = vunpack.c.h.b16 %v26
  %v286 = vunpack.c.l.b16 %v27
  %v287 = vunpack.c.h.b16 %v27
  %v288 = vunpack.c.l.b16 %v28
  %v289 = vunpack.c.h.b16 %v28
  %v290 = vunpack.c.l.b16 %v29
  %v291 = vunpack.c.h.b16 %v29
  %v292 = vunpack.c.l.b16 %v30
  %v293 = vunpack.c.h.b16 %v30
  %v294 = vunpack.c.l.b16 %v31
  %v295 = vunpack.c.h.b16 %v31
  %v296 = vunpack.c.l.b16 %v32
  %v297 = vunpack.c.h.b16 %v32
  %v298 = vunpack.c.l.b16 %v33
  %v299 = vunpack.c.h.b16 %v33
  %v300 = vunpack.c.l.b16 %v34
  %v301 = vunpack.c.h.b16 %v34
  %v302 = vunpack.c.l.b16 %v35
  %v303 = vunpack.c.h.b16 %v35
  %v304 = vunpack.c.l.b16 %v36
  %v305 = vunpack.c.h.b16 %v36
  %v306 = vunpack.c.l.b16 %v37
  %v307 = vunpack.c.h.b16 %v37
  %v308 = vunpack.c.l.b16 %v38
  %v309 = vunpack.c.h.b16 %v38
  %v310 = vunpack.c.l.b16 %v39
  %v311 = vunpack.c.h.b16 %v39
  %v312 = vunpack.c.l.b16 %v40
  %v313 = vunpack.c.h.b16 %v40
  %v314 = vunpack.c.l.b16 %v41
  %v315 = vunpack.c.h.b16 %v41
  %v316 = vunpack.c.l.b16 %v42
  %v317 = vunpack.c.h.b16 %v42
  %v318 = vunpack.c.l.b16 %v43
  %v319 = vunpack.c.h.b16 %v43
  %v320 = vunpack.c.l.b16 %v44
  %v321 = vunpack.c.h.b16 %v44
  %v322 = vunpack.c.l.b16 %v45
  %v323 = vunpack.c.h.b16 %v45
  %v324 = vunpack.c.l.b16 %v46
  %v325 = vunpack.c.h.b16 %v46
  %v326 = vunpack.c.l.b16 %v47
  %v327 = vunpack.c.h.b16 %v47
  %v328 = vunpack.c.l.b16 %v48
  %v329 = vunpack.c.h.b16 %v48
  %v330 = vunpack.c.l.b16 %v49
  %v331 = vunpack.c.h.b16 %v49
  %v332 = vunpack.c.l.b16 %v50
  %v333 = vunpack.c.h.b16 %v50
  %v334 = vunpack.c.l.b16 %v51
  %v335 = vunpack.c.h.b16 %v51
  %v336 = vunpack.c.l.b16 %v52
  %v337 = vunpack.c.h.b16 %v52
  %v338 = vunpack.c.l.b16 %v53
  %v339 = vunpack.c.h.b16 %v53
  %v340 = vunpack.c.l.b16 %v54
  %v341 = vunpack.c.h.b16 %v54
  %v342 = vunpack.c.l.b16 %v55
  %v343 = vunpack.c.h.b16 %v55
  %v344 = vunpack.c.l.b16 %v56
  %v345 = vunpack.c.h.b16 %v56
  %v346 = vunpack.c.l.b16 %v57
  %v347 = vunpack.c.h.b16 %v57
  %v348 = vunpack.c.l.b16 %v58
  %v349 = vunpack.c.h.b16 %v58
  %v350 = vunpack.c.l.b16 %v59
  %v351 = vunpack.c.h.b16 %v59
  %v352 = vunpack.c.l.b16 %v60
  %v353 = vunpack.c.h.b16 %v60
  %v354 = vunpack.c.l.b16 %v61
  %v355 = vunpack.c.h.b16 %v61
  %v356 = vunpack.c.l.b16 %v62
  %v357 = vunpack.c.h.b16 %v62
  %v358 = vunpack.c.l.b16 %v63
  %v359 = vunpack.c.h.b16 %v63
  %v360 = vunpack.c.l.b16 %v64
  %v361 = vunpack.c.h.b16 %v64
  %v362 = vunpack.c.l.b16 %v65
  %v363 = vunpack.c.h.b16 %v65
  %v364 = vunpack.c.l.b16 %v66
  %v365 = vunpack.c.h.b16 %v66
  %v366 = vunpack.c.l.b16 %v67
  %v367 = vunpack.c.h.b16 %v67
  %v368 = vunpack.c.l.b16 %v68
  %v369 = vunpack.c.h.b16 %v68
  %v370 = vunpack.c.l.b16 %v69
  %v371 = vunpack.c.h.b16 %v69
  %v372 = vunpack.c.l.b16 %v70
  %v373 = vunpack.c.h.b16 %v70
  %v374 = vunpack.c.l.b16 %v71
  %v375 = vunpack.c.h.b16 %v71
  %v376 = vunpack.c.l.b16 %v72
  %v377 = vunpack.c.h.b16 %v72
  %v378 = vunpack.c.l.b16 %v73
  %v379 = vunpack.c.h.b16 %v73
  %v380 = vunpack.c.l.b16 %v74
  %v381 = vunpack.c.h.b16 %v74
  %v382 = vunpack.c.l.b16 %v75
  %v383 = vunpack.c.h.b16 %v75
  %v384 = vunpack.c.l.b16 %v76
  %v385 = vunpack.c.h.b16 %v76
  %v386 = vunpack.c.l.b16 %v77
  %v387 = vunpack.c.h.b16 %v77
  %v388 = vunpack.c.l.b16 %v78
  %v389 = vunpack.c.h.b16 %v78
  %v390 = vunpack.c.l.b16 %v79
  %v391 = vunpack.c.h.b16 %v79
  %v392 = vunpack.c.l.b16 %v80
  %v393 = vunpack.c.h.b16 %v80
  %v394 = vunpack.c.l.b16 %v81
  %v395 = vunpack.c.h.b16 %v81
  %v396 = vunpack.c.l.b16 %v82
  %v397 = vunpack.c.h.b16 %v82
  %v398 = vunpack.c.l.b16 %v83
  %v399 = vunpack.c.h.b16 %v83
  %v400 = vunpack.c.l.b16 %v84
  %v401 = vunpack.c.h.b16 %v84
  %v402 = vunpack.c.l.b16 %v85
  %v403 = vunpack.c.h.b16 %v85
  %v404 = vunpack.c.l.b16 %v86
  %v405 = vunpack.c.h.b16 %v86
  %v406 = vunpack.c.l.b16 %v87
  %v407 = vunpack.c.h.b16 %v87
  %v408 = vunpack.c.l.b16 %v88
  %v409 = vunpack.c.h.b16 %v88
  %v410 = vunpack.c.l.b16 %v89
  %v411 = vunpack.c.h.b16 %v89
  %v412 = vunpack.c.l.b16 %v90
  %v413 = vunpack.c.h.b16 %v90
  %v414 = vunpack.c.l.b16 %v91
  %v415 = vunpack.c.h.b16 %v91
  %v416 = vunpack.c.l.b16 %v92
  %v417 = vunpack.c.h.b16 %v92
  %v418 = vunpack.c.l.b16 %v93
  %v419 = vunpack.c.h.b16 %v93
  %v420 = vunpack.c.l.b16 %v94
  %v421 = vunpack.c.h.b16 %v94
  %v422 = vunpack.c.l.b16 %v95
  %v423 = vunpack.c.h.b16 %v95
  %v424 = vunpack.c.l.b16 %v96
  %v425 = vunpack.c.h.b16 %v96
  %v426 = vunpack.c.l.b16 %v97
  %v427 = vunpack.c.h.b16 %v97
  %v428 = vunpack.c.l.b16 %v98
  %v429 = vunpack.c.h.b16 %v98
  %v430 = vunpack.c.l.b16 %v99
  %v431 = vunpack.c.h.b16 %v99
  %v432 = vunpack.c.l.b16 %v100
  %v433 = vunpack.c.h.b16 %v100
  %v434 = vunpack.c.l.b16 %v101
  %v435 = vunpack.c.h.b16 %v101
  %v436 = vunpack.c.l.b16 %v102
  %v437 = vunpack.c.h.b16 %v102
  %v438 = vunpack.c.l.b16 %v103
  %v439 = vunpack.c.h.b16 %v103
  %v440 = vunpack.c.l.b16 %v104
  %v441 = vunpack.c.h.b16 %v104
  %v442 = vunpack.c.l.b16 %v105
  %v443 = vunpack.c.h.b16 %v105
  %v444 = vunpack.c.l.b16 %v106
  %v445 = vunpack.c.h.b16 %v106
  %v446 = vunpack.c.l.b16 %v107
  %v447 = vunpack.c.h.b16 %v107
  %v448 = vunpack.c.l.b16 %v108
  %v449 = vunpack.c.h.b16 %v108
  %v450 = vunpack.c.l.b16 %v109
  %v451 = vunpack.c.h.b16 %v109
  %v452 = vunpack.c.l.b16 %v110
  %v453 = vunpack.c.h.b16 %v110
  %v454 = vunpack.c.l.b16 %v111
  %v455 = vunpack.c.h.b16 %v111
  %v456 = vunpack.c.l.b16 %v112
  %v457 = vunpack.c.h.b16 %v112
  %v458 = vunpack.c.l.b16 %v113
  %v459 = vunpack.c.h.b16 %v113
  %v460 = vunpack.c.l.b16 %v114
  %v461 = vunpack.c.h.b16 %v114
  %v462 = vunpack.c.l.b16 %v115
  %v463 = vunpack.c.h.b16 %v115
  %v464 = vunpack.c.l.b16 %v116
  %v465 = vunpack.c.h.b16 %v116
  %v466 = vunpack.c.l.b16 %v117
  %v467 = vunpack.c.h.b16 %v117
  %v468 = vunpack.c.l.b16 %v118
  %v469 = vunpack.c.h.b16 %v118
  %v470 = vunpack.c.l.b16 %v119
  %v471 = vunpack.c.h.b16 %v119
  %v472 = vunpack.c.l.b16 %v120
  %v473 = vunpack.c.h.b16 %v120
  %v474 = vunpack.c.l.b16 %v121
  %v475 = vunpack.c.h.b16 %v121
  %v476 = vpack.c.b16 %v286, %v284
  %v477 = vpack.c.b16 %v287, %v285
  %v478 = vpack.c.b16 %v290, %v288
  %v479 = vpack.c.b16 %v291, %v289
  %v480 = vpack.c.b16 %v294, %v292
  %v481 = vpack.c.b16 %v295, %v293
  %v482 = vpack.c.b16 %v298, %v296
  %v483 = vpack.c.b16 %v299, %v297
  %v484 = vpack.c.b16 %v302, %v300
  %v485 = vpack.c.b16 %v303, %v301
  %v486 = vpack.c.b16 %v306, %v304
  %v487 = vpack.c.b16 %v307, %v305
  %v488 = vpack.c.b16 %v310, %v308
  %v489 = vpack.c.b16 %v311, %v309
  %v490 = vpack.c.b16 %v314, %v312
  %v491 = vpack.c.b16 %v315, %v313
  %v492 = vpack.c.b16 %v318, %v316
  %v493 = vpack.c.b16 %v319, %v317
  %v494 = vpack.c.b16 %v322, %v320
  %v495 = vpack.c.b16 %v323, %v321
  %v496 = vpack.c.b16 %v326, %v324
  %v497 = vpack.c.b16 %v327, %v325
  %v498 = vpack.c.b16 %v330, %v328
  %v499 = vpack.c.b16 %v331, %v329
  %v500 = vpack.c.b16 %v334, %v332
  %v501 = vpack.c.b16 %v335, %v333
  %v502 = vpack.c.b16 %v338, %v336
  %v503 = vpack.c.b16 %v339, %v337
  %v504 = vpack.c.b16 %v342, %v340
  %v505 = vpack.c.b16 %v343, %v341
  %v506 = vpack.c.b16 %v346, %v344
  %v507 = vpack.c.b16 %v347, %v345
  %v508 = vpack.c.b16 %v350, %v348
  %v509 = vpack.c.b16 %v351, %v349
  %v510 = vpack.c.b16 %v354, %v352
  %v511 = vpack.c.b16 %v355, %v353
  %v512 = vpack.c.b16 %v358, %v356
  %v513 = vpack.c.b16 %v359, %v357
  %v514 = vpack.c.b16 %v362, %v360
  %v515 = vpack.c.b16 %v363, %v361
  %v516 = vpack.c.b16 %v366, %v364
  %v517 = vpack.c.b16 %v367, %v365
  %v518 = vpack.c.b16 %v370, %v368
  %v519 = vpack.c.b16 %v371, %v369
  %v520 = vpack.c.b16 %v374, %v372
  %v521 = vpack.c.b16 %v375, %v373
  %v522 = vpack.c.b16 %v378, %v376
  %v523 = vpack.c.b16 %v379, %v377
  %v524 = vpack.c.b16 %v382, %v380
  %v525 = vpack.c.b16 %v383, %v381
  %v526 = vpack.c.b16 %v386, %v384
  %v527 = vpack.c.b16 %v387, %v385
  %v528 = vpack.c.b16 %v390, %v388
  %v529 = vpack.c.b16 %v391, %v389
  %v530 = vpack.c.b16 %v394, %v392
  %v531 = vpack.c.b16 %v395, %v393
  %v532 = vpack.c.b16 %v398, %v396
  %v533 = vpack.c.b16 %v399, %v397
  %v534 = vpack.c.b16 %v402, %v400
  %v535 = vpack.c.b16 %v403, %v401
  %v536 = vpack.c.b16 %v406, %v404
  %v537 = vpack.c.b16 %v407, %v405
  %v538 = vpack.c.b16 %v410, %v408
  %v539 = vpack.c.b16 %v411, %v409
  %v540 = vpack.c.b16 %v414, %v412
  %v541 = vpack.c.b16 %v415, %v413
  %v542 = vpack.c.b16 %v418, %v416
  %v543 = vpack.c.b16 %v419, %v417
  %v544 = vpack.c.b16 %v422, %v420
  %v545 = vpack.c.b16 %v423, %v421
  %v546 = vpack.c.b16 %v426, %v424
  %v547 = vpack.c.b16 %v427, %v425
  %v548 = vpack.c.b16 %v430, %v428
  %v549 = vpack.c.b16 %v431, %v429
  %v550 = vpack.c.b16 %v434, %v432
  %v551 = vpack.c.b16 %v435, %v433
  %v552 = vpack.c.b16 %v438, %v436
  %v553 = vpack.c.b16 %v439, %v437
  %v554 = vpack.c.b16 %v442, %v440
  %v555 = vpack.c.b16 %v443, %v441
  %v556 = vpack.c.b16 %v446, %v444
  %v557 = vpack.c.b16 %v447, %v445
  %v558 = vpack.c.b16 %v450, %v448
  %v559 = vpack.c.b16 %v451, %v449
  %v560 = vpack.c.b16 %v454, %v452
  %v561 = vpack.c.b16 %v455, %v453
  %v562 = vpack.c.b16 %v458, %v456
  %v563 = vpack.c.b16 %v459, %v457
  %v564 = vpack.c.b16 %v462, %v460
  %v565 = vpack.c.b16 %v463, %v461
  %v566 = vpack.c.b16 %v466, %v464
  %v567 = vpack.c.b16 %v467, %v465
  %v568 = vpack.c.b16 %v470, %v468
  %v569 = vpack.c.b16 %v471, %v469
  %v570 = vpack.c.b16 %v474, %v472
  %v571 = vpack.c.b16 %v475, %v473
  %668 = vmatpush.bf16.msra.mxu0 %v490
  %669 = vmatpush.bf16.msra.mxu0 %v488
  %670 = vmatpush.bf16.msra.mxu0 %v486
  %671 = vmatpush.bf16.msra.mxu0 %v484
  %672 = vmatpush.bf16.msra.mxu0 %v482
  %673 = vmatpush.bf16.msra.mxu0 %v480
  %674 = vmatpush.bf16.msra.mxu0 %v478
  %675 = vmatpush.bf16.msra.mxu0 %v476
  %676 = vmatmul.bf16.gmra.mxu0 %v164
  %v677 = vpop.f32.mrf.mxu0
  %v678 = vadd.f32 %v124, %v677
  %v679 = vpop.f32.mrf.mxu0
  %v680 = vadd.f32 %v124, %v679
  %681 = vmatmul.bf16.gmra.mxu0 %v170
  %v682 = vpop.f32.mrf.mxu0
  %v683 = vadd.f32 %v124, %v682
  %v684 = vpop.f32.mrf.mxu0
  %v685 = vadd.f32 %v124, %v684
  %686 = vdwg.mxu0
  %687 = vmatpush.bf16.msra.mxu0 %v506
  %688 = vmatpush.bf16.msra.mxu0 %v504
  %689 = vmatpush.bf16.msra.mxu0 %v502
  %690 = vmatpush.bf16.msra.mxu0 %v500
  %691 = vmatpush.bf16.msra.mxu0 %v498
  %692 = vmatpush.bf16.msra.mxu0 %v496
  %693 = vmatpush.bf16.msra.mxu0 %v494
  %694 = vmatpush.bf16.msra.mxu0 %v492
  %695 = vmatmul.bf16.gmra.mxu0 %v165
  %v696 = vpop.f32.mrf.mxu0
  %v697 = vadd.f32 %v678, %v696
  %v698 = vpop.f32.mrf.mxu0
  %v699 = vadd.f32 %v680, %v698
  %700 = vmatmul.bf16.gmra.mxu0 %v171
  %v701 = vpop.f32.mrf.mxu0
  %v702 = vadd.f32 %v683, %v701
  %v703 = vpop.f32.mrf.mxu0
  %v704 = vadd.f32 %v685, %v703
  %705 = vdwg.mxu0
  %706 = vmatpush.bf16.msra.mxu0 %v522
  %707 = vmatpush.bf16.msra.mxu0 %v520
  %708 = vmatpush.bf16.msra.mxu0 %v518
  %709 = vmatpush.bf16.msra.mxu0 %v516
  %710 = vmatpush.bf16.msra.mxu0 %v514
  %711 = vmatpush.bf16.msra.mxu0 %v512
  %712 = vmatpush.bf16.msra.mxu0 %v510
  %713 = vmatpush.bf16.msra.mxu0 %v508
  %714 = vmatmul.bf16.gmra.mxu0 %v166
  %v715 = vpop.f32.mrf.mxu0
  %v716 = vadd.f32 %v697, %v715
  %v717 = vpop.f32.mrf.mxu0
  %v718 = vadd.f32 %v699, %v717
  %719 = vmatmul.bf16.gmra.mxu0 %v172
  %v720 = vpop.f32.mrf.mxu0
  %v721 = vadd.f32 %v702, %v720
  %v722 = vpop.f32.mrf.mxu0
  %v723 = vadd.f32 %v704, %v722
  %724 = vdwg.mxu0
  %725 = vmatpush.bf16.msra.mxu0 %v538
  %726 = vmatpush.bf16.msra.mxu0 %v536
  %727 = vmatpush.bf16.msra.mxu0 %v534
  %728 = vmatpush.bf16.msra.mxu0 %v532
  %729 = vmatpush.bf16.msra.mxu0 %v530
  %730 = vmatpush.bf16.msra.mxu0 %v528
  %731 = vmatpush.bf16.msra.mxu0 %v526
  %732 = vmatpush.bf16.msra.mxu0 %v524
  %733 = vmatmul.bf16.gmra.mxu0 %v167
  %v734 = vpop.f32.mrf.mxu0
  %v735 = vadd.f32 %v716, %v734
  %v736 = vpop.f32.mrf.mxu0
  %v737 = vadd.f32 %v718, %v736
  %738 = vmatmul.bf16.gmra.mxu0 %v173
  %v739 = vpop.f32.mrf.mxu0
  %v740 = vadd.f32 %v721, %v739
  %v741 = vpop.f32.mrf.mxu0
  %v742 = vadd.f32 %v723, %v741
  %743 = vdwg.mxu0
  %744 = vmatpush.bf16.msra.mxu0 %v554
  %745 = vmatpush.bf16.msra.mxu0 %v552
  %746 = vmatpush.bf16.msra.mxu0 %v550
  %747 = vmatpush.bf16.msra.mxu0 %v548
  %748 = vmatpush.bf16.msra.mxu0 %v546
  %749 = vmatpush.bf16.msra.mxu0 %v544
  %750 = vmatpush.bf16.msra.mxu0 %v542
  %751 = vmatpush.bf16.msra.mxu0 %v540
  %752 = vmatmul.bf16.gmra.mxu0 %v168
  %v753 = vpop.f32.mrf.mxu0
  %v754 = vadd.f32 %v735, %v753
  %v755 = vpop.f32.mrf.mxu0
  %v756 = vadd.f32 %v737, %v755
  %757 = vmatmul.bf16.gmra.mxu0 %v174
  %v758 = vpop.f32.mrf.mxu0
  %v759 = vadd.f32 %v740, %v758
  %v760 = vpop.f32.mrf.mxu0
  %v761 = vadd.f32 %v742, %v760
  %762 = vdwg.mxu0
  %763 = vmatpush.bf16.msra.mxu0 %v570
  %764 = vmatpush.bf16.msra.mxu0 %v568
  %765 = vmatpush.bf16.msra.mxu0 %v566
  %766 = vmatpush.bf16.msra.mxu0 %v564
  %767 = vmatpush.bf16.msra.mxu0 %v562
  %768 = vmatpush.bf16.msra.mxu0 %v560
  %769 = vmatpush.bf16.msra.mxu0 %v558
  %770 = vmatpush.bf16.msra.mxu0 %v556
  %771 = vmatmul.bf16.gmra.mxu0 %v169
  %v772 = vpop.f32.mrf.mxu0
  %v773 = vadd.f32 %v754, %v772
  %v774 = vpop.f32.mrf.mxu0
  %v775 = vadd.f32 %v756, %v774
  %776 = vmatmul.bf16.gmra.mxu0 %v175
  %v777 = vpop.f32.mrf.mxu0
  %v778 = vadd.f32 %v759, %v777
  %v779 = vpop.f32.mrf.mxu0
  %v780 = vadd.f32 %v761, %v779
  %781 = vdwg.mxu0
  %782 = vmatpush.bf16.msra.mxu0 %v491
  %783 = vmatpush.bf16.msra.mxu0 %v489
  %784 = vmatpush.bf16.msra.mxu0 %v487
  %785 = vmatpush.bf16.msra.mxu0 %v485
  %786 = vmatpush.bf16.msra.mxu0 %v483
  %787 = vmatpush.bf16.msra.mxu0 %v481
  %788 = vmatpush.bf16.msra.mxu0 %v479
  %789 = vmatpush.bf16.msra.mxu0 %v477
  %790 = vmatmul.bf16.gmra.mxu0 %v164
  %v791 = vpop.f32.mrf.mxu0
  %v792 = vadd.f32 %v125, %v791
  %v793 = vpop.f32.mrf.mxu0
  %v794 = vadd.f32 %v125, %v793
  %795 = vmatmul.bf16.gmra.mxu0 %v170
  %v796 = vpop.f32.mrf.mxu0
  %v797 = vadd.f32 %v125, %v796
  %v798 = vpop.f32.mrf.mxu0
  %v799 = vadd.f32 %v125, %v798
  %800 = vdwg.mxu0
  %801 = vmatpush.bf16.msra.mxu0 %v507
  %802 = vmatpush.bf16.msra.mxu0 %v505
  %803 = vmatpush.bf16.msra.mxu0 %v503
  %804 = vmatpush.bf16.msra.mxu0 %v501
  %805 = vmatpush.bf16.msra.mxu0 %v499
  %806 = vmatpush.bf16.msra.mxu0 %v497
  %807 = vmatpush.bf16.msra.mxu0 %v495
  %808 = vmatpush.bf16.msra.mxu0 %v493
  %809 = vmatmul.bf16.gmra.mxu0 %v165
  %v810 = vpop.f32.mrf.mxu0
  %v811 = vadd.f32 %v792, %v810
  %v812 = vpop.f32.mrf.mxu0
  %v813 = vadd.f32 %v794, %v812
  %814 = vmatmul.bf16.gmra.mxu0 %v171
  %v815 = vpop.f32.mrf.mxu0
  %v816 = vadd.f32 %v797, %v815
  %v817 = vpop.f32.mrf.mxu0
  %v818 = vadd.f32 %v799, %v817
  %819 = vdwg.mxu0
  %820 = vmatpush.bf16.msra.mxu0 %v523
  %821 = vmatpush.bf16.msra.mxu0 %v521
  %822 = vmatpush.bf16.msra.mxu0 %v519
  %823 = vmatpush.bf16.msra.mxu0 %v517
  %824 = vmatpush.bf16.msra.mxu0 %v515
  %825 = vmatpush.bf16.msra.mxu0 %v513
  %826 = vmatpush.bf16.msra.mxu0 %v511
  %827 = vmatpush.bf16.msra.mxu0 %v509
  %828 = vmatmul.bf16.gmra.mxu0 %v166
  %v829 = vpop.f32.mrf.mxu0
  %v830 = vadd.f32 %v811, %v829
  %v831 = vpop.f32.mrf.mxu0
  %v832 = vadd.f32 %v813, %v831
  %833 = vmatmul.bf16.gmra.mxu0 %v172
  %v834 = vpop.f32.mrf.mxu0
  %v835 = vadd.f32 %v816, %v834
  %v836 = vpop.f32.mrf.mxu0
  %v837 = vadd.f32 %v818, %v836
  %838 = vdwg.mxu0
  %839 = vmatpush.bf16.msra.mxu0 %v539
  %840 = vmatpush.bf16.msra.mxu0 %v537
  %841 = vmatpush.bf16.msra.mxu0 %v535
  %842 = vmatpush.bf16.msra.mxu0 %v533
  %843 = vmatpush.bf16.msra.mxu0 %v531
  %844 = vmatpush.bf16.msra.mxu0 %v529
  %845 = vmatpush.bf16.msra.mxu0 %v527
  %846 = vmatpush.bf16.msra.mxu0 %v525
  %847 = vmatmul.bf16.gmra.mxu0 %v167
  %v848 = vpop.f32.mrf.mxu0
  %v849 = vadd.f32 %v830, %v848
  %v850 = vpop.f32.mrf.mxu0
  %v851 = vadd.f32 %v832, %v850
  %852 = vmatmul.bf16.gmra.mxu0 %v173
  %v853 = vpop.f32.mrf.mxu0
  %v854 = vadd.f32 %v835, %v853
  %v855 = vpop.f32.mrf.mxu0
  %v856 = vadd.f32 %v837, %v855
  %857 = vdwg.mxu0
  %858 = vmatpush.bf16.msra.mxu0 %v555
  %859 = vmatpush.bf16.msra.mxu0 %v553
  %860 = vmatpush.bf16.msra.mxu0 %v551
  %861 = vmatpush.bf16.msra.mxu0 %v549
  %862 = vmatpush.bf16.msra.mxu0 %v547
  %863 = vmatpush.bf16.msra.mxu0 %v545
  %864 = vmatpush.bf16.msra.mxu0 %v543
  %865 = vmatpush.bf16.msra.mxu0 %v541
  %866 = vmatmul.bf16.gmra.mxu0 %v168
  %v867 = vpop.f32.mrf.mxu0
  %v868 = vadd.f32 %v849, %v867
  %v869 = vpop.f32.mrf.mxu0
  %v870 = vadd.f32 %v851, %v869
  %871 = vmatmul.bf16.gmra.mxu0 %v174
  %v872 = vpop.f32.mrf.mxu0
  %v873 = vadd.f32 %v854, %v872
  %v874 = vpop.f32.mrf.mxu0
  %v875 = vadd.f32 %v856, %v874
  %876 = vdwg.mxu0
  %877 = vmatpush.bf16.msra.mxu0 %v571
  %878 = vmatpush.bf16.msra.mxu0 %v569
  %879 = vmatpush.bf16.msra.mxu0 %v567
  %880 = vmatpush.bf16.msra.mxu0 %v565
  %881 = vmatpush.bf16.msra.mxu0 %v563
  %882 = vmatpush.bf16.msra.mxu0 %v561
  %883 = vmatpush.bf16.msra.mxu0 %v559
  %884 = vmatpush.bf16.msra.mxu0 %v557
  %885 = vmatmul.bf16.gmra.mxu0 %v169
  %v886 = vpop.f32.mrf.mxu0
  %v887 = vadd.f32 %v868, %v886
  %v888 = vpop.f32.mrf.mxu0
  %v889 = vadd.f32 %v870, %v888
  %890 = vmatmul.bf16.gmra.mxu0 %v175
  %v891 = vpop.f32.mrf.mxu0
  %v892 = vadd.f32 %v873, %v891
  %v893 = vpop.f32.mrf.mxu0
  %v894 = vadd.f32 %v875, %v893
  %895 = vdwg.mxu0
  %v896 = vpack.c.bf16 %v887, %v773
  %v897 = vpack.c.bf16 %v889, %v775
  %v898 = vpack.c.bf16 %v892, %v778
  %v899 = vpack.c.bf16 %v894, %v780
  %900 = vst [vmem:[%s3] sm:$0xff] %v896
  %901 = vst [vmem:[%s3 + $0x8] sm:$0xff] %v897
  %902 = vst [vmem:[%s3 + $0x10] sm:$0xff] %v898
  %903 = vst [vmem:[%s3 + $0x18] sm:$0xff] %v899
  // Predicated region
  $region14: #{detector_backbone_with_fpn_forward.10} parent=0 // pred_check
    _
  $region15: #{detector_backbone_with_fpn_forward.10} parent=0 // pred_check_branch
    %905 = sbr.rel (0) target = $region17
  $region16: #{detector_backbone_with_fpn_forward.10} parent=0 // pred_region
    _
  $region17: #{detector_backbone_with_fpn_forward.10} parent=0 // pred_fallthru
    _
  // Predicated region
  $region18: #{detector_backbone_with_fpn_forward.10} parent=0 // pred_check
    _
  $region19: #{detector_backbone_with_fpn_forward.10} parent=0 // pred_check_branch
    %907 = sbr.rel (0) target = $region21
  $region20: #{detector_backbone_with_fpn_forward.10} parent=0 // pred_region
    _
  $region21: #{detector_backbone_with_fpn_forward.10} parent=0 // pred_fallthru
    _

// kernel: detector_backbone_with_fpn_forward.12
$region0: #{detector_backbone_with_fpn_forward.12}
  #allocation0 [shape = 'u32[]', space=smem, size = 0x4, offset = 0x4, fixed_abs, tag = 'smem constant byte address 0x4 - core index']
  #allocation1 [shape = 'u32[72,128]{1,0:T(1,128)}', space=vmem, size = 0x9000, scoped, tag = 'internal scratch']
  %s0 = inlined_call_operand.vmem [shape: bf16[16,512], index: 0, kind: input, shape index: {}]
  %s1 = inlined_call_operand.vmem [shape: bf16[512,128], index: 1, kind: input, shape index: {}]
  %s2 = inlined_call_operand.vmem [shape: f32[1,128], index: 2, kind: input, shape index: {}]
  %s3 = inlined_call_operand.vmem [shape: bf16[16,128], index: 3, kind: output, shape index: {}]
  %s4 = sld [smem:[#allocation0]]
  $region22: #{detector_backbone_with_fpn_forward.12} parent=0
    _
  %s6 = ssub.s32 1, %s4
  %s7 = scalar_select 0, %s6, %s4
  // Predicated region
  $region2: #{detector_backbone_with_fpn_forward.12} parent=0 // pred_check
    _
  $region3: #{detector_backbone_with_fpn_forward.12} parent=0 // pred_check_branch
    %9 = sbr.rel (0) target = $region5
  $region4: #{detector_backbone_with_fpn_forward.12} parent=0 // pred_region
    _
  $region5: #{detector_backbone_with_fpn_forward.12} parent=0 // pred_fallthru
    _
  // Predicated region
  $region6: #{detector_backbone_with_fpn_forward.12} parent=0 // pred_check
    _
  $region7: #{detector_backbone_with_fpn_forward.12} parent=0 // pred_check_branch
    %11 = sbr.rel (0) target = $region9
  $region8: #{detector_backbone_with_fpn_forward.12} parent=0 // pred_region
    _
  $region9: #{detector_backbone_with_fpn_forward.12} parent=0 // pred_fallthru
    _
  // Predicated region
  $region10: #{detector_backbone_with_fpn_forward.12} parent=0 // pred_check
    _
  $region11: #{detector_backbone_with_fpn_forward.12} parent=0 // pred_check_branch
    %13 = sbr.rel (0) target = $region13
  $region12: #{detector_backbone_with_fpn_forward.12} parent=0 // pred_region
    _
  $region13: #{detector_backbone_with_fpn_forward.12} parent=0 // pred_fallthru
    _
  %v14 = vld [vmem:[%s0] sm:$0xff]
  %v15 = vld [vmem:[%s0 + $0x8] sm:$0xff]
  %v16 = vld [vmem:[%s0 + $0x10] sm:$0xff]
  %v17 = vld [vmem:[%s0 + $0x18] sm:$0xff]
  %v18 = vld [vmem:[%s1] sm:$0xf]
  %v19 = vld [vmem:[%s1 + $0x4] sm:$0xf]
  %v20 = vld [vmem:[%s1 + $0x8] sm:$0xf]
  %v21 = vld [vmem:[%s1 + $0xc] sm:$0xf]
  %v22 = vld [vmem:[%s1 + $0x10] sm:$0xf]
  %v23 = vld [vmem:[%s1 + $0x14] sm:$0xf]
  %v24 = vld [vmem:[%s1 + $0x18] sm:$0xf]
  %v25 = vld [vmem:[%s1 + $0x1c] sm:$0xf]
  %v26 = vld [vmem:[%s1 + $0x20] sm:$0xf]
  %v27 = vld [vmem:[%s1 + $0x24] sm:$0xf]
  %v28 = vld [vmem:[%s1 + $0x28] sm:$0xf]
  %v29 = vld [vmem:[%s1 + $0x2c] sm:$0xf]
  %v30 = vld [vmem:[%s1 + $0x30] sm:$0xf]
  %v31 = vld [vmem:[%s1 + $0x34] sm:$0xf]
  %v32 = vld [vmem:[%s1 + $0x38] sm:$0xf]
  %v33 = vld [vmem:[%s1 + $0x3c] sm:$0xf]
  %v34 = vld [vmem:[%s1 + $0x40] sm:$0xf]
  %v35 = vld [vmem:[%s1 + $0x44] sm:$0xf]
  %v36 = vld [vmem:[%s1 + $0x48] sm:$0xf]
  %v37 = vld [vmem:[%s1 + $0x4c] sm:$0xf]
  %v38 = vld [vmem:[%s1 + $0x50] sm:$0xf]
  %v39 = vld [vmem:[%s1 + $0x54] sm:$0xf]
  %v40 = vld [vmem:[%s1 + $0x58] sm:$0xf]
  %v41 = vld [vmem:[%s1 + $0x5c] sm:$0xf]
  %v42 = vld [vmem:[%s1 + $0x60] sm:$0xf]
  %v43 = vld [vmem:[%s1 + $0x64] sm:$0xf]
  %v44 = vld [vmem:[%s1 + $0x68] sm:$0xf]
  %v45 = vld [vmem:[%s1 + $0x6c] sm:$0xf]
  %v46 = vld [vmem:[%s1 + $0x70] sm:$0xf]
  %v47 = vld [vmem:[%s1 + $0x74] sm:$0xf]
  %v48 = vld [vmem:[%s1 + $0x78] sm:$0xf]
  %v49 = vld [vmem:[%s1 + $0x7c] sm:$0xf]
  %v50 = vld [vmem:[%s1 + $0x80] sm:$0xf]
  %v51 = vld [vmem:[%s1 + $0x84] sm:$0xf]
  %v52 = vld [vmem:[%s1 + $0x88] sm:$0xf]
  %v53 = vld [vmem:[%s1 + $0x8c] sm:$0xf]
  %v54 = vld [vmem:[%s1 + $0x90] sm:$0xf]
  %v55 = vld [vmem:[%s1 + $0x94] sm:$0xf]
  %v56 = vld [vmem:[%s1 + $0x98] sm:$0xf]
  %v57 = vld [vmem:[%s1 + $0x9c] sm:$0xf]
  %v58 = vld [vmem:[%s1 + $0xa0] sm:$0xf]
  %v59 = vld [vmem:[%s1 + $0xa4] sm:$0xf]
  %v60 = vld [vmem:[%s1 + $0xa8] sm:$0xf]
  %v61 = vld [vmem:[%s1 + $0xac] sm:$0xf]
  %v62 = vld [vmem:[%s1 + $0xb0] sm:$0xf]
  %v63 = vld [vmem:[%s1 + $0xb4] sm:$0xf]
  %v64 = vld [vmem:[%s1 + $0xb8] sm:$0xf]
  %v65 = vld [vmem:[%s1 + $0xbc] sm:$0xf]
  %v66 = vld [vmem:[%s1 + $0xc0] sm:$0xf]
  %v67 = vld [vmem:[%s1 + $0xc4] sm:$0xf]
  %v68 = vld [vmem:[%s1 + $0xc8] sm:$0xf]
  %v69 = vld [vmem:[%s1 + $0xcc] sm:$0xf]
  %v70 = vld [vmem:[%s1 + $0xd0] sm:$0xf]
  %v71 = vld [vmem:[%s1 + $0xd4] sm:$0xf]
  %v72 = vld [vmem:[%s1 + $0xd8] sm:$0xf]
  %v73 = vld [vmem:[%s1 + $0xdc] sm:$0xf]
  %v74 = vld [vmem:[%s1 + $0xe0] sm:$0xf]
  %v75 = vld [vmem:[%s1 + $0xe4] sm:$0xf]
  %v76 = vld [vmem:[%s1 + $0xe8] sm:$0xf]
  %v77 = vld [vmem:[%s1 + $0xec] sm:$0xf]
  %v78 = vld [vmem:[%s1 + $0xf0] sm:$0xf]
  %v79 = vld [vmem:[%s1 + $0xf4] sm:$0xf]
  %v80 = vld [vmem:[%s1 + $0xf8] sm:$0xf]
  %v81 = vld [vmem:[%s1 + $0xfc] sm:$0xf]
  %v82 = vld [vmem:[%s2] sm:$0x1]
  %v84 = vperm.slane %v82, 0
  %v90 = vunpack.c.l.b16 %v14
  %v91 = vunpack.c.h.b16 %v14
  %v92 = vunpack.c.l.b16 %v15
  %v93 = vunpack.c.h.b16 %v15
  %v94 = vunpack.c.l.b16 %v16
  %v95 = vunpack.c.h.b16 %v16
  %v96 = vunpack.c.l.b16 %v17
  %v97 = vunpack.c.h.b16 %v17
  %v98 = vpack.c.b16 %v94, %v90
  %v99 = vpack.c.b16 %v95, %v91
  %v100 = vpack.c.b16 %v96, %v92
  %v101 = vpack.c.b16 %v97, %v93
  %v170 = vunpack.c.l.b16 %v18
  %v171 = vunpack.c.l.b16 %v19
  %v172 = vunpack.c.l.b16 %v20
  %v173 = vunpack.c.l.b16 %v21
  %v174 = vunpack.c.l.b16 %v22
  %v175 = vunpack.c.l.b16 %v23
  %v176 = vunpack.c.l.b16 %v24
  %v177 = vunpack.c.l.b16 %v25
  %v178 = vunpack.c.l.b16 %v26
  %v179 = vunpack.c.l.b16 %v27
  %v180 = vunpack.c.l.b16 %v28
  %v181 = vunpack.c.l.b16 %v29
  %v182 = vunpack.c.l.b16 %v30
  %v183 = vunpack.c.l.b16 %v31
  %v184 = vunpack.c.l.b16 %v32
  %v185 = vunpack.c.l.b16 %v33
  %v186 = vunpack.c.l.b16 %v34
  %v187 = vunpack.c.l.b16 %v35
  %v188 = vunpack.c.l.b16 %v36
  %v189 = vunpack.c.l.b16 %v37
  %v190 = vunpack.c.l.b16 %v38
  %v191 = vunpack.c.l.b16 %v39
  %v192 = vunpack.c.l.b16 %v40
  %v193 = vunpack.c.l.b16 %v41
  %v194 = vunpack.c.l.b16 %v42
  %v195 = vunpack.c.l.b16 %v43
  %v196 = vunpack.c.l.b16 %v44
  %v197 = vunpack.c.l.b16 %v45
  %v198 = vunpack.c.l.b16 %v46
  %v199 = vunpack.c.l.b16 %v47
  %v200 = vunpack.c.l.b16 %v48
  %v201 = vunpack.c.l.b16 %v49
  %v202 = vunpack.c.l.b16 %v50
  %v203 = vunpack.c.l.b16 %v51
  %v204 = vunpack.c.l.b16 %v52
  %v205 = vunpack.c.l.b16 %v53
  %v206 = vunpack.c.l.b16 %v54
  %v207 = vunpack.c.l.b16 %v55
  %v208 = vunpack.c.l.b16 %v56
  %v209 = vunpack.c.l.b16 %v57
  %v210 = vunpack.c.l.b16 %v58
  %v211 = vunpack.c.l.b16 %v59
  %v212 = vunpack.c.l.b16 %v60
  %v213 = vunpack.c.l.b16 %v61
  %v214 = vunpack.c.l.b16 %v62
  %v215 = vunpack.c.l.b16 %v63
  %v216 = vunpack.c.l.b16 %v64
  %v217 = vunpack.c.l.b16 %v65
  %v218 = vunpack.c.l.b16 %v66
  %v219 = vunpack.c.l.b16 %v67
  %v220 = vunpack.c.l.b16 %v68
  %v221 = vunpack.c.l.b16 %v69
  %v222 = vunpack.c.l.b16 %v70
  %v223 = vunpack.c.l.b16 %v71
  %v224 = vunpack.c.l.b16 %v72
  %v225 = vunpack.c.l.b16 %v73
  %v226 = vunpack.c.l.b16 %v74
  %v227 = vunpack.c.l.b16 %v75
  %v228 = vunpack.c.l.b16 %v76
  %v229 = vunpack.c.l.b16 %v77
  %v230 = vunpack.c.l.b16 %v78
  %v231 = vunpack.c.l.b16 %v79
  %v232 = vunpack.c.l.b16 %v80
  %v233 = vunpack.c.l.b16 %v81
  %v234 = vpack.c.b16 %v171, %v170
  %v235 = vpack.c.b16 %v173, %v172
  %v236 = vpack.c.b16 %v175, %v174
  %v237 = vpack.c.b16 %v177, %v176
  %v238 = vpack.c.b16 %v179, %v178
  %v239 = vpack.c.b16 %v181, %v180
  %v240 = vpack.c.b16 %v183, %v182
  %v241 = vpack.c.b16 %v185, %v184
  %v242 = vpack.c.b16 %v187, %v186
  %v243 = vpack.c.b16 %v189, %v188
  %v244 = vpack.c.b16 %v191, %v190
  %v245 = vpack.c.b16 %v193, %v192
  %v246 = vpack.c.b16 %v195, %v194
  %v247 = vpack.c.b16 %v197, %v196
  %v248 = vpack.c.b16 %v199, %v198
  %v249 = vpack.c.b16 %v201, %v200
  %v250 = vpack.c.b16 %v203, %v202
  %v251 = vpack.c.b16 %v205, %v204
  %v252 = vpack.c.b16 %v207, %v206
  %v253 = vpack.c.b16 %v209, %v208
  %v254 = vpack.c.b16 %v211, %v210
  %v255 = vpack.c.b16 %v213, %v212
  %v256 = vpack.c.b16 %v215, %v214
  %v257 = vpack.c.b16 %v217, %v216
  %v258 = vpack.c.b16 %v219, %v218
  %v259 = vpack.c.b16 %v221, %v220
  %v260 = vpack.c.b16 %v223, %v222
  %v261 = vpack.c.b16 %v225, %v224
  %v262 = vpack.c.b16 %v227, %v226
  %v263 = vpack.c.b16 %v229, %v228
  %v264 = vpack.c.b16 %v231, %v230
  %v265 = vpack.c.b16 %v233, %v232
  %298 = vmatpush.bf16.msra.mxu0 %v241
  %299 = vmatpush.bf16.msra.mxu0 %v240
  %300 = vmatpush.bf16.msra.mxu0 %v239
  %301 = vmatpush.bf16.msra.mxu0 %v238
  %302 = vmatpush.bf16.msra.mxu0 %v237
  %303 = vmatpush.bf16.msra.mxu0 %v236
  %304 = vmatpush.bf16.msra.mxu0 %v235
  %305 = vmatpush.bf16.msra.mxu0 %v234
  %306 = vmatmul.bf16.gmra.mxu0 %v98
  %v307 = vpop.f32.mrf.mxu0
  %v308 = vadd.f32 %v84, %v307
  %v309 = vpop.f32.mrf.mxu0
  %v310 = vadd.f32 %v84, %v309
  %311 = vdwg.mxu0
  %312 = vmatpush.bf16.msra.mxu0 %v249
  %313 = vmatpush.bf16.msra.mxu0 %v248
  %314 = vmatpush.bf16.msra.mxu0 %v247
  %315 = vmatpush.bf16.msra.mxu0 %v246
  %316 = vmatpush.bf16.msra.mxu0 %v245
  %317 = vmatpush.bf16.msra.mxu0 %v244
  %318 = vmatpush.bf16.msra.mxu0 %v243
  %319 = vmatpush.bf16.msra.mxu0 %v242
  %320 = vmatmul.bf16.gmra.mxu0 %v99
  %v321 = vpop.f32.mrf.mxu0
  %v322 = vadd.f32 %v308, %v321
  %v323 = vpop.f32.mrf.mxu0
  %v324 = vadd.f32 %v310, %v323
  %325 = vdwg.mxu0
  %326 = vmatpush.bf16.msra.mxu0 %v257
  %327 = vmatpush.bf16.msra.mxu0 %v256
  %328 = vmatpush.bf16.msra.mxu0 %v255
  %329 = vmatpush.bf16.msra.mxu0 %v254
  %330 = vmatpush.bf16.msra.mxu0 %v253
  %331 = vmatpush.bf16.msra.mxu0 %v252
  %332 = vmatpush.bf16.msra.mxu0 %v251
  %333 = vmatpush.bf16.msra.mxu0 %v250
  %334 = vmatmul.bf16.gmra.mxu0 %v100
  %v335 = vpop.f32.mrf.mxu0
  %v336 = vadd.f32 %v322, %v335
  %v337 = vpop.f32.mrf.mxu0
  %v338 = vadd.f32 %v324, %v337
  %339 = vdwg.mxu0
  %340 = vmatpush.bf16.msra.mxu0 %v265
  %341 = vmatpush.bf16.msra.mxu0 %v264
  %342 = vmatpush.bf16.msra.mxu0 %v263
  %343 = vmatpush.bf16.msra.mxu0 %v262
  %344 = vmatpush.bf16.msra.mxu0 %v261
  %345 = vmatpush.bf16.msra.mxu0 %v260
  %346 = vmatpush.bf16.msra.mxu0 %v259
  %347 = vmatpush.bf16.msra.mxu0 %v258
  %348 = vmatmul.bf16.gmra.mxu0 %v101
  %v349 = vpop.f32.mrf.mxu0
  %v350 = vadd.f32 %v336, %v349
  %v351 = vpop.f32.mrf.mxu0
  %v352 = vadd.f32 %v338, %v351
  %353 = vdwg.mxu0
  %v354 = vpack.c.bf16 %v350, %v350
  %v355 = vpack.c.bf16 %v352, %v352
  %356 = vst [vmem:[%s3] sm:$0xf] %v354
  %357 = vst [vmem:[%s3 + $0x4] sm:$0xf] %v355
  // Predicated region
  $region14: #{detector_backbone_with_fpn_forward.12} parent=0 // pred_check
    _
  $region15: #{detector_backbone_with_fpn_forward.12} parent=0 // pred_check_branch
    %359 = sbr.rel (0) target = $region17
  $region16: #{detector_backbone_with_fpn_forward.12} parent=0 // pred_region
    _
  $region17: #{detector_backbone_with_fpn_forward.12} parent=0 // pred_fallthru
    _
  // Predicated region
  $region18: #{detector_backbone_with_fpn_forward.12} parent=0 // pred_check
    _
  $region19: #{detector_backbone_with_fpn_forward.12} parent=0 // pred_check_branch
    %361 = sbr.rel (0) target = $region21
  $region20: #{detector_backbone_with_fpn_forward.12} parent=0 // pred_region
    _
  $region21: #{detector_backbone_with_fpn_forward.12} parent=0 // pred_fallthru
    _

// kernel: detector_backbone_with_fpn_forward.13
$region0: #{detector_backbone_with_fpn_forward.13}
  #allocation0 [shape = 'u32[]', space=smem, size = 0x4, offset = 0x4, fixed_abs, tag = 'smem constant byte address 0x4 - core index']
  #allocation1 [shape = 'u32[72,128]{1,0:T(1,128)}', space=vmem, size = 0x9000, scoped, tag = 'internal scratch']
  %s0 = inlined_call_operand.vmem [shape: bf16[2,64,384], index: 0, kind: input, shape index: {}]
  %s1 = inlined_call_operand.vmem [shape: bf16[3,384,128], index: 1, kind: input, shape index: {}]
  %s2 = inlined_call_operand.vmem [shape: f32[1,128], index: 2, kind: input, shape index: {}]
  %s3 = inlined_call_operand.vmem [shape: bf16[2,32,128], index: 3, kind: output, shape index: {}]
  %s4 = sld [smem:[#allocation0]]
  $region45: #{detector_backbone_with_fpn_forward.13} parent=0
    _
  %s6 = ssub.s32 1, %s4
  %s7 = scalar_select 0, %s6, %s4
  loop: start=0, step=1, limit=4
  $region2: #{detector_backbone_with_fpn_forward.13} parent=0 // loop_pre_header
    _
  $region3: #{detector_backbone_with_fpn_forward.13} parent=0 // loop_header
    %s9 = sphi 0, %s13
    %p10 = scmp.ge.s32.totalorder %s9, 4
    %s19 = sphi 0, %s21
    %s22 = sphi 0, %s19
    %s23 = sphi 0, %s22
    %s39 = sphi 0, %s23
    %s43 = sphi 0, %s43
    %s45 = sphi 0, %s43
    %s46 = sphi 0, %s45
    %s60 = sphi 0, %s46
    %s64 = sphi 0, %s64
    %s66 = sphi 0, %s64
    %s67 = sphi 0, %s66
    %s81 = sphi 0, %s67
    %s87 = sphi 0, %s89
    %s90 = sphi 0, %s87
    %s91 = sphi 0, %s90
    %s107 = sphi 0, %s91
  $region4: #{detector_backbone_with_fpn_forward.13} parent=0 // loop_header_branch
    %12 = sbr.rel (%p10) target = $region8
  $region5: #{detector_backbone_with_fpn_forward.13} parent=0 // loop_body
    %s14 = ssub.s32 %s9, 1
    %s15 = ssub.s32 %s9, 2
    %s16 = sadd.s32 %s9, 1
    %s17 = ssub.s32 %s9, %s16
    %p18 = scmp.eq.s32.totalorder %s17, 0
    %s20 = sadd.s32 %s19, 1
    %s21 = scalar_select %p18, %s19, %s20
    %p24 = pneg %p18
    %p25 = scmp.eq.s32.totalorder %s9, 1
    %p26 = por %p24, %p25
    %p27 = scmp.ne.s32.totalorder %s19, %s22
    %p28 = scmp.eq.s32.totalorder %s9, 0
    %p29 = por %p27, %p28
    %p30 = scmp.ne.s32.totalorder %s19, %s22
    %p31 = scmp.eq.s32.totalorder %s14, 1
    %p32 = por %p30, %p31
    %p33 = scmp.ne.s32.totalorder %s22, %s23
    %p34 = scmp.eq.s32.totalorder %s14, 0
    %p35 = por %p33, %p34
    %p36 = scmp.ne.s32.totalorder %s22, %s23
    %p37 = scmp.eq.s32.totalorder %s15, 1
    %p38 = por %p36, %p37
    %p40 = scmp.ne.s32.totalorder %s23, %s39
    %p41 = scmp.eq.s32.totalorder %s15, 0
    %p42 = por %p40, %p41
    %s44 = sadd.s32 %s43, 1
    %p47 = scmp.eq.s32.totalorder %s9, 1
    %p48 = scmp.ne.s32.totalorder %s43, %s45
    %p49 = scmp.eq.s32.totalorder %s9, 0
    %p50 = por %p48, %p49
    %p51 = scmp.ne.s32.totalorder %s43, %s45
    %p52 = scmp.eq.s32.totalorder %s14, 1
    %p53 = por %p51, %p52
    %p54 = scmp.ne.s32.totalorder %s45, %s46
    %p55 = scmp.eq.s32.totalorder %s14, 0
    %p56 = por %p54, %p55
    %p57 = scmp.ne.s32.totalorder %s45, %s46
    %p58 = scmp.eq.s32.totalorder %s15, 1
    %p59 = por %p57, %p58
    %p61 = scmp.ne.s32.totalorder %s46, %s60
    %p62 = scmp.eq.s32.totalorder %s15, 0
    %p63 = por %p61, %p62
    %s65 = sadd.s32 %s64, 1
    %p68 = scmp.eq.s32.totalorder %s9, 1
    %p69 = scmp.ne.s32.totalorder %s64, %s66
    %p70 = scmp.eq.s32.totalorder %s9, 0
    %p71 = por %p69, %p70
    %p72 = scmp.ne.s32.totalorder %s64, %s66
    %p73 = scmp.eq.s32.totalorder %s14, 1
    %p74 = por %p72, %p73
    %p75 = scmp.ne.s32.totalorder %s66, %s67
    %p76 = scmp.eq.s32.totalorder %s14, 0
    %p77 = por %p75, %p76
    %p78 = scmp.ne.s32.totalorder %s66, %s67
    %p79 = scmp.eq.s32.totalorder %s15, 1
    %p80 = por %p78, %p79
    %p82 = scmp.ne.s32.totalorder %s67, %s81
    %p83 = scmp.eq.s32.totalorder %s15, 0
    %p84 = por %p82, %p83
    %s85 = ssub.s32 %s9, %s16
    %p86 = scmp.eq.s32.totalorder %s85, 0
    %s88 = sadd.s32 %s87, 1
    %s89 = scalar_select %p86, %s87, %s88
    %p92 = pneg %p86
    %p93 = scmp.eq.s32.totalorder %s9, 1
    %p94 = por %p92, %p93
    %p95 = scmp.ne.s32.totalorder %s87, %s90
    %p96 = scmp.eq.s32.totalorder %s9, 0
    %p97 = por %p95, %p96
    %p98 = scmp.ne.s32.totalorder %s87, %s90
    %p99 = scmp.eq.s32.totalorder %s14, 1
    %p100 = por %p98, %p99
    %p101 = scmp.ne.s32.totalorder %s90, %s91
    %p102 = scmp.eq.s32.totalorder %s14, 0
    %p103 = por %p101, %p102
    %p104 = scmp.ne.s32.totalorder %s90, %s91
    %p105 = scmp.eq.s32.totalorder %s15, 1
    %p106 = por %p104, %p105
    %p108 = scmp.ne.s32.totalorder %s91, %s107
    %p109 = scmp.eq.s32.totalorder %s15, 0
    %p110 = por %p108, %p109
    %p111 = scmp.le.s32.totalorder 1, %s9
    %p112 = scmp.lt.s32.totalorder %s9, 3
    %p113 = pnand %p111, %p112
    %p114 = pneg %p113
    // Predicated region
    $region9: #{detector_backbone_with_fpn_forward.13} parent=5 // pred_check
      _
    $region10: #{detector_backbone_with_fpn_forward.13} parent=5 // pred_check_branch
      %116 = sbr.rel (%p113) target = $region12
    $region11: #{detector_backbone_with_fpn_forward.13} parent=5 // pred_region
      %s117 = ssub.s32 %s9, 1
      // Predicated region
      $region13: #{detector_backbone_with_fpn_forward.13} parent=11 // pred_check
        %p118 = pneg %p56
      $region14: #{detector_backbone_with_fpn_forward.13} parent=11 // pred_check_branch
        %120 = sbr.rel (%p118) target = $region16
      $region15: #{detector_backbone_with_fpn_forward.13} parent=11 // pred_region
        _
      $region16: #{detector_backbone_with_fpn_forward.13} parent=11 // pred_fallthru
        _
      // Predicated region
      $region17: #{detector_backbone_with_fpn_forward.13} parent=11 // pred_check
        %p121 = pneg %p77
      $region18: #{detector_backbone_with_fpn_forward.13} parent=11 // pred_check_branch
        %123 = sbr.rel (%p121) target = $region20
      $region19: #{detector_backbone_with_fpn_forward.13} parent=11 // pred_region
        _
      $region20: #{detector_backbone_with_fpn_forward.13} parent=11 // pred_fallthru
        _
    $region12: #{detector_backbone_with_fpn_forward.13} parent=5 // pred_fallthru
      _
    %p124 = scmp.lt.s32.totalorder %s9, 2
    // Predicated region
    $region21: #{detector_backbone_with_fpn_forward.13} parent=5 // pred_check
      %p125 = pneg %p124
    $region22: #{detector_backbone_with_fpn_forward.13} parent=5 // pred_check_branch
      %127 = sbr.rel (%p125) target = $region24
    $region23: #{detector_backbone_with_fpn_forward.13} parent=5 // pred_region
      // Predicated region
      $region25: #{detector_backbone_with_fpn_forward.13} parent=23 // pred_check
        %p128 = pneg %p29
      $region26: #{detector_backbone_with_fpn_forward.13} parent=23 // pred_check_branch
        %130 = sbr.rel (%p128) target = $region28
      $region27: #{detector_backbone_with_fpn_forward.13} parent=23 // pred_region
        %p131 = scmp.lt.s32.totalorder %s9, 1
        %s132 = scalar_select %p131, %s9, 1
        %s133 = smul.addr %s132, 24
        %s134 = smul.addr %s133, 4
        %s135 = scalar_lea.vmem %s0, %s134
      $region28: #{detector_backbone_with_fpn_forward.13} parent=23 // pred_fallthru
        _
    $region24: #{detector_backbone_with_fpn_forward.13} parent=5 // pred_fallthru
      _
    %p136 = scmp.le.s32.totalorder 1, %s9
    %p137 = scmp.lt.s32.totalorder %s9, 3
    %p138 = pnand %p136, %p137
    %p139 = pneg %p138
    // Predicated region
    $region29: #{detector_backbone_with_fpn_forward.13} parent=5 // pred_check
      _
    $region30: #{detector_backbone_with_fpn_forward.13} parent=5 // pred_check_branch
      %141 = sbr.rel (%p138) target = $region32
    $region31: #{detector_backbone_with_fpn_forward.13} parent=5 // pred_region
      %s142 = ssub.s32 %s9, 1
      %p143 = scmp.lt.s32.totalorder %s14, 1
      %s144 = scalar_select %p143, %s14, 1
      %s145 = smul.addr %s144, 24
      %s146 = smul.addr %s145, 4
      %s147 = scalar_lea.vmem %s0, %s146
      %p148 = pneg %p35
      %p149 = pneg %p32
      %p150 = pneg %p56
      %p151 = pneg %p53
      %p152 = pneg %p77
      %p153 = pneg %p74
      %p154 = pneg %p103
      %p155 = pneg %p100
      %p156 = scmp.lt.s32.totalorder %s14, 1
      %s157 = scalar_select %p156, %s14, 1
      %s158 = smul.addr %s157, 4
      %s159 = smul.addr %s158, 4
      %s160 = scalar_lea.vmem %s3, %s159
      %p161 = scmp.lt.s32.totalorder %s14, 1
      %s162 = scalar_select %p161, %s14, 1
      %s163 = smul.addr %s162, 24
      %s164 = smul.addr %s163, 4
      %s165 = scalar_lea.vmem %s0, %s164
      %p166 = scmp.lt.s32.totalorder %s14, 1
      %s167 = scalar_select %p166, %s14, 1
      %s168 = smul.addr %s167, 4
      %s169 = smul.addr %s168, 4
      %s170 = scalar_lea.vmem %s3, %s169
      %v171 = vld [vmem:[%s165] sm:$0xff]
      %v172 = vld [vmem:[%s165 + $0x8] sm:$0xf]
      %v173 = vld [vmem:[%s165 + $0xc] sm:$0xff]
      %v174 = vld [vmem:[%s165 + $0x14] sm:$0xf]
      %v175 = vld [vmem:[%s165 + $0x18] sm:$0xff]
      %v176 = vld [vmem:[%s165 + $0x20] sm:$0xf]
      %v177 = vld [vmem:[%s165 + $0x24] sm:$0xff]
      %v178 = vld [vmem:[%s165 + $0x2c] sm:$0xf]
      %v179 = vld [vmem:[%s1] sm:$0xf]
      %v180 = vld [vmem:[%s1 + $0x4] sm:$0xf]
      %v181 = vld [vmem:[%s1 + $0x8] sm:$0xf]
      %v182 = vld [vmem:[%s1 + $0xc] sm:$0xf]
      %v183 = vld [vmem:[%s1 + $0x10] sm:$0xf]
      %v184 = vld [vmem:[%s1 + $0x14] sm:$0xf]
      %v185 = vld [vmem:[%s1 + $0x18] sm:$0xf]
      %v186 = vld [vmem:[%s1 + $0x1c] sm:$0xf]
      %v187 = vld [vmem:[%s1 + $0x20] sm:$0xf]
      %v188 = vld [vmem:[%s1 + $0x24] sm:$0xf]
      %v189 = vld [vmem:[%s1 + $0x28] sm:$0xf]
      %v190 = vld [vmem:[%s1 + $0x2c] sm:$0xf]
      %v191 = vld [vmem:[%s1 + $0x30] sm:$0xf]
      %v192 = vld [vmem:[%s1 + $0x34] sm:$0xf]
      %v193 = vld [vmem:[%s1 + $0x38] sm:$0xf]
      %v194 = vld [vmem:[%s1 + $0x3c] sm:$0xf]
      %v195 = vld [vmem:[%s1 + $0x40] sm:$0xf]
      %v196 = vld [vmem:[%s1 + $0x44] sm:$0xf]
      %v197 = vld [vmem:[%s1 + $0x48] sm:$0xf]
      %v198 = vld [vmem:[%s1 + $0x4c] sm:$0xf]
      %v199 = vld [vmem:[%s1 + $0x50] sm:$0xf]
      %v200 = vld [vmem:[%s1 + $0x54] sm:$0xf]
      %v201 = vld [vmem:[%s1 + $0x58] sm:$0xf]
      %v202 = vld [vmem:[%s1 + $0x5c] sm:$0xf]
      %v203 = vld [vmem:[%s1 + $0x60] sm:$0xf]
      %v204 = vld [vmem:[%s1 + $0x64] sm:$0xf]
      %v205 = vld [vmem:[%s1 + $0x68] sm:$0xf]
      %v206 = vld [vmem:[%s1 + $0x6c] sm:$0xf]
      %v207 = vld [vmem:[%s1 + $0x70] sm:$0xf]
      %v208 = vld [vmem:[%s1 + $0x74] sm:$0xf]
      %v209 = vld [vmem:[%s1 + $0x78] sm:$0xf]
      %v210 = vld [vmem:[%s1 + $0x7c] sm:$0xf]
      %v211 = vld [vmem:[%s1 + $0x80] sm:$0xf]
      %v212 = vld [vmem:[%s1 + $0x84] sm:$0xf]
      %v213 = vld [vmem:[%s1 + $0x88] sm:$0xf]
      %v214 = vld [vmem:[%s1 + $0x8c] sm:$0xf]
      %v215 = vld [vmem:[%s1 + $0x90] sm:$0xf]
      %v216 = vld [vmem:[%s1 + $0x94] sm:$0xf]
      %v217 = vld [vmem:[%s1 + $0x98] sm:$0xf]
      %v218 = vld [vmem:[%s1 + $0x9c] sm:$0xf]
      %v219 = vld [vmem:[%s1 + $0xa0] sm:$0xf]
      %v220 = vld [vmem:[%s1 + $0xa4] sm:$0xf]
      %v221 = vld [vmem:[%s1 + $0xa8] sm:$0xf]
      %v222 = vld [vmem:[%s1 + $0xac] sm:$0xf]
      %v223 = vld [vmem:[%s1 + $0xb0] sm:$0xf]
      %v224 = vld [vmem:[%s1 + $0xb4] sm:$0xf]
      %v225 = vld [vmem:[%s1 + $0xb8] sm:$0xf]
      %v226 = vld [vmem:[%s1 + $0xbc] sm:$0xf]
      %v227 = vld [vmem:[%s165 + $0x30] sm:$0xff]
      %v228 = vld [vmem:[%s165 + $0x38] sm:$0xf]
      %v229 = vld [vmem:[%s165 + $0x3c] sm:$0xff]
      %v230 = vld [vmem:[%s165 + $0x44] sm:$0xf]
      %s231 = scalar_lea.vmem %s1, 192
      %v232 = vld [vmem:[%s231] sm:$0xf]
      %v233 = vld [vmem:[%s231 + $0x4] sm:$0xf]
      %v234 = vld [vmem:[%s231 + $0x8] sm:$0xf]
      %v235 = vld [vmem:[%s231 + $0xc] sm:$0xf]
      %v236 = vld [vmem:[%s231 + $0x10] sm:$0xf]
      %v237 = vld [vmem:[%s231 + $0x14] sm:$0xf]
      %v238 = vld [vmem:[%s231 + $0x18] sm:$0xf]
      %v239 = vld [vmem:[%s231 + $0x1c] sm:$0xf]
      %v240 = vld [vmem:[%s231 + $0x20] sm:$0xf]
      %v241 = vld [vmem:[%s231 + $0x24] sm:$0xf]
      %v242 = vld [vmem:[%s231 + $0x28] sm:$0xf]
      %v243 = vld [vmem:[%s231 + $0x2c] sm:$0xf]
      %v244 = vld [vmem:[%s231 + $0x30] sm:$0xf]
      %v245 = vld [vmem:[%s231 + $0x34] sm:$0xf]
      %v246 = vld [vmem:[%s231 + $0x38] sm:$0xf]
      %v247 = vld [vmem:[%s231 + $0x3c] sm:$0xf]
      %v248 = vld [vmem:[%s231 + $0x40] sm:$0xf]
      %v249 = vld [vmem:[%s231 + $0x44] sm:$0xf]
      %v250 = vld [vmem:[%s231 + $0x48] sm:$0xf]
      %v251 = vld [vmem:[%s231 + $0x4c] sm:$0xf]
      %v252 = vld [vmem:[%s231 + $0x50] sm:$0xf]
      %v253 = vld [vmem:[%s231 + $0x54] sm:$0xf]
      %v254 = vld [vmem:[%s231 + $0x58] sm:$0xf]
      %v255 = vld [vmem:[%s231 + $0x5c] sm:$0xf]
      %v256 = vld [vmem:[%s231 + $0x60] sm:$0xf]
      %v257 = vld [vmem:[%s231 + $0x64] sm:$0xf]
      %v258 = vld [vmem:[%s231 + $0x68] sm:$0xf]
      %v259 = vld [vmem:[%s231 + $0x6c] sm:$0xf]
      %v260 = vld [vmem:[%s231 + $0x70] sm:$0xf]
      %v261 = vld [vmem:[%s231 + $0x74] sm:$0xf]
      %v262 = vld [vmem:[%s231 + $0x78] sm:$0xf]
      %v263 = vld [vmem:[%s231 + $0x7c] sm:$0xf]
      %v264 = vld [vmem:[%s231 + $0x80] sm:$0xf]
      %v265 = vld [vmem:[%s231 + $0x84] sm:$0xf]
      %v266 = vld [vmem:[%s231 + $0x88] sm:$0xf]
      %v267 = vld [vmem:[%s231 + $0x8c] sm:$0xf]
      %v268 = vld [vmem:[%s231 + $0x90] sm:$0xf]
      %v269 = vld [vmem:[%s231 + $0x94] sm:$0xf]
      %v270 = vld [vmem:[%s231 + $0x98] sm:$0xf]
      %v271 = vld [vmem:[%s231 + $0x9c] sm:$0xf]
      %v272 = vld [vmem:[%s231 + $0xa0] sm:$0xf]
      %v273 = vld [vmem:[%s231 + $0xa4] sm:$0xf]
      %v274 = vld [vmem:[%s231 + $0xa8] sm:$0xf]
      %v275 = vld [vmem:[%s231 + $0xac] sm:$0xf]
      %v276 = vld [vmem:[%s231 + $0xb0] sm:$0xf]
      %v277 = vld [vmem:[%s231 + $0xb4] sm:$0xf]
      %v278 = vld [vmem:[%s231 + $0xb8] sm:$0xf]
      %v279 = vld [vmem:[%s231 + $0xbc] sm:$0xf]
      %v288 = vunpack.c.l.b16 %v175
      %v289 = vunpack.c.h.b16 %v175
      %v290 = vunpack.c.l.b16 %v176
      %v291 = vunpack.c.l.b16 %v177
      %v292 = vunpack.c.h.b16 %v177
      %v293 = vunpack.c.l.b16 %v178
      %v294 = vunpack.c.l.b16 %v227
      %v295 = vunpack.c.h.b16 %v227
      %v296 = vunpack.c.l.b16 %v228
      %v297 = vunpack.c.l.b16 %v229
      %v298 = vunpack.c.h.b16 %v229
      %v299 = vunpack.c.l.b16 %v230
      %v300 = vpack.c.b16 %v291, %v288
      %v301 = vpack.c.b16 %v292, %v289
      %v302 = vpack.c.b16 %v293, %v290
      %v303 = vpack.c.b16 %v297, %v294
      %v304 = vpack.c.b16 %v298, %v295
      %v305 = vpack.c.b16 %v299, %v296
      %v360 = vunpack.c.l.b16 %v232
      %v361 = vunpack.c.l.b16 %v233
      %v362 = vunpack.c.l.b16 %v234
      %v363 = vunpack.c.l.b16 %v235
      %v364 = vunpack.c.l.b16 %v236
      %v365 = vunpack.c.l.b16 %v237
      %v366 = vunpack.c.l.b16 %v238
      %v367 = vunpack.c.l.b16 %v239
      %v368 = vunpack.c.l.b16 %v240
      %v369 = vunpack.c.l.b16 %v241
      %v370 = vunpack.c.l.b16 %v242
      %v371 = vunpack.c.l.b16 %v243
      %v372 = vunpack.c.l.b16 %v244
      %v373 = vunpack.c.l.b16 %v245
      %v374 = vunpack.c.l.b16 %v246
      %v375 = vunpack.c.l.b16 %v247
      %v376 = vunpack.c.l.b16 %v248
      %v377 = vunpack.c.l.b16 %v249
      %v378 = vunpack.c.l.b16 %v250
      %v379 = vunpack.c.l.b16 %v251
      %v380 = vunpack.c.l.b16 %v252
      %v381 = vunpack.c.l.b16 %v253
      %v382 = vunpack.c.l.b16 %v254
      %v383 = vunpack.c.l.b16 %v255
      %v384 = vunpack.c.l.b16 %v256
      %v385 = vunpack.c.l.b16 %v257
      %v386 = vunpack.c.l.b16 %v258
      %v387 = vunpack.c.l.b16 %v259
      %v388 = vunpack.c.l.b16 %v260
      %v389 = vunpack.c.l.b16 %v261
      %v390 = vunpack.c.l.b16 %v262
      %v391 = vunpack.c.l.b16 %v263
      %v392 = vunpack.c.l.b16 %v264
      %v393 = vunpack.c.l.b16 %v265
      %v394 = vunpack.c.l.b16 %v266
      %v395 = vunpack.c.l.b16 %v267
      %v396 = vunpack.c.l.b16 %v268
      %v397 = vunpack.c.l.b16 %v269
      %v398 = vunpack.c.l.b16 %v270
      %v399 = vunpack.c.l.b16 %v271
      %v400 = vunpack.c.l.b16 %v272
      %v401 = vunpack.c.l.b16 %v273
      %v402 = vunpack.c.l.b16 %v274
      %v403 = vunpack.c.l.b16 %v275
      %v404 = vunpack.c.l.b16 %v276
      %v405 = vunpack.c.l.b16 %v277
      %v406 = vunpack.c.l.b16 %v278
      %v407 = vunpack.c.l.b16 %v279
      %v408 = vpack.c.b16 %v361, %v360
      %v409 = vpack.c.b16 %v363, %v362
      %v410 = vpack.c.b16 %v365, %v364
      %v411 = vpack.c.b16 %v367, %v366
      %v412 = vpack.c.b16 %v369, %v368
      %v413 = vpack.c.b16 %v371, %v370
      %v414 = vpack.c.b16 %v373, %v372
      %v415 = vpack.c.b16 %v375, %v374
      %v416 = vpack.c.b16 %v377, %v376
      %v417 = vpack.c.b16 %v379, %v378
      %v418 = vpack.c.b16 %v381, %v380
      %v419 = vpack.c.b16 %v383, %v382
      %v420 = vpack.c.b16 %v385, %v384
      %v421 = vpack.c.b16 %v387, %v386
      %v422 = vpack.c.b16 %v389, %v388
      %v423 = vpack.c.b16 %v391, %v390
      %v424 = vpack.c.b16 %v393, %v392
      %v425 = vpack.c.b16 %v395, %v394
      %v426 = vpack.c.b16 %v397, %v396
      %v427 = vpack.c.b16 %v399, %v398
      %v428 = vpack.c.b16 %v401, %v400
      %v429 = vpack.c.b16 %v403, %v402
      %v430 = vpack.c.b16 %v405, %v404
      %v431 = vpack.c.b16 %v407, %v406
      %456 = vmatpush.bf16.msra.mxu0 %v415
      %457 = vmatpush.bf16.msra.mxu0 %v414
      %458 = vmatpush.bf16.msra.mxu0 %v413
      %459 = vmatpush.bf16.msra.mxu0 %v412
      %460 = vmatpush.bf16.msra.mxu0 %v411
      %461 = vmatpush.bf16.msra.mxu0 %v410
      %462 = vmatpush.bf16.msra.mxu0 %v409
      %463 = vmatpush.bf16.msra.mxu0 %v408
      %464 = vmatmul.bf16.gmra.mxu0 %v300
      %v465 = vpop.f32.mrf.mxu0
      %v466 = vadd.f32 0.0, %v465
      %v467 = vpop.f32.mrf.mxu0
      %v468 = vadd.f32 0.0, %v467
      %469 = vmatmul.bf16.gmra.mxu0 %v303
      %v470 = vpop.f32.mrf.mxu0
      %v471 = vadd.f32 0.0, %v470
      %v472 = vpop.f32.mrf.mxu0
      %v473 = vadd.f32 0.0, %v472
      %474 = vdwg.mxu0
      %475 = vmatpush.bf16.msra.mxu0 %v423
      %476 = vmatpush.bf16.msra.mxu0 %v422
      %477 = vmatpush.bf16.msra.mxu0 %v421
      %478 = vmatpush.bf16.msra.mxu0 %v420
      %479 = vmatpush.bf16.msra.mxu0 %v419
      %480 = vmatpush.bf16.msra.mxu0 %v418
      %481 = vmatpush.bf16.msra.mxu0 %v417
      %482 = vmatpush.bf16.msra.mxu0 %v416
      %483 = vmatmul.bf16.gmra.mxu0 %v301
      %v484 = vpop.f32.mrf.mxu0
      %v485 = vadd.f32 %v466, %v484
      %v486 = vpop.f32.mrf.mxu0
      %v487 = vadd.f32 %v468, %v486
      %488 = vmatmul.bf16.gmra.mxu0 %v304
      %v489 = vpop.f32.mrf.mxu0
      %v490 = vadd.f32 %v471, %v489
      %v491 = vpop.f32.mrf.mxu0
      %v492 = vadd.f32 %v473, %v491
      %493 = vdwg.mxu0
      %494 = vmatpush.bf16.msra.mxu0 %v431
      %495 = vmatpush.bf16.msra.mxu0 %v430
      %496 = vmatpush.bf16.msra.mxu0 %v429
      %497 = vmatpush.bf16.msra.mxu0 %v428
      %498 = vmatpush.bf16.msra.mxu0 %v427
      %499 = vmatpush.bf16.msra.mxu0 %v426
      %500 = vmatpush.bf16.msra.mxu0 %v425
      %501 = vmatpush.bf16.msra.mxu0 %v424
      %502 = vmatmul.bf16.gmra.mxu0 %v302
      %v503 = vpop.f32.mrf.mxu0
      %v504 = vadd.f32 %v485, %v503
      %v505 = vpop.f32.mrf.mxu0
      %v506 = vadd.f32 %v487, %v505
      %507 = vmatmul.bf16.gmra.mxu0 %v305
      %v508 = vpop.f32.mrf.mxu0
      %v509 = vadd.f32 %v490, %v508
      %v510 = vpop.f32.mrf.mxu0
      %v511 = vadd.f32 %v492, %v510
      %512 = vdwg.mxu0
      %v517 = vunpack.c.l.b16 %v171
      %v518 = vunpack.c.h.b16 %v171
      %v519 = vunpack.c.l.b16 %v172
      %v520 = vunpack.c.l.b16 %v173
      %v521 = vunpack.c.h.b16 %v173
      %v522 = vunpack.c.l.b16 %v174
      %v523 = vpack.c.b16 %v520, %v517
      %v524 = vpack.c.b16 %v521, %v518
      %v525 = vpack.c.b16 %v522, %v519
      %v577 = vunpack.c.l.b16 %v179
      %v578 = vunpack.c.l.b16 %v180
      %v579 = vunpack.c.l.b16 %v181
      %v580 = vunpack.c.l.b16 %v182
      %v581 = vunpack.c.l.b16 %v183
      %v582 = vunpack.c.l.b16 %v184
      %v583 = vunpack.c.l.b16 %v185
      %v584 = vunpack.c.l.b16 %v186
      %v585 = vunpack.c.l.b16 %v187
      %v586 = vunpack.c.l.b16 %v188
      %v587 = vunpack.c.l.b16 %v189
      %v588 = vunpack.c.l.b16 %v190
      %v589 = vunpack.c.l.b16 %v191
      %v590 = vunpack.c.l.b16 %v192
      %v591 = vunpack.c.l.b16 %v193
      %v592 = vunpack.c.l.b16 %v194
      %v593 = vunpack.c.l.b16 %v195
      %v594 = vunpack.c.l.b16 %v196
      %v595 = vunpack.c.l.b16 %v197
      %v596 = vunpack.c.l.b16 %v198
      %v597 = vunpack.c.l.b16 %v199
      %v598 = vunpack.c.l.b16 %v200
      %v599 = vunpack.c.l.b16 %v201
      %v600 = vunpack.c.l.b16 %v202
      %v601 = vunpack.c.l.b16 %v203
      %v602 = vunpack.c.l.b16 %v204
      %v603 = vunpack.c.l.b16 %v205
      %v604 = vunpack.c.l.b16 %v206
      %v605 = vunpack.c.l.b16 %v207
      %v606 = vunpack.c.l.b16 %v208
      %v607 = vunpack.c.l.b16 %v209
      %v608 = vunpack.c.l.b16 %v210
      %v609 = vunpack.c.l.b16 %v211
      %v610 = vunpack.c.l.b16 %v212
      %v611 = vunpack.c.l.b16 %v213
      %v612 = vunpack.c.l.b16 %v214
      %v613 = vunpack.c.l.b16 %v215
      %v614 = vunpack.c.l.b16 %v216
      %v615 = vunpack.c.l.b16 %v217
      %v616 = vunpack.c.l.b16 %v218
      %v617 = vunpack.c.l.b16 %v219
      %v618 = vunpack.c.l.b16 %v220
      %v619 = vunpack.c.l.b16 %v221
      %v620 = vunpack.c.l.b16 %v222
      %v621 = vunpack.c.l.b16 %v223
      %v622 = vunpack.c.l.b16 %v224
      %v623 = vunpack.c.l.b16 %v225
      %v624 = vunpack.c.l.b16 %v226
      %v625 = vpack.c.b16 %v578, %v577
      %v626 = vpack.c.b16 %v580, %v579
      %v627 = vpack.c.b16 %v582, %v581
      %v628 = vpack.c.b16 %v584, %v583
      %v629 = vpack.c.b16 %v586, %v585
      %v630 = vpack.c.b16 %v588, %v587
      %v631 = vpack.c.b16 %v590, %v589
      %v632 = vpack.c.b16 %v592, %v591
      %v633 = vpack.c.b16 %v594, %v593
      %v634 = vpack.c.b16 %v596, %v595
      %v635 = vpack.c.b16 %v598, %v597
      %v636 = vpack.c.b16 %v600, %v599
      %v637 = vpack.c.b16 %v602, %v601
      %v638 = vpack.c.b16 %v604, %v603
      %v639 = vpack.c.b16 %v606, %v605
      %v640 = vpack.c.b16 %v608, %v607
      %v641 = vpack.c.b16 %v610, %v609
      %v642 = vpack.c.b16 %v612, %v611
      %v643 = vpack.c.b16 %v614, %v613
      %v644 = vpack.c.b16 %v616, %v615
      %v645 = vpack.c.b16 %v618, %v617
      %v646 = vpack.c.b16 %v620, %v619
      %v647 = vpack.c.b16 %v622, %v621
      %v648 = vpack.c.b16 %v624, %v623
      %673 = vmatpush.bf16.msra.mxu0 %v632
      %674 = vmatpush.bf16.msra.mxu0 %v631
      %675 = vmatpush.bf16.msra.mxu0 %v630
      %676 = vmatpush.bf16.msra.mxu0 %v629
      %677 = vmatpush.bf16.msra.mxu0 %v628
      %678 = vmatpush.bf16.msra.mxu0 %v627
      %679 = vmatpush.bf16.msra.mxu0 %v626
      %680 = vmatpush.bf16.msra.mxu0 %v625
      %681 = vmatmul.bf16.gmra.mxu0 %v523
      %v682 = vpop.f32.mrf.mxu0
      %v683 = vadd.f32 %v504, %v682
      %v684 = vpop.f32.mrf.mxu0
      %v685 = vadd.f32 %v506, %v684
      %686 = vmatmul.bf16.gmra.mxu0 %v300
      %v687 = vpop.f32.mrf.mxu0
      %v688 = vadd.f32 %v509, %v687
      %v689 = vpop.f32.mrf.mxu0
      %v690 = vadd.f32 %v511, %v689
      %691 = vdwg.mxu0
      %692 = vmatpush.bf16.msra.mxu0 %v640
      %693 = vmatpush.bf16.msra.mxu0 %v639
      %694 = vmatpush.bf16.msra.mxu0 %v638
      %695 = vmatpush.bf16.msra.mxu0 %v637
      %696 = vmatpush.bf16.msra.mxu0 %v636
      %697 = vmatpush.bf16.msra.mxu0 %v635
      %698 = vmatpush.bf16.msra.mxu0 %v634
      %699 = vmatpush.bf16.msra.mxu0 %v633
      %700 = vmatmul.bf16.gmra.mxu0 %v524
      %v701 = vpop.f32.mrf.mxu0
      %v702 = vadd.f32 %v683, %v701
      %v703 = vpop.f32.mrf.mxu0
      %v704 = vadd.f32 %v685, %v703
      %705 = vmatmul.bf16.gmra.mxu0 %v301
      %v706 = vpop.f32.mrf.mxu0
      %v707 = vadd.f32 %v688, %v706
      %v708 = vpop.f32.mrf.mxu0
      %v709 = vadd.f32 %v690, %v708
      %710 = vdwg.mxu0
      %711 = vmatpush.bf16.msra.mxu0 %v648
      %712 = vmatpush.bf16.msra.mxu0 %v647
      %713 = vmatpush.bf16.msra.mxu0 %v646
      %714 = vmatpush.bf16.msra.mxu0 %v645
      %715 = vmatpush.bf16.msra.mxu0 %v644
      %716 = vmatpush.bf16.msra.mxu0 %v643
      %717 = vmatpush.bf16.msra.mxu0 %v642
      %718 = vmatpush.bf16.msra.mxu0 %v641
      %719 = vmatmul.bf16.gmra.mxu0 %v525
      %v720 = vpop.f32.mrf.mxu0
      %v721 = vadd.f32 %v702, %v720
      %v722 = vpop.f32.mrf.mxu0
      %v723 = vadd.f32 %v704, %v722
      %724 = vmatmul.bf16.gmra.mxu0 %v302
      %v725 = vpop.f32.mrf.mxu0
      %v726 = vadd.f32 %v707, %v725
      %v727 = vpop.f32.mrf.mxu0
      %v728 = vadd.f32 %v709, %v727
      %729 = vdwg.mxu0
      %v730 = vld [vmem:[%s165 + $0x30] sm:$0xff]
      %v731 = vld [vmem:[%s165 + $0x38] sm:$0xf]
      %v732 = vld [vmem:[%s165 + $0x3c] sm:$0xff]
      %v733 = vld [vmem:[%s165 + $0x44] sm:$0xf]
      %v734 = vld [vmem:[%s165 + $0x48] sm:$0xff]
      %v735 = vld [vmem:[%s165 + $0x50] sm:$0xf]
      %v736 = vld [vmem:[%s165 + $0x54] sm:$0xff]
      %v737 = vld [vmem:[%s165 + $0x5c] sm:$0xf]
      %s738 = scalar_lea.vmem %s1, 384
      %v739 = vld [vmem:[%s738] sm:$0xf]
      %v740 = vld [vmem:[%s738 + $0x4] sm:$0xf]
      %v741 = vld [vmem:[%s738 + $0x8] sm:$0xf]
      %v742 = vld [vmem:[%s738 + $0xc] sm:$0xf]
      %v743 = vld [vmem:[%s738 + $0x10] sm:$0xf]
      %v744 = vld [vmem:[%s738 + $0x14] sm:$0xf]
      %v745 = vld [vmem:[%s738 + $0x18] sm:$0xf]
      %v746 = vld [vmem:[%s738 + $0x1c] sm:$0xf]
      %v747 = vld [vmem:[%s738 + $0x20] sm:$0xf]
      %v748 = vld [vmem:[%s738 + $0x24] sm:$0xf]
      %v749 = vld [vmem:[%s738 + $0x28] sm:$0xf]
      %v750 = vld [vmem:[%s738 + $0x2c] sm:$0xf]
      %v751 = vld [vmem:[%s738 + $0x30] sm:$0xf]
      %v752 = vld [vmem:[%s738 + $0x34] sm:$0xf]
      %v753 = vld [vmem:[%s738 + $0x38] sm:$0xf]
      %v754 = vld [vmem:[%s738 + $0x3c] sm:$0xf]
      %v755 = vld [vmem:[%s738 + $0x40] sm:$0xf]
      %v756 = vld [vmem:[%s738 + $0x44] sm:$0xf]
      %v757 = vld [vmem:[%s738 + $0x48] sm:$0xf]
      %v758 = vld [vmem:[%s738 + $0x4c] sm:$0xf]
      %v759 = vld [vmem:[%s738 + $0x50] sm:$0xf]
      %v760 = vld [vmem:[%s738 + $0x54] sm:$0xf]
      %v761 = vld [vmem:[%s738 + $0x58] sm:$0xf]
      %v762 = vld [vmem:[%s738 + $0x5c] sm:$0xf]
      %v763 = vld [vmem:[%s738 + $0x60] sm:$0xf]
      %v764 = vld [vmem:[%s738 + $0x64] sm:$0xf]
      %v765 = vld [vmem:[%s738 + $0x68] sm:$0xf]
      %v766 = vld [vmem:[%s738 + $0x6c] sm:$0xf]
      %v767 = vld [vmem:[%s738 + $0x70] sm:$0xf]
      %v768 = vld [vmem:[%s738 + $0x74] sm:$0xf]
      %v769 = vld [vmem:[%s738 + $0x78] sm:$0xf]
      %v770 = vld [vmem:[%s738 + $0x7c] sm:$0xf]
      %v771 = vld [vmem:[%s738 + $0x80] sm:$0xf]
      %v772 = vld [vmem:[%s738 + $0x84] sm:$0xf]
      %v773 = vld [vmem:[%s738 + $0x88] sm:$0xf]
      %v774 = vld [vmem:[%s738 + $0x8c] sm:$0xf]
      %v775 = vld [vmem:[%s738 + $0x90] sm:$0xf]
      %v776 = vld [vmem:[%s738 + $0x94] sm:$0xf]
      %v777 = vld [vmem:[%s738 + $0x98] sm:$0xf]
      %v778 = vld [vmem:[%s738 + $0x9c] sm:$0xf]
      %v779 = vld [vmem:[%s738 + $0xa0] sm:$0xf]
      %v780 = vld [vmem:[%s738 + $0xa4] sm:$0xf]
      %v781 = vld [vmem:[%s738 + $0xa8] sm:$0xf]
      %v782 = vld [vmem:[%s738 + $0xac] sm:$0xf]
      %v783 = vld [vmem:[%s738 + $0xb0] sm:$0xf]
      %v784 = vld [vmem:[%s738 + $0xb4] sm:$0xf]
      %v785 = vld [vmem:[%s738 + $0xb8] sm:$0xf]
      %v786 = vld [vmem:[%s738 + $0xbc] sm:$0xf]
      %v795 = vunpack.c.l.b16 %v730
      %v796 = vunpack.c.h.b16 %v730
      %v797 = vunpack.c.l.b16 %v731
      %v798 = vunpack.c.l.b16 %v732
      %v799 = vunpack.c.h.b16 %v732
      %v800 = vunpack.c.l.b16 %v733
      %v801 = vunpack.c.l.b16 %v734
      %v802 = vunpack.c.h.b16 %v734
      %v803 = vunpack.c.l.b16 %v735
      %v804 = vunpack.c.l.b16 %v736
      %v805 = vunpack.c.h.b16 %v736
      %v806 = vunpack.c.l.b16 %v737
      %v807 = vpack.c.b16 %v798, %v795
      %v808 = vpack.c.b16 %v799, %v796
      %v809 = vpack.c.b16 %v800, %v797
      %v810 = vpack.c.b16 %v804, %v801
      %v811 = vpack.c.b16 %v805, %v802
      %v812 = vpack.c.b16 %v806, %v803
      %v867 = vunpack.c.l.b16 %v739
      %v868 = vunpack.c.l.b16 %v740
      %v869 = vunpack.c.l.b16 %v741
      %v870 = vunpack.c.l.b16 %v742
      %v871 = vunpack.c.l.b16 %v743
      %v872 = vunpack.c.l.b16 %v744
      %v873 = vunpack.c.l.b16 %v745
      %v874 = vunpack.c.l.b16 %v746
      %v875 = vunpack.c.l.b16 %v747
      %v876 = vunpack.c.l.b16 %v748
      %v877 = vunpack.c.l.b16 %v749
      %v878 = vunpack.c.l.b16 %v750
      %v879 = vunpack.c.l.b16 %v751
      %v880 = vunpack.c.l.b16 %v752
      %v881 = vunpack.c.l.b16 %v753
      %v882 = vunpack.c.l.b16 %v754
      %v883 = vunpack.c.l.b16 %v755
      %v884 = vunpack.c.l.b16 %v756
      %v885 = vunpack.c.l.b16 %v757
      %v886 = vunpack.c.l.b16 %v758
      %v887 = vunpack.c.l.b16 %v759
      %v888 = vunpack.c.l.b16 %v760
      %v889 = vunpack.c.l.b16 %v761
      %v890 = vunpack.c.l.b16 %v762
      %v891 = vunpack.c.l.b16 %v763
      %v892 = vunpack.c.l.b16 %v764
      %v893 = vunpack.c.l.b16 %v765
      %v894 = vunpack.c.l.b16 %v766
      %v895 = vunpack.c.l.b16 %v767
      %v896 = vunpack.c.l.b16 %v768
      %v897 = vunpack.c.l.b16 %v769
      %v898 = vunpack.c.l.b16 %v770
      %v899 = vunpack.c.l.b16 %v771
      %v900 = vunpack.c.l.b16 %v772
      %v901 = vunpack.c.l.b16 %v773
      %v902 = vunpack.c.l.b16 %v774
      %v903 = vunpack.c.l.b16 %v775
      %v904 = vunpack.c.l.b16 %v776
      %v905 = vunpack.c.l.b16 %v777
      %v906 = vunpack.c.l.b16 %v778
      %v907 = vunpack.c.l.b16 %v779
      %v908 = vunpack.c.l.b16 %v780
      %v909 = vunpack.c.l.b16 %v781
      %v910 = vunpack.c.l.b16 %v782
      %v911 = vunpack.c.l.b16 %v783
      %v912 = vunpack.c.l.b16 %v784
      %v913 = vunpack.c.l.b16 %v785
      %v914 = vunpack.c.l.b16 %v786
      %v915 = vpack.c.b16 %v868, %v867
      %v916 = vpack.c.b16 %v870, %v869
      %v917 = vpack.c.b16 %v872, %v871
      %v918 = vpack.c.b16 %v874, %v873
      %v919 = vpack.c.b16 %v876, %v875
      %v920 = vpack.c.b16 %v878, %v877
      %v921 = vpack.c.b16 %v880, %v879
      %v922 = vpack.c.b16 %v882, %v881
      %v923 = vpack.c.b16 %v884, %v883
      %v924 = vpack.c.b16 %v886, %v885
      %v925 = vpack.c.b16 %v888, %v887
      %v926 = vpack.c.b16 %v890, %v889
      %v927 = vpack.c.b16 %v892, %v891
      %v928 = vpack.c.b16 %v894, %v893
      %v929 = vpack.c.b16 %v896, %v895
      %v930 = vpack.c.b16 %v898, %v897
      %v931 = vpack.c.b16 %v900, %v899
      %v932 = vpack.c.b16 %v902, %v901
      %v933 = vpack.c.b16 %v904, %v903
      %v934 = vpack.c.b16 %v906, %v905
      %v935 = vpack.c.b16 %v908, %v907
      %v936 = vpack.c.b16 %v910, %v909
      %v937 = vpack.c.b16 %v912, %v911
      %v938 = vpack.c.b16 %v914, %v913
      %963 = vmatpush.bf16.msra.mxu0 %v922
      %964 = vmatpush.bf16.msra.mxu0 %v921
      %965 = vmatpush.bf16.msra.mxu0 %v920
      %966 = vmatpush.bf16.msra.mxu0 %v919
      %967 = vmatpush.bf16.msra.mxu0 %v918
      %968 = vmatpush.bf16.msra.mxu0 %v917
      %969 = vmatpush.bf16.msra.mxu0 %v916
      %970 = vmatpush.bf16.msra.mxu0 %v915
      %971 = vmatmul.bf16.gmra.mxu0 %v807
      %v972 = vpop.f32.mrf.mxu0
      %v973 = vadd.f32 0.0, %v972
      %v974 = vpop.f32.mrf.mxu0
      %v975 = vadd.f32 0.0, %v974
      %976 = vmatmul.bf16.gmra.mxu0 %v810
      %v977 = vpop.f32.mrf.mxu0
      %v978 = vadd.f32 0.0, %v977
      %v979 = vpop.f32.mrf.mxu0
      %v980 = vadd.f32 0.0, %v979
      %981 = vdwg.mxu0
      %982 = vmatpush.bf16.msra.mxu0 %v930
      %983 = vmatpush.bf16.msra.mxu0 %v929
      %984 = vmatpush.bf16.msra.mxu0 %v928
      %985 = vmatpush.bf16.msra.mxu0 %v927
      %986 = vmatpush.bf16.msra.mxu0 %v926
      %987 = vmatpush.bf16.msra.mxu0 %v925
      %988 = vmatpush.bf16.msra.mxu0 %v924
      %989 = vmatpush.bf16.msra.mxu0 %v923
      %990 = vmatmul.bf16.gmra.mxu0 %v808
      %v991 = vpop.f32.mrf.mxu0
      %v992 = vadd.f32 %v973, %v991
      %v993 = vpop.f32.mrf.mxu0
      %v994 = vadd.f32 %v975, %v993
      %995 = vmatmul.bf16.gmra.mxu0 %v811
      %v996 = vpop.f32.mrf.mxu0
      %v997 = vadd.f32 %v978, %v996
      %v998 = vpop.f32.mrf.mxu0
      %v999 = vadd.f32 %v980, %v998
      %1000 = vdwg.mxu0
      %1001 = vmatpush.bf16.msra.mxu0 %v938
      %1002 = vmatpush.bf16.msra.mxu0 %v937
      %1003 = vmatpush.bf16.msra.mxu0 %v936
      %1004 = vmatpush.bf16.msra.mxu0 %v935
      %1005 = vmatpush.bf16.msra.mxu0 %v934
      %1006 = vmatpush.bf16.msra.mxu0 %v933
      %1007 = vmatpush.bf16.msra.mxu0 %v932
      %1008 = vmatpush.bf16.msra.mxu0 %v931
      %1009 = vmatmul.bf16.gmra.mxu0 %v809
      %v1010 = vpop.f32.mrf.mxu0
      %v1011 = vadd.f32 %v992, %v1010
      %v1012 = vpop.f32.mrf.mxu0
      %v1013 = vadd.f32 %v994, %v1012
      %1014 = vmatmul.bf16.gmra.mxu0 %v812
      %v1015 = vpop.f32.mrf.mxu0
      %v1016 = vadd.f32 %v997, %v1015
      %v1017 = vpop.f32.mrf.mxu0
      %v1018 = vadd.f32 %v999, %v1017
      %1019 = vdwg.mxu0
      %v1020 = vadd.f32 %v721, %v1011
      %v1021 = vadd.f32 %v723, %v1013
      %v1022 = vadd.f32 %v726, %v1016
      %v1023 = vadd.f32 %v728, %v1018
      %v1024 = vld [vmem:[%s2] sm:$0x1]
      %v1026 = vperm.slane %v1024, 0
      %v1028 = vadd.f32 %v1020, %v1026
      %v1029 = vadd.f32 %v1021, %v1026
      %v1030 = vadd.f32 %v1022, %v1026
      %v1031 = vadd.f32 %v1023, %v1026
      %v1032 = vpack.c.bf16 %v1028, %v1028
      %v1033 = vpack.c.bf16 %v1029, %v1029
      %v1034 = vpack.c.bf16 %v1030, %v1030
      %v1035 = vpack.c.bf16 %v1031, %v1031
      %1036 = vst [vmem:[%s170] sm:$0xf] %v1032
      %1037 = vst [vmem:[%s170 + $0x4] sm:$0xf] %v1033
      %1038 = vst [vmem:[%s170 + $0x8] sm:$0xf] %v1034
      %1039 = vst [vmem:[%s170 + $0xc] sm:$0xf] %v1035
      %p1040 = scmp.lt.s32.totalorder %s14, 1
      %s1041 = scalar_select %p1040, %s14, 1
      %s1042 = smul.addr %s1041, 4
      %s1043 = smul.addr %s1042, 4
      %s1044 = scalar_lea.vmem %s3, %s1043
      // Predicated region
      $region33: #{detector_backbone_with_fpn_forward.13} parent=31 // pred_check
        %p1045 = pneg %p100
      $region34: #{detector_backbone_with_fpn_forward.13} parent=31 // pred_check_branch
        %1047 = sbr.rel (%p1045) target = $region36
      $region35: #{detector_backbone_with_fpn_forward.13} parent=31 // pred_region
        _
      $region36: #{detector_backbone_with_fpn_forward.13} parent=31 // pred_fallthru
        _
    $region32: #{detector_backbone_with_fpn_forward.13} parent=5 // pred_fallthru
      _
    %p1048 = scmp.le.s32.totalorder 2, %s9
    // Predicated region
    $region37: #{detector_backbone_with_fpn_forward.13} parent=5 // pred_check
      %p1049 = pneg %p1048
    $region38: #{detector_backbone_with_fpn_forward.13} parent=5 // pred_check_branch
      %1051 = sbr.rel (%p1049) target = $region40
    $region39: #{detector_backbone_with_fpn_forward.13} parent=5 // pred_region
      %s1052 = ssub.s32 %s9, 2
      // Predicated region
      $region41: #{detector_backbone_with_fpn_forward.13} parent=39 // pred_check
        %p1053 = pneg %p106
      $region42: #{detector_backbone_with_fpn_forward.13} parent=39 // pred_check_branch
        %1055 = sbr.rel (%p1053) target = $region44
      $region43: #{detector_backbone_with_fpn_forward.13} parent=39 // pred_region
        %p1056 = scmp.lt.s32.totalorder %s15, 1
        %s1057 = scalar_select %p1056, %s15, 1
        %s1058 = smul.addr %s1057, 4
        %s1059 = smul.addr %s1058, 4
        %s1060 = scalar_lea.vmem %s3, %s1059
      $region44: #{detector_backbone_with_fpn_forward.13} parent=39 // pred_fallthru
        _
    $region40: #{detector_backbone_with_fpn_forward.13} parent=5 // pred_fallthru
      _
  $region6: #{detector_backbone_with_fpn_forward.13} parent=0 // loop_footer
    %s13 = sadd.s32 1, %s9
  $region7: #{detector_backbone_with_fpn_forward.13} parent=0 // loop_footer_branch
    %8 = sbr.rel target = $region3
  $region8: #{detector_backbone_with_fpn_forward.13} parent=0 // loop_exit
    _

// kernel: detector_backbone_with_fpn_forward.11
$region0: #{detector_backbone_with_fpn_forward.11}
  #allocation0 [shape = 'u32[]', space=smem, size = 0x4, offset = 0x4, fixed_abs, tag = 'smem constant byte address 0x4 - core index']
  #allocation1 [shape = 'u32[72,128]{1,0:T(1,128)}', space=vmem, size = 0x9000, scoped, tag = 'internal scratch']
  %s0 = inlined_call_operand.vmem [shape: bf16[16,3072], index: 0, kind: input, shape index: {}]
  %s1 = inlined_call_operand.vmem [shape: bf16[3072,512], index: 1, kind: input, shape index: {}]
  %s2 = inlined_call_operand.vmem [shape: f32[1,512], index: 2, kind: input, shape index: {}]
  %s3 = inlined_call_operand.vmem [shape: bf16[16,512], index: 3, kind: output, shape index: {}]
  %s4 = sld [smem:[#allocation0]]
  $region22: #{detector_backbone_with_fpn_forward.11} parent=0
    _
  %s6 = ssub.s32 1, %s4
  %s7 = scalar_select 0, %s6, %s4
  // Predicated region
  $region2: #{detector_backbone_with_fpn_forward.11} parent=0 // pred_check
    _
  $region3: #{detector_backbone_with_fpn_forward.11} parent=0 // pred_check_branch
    %9 = sbr.rel (0) target = $region5
  $region4: #{detector_backbone_with_fpn_forward.11} parent=0 // pred_region
    _
  $region5: #{detector_backbone_with_fpn_forward.11} parent=0 // pred_fallthru
    _
  // Predicated region
  $region6: #{detector_backbone_with_fpn_forward.11} parent=0 // pred_check
    _
  $region7: #{detector_backbone_with_fpn_forward.11} parent=0 // pred_check_branch
    %11 = sbr.rel (0) target = $region9
  $region8: #{detector_backbone_with_fpn_forward.11} parent=0 // pred_region
    _
  $region9: #{detector_backbone_with_fpn_forward.11} parent=0 // pred_fallthru
    _
  // Predicated region
  $region10: #{detector_backbone_with_fpn_forward.11} parent=0 // pred_check
    _
  $region11: #{detector_backbone_with_fpn_forward.11} parent=0 // pred_check_branch
    %13 = sbr.rel (0) target = $region13
  $region12: #{detector_backbone_with_fpn_forward.11} parent=0 // pred_region
    _
  $region13: #{detector_backbone_with_fpn_forward.11} parent=0 // pred_fallthru
    _
  %v14 = vld [vmem:[%s0] sm:$0xff]
  %v15 = vld [vmem:[%s0 + $0x8] sm:$0xff]
  %v16 = vld [vmem:[%s0 + $0x10] sm:$0xff]
  %v17 = vld [vmem:[%s0 + $0x18] sm:$0xff]
  %v18 = vld [vmem:[%s0 + $0x20] sm:$0xff]
  %v19 = vld [vmem:[%s0 + $0x28] sm:$0xff]
  %v20 = vld [vmem:[%s0 + $0x30] sm:$0xff]
  %v21 = vld [vmem:[%s0 + $0x38] sm:$0xff]
  %v22 = vld [vmem:[%s0 + $0x40] sm:$0xff]
  %v23 = vld [vmem:[%s0 + $0x48] sm:$0xff]
  %v24 = vld [vmem:[%s0 + $0x50] sm:$0xff]
  %v25 = vld [vmem:[%s0 + $0x58] sm:$0xff]
  %v26 = vld [vmem:[%s0 + $0x60] sm:$0xff]
  %v27 = vld [vmem:[%s0 + $0x68] sm:$0xff]
  %v28 = vld [vmem:[%s0 + $0x70] sm:$0xff]
  %v29 = vld [vmem:[%s0 + $0x78] sm:$0xff]
  %v30 = vld [vmem:[%s0 + $0x80] sm:$0xff]
  %v31 = vld [vmem:[%s0 + $0x88] sm:$0xff]
  %v32 = vld [vmem:[%s0 + $0x90] sm:$0xff]
  %v33 = vld [vmem:[%s0 + $0x98] sm:$0xff]
  %v34 = vld [vmem:[%s0 + $0xa0] sm:$0xff]
  %v35 = vld [vmem:[%s0 + $0xa8] sm:$0xff]
  %v36 = vld [vmem:[%s0 + $0xb0] sm:$0xff]
  %v37 = vld [vmem:[%s0 + $0xb8] sm:$0xff]
  %v38 = vld [vmem:[%s1] sm:$0xff]
  %v39 = vld [vmem:[%s1 + $0x8] sm:$0xff]
  %v40 = vld [vmem:[%s1 + $0x10] sm:$0xff]
  %v41 = vld [vmem:[%s1 + $0x18] sm:$0xff]
  %v42 = vld [vmem:[%s1 + $0x20] sm:$0xff]
  %v43 = vld [vmem:[%s1 + $0x28] sm:$0xff]
  %v44 = vld [vmem:[%s1 + $0x30] sm:$0xff]
  %v45 = vld [vmem:[%s1 + $0x38] sm:$0xff]
  %v46 = vld [vmem:[%s1 + $0x40] sm:$0xff]
  %v47 = vld [vmem:[%s1 + $0x48] sm:$0xff]
  %v48 = vld [vmem:[%s1 + $0x50] sm:$0xff]
  %v49 = vld [vmem:[%s1 + $0x58] sm:$0xff]
  %v50 = vld [vmem:[%s1 + $0x60] sm:$0xff]
  %v51 = vld [vmem:[%s1 + $0x68] sm:$0xff]
  %v52 = vld [vmem:[%s1 + $0x70] sm:$0xff]
  %v53 = vld [vmem:[%s1 + $0x78] sm:$0xff]
  %v54 = vld [vmem:[%s1 + $0x80] sm:$0xff]
  %v55 = vld [vmem:[%s1 + $0x88] sm:$0xff]
  %v56 = vld [vmem:[%s1 + $0x90] sm:$0xff]
  %v57 = vld [vmem:[%s1 + $0x98] sm:$0xff]
  %v58 = vld [vmem:[%s1 + $0xa0] sm:$0xff]
  %v59 = vld [vmem:[%s1 + $0xa8] sm:$0xff]
  %v60 = vld [vmem:[%s1 + $0xb0] sm:$0xff]
  %v61 = vld [vmem:[%s1 + $0xb8] sm:$0xff]
  %v62 = vld [vmem:[%s1 + $0xc0] sm:$0xff]
  %v63 = vld [vmem:[%s1 + $0xc8] sm:$0xff]
  %v64 = vld [vmem:[%s1 + $0xd0] sm:$0xff]
  %v65 = vld [vmem:[%s1 + $0xd8] sm:$0xff]
  %v66 = vld [vmem:[%s1 + $0xe0] sm:$0xff]
  %v67 = vld [vmem:[%s1 + $0xe8] sm:$0xff]
  %v68 = vld [vmem:[%s1 + $0xf0] sm:$0xff]
  %v69 = vld [vmem:[%s1 + $0xf8] sm:$0xff]
  %v70 = vld [vmem:[%s1 + $0x100] sm:$0xff]
  %v71 = vld [vmem:[%s1 + $0x108] sm:$0xff]
  %v72 = vld [vmem:[%s1 + $0x110] sm:$0xff]
  %v73 = vld [vmem:[%s1 + $0x118] sm:$0xff]
  %v74 = vld [vmem:[%s1 + $0x120] sm:$0xff]
  %v75 = vld [vmem:[%s1 + $0x128] sm:$0xff]
  %v76 = vld [vmem:[%s1 + $0x130] sm:$0xff]
  %v77 = vld [vmem:[%s1 + $0x138] sm:$0xff]
  %v78 = vld [vmem:[%s1 + $0x140] sm:$0xff]
  %v79 = vld [vmem:[%s1 + $0x148] sm:$0xff]
  %v80 = vld [vmem:[%s1 + $0x150] sm:$0xff]
  %v81 = vld [vmem:[%s1 + $0x158] sm:$0xff]
  %v82 = vld [vmem:[%s1 + $0x160] sm:$0xff]
  %v83 = vld [vmem:[%s1 + $0x168] sm:$0xff]
  %v84 = vld [vmem:[%s1 + $0x170] sm:$0xff]
  %v85 = vld [vmem:[%s1 + $0x178] sm:$0xff]
  %v86 = vld [vmem:[%s1 + $0x180] sm:$0xff]
  %v87 = vld [vmem:[%s1 + $0x188] sm:$0xff]
  %v88 = vld [vmem:[%s1 + $0x190] sm:$0xff]
  %v89 = vld [vmem:[%s1 + $0x198] sm:$0xff]
  %v90 = vld [vmem:[%s1 + $0x1a0] sm:$0xff]
  %v91 = vld [vmem:[%s1 + $0x1a8] sm:$0xff]
  %v92 = vld [vmem:[%s1 + $0x1b0] sm:$0xff]
  %v93 = vld [vmem:[%s1 + $0x1b8] sm:$0xff]
  %v94 = vld [vmem:[%s1 + $0x1c0] sm:$0xff]
  %v95 = vld [vmem:[%s1 + $0x1c8] sm:$0xff]
  %v96 = vld [vmem:[%s1 + $0x1d0] sm:$0xff]
  %v97 = vld [vmem:[%s1 + $0x1d8] sm:$0xff]
  %v98 = vld [vmem:[%s1 + $0x1e0] sm:$0xff]
  %v99 = vld [vmem:[%s1 + $0x1e8] sm:$0xff]
  %v100 = vld [vmem:[%s1 + $0x1f0] sm:$0xff]
  %v101 = vld [vmem:[%s1 + $0x1f8] sm:$0xff]
  %v102 = vld [vmem:[%s1 + $0x200] sm:$0xff]
  %v103 = vld [vmem:[%s1 + $0x208] sm:$0xff]
  %v104 = vld [vmem:[%s1 + $0x210] sm:$0xff]
  %v105 = vld [vmem:[%s1 + $0x218] sm:$0xff]
  %v106 = vld [vmem:[%s1 + $0x220] sm:$0xff]
  %v107 = vld [vmem:[%s1 + $0x228] sm:$0xff]
  %v108 = vld [vmem:[%s1 + $0x230] sm:$0xff]
  %v109 = vld [vmem:[%s1 + $0x238] sm:$0xff]
  %v110 = vld [vmem:[%s1 + $0x240] sm:$0xff]
  %v111 = vld [vmem:[%s1 + $0x248] sm:$0xff]
  %v112 = vld [vmem:[%s1 + $0x250] sm:$0xff]
  %v113 = vld [vmem:[%s1 + $0x258] sm:$0xff]
  %v114 = vld [vmem:[%s1 + $0x260] sm:$0xff]
  %v115 = vld [vmem:[%s1 + $0x268] sm:$0xff]
  %v116 = vld [vmem:[%s1 + $0x270] sm:$0xff]
  %v117 = vld [vmem:[%s1 + $0x278] sm:$0xff]
  %v118 = vld [vmem:[%s1 + $0x280] sm:$0xff]
  %v119 = vld [vmem:[%s1 + $0x288] sm:$0xff]
  %v120 = vld [vmem:[%s1 + $0x290] sm:$0xff]
  %v121 = vld [vmem:[%s1 + $0x298] sm:$0xff]
  %v122 = vld [vmem:[%s1 + $0x2a0] sm:$0xff]
  %v123 = vld [vmem:[%s1 + $0x2a8] sm:$0xff]
  %v124 = vld [vmem:[%s1 + $0x2b0] sm:$0xff]
  %v125 = vld [vmem:[%s1 + $0x2b8] sm:$0xff]
  %v126 = vld [vmem:[%s1 + $0x2c0] sm:$0xff]
  %v127 = vld [vmem:[%s1 + $0x2c8] sm:$0xff]
  %v128 = vld [vmem:[%s1 + $0x2d0] sm:$0xff]
  %v129 = vld [vmem:[%s1 + $0x2d8] sm:$0xff]
  %v130 = vld [vmem:[%s1 + $0x2e0] sm:$0xff]
  %v131 = vld [vmem:[%s1 + $0x2e8] sm:$0xff]
  %v132 = vld [vmem:[%s1 + $0x2f0] sm:$0xff]
  %v133 = vld [vmem:[%s1 + $0x2f8] sm:$0xff]
  %v134 = vld [vmem:[%s1 + $0x300] sm:$0xff]
  %v135 = vld [vmem:[%s1 + $0x308] sm:$0xff]
  %v136 = vld [vmem:[%s1 + $0x310] sm:$0xff]
  %v137 = vld [vmem:[%s1 + $0x318] sm:$0xff]
  %v138 = vld [vmem:[%s1 + $0x320] sm:$0xff]
  %v139 = vld [vmem:[%s1 + $0x328] sm:$0xff]
  %v140 = vld [vmem:[%s1 + $0x330] sm:$0xff]
  %v141 = vld [vmem:[%s1 + $0x338] sm:$0xff]
  %v142 = vld [vmem:[%s1 + $0x340] sm:$0xff]
  %v143 = vld [vmem:[%s1 + $0x348] sm:$0xff]
  %v144 = vld [vmem:[%s1 + $0x350] sm:$0xff]
  %v145 = vld [vmem:[%s1 + $0x358] sm:$0xff]
  %v146 = vld [vmem:[%s1 + $0x360] sm:$0xff]
  %v147 = vld [vmem:[%s1 + $0x368] sm:$0xff]
  %v148 = vld [vmem:[%s1 + $0x370] sm:$0xff]
  %v149 = vld [vmem:[%s1 + $0x378] sm:$0xff]
  %v150 = vld [vmem:[%s1 + $0x380] sm:$0xff]
  %v151 = vld [vmem:[%s1 + $0x388] sm:$0xff]
  %v152 = vld [vmem:[%s1 + $0x390] sm:$0xff]
  %v153 = vld [vmem:[%s1 + $0x398] sm:$0xff]
  %v154 = vld [vmem:[%s1 + $0x3a0] sm:$0xff]
  %v155 = vld [vmem:[%s1 + $0x3a8] sm:$0xff]
  %v156 = vld [vmem:[%s1 + $0x3b0] sm:$0xff]
  %v157 = vld [vmem:[%s1 + $0x3b8] sm:$0xff]
  %v158 = vld [vmem:[%s1 + $0x3c0] sm:$0xff]
  %v159 = vld [vmem:[%s1 + $0x3c8] sm:$0xff]
  %v160 = vld [vmem:[%s1 + $0x3d0] sm:$0xff]
  %v161 = vld [vmem:[%s1 + $0x3d8] sm:$0xff]
  %v162 = vld [vmem:[%s1 + $0x3e0] sm:$0xff]
  %v163 = vld [vmem:[%s1 + $0x3e8] sm:$0xff]
  %v164 = vld [vmem:[%s1 + $0x3f0] sm:$0xff]
  %v165 = vld [vmem:[%s1 + $0x3f8] sm:$0xff]
  %v166 = vld [vmem:[%s1 + $0x400] sm:$0xff]
  %v167 = vld [vmem:[%s1 + $0x408] sm:$0xff]
  %v168 = vld [vmem:[%s1 + $0x410] sm:$0xff]
  %v169 = vld [vmem:[%s1 + $0x418] sm:$0xff]
  %v170 = vld [vmem:[%s1 + $0x420] sm:$0xff]
  %v171 = vld [vmem:[%s1 + $0x428] sm:$0xff]
  %v172 = vld [vmem:[%s1 + $0x430] sm:$0xff]
  %v173 = vld [vmem:[%s1 + $0x438] sm:$0xff]
  %v174 = vld [vmem:[%s1 + $0x440] sm:$0xff]
  %v175 = vld [vmem:[%s1 + $0x448] sm:$0xff]
  %v176 = vld [vmem:[%s1 + $0x450] sm:$0xff]
  %v177 = vld [vmem:[%s1 + $0x458] sm:$0xff]
  %v178 = vld [vmem:[%s1 + $0x460] sm:$0xff]
  %v179 = vld [vmem:[%s1 + $0x468] sm:$0xff]
  %v180 = vld [vmem:[%s1 + $0x470] sm:$0xff]
  %v181 = vld [vmem:[%s1 + $0x478] sm:$0xff]
  %v182 = vld [vmem:[%s1 + $0x480] sm:$0xff]
  %v183 = vld [vmem:[%s1 + $0x488] sm:$0xff]
  %v184 = vld [vmem:[%s1 + $0x490] sm:$0xff]
  %v185 = vld [vmem:[%s1 + $0x498] sm:$0xff]
  %v186 = vld [vmem:[%s1 + $0x4a0] sm:$0xff]
  %v187 = vld [vmem:[%s1 + $0x4a8] sm:$0xff]
  %v188 = vld [vmem:[%s1 + $0x4b0] sm:$0xff]
  %v189 = vld [vmem:[%s1 + $0x4b8] sm:$0xff]
  %v190 = vld [vmem:[%s1 + $0x4c0] sm:$0xff]
  %v191 = vld [vmem:[%s1 + $0x4c8] sm:$0xff]
  %v192 = vld [vmem:[%s1 + $0x4d0] sm:$0xff]
  %v193 = vld [vmem:[%s1 + $0x4d8] sm:$0xff]
  %v194 = vld [vmem:[%s1 + $0x4e0] sm:$0xff]
  %v195 = vld [vmem:[%s1 + $0x4e8] sm:$0xff]
  %v196 = vld [vmem:[%s1 + $0x4f0] sm:$0xff]
  %v197 = vld [vmem:[%s1 + $0x4f8] sm:$0xff]
  %v198 = vld [vmem:[%s1 + $0x500] sm:$0xff]
  %v199 = vld [vmem:[%s1 + $0x508] sm:$0xff]
  %v200 = vld [vmem:[%s1 + $0x510] sm:$0xff]
  %v201 = vld [vmem:[%s1 + $0x518] sm:$0xff]
  %v202 = vld [vmem:[%s1 + $0x520] sm:$0xff]
  %v203 = vld [vmem:[%s1 + $0x528] sm:$0xff]
  %v204 = vld [vmem:[%s1 + $0x530] sm:$0xff]
  %v205 = vld [vmem:[%s1 + $0x538] sm:$0xff]
  %v206 = vld [vmem:[%s1 + $0x540] sm:$0xff]
  %v207 = vld [vmem:[%s1 + $0x548] sm:$0xff]
  %v208 = vld [vmem:[%s1 + $0x550] sm:$0xff]
  %v209 = vld [vmem:[%s1 + $0x558] sm:$0xff]
  %v210 = vld [vmem:[%s1 + $0x560] sm:$0xff]
  %v211 = vld [vmem:[%s1 + $0x568] sm:$0xff]
  %v212 = vld [vmem:[%s1 + $0x570] sm:$0xff]
  %v213 = vld [vmem:[%s1 + $0x578] sm:$0xff]
  %v214 = vld [vmem:[%s1 + $0x580] sm:$0xff]
  %v215 = vld [vmem:[%s1 + $0x588] sm:$0xff]
  %v216 = vld [vmem:[%s1 + $0x590] sm:$0xff]
  %v217 = vld [vmem:[%s1 + $0x598] sm:$0xff]
  %v218 = vld [vmem:[%s1 + $0x5a0] sm:$0xff]
  %v219 = vld [vmem:[%s1 + $0x5a8] sm:$0xff]
  %v220 = vld [vmem:[%s1 + $0x5b0] sm:$0xff]
  %v221 = vld [vmem:[%s1 + $0x5b8] sm:$0xff]
  %v222 = vld [vmem:[%s1 + $0x5c0] sm:$0xff]
  %v223 = vld [vmem:[%s1 + $0x5c8] sm:$0xff]
  %v224 = vld [vmem:[%s1 + $0x5d0] sm:$0xff]
  %v225 = vld [vmem:[%s1 + $0x5d8] sm:$0xff]
  %v226 = vld [vmem:[%s1 + $0x5e0] sm:$0xff]
  %v227 = vld [vmem:[%s1 + $0x5e8] sm:$0xff]
  %v228 = vld [vmem:[%s1 + $0x5f0] sm:$0xff]
  %v229 = vld [vmem:[%s1 + $0x5f8] sm:$0xff]
  %v230 = vld [vmem:[%s1 + $0x600] sm:$0xff]
  %v231 = vld [vmem:[%s1 + $0x608] sm:$0xff]
  %v232 = vld [vmem:[%s1 + $0x610] sm:$0xff]
  %v233 = vld [vmem:[%s1 + $0x618] sm:$0xff]
  %v234 = vld [vmem:[%s1 + $0x620] sm:$0xff]
  %v235 = vld [vmem:[%s1 + $0x628] sm:$0xff]
  %v236 = vld [vmem:[%s1 + $0x630] sm:$0xff]
  %v237 = vld [vmem:[%s1 + $0x638] sm:$0xff]
  %v238 = vld [vmem:[%s1 + $0x640] sm:$0xff]
  %v239 = vld [vmem:[%s1 + $0x648] sm:$0xff]
  %v240 = vld [vmem:[%s1 + $0x650] sm:$0xff]
  %v241 = vld [vmem:[%s1 + $0x658] sm:$0xff]
  %v242 = vld [vmem:[%s1 + $0x660] sm:$0xff]
  %v243 = vld [vmem:[%s1 + $0x668] sm:$0xff]
  %v244 = vld [vmem:[%s1 + $0x670] sm:$0xff]
  %v245 = vld [vmem:[%s1 + $0x678] sm:$0xff]
  %v246 = vld [vmem:[%s1 + $0x680] sm:$0xff]
  %v247 = vld [vmem:[%s1 + $0x688] sm:$0xff]
  %v248 = vld [vmem:[%s1 + $0x690] sm:$0xff]
  %v249 = vld [vmem:[%s1 + $0x698] sm:$0xff]
  %v250 = vld [vmem:[%s1 + $0x6a0] sm:$0xff]
  %v251 = vld [vmem:[%s1 + $0x6a8] sm:$0xff]
  %v252 = vld [vmem:[%s1 + $0x6b0] sm:$0xff]
  %v253 = vld [vmem:[%s1 + $0x6b8] sm:$0xff]
  %v254 = vld [vmem:[%s1 + $0x6c0] sm:$0xff]
  %v255 = vld [vmem:[%s1 + $0x6c8] sm:$0xff]
  %v256 = vld [vmem:[%s1 + $0x6d0] sm:$0xff]
  %v257 = vld [vmem:[%s1 + $0x6d8] sm:$0xff]
  %v258 = vld [vmem:[%s1 + $0x6e0] sm:$0xff]
  %v259 = vld [vmem:[%s1 + $0x6e8] sm:$0xff]
  %v260 = vld [vmem:[%s1 + $0x6f0] sm:$0xff]
  %v261 = vld [vmem:[%s1 + $0x6f8] sm:$0xff]
  %v262 = vld [vmem:[%s1 + $0x700] sm:$0xff]
  %v263 = vld [vmem:[%s1 + $0x708] sm:$0xff]
  %v264 = vld [vmem:[%s1 + $0x710] sm:$0xff]
  %v265 = vld [vmem:[%s1 + $0x718] sm:$0xff]
  %v266 = vld [vmem:[%s1 + $0x720] sm:$0xff]
  %v267 = vld [vmem:[%s1 + $0x728] sm:$0xff]
  %v268 = vld [vmem:[%s1 + $0x730] sm:$0xff]
  %v269 = vld [vmem:[%s1 + $0x738] sm:$0xff]
  %v270 = vld [vmem:[%s1 + $0x740] sm:$0xff]
  %v271 = vld [vmem:[%s1 + $0x748] sm:$0xff]
  %v272 = vld [vmem:[%s1 + $0x750] sm:$0xff]
  %v273 = vld [vmem:[%s1 + $0x758] sm:$0xff]
  %v274 = vld [vmem:[%s1 + $0x760] sm:$0xff]
  %v275 = vld [vmem:[%s1 + $0x768] sm:$0xff]
  %v276 = vld [vmem:[%s1 + $0x770] sm:$0xff]
  %v277 = vld [vmem:[%s1 + $0x778] sm:$0xff]
  %v278 = vld [vmem:[%s1 + $0x780] sm:$0xff]
  %v279 = vld [vmem:[%s1 + $0x788] sm:$0xff]
  %v280 = vld [vmem:[%s1 + $0x790] sm:$0xff]
  %v281 = vld [vmem:[%s1 + $0x798] sm:$0xff]
  %v282 = vld [vmem:[%s1 + $0x7a0] sm:$0xff]
  %v283 = vld [vmem:[%s1 + $0x7a8] sm:$0xff]
  %v284 = vld [vmem:[%s1 + $0x7b0] sm:$0xff]
  %v285 = vld [vmem:[%s1 + $0x7b8] sm:$0xff]
  %v286 = vld [vmem:[%s1 + $0x7c0] sm:$0xff]
  %v287 = vld [vmem:[%s1 + $0x7c8] sm:$0xff]
  %v288 = vld [vmem:[%s1 + $0x7d0] sm:$0xff]
  %v289 = vld [vmem:[%s1 + $0x7d8] sm:$0xff]
  %v290 = vld [vmem:[%s1 + $0x7e0] sm:$0xff]
  %v291 = vld [vmem:[%s1 + $0x7e8] sm:$0xff]
  %v292 = vld [vmem:[%s1 + $0x7f0] sm:$0xff]
  %v293 = vld [vmem:[%s1 + $0x7f8] sm:$0xff]
  %v294 = vld [vmem:[%s1 + $0x800] sm:$0xff]
  %v295 = vld [vmem:[%s1 + $0x808] sm:$0xff]
  %v296 = vld [vmem:[%s1 + $0x810] sm:$0xff]
  %v297 = vld [vmem:[%s1 + $0x818] sm:$0xff]
  %v298 = vld [vmem:[%s1 + $0x820] sm:$0xff]
  %v299 = vld [vmem:[%s1 + $0x828] sm:$0xff]
  %v300 = vld [vmem:[%s1 + $0x830] sm:$0xff]
  %v301 = vld [vmem:[%s1 + $0x838] sm:$0xff]
  %v302 = vld [vmem:[%s1 + $0x840] sm:$0xff]
  %v303 = vld [vmem:[%s1 + $0x848] sm:$0xff]
  %v304 = vld [vmem:[%s1 + $0x850] sm:$0xff]
  %v305 = vld [vmem:[%s1 + $0x858] sm:$0xff]
  %v306 = vld [vmem:[%s1 + $0x860] sm:$0xff]
  %v307 = vld [vmem:[%s1 + $0x868] sm:$0xff]
  %v308 = vld [vmem:[%s1 + $0x870] sm:$0xff]
  %v309 = vld [vmem:[%s1 + $0x878] sm:$0xff]
  %v310 = vld [vmem:[%s1 + $0x880] sm:$0xff]
  %v311 = vld [vmem:[%s1 + $0x888] sm:$0xff]
  %v312 = vld [vmem:[%s1 + $0x890] sm:$0xff]
  %v313 = vld [vmem:[%s1 + $0x898] sm:$0xff]
  %v314 = vld [vmem:[%s1 + $0x8a0] sm:$0xff]
  %v315 = vld [vmem:[%s1 + $0x8a8] sm:$0xff]
  %v316 = vld [vmem:[%s1 + $0x8b0] sm:$0xff]
  %v317 = vld [vmem:[%s1 + $0x8b8] sm:$0xff]
  %v318 = vld [vmem:[%s1 + $0x8c0] sm:$0xff]
  %v319 = vld [vmem:[%s1 + $0x8c8] sm:$0xff]
  %v320 = vld [vmem:[%s1 + $0x8d0] sm:$0xff]
  %v321 = vld [vmem:[%s1 + $0x8d8] sm:$0xff]
  %v322 = vld [vmem:[%s1 + $0x8e0] sm:$0xff]
  %v323 = vld [vmem:[%s1 + $0x8e8] sm:$0xff]
  %v324 = vld [vmem:[%s1 + $0x8f0] sm:$0xff]
  %v325 = vld [vmem:[%s1 + $0x8f8] sm:$0xff]
  %v326 = vld [vmem:[%s1 + $0x900] sm:$0xff]
  %v327 = vld [vmem:[%s1 + $0x908] sm:$0xff]
  %v328 = vld [vmem:[%s1 + $0x910] sm:$0xff]
  %v329 = vld [vmem:[%s1 + $0x918] sm:$0xff]
  %v330 = vld [vmem:[%s1 + $0x920] sm:$0xff]
  %v331 = vld [vmem:[%s1 + $0x928] sm:$0xff]
  %v332 = vld [vmem:[%s1 + $0x930] sm:$0xff]
  %v333 = vld [vmem:[%s1 + $0x938] sm:$0xff]
  %v334 = vld [vmem:[%s1 + $0x940] sm:$0xff]
  %v335 = vld [vmem:[%s1 + $0x948] sm:$0xff]
  %v336 = vld [vmem:[%s1 + $0x950] sm:$0xff]
  %v337 = vld [vmem:[%s1 + $0x958] sm:$0xff]
  %v338 = vld [vmem:[%s1 + $0x960] sm:$0xff]
  %v339 = vld [vmem:[%s1 + $0x968] sm:$0xff]
  %v340 = vld [vmem:[%s1 + $0x970] sm:$0xff]
  %v341 = vld [vmem:[%s1 + $0x978] sm:$0xff]
  %v342 = vld [vmem:[%s1 + $0x980] sm:$0xff]
  %v343 = vld [vmem:[%s1 + $0x988] sm:$0xff]
  %v344 = vld [vmem:[%s1 + $0x990] sm:$0xff]
  %v345 = vld [vmem:[%s1 + $0x998] sm:$0xff]
  %v346 = vld [vmem:[%s1 + $0x9a0] sm:$0xff]
  %v347 = vld [vmem:[%s1 + $0x9a8] sm:$0xff]
  %v348 = vld [vmem:[%s1 + $0x9b0] sm:$0xff]
  %v349 = vld [vmem:[%s1 + $0x9b8] sm:$0xff]
  %v350 = vld [vmem:[%s1 + $0x9c0] sm:$0xff]
  %v351 = vld [vmem:[%s1 + $0x9c8] sm:$0xff]
  %v352 = vld [vmem:[%s1 + $0x9d0] sm:$0xff]
  %v353 = vld [vmem:[%s1 + $0x9d8] sm:$0xff]
  %v354 = vld [vmem:[%s1 + $0x9e0] sm:$0xff]
  %v355 = vld [vmem:[%s1 + $0x9e8] sm:$0xff]
  %v356 = vld [vmem:[%s1 + $0x9f0] sm:$0xff]
  %v357 = vld [vmem:[%s1 + $0x9f8] sm:$0xff]
  %v358 = vld [vmem:[%s1 + $0xa00] sm:$0xff]
  %v359 = vld [vmem:[%s1 + $0xa08] sm:$0xff]
  %v360 = vld [vmem:[%s1 + $0xa10] sm:$0xff]
  %v361 = vld [vmem:[%s1 + $0xa18] sm:$0xff]
  %v362 = vld [vmem:[%s1 + $0xa20] sm:$0xff]
  %v363 = vld [vmem:[%s1 + $0xa28] sm:$0xff]
  %v364 = vld [vmem:[%s1 + $0xa30] sm:$0xff]
  %v365 = vld [vmem:[%s1 + $0xa38] sm:$0xff]
  %v366 = vld [vmem:[%s1 + $0xa40] sm:$0xff]
  %v367 = vld [vmem:[%s1 + $0xa48] sm:$0xff]
  %v368 = vld [vmem:[%s1 + $0xa50] sm:$0xff]
  %v369 = vld [vmem:[%s1 + $0xa58] sm:$0xff]
  %v370 = vld [vmem:[%s1 + $0xa60] sm:$0xff]
  %v371 = vld [vmem:[%s1 + $0xa68] sm:$0xff]
  %v372 = vld [vmem:[%s1 + $0xa70] sm:$0xff]
  %v373 = vld [vmem:[%s1 + $0xa78] sm:$0xff]
  %v374 = vld [vmem:[%s1 + $0xa80] sm:$0xff]
  %v375 = vld [vmem:[%s1 + $0xa88] sm:$0xff]
  %v376 = vld [vmem:[%s1 + $0xa90] sm:$0xff]
  %v377 = vld [vmem:[%s1 + $0xa98] sm:$0xff]
  %v378 = vld [vmem:[%s1 + $0xaa0] sm:$0xff]
  %v379 = vld [vmem:[%s1 + $0xaa8] sm:$0xff]
  %v380 = vld [vmem:[%s1 + $0xab0] sm:$0xff]
  %v381 = vld [vmem:[%s1 + $0xab8] sm:$0xff]
  %v382 = vld [vmem:[%s1 + $0xac0] sm:$0xff]
  %v383 = vld [vmem:[%s1 + $0xac8] sm:$0xff]
  %v384 = vld [vmem:[%s1 + $0xad0] sm:$0xff]
  %v385 = vld [vmem:[%s1 + $0xad8] sm:$0xff]
  %v386 = vld [vmem:[%s1 + $0xae0] sm:$0xff]
  %v387 = vld [vmem:[%s1 + $0xae8] sm:$0xff]
  %v388 = vld [vmem:[%s1 + $0xaf0] sm:$0xff]
  %v389 = vld [vmem:[%s1 + $0xaf8] sm:$0xff]
  %v390 = vld [vmem:[%s1 + $0xb00] sm:$0xff]
  %v391 = vld [vmem:[%s1 + $0xb08] sm:$0xff]
  %v392 = vld [vmem:[%s1 + $0xb10] sm:$0xff]
  %v393 = vld [vmem:[%s1 + $0xb18] sm:$0xff]
  %v394 = vld [vmem:[%s1 + $0xb20] sm:$0xff]
  %v395 = vld [vmem:[%s1 + $0xb28] sm:$0xff]
  %v396 = vld [vmem:[%s1 + $0xb30] sm:$0xff]
  %v397 = vld [vmem:[%s1 + $0xb38] sm:$0xff]
  %v398 = vld [vmem:[%s1 + $0xb40] sm:$0xff]
  %v399 = vld [vmem:[%s1 + $0xb48] sm:$0xff]
  %v400 = vld [vmem:[%s1 + $0xb50] sm:$0xff]
  %v401 = vld [vmem:[%s1 + $0xb58] sm:$0xff]
  %v402 = vld [vmem:[%s1 + $0xb60] sm:$0xff]
  %v403 = vld [vmem:[%s1 + $0xb68] sm:$0xff]
  %v404 = vld [vmem:[%s1 + $0xb70] sm:$0xff]
  %v405 = vld [vmem:[%s1 + $0xb78] sm:$0xff]
  %v406 = vld [vmem:[%s1 + $0xb80] sm:$0xff]
  %v407 = vld [vmem:[%s1 + $0xb88] sm:$0xff]
  %v408 = vld [vmem:[%s1 + $0xb90] sm:$0xff]
  %v409 = vld [vmem:[%s1 + $0xb98] sm:$0xff]
  %v410 = vld [vmem:[%s1 + $0xba0] sm:$0xff]
  %v411 = vld [vmem:[%s1 + $0xba8] sm:$0xff]
  %v412 = vld [vmem:[%s1 + $0xbb0] sm:$0xff]
  %v413 = vld [vmem:[%s1 + $0xbb8] sm:$0xff]
  %v414 = vld [vmem:[%s1 + $0xbc0] sm:$0xff]
  %v415 = vld [vmem:[%s1 + $0xbc8] sm:$0xff]
  %v416 = vld [vmem:[%s1 + $0xbd0] sm:$0xff]
  %v417 = vld [vmem:[%s1 + $0xbd8] sm:$0xff]
  %v418 = vld [vmem:[%s1 + $0xbe0] sm:$0xff]
  %v419 = vld [vmem:[%s1 + $0xbe8] sm:$0xff]
  %v420 = vld [vmem:[%s1 + $0xbf0] sm:$0xff]
  %v421 = vld [vmem:[%s1 + $0xbf8] sm:$0xff]
  %v422 = vld [vmem:[%s1 + $0xc00] sm:$0xff]
  %v423 = vld [vmem:[%s1 + $0xc08] sm:$0xff]
  %v424 = vld [vmem:[%s1 + $0xc10] sm:$0xff]
  %v425 = vld [vmem:[%s1 + $0xc18] sm:$0xff]
  %v426 = vld [vmem:[%s1 + $0xc20] sm:$0xff]
  %v427 = vld [vmem:[%s1 + $0xc28] sm:$0xff]
  %v428 = vld [vmem:[%s1 + $0xc30] sm:$0xff]
  %v429 = vld [vmem:[%s1 + $0xc38] sm:$0xff]
  %v430 = vld [vmem:[%s1 + $0xc40] sm:$0xff]
  %v431 = vld [vmem:[%s1 + $0xc48] sm:$0xff]
  %v432 = vld [vmem:[%s1 + $0xc50] sm:$0xff]
  %v433 = vld [vmem:[%s1 + $0xc58] sm:$0xff]
  %v434 = vld [vmem:[%s1 + $0xc60] sm:$0xff]
  %v435 = vld [vmem:[%s1 + $0xc68] sm:$0xff]
  %v436 = vld [vmem:[%s1 + $0xc70] sm:$0xff]
  %v437 = vld [vmem:[%s1 + $0xc78] sm:$0xff]
  %v438 = vld [vmem:[%s1 + $0xc80] sm:$0xff]
  %v439 = vld [vmem:[%s1 + $0xc88] sm:$0xff]
  %v440 = vld [vmem:[%s1 + $0xc90] sm:$0xff]
  %v441 = vld [vmem:[%s1 + $0xc98] sm:$0xff]
  %v442 = vld [vmem:[%s1 + $0xca0] sm:$0xff]
  %v443 = vld [vmem:[%s1 + $0xca8] sm:$0xff]
  %v444 = vld [vmem:[%s1 + $0xcb0] sm:$0xff]
  %v445 = vld [vmem:[%s1 + $0xcb8] sm:$0xff]
  %v446 = vld [vmem:[%s1 + $0xcc0] sm:$0xff]
  %v447 = vld [vmem:[%s1 + $0xcc8] sm:$0xff]
  %v448 = vld [vmem:[%s1 + $0xcd0] sm:$0xff]
  %v449 = vld [vmem:[%s1 + $0xcd8] sm:$0xff]
  %v450 = vld [vmem:[%s1 + $0xce0] sm:$0xff]
  %v451 = vld [vmem:[%s1 + $0xce8] sm:$0xff]
  %v452 = vld [vmem:[%s1 + $0xcf0] sm:$0xff]
  %v453 = vld [vmem:[%s1 + $0xcf8] sm:$0xff]
  %v454 = vld [vmem:[%s1 + $0xd00] sm:$0xff]
  %v455 = vld [vmem:[%s1 + $0xd08] sm:$0xff]
  %v456 = vld [vmem:[%s1 + $0xd10] sm:$0xff]
  %v457 = vld [vmem:[%s1 + $0xd18] sm:$0xff]
  %v458 = vld [vmem:[%s1 + $0xd20] sm:$0xff]
  %v459 = vld [vmem:[%s1 + $0xd28] sm:$0xff]
  %v460 = vld [vmem:[%s1 + $0xd30] sm:$0xff]
  %v461 = vld [vmem:[%s1 + $0xd38] sm:$0xff]
  %v462 = vld [vmem:[%s1 + $0xd40] sm:$0xff]
  %v463 = vld [vmem:[%s1 + $0xd48] sm:$0xff]
  %v464 = vld [vmem:[%s1 + $0xd50] sm:$0xff]
  %v465 = vld [vmem:[%s1 + $0xd58] sm:$0xff]
  %v466 = vld [vmem:[%s1 + $0xd60] sm:$0xff]
  %v467 = vld [vmem:[%s1 + $0xd68] sm:$0xff]
  %v468 = vld [vmem:[%s1 + $0xd70] sm:$0xff]
  %v469 = vld [vmem:[%s1 + $0xd78] sm:$0xff]
  %v470 = vld [vmem:[%s1 + $0xd80] sm:$0xff]
  %v471 = vld [vmem:[%s1 + $0xd88] sm:$0xff]
  %v472 = vld [vmem:[%s1 + $0xd90] sm:$0xff]
  %v473 = vld [vmem:[%s1 + $0xd98] sm:$0xff]
  %v474 = vld [vmem:[%s1 + $0xda0] sm:$0xff]
  %v475 = vld [vmem:[%s1 + $0xda8] sm:$0xff]
  %v476 = vld [vmem:[%s1 + $0xdb0] sm:$0xff]
  %v477 = vld [vmem:[%s1 + $0xdb8] sm:$0xff]
  %v478 = vld [vmem:[%s1 + $0xdc0] sm:$0xff]
  %v479 = vld [vmem:[%s1 + $0xdc8] sm:$0xff]
  %v480 = vld [vmem:[%s1 + $0xdd0] sm:$0xff]
  %v481 = vld [vmem:[%s1 + $0xdd8] sm:$0xff]
  %v482 = vld [vmem:[%s1 + $0xde0] sm:$0xff]
  %v483 = vld [vmem:[%s1 + $0xde8] sm:$0xff]
  %v484 = vld [vmem:[%s1 + $0xdf0] sm:$0xff]
  %v485 = vld [vmem:[%s1 + $0xdf8] sm:$0xff]
  %v486 = vld [vmem:[%s1 + $0xe00] sm:$0xff]
  %v487 = vld [vmem:[%s1 + $0xe08] sm:$0xff]
  %v488 = vld [vmem:[%s1 + $0xe10] sm:$0xff]
  %v489 = vld [vmem:[%s1 + $0xe18] sm:$0xff]
  %v490 = vld [vmem:[%s1 + $0xe20] sm:$0xff]
  %v491 = vld [vmem:[%s1 + $0xe28] sm:$0xff]
  %v492 = vld [vmem:[%s1 + $0xe30] sm:$0xff]
  %v493 = vld [vmem:[%s1 + $0xe38] sm:$0xff]
  %v494 = vld [vmem:[%s1 + $0xe40] sm:$0xff]
  %v495 = vld [vmem:[%s1 + $0xe48] sm:$0xff]
  %v496 = vld [vmem:[%s1 + $0xe50] sm:$0xff]
  %v497 = vld [vmem:[%s1 + $0xe58] sm:$0xff]
  %v498 = vld [vmem:[%s1 + $0xe60] sm:$0xff]
  %v499 = vld [vmem:[%s1 + $0xe68] sm:$0xff]
  %v500 = vld [vmem:[%s1 + $0xe70] sm:$0xff]
  %v501 = vld [vmem:[%s1 + $0xe78] sm:$0xff]
  %v502 = vld [vmem:[%s1 + $0xe80] sm:$0xff]
  %v503 = vld [vmem:[%s1 + $0xe88] sm:$0xff]
  %v504 = vld [vmem:[%s1 + $0xe90] sm:$0xff]
  %v505 = vld [vmem:[%s1 + $0xe98] sm:$0xff]
  %v506 = vld [vmem:[%s1 + $0xea0] sm:$0xff]
  %v507 = vld [vmem:[%s1 + $0xea8] sm:$0xff]
  %v508 = vld [vmem:[%s1 + $0xeb0] sm:$0xff]
  %v509 = vld [vmem:[%s1 + $0xeb8] sm:$0xff]
  %v510 = vld [vmem:[%s1 + $0xec0] sm:$0xff]
  %v511 = vld [vmem:[%s1 + $0xec8] sm:$0xff]
  %v512 = vld [vmem:[%s1 + $0xed0] sm:$0xff]
  %v513 = vld [vmem:[%s1 + $0xed8] sm:$0xff]
  %v514 = vld [vmem:[%s1 + $0xee0] sm:$0xff]
  %v515 = vld [vmem:[%s1 + $0xee8] sm:$0xff]
  %v516 = vld [vmem:[%s1 + $0xef0] sm:$0xff]
  %v517 = vld [vmem:[%s1 + $0xef8] sm:$0xff]
  %v518 = vld [vmem:[%s1 + $0xf00] sm:$0xff]
  %v519 = vld [vmem:[%s1 + $0xf08] sm:$0xff]
  %v520 = vld [vmem:[%s1 + $0xf10] sm:$0xff]
  %v521 = vld [vmem:[%s1 + $0xf18] sm:$0xff]
  %v522 = vld [vmem:[%s1 + $0xf20] sm:$0xff]
  %v523 = vld [vmem:[%s1 + $0xf28] sm:$0xff]
  %v524 = vld [vmem:[%s1 + $0xf30] sm:$0xff]
  %v525 = vld [vmem:[%s1 + $0xf38] sm:$0xff]
  %v526 = vld [vmem:[%s1 + $0xf40] sm:$0xff]
  %v527 = vld [vmem:[%s1 + $0xf48] sm:$0xff]
  %v528 = vld [vmem:[%s1 + $0xf50] sm:$0xff]
  %v529 = vld [vmem:[%s1 + $0xf58] sm:$0xff]
  %v530 = vld [vmem:[%s1 + $0xf60] sm:$0xff]
  %v531 = vld [vmem:[%s1 + $0xf68] sm:$0xff]
  %v532 = vld [vmem:[%s1 + $0xf70] sm:$0xff]
  %v533 = vld [vmem:[%s1 + $0xf78] sm:$0xff]
  %v534 = vld [vmem:[%s1 + $0xf80] sm:$0xff]
  %v535 = vld [vmem:[%s1 + $0xf88] sm:$0xff]
  %v536 = vld [vmem:[%s1 + $0xf90] sm:$0xff]
  %v537 = vld [vmem:[%s1 + $0xf98] sm:$0xff]
  %v538 = vld [vmem:[%s1 + $0xfa0] sm:$0xff]
  %v539 = vld [vmem:[%s1 + $0xfa8] sm:$0xff]
  %v540 = vld [vmem:[%s1 + $0xfb0] sm:$0xff]
  %v541 = vld [vmem:[%s1 + $0xfb8] sm:$0xff]
  %v542 = vld [vmem:[%s1 + $0xfc0] sm:$0xff]
  %v543 = vld [vmem:[%s1 + $0xfc8] sm:$0xff]
  %v544 = vld [vmem:[%s1 + $0xfd0] sm:$0xff]
  %v545 = vld [vmem:[%s1 + $0xfd8] sm:$0xff]
  %v546 = vld [vmem:[%s1 + $0xfe0] sm:$0xff]
  %v547 = vld [vmem:[%s1 + $0xfe8] sm:$0xff]
  %v548 = vld [vmem:[%s1 + $0xff0] sm:$0xff]
  %v549 = vld [vmem:[%s1 + $0xff8] sm:$0xff]
  %v550 = vld [vmem:[%s1 + $0x1000] sm:$0xff]
  %v551 = vld [vmem:[%s1 + $0x1008] sm:$0xff]
  %v552 = vld [vmem:[%s1 + $0x1010] sm:$0xff]
  %v553 = vld [vmem:[%s1 + $0x1018] sm:$0xff]
  %v554 = vld [vmem:[%s1 + $0x1020] sm:$0xff]
  %v555 = vld [vmem:[%s1 + $0x1028] sm:$0xff]
  %v556 = vld [vmem:[%s1 + $0x1030] sm:$0xff]
  %v557 = vld [vmem:[%s1 + $0x1038] sm:$0xff]
  %v558 = vld [vmem:[%s1 + $0x1040] sm:$0xff]
  %v559 = vld [vmem:[%s1 + $0x1048] sm:$0xff]
  %v560 = vld [vmem:[%s1 + $0x1050] sm:$0xff]
  %v561 = vld [vmem:[%s1 + $0x1058] sm:$0xff]
  %v562 = vld [vmem:[%s1 + $0x1060] sm:$0xff]
  %v563 = vld [vmem:[%s1 + $0x1068] sm:$0xff]
  %v564 = vld [vmem:[%s1 + $0x1070] sm:$0xff]
  %v565 = vld [vmem:[%s1 + $0x1078] sm:$0xff]
  %v566 = vld [vmem:[%s1 + $0x1080] sm:$0xff]
  %v567 = vld [vmem:[%s1 + $0x1088] sm:$0xff]
  %v568 = vld [vmem:[%s1 + $0x1090] sm:$0xff]
  %v569 = vld [vmem:[%s1 + $0x1098] sm:$0xff]
  %v570 = vld [vmem:[%s1 + $0x10a0] sm:$0xff]
  %v571 = vld [vmem:[%s1 + $0x10a8] sm:$0xff]
  %v572 = vld [vmem:[%s1 + $0x10b0] sm:$0xff]
  %v573 = vld [vmem:[%s1 + $0x10b8] sm:$0xff]
  %v574 = vld [vmem:[%s1 + $0x10c0] sm:$0xff]
  %v575 = vld [vmem:[%s1 + $0x10c8] sm:$0xff]
  %v576 = vld [vmem:[%s1 + $0x10d0] sm:$0xff]
  %v577 = vld [vmem:[%s1 + $0x10d8] sm:$0xff]
  %v578 = vld [vmem:[%s1 + $0x10e0] sm:$0xff]
  %v579 = vld [vmem:[%s1 + $0x10e8] sm:$0xff]
  %v580 = vld [vmem:[%s1 + $0x10f0] sm:$0xff]
  %v581 = vld [vmem:[%s1 + $0x10f8] sm:$0xff]
  %v582 = vld [vmem:[%s1 + $0x1100] sm:$0xff]
  %v583 = vld [vmem:[%s1 + $0x1108] sm:$0xff]
  %v584 = vld [vmem:[%s1 + $0x1110] sm:$0xff]
  %v585 = vld [vmem:[%s1 + $0x1118] sm:$0xff]
  %v586 = vld [vmem:[%s1 + $0x1120] sm:$0xff]
  %v587 = vld [vmem:[%s1 + $0x1128] sm:$0xff]
  %v588 = vld [vmem:[%s1 + $0x1130] sm:$0xff]
  %v589 = vld [vmem:[%s1 + $0x1138] sm:$0xff]
  %v590 = vld [vmem:[%s1 + $0x1140] sm:$0xff]
  %v591 = vld [vmem:[%s1 + $0x1148] sm:$0xff]
  %v592 = vld [vmem:[%s1 + $0x1150] sm:$0xff]
  %v593 = vld [vmem:[%s1 + $0x1158] sm:$0xff]
  %v594 = vld [vmem:[%s1 + $0x1160] sm:$0xff]
  %v595 = vld [vmem:[%s1 + $0x1168] sm:$0xff]
  %v596 = vld [vmem:[%s1 + $0x1170] sm:$0xff]
  %v597 = vld [vmem:[%s1 + $0x1178] sm:$0xff]
  %v598 = vld [vmem:[%s1 + $0x1180] sm:$0xff]
  %v599 = vld [vmem:[%s1 + $0x1188] sm:$0xff]
  %v600 = vld [vmem:[%s1 + $0x1190] sm:$0xff]
  %v601 = vld [vmem:[%s1 + $0x1198] sm:$0xff]
  %v602 = vld [vmem:[%s1 + $0x11a0] sm:$0xff]
  %v603 = vld [vmem:[%s1 + $0x11a8] sm:$0xff]
  %v604 = vld [vmem:[%s1 + $0x11b0] sm:$0xff]
  %v605 = vld [vmem:[%s1 + $0x11b8] sm:$0xff]
  %v606 = vld [vmem:[%s1 + $0x11c0] sm:$0xff]
  %v607 = vld [vmem:[%s1 + $0x11c8] sm:$0xff]
  %v608 = vld [vmem:[%s1 + $0x11d0] sm:$0xff]
  %v609 = vld [vmem:[%s1 + $0x11d8] sm:$0xff]
  %v610 = vld [vmem:[%s1 + $0x11e0] sm:$0xff]
  %v611 = vld [vmem:[%s1 + $0x11e8] sm:$0xff]
  %v612 = vld [vmem:[%s1 + $0x11f0] sm:$0xff]
  %v613 = vld [vmem:[%s1 + $0x11f8] sm:$0xff]
  %v614 = vld [vmem:[%s1 + $0x1200] sm:$0xff]
  %v615 = vld [vmem:[%s1 + $0x1208] sm:$0xff]
  %v616 = vld [vmem:[%s1 + $0x1210] sm:$0xff]
  %v617 = vld [vmem:[%s1 + $0x1218] sm:$0xff]
  %v618 = vld [vmem:[%s1 + $0x1220] sm:$0xff]
  %v619 = vld [vmem:[%s1 + $0x1228] sm:$0xff]
  %v620 = vld [vmem:[%s1 + $0x1230] sm:$0xff]
  %v621 = vld [vmem:[%s1 + $0x1238] sm:$0xff]
  %v622 = vld [vmem:[%s1 + $0x1240] sm:$0xff]
  %v623 = vld [vmem:[%s1 + $0x1248] sm:$0xff]
  %v624 = vld [vmem:[%s1 + $0x1250] sm:$0xff]
  %v625 = vld [vmem:[%s1 + $0x1258] sm:$0xff]
  %v626 = vld [vmem:[%s1 + $0x1260] sm:$0xff]
  %v627 = vld [vmem:[%s1 + $0x1268] sm:$0xff]
  %v628 = vld [vmem:[%s1 + $0x1270] sm:$0xff]
  %v629 = vld [vmem:[%s1 + $0x1278] sm:$0xff]
  %v630 = vld [vmem:[%s1 + $0x1280] sm:$0xff]
  %v631 = vld [vmem:[%s1 + $0x1288] sm:$0xff]
  %v632 = vld [vmem:[%s1 + $0x1290] sm:$0xff]
  %v633 = vld [vmem:[%s1 + $0x1298] sm:$0xff]
  %v634 = vld [vmem:[%s1 + $0x12a0] sm:$0xff]
  %v635 = vld [vmem:[%s1 + $0x12a8] sm:$0xff]
  %v636 = vld [vmem:[%s1 + $0x12b0] sm:$0xff]
  %v637 = vld [vmem:[%s1 + $0x12b8] sm:$0xff]
  %v638 = vld [vmem:[%s1 + $0x12c0] sm:$0xff]
  %v639 = vld [vmem:[%s1 + $0x12c8] sm:$0xff]
  %v640 = vld [vmem:[%s1 + $0x12d0] sm:$0xff]
  %v641 = vld [vmem:[%s1 + $0x12d8] sm:$0xff]
  %v642 = vld [vmem:[%s1 + $0x12e0] sm:$0xff]
  %v643 = vld [vmem:[%s1 + $0x12e8] sm:$0xff]
  %v644 = vld [vmem:[%s1 + $0x12f0] sm:$0xff]
  %v645 = vld [vmem:[%s1 + $0x12f8] sm:$0xff]
  %v646 = vld [vmem:[%s1 + $0x1300] sm:$0xff]
  %v647 = vld [vmem:[%s1 + $0x1308] sm:$0xff]
  %v648 = vld [vmem:[%s1 + $0x1310] sm:$0xff]
  %v649 = vld [vmem:[%s1 + $0x1318] sm:$0xff]
  %v650 = vld [vmem:[%s1 + $0x1320] sm:$0xff]
  %v651 = vld [vmem:[%s1 + $0x1328] sm:$0xff]
  %v652 = vld [vmem:[%s1 + $0x1330] sm:$0xff]
  %v653 = vld [vmem:[%s1 + $0x1338] sm:$0xff]
  %v654 = vld [vmem:[%s1 + $0x1340] sm:$0xff]
  %v655 = vld [vmem:[%s1 + $0x1348] sm:$0xff]
  %v656 = vld [vmem:[%s1 + $0x1350] sm:$0xff]
  %v657 = vld [vmem:[%s1 + $0x1358] sm:$0xff]
  %v658 = vld [vmem:[%s1 + $0x1360] sm:$0xff]
  %v659 = vld [vmem:[%s1 + $0x1368] sm:$0xff]
  %v660 = vld [vmem:[%s1 + $0x1370] sm:$0xff]
  %v661 = vld [vmem:[%s1 + $0x1378] sm:$0xff]
  %v662 = vld [vmem:[%s1 + $0x1380] sm:$0xff]
  %v663 = vld [vmem:[%s1 + $0x1388] sm:$0xff]
  %v664 = vld [vmem:[%s1 + $0x1390] sm:$0xff]
  %v665 = vld [vmem:[%s1 + $0x1398] sm:$0xff]
  %v666 = vld [vmem:[%s1 + $0x13a0] sm:$0xff]
  %v667 = vld [vmem:[%s1 + $0x13a8] sm:$0xff]
  %v668 = vld [vmem:[%s1 + $0x13b0] sm:$0xff]
  %v669 = vld [vmem:[%s1 + $0x13b8] sm:$0xff]
  %v670 = vld [vmem:[%s1 + $0x13c0] sm:$0xff]
  %v671 = vld [vmem:[%s1 + $0x13c8] sm:$0xff]
  %v672 = vld [vmem:[%s1 + $0x13d0] sm:$0xff]
  %v673 = vld [vmem:[%s1 + $0x13d8] sm:$0xff]
  %v674 = vld [vmem:[%s1 + $0x13e0] sm:$0xff]
  %v675 = vld [vmem:[%s1 + $0x13e8] sm:$0xff]
  %v676 = vld [vmem:[%s1 + $0x13f0] sm:$0xff]
  %v677 = vld [vmem:[%s1 + $0x13f8] sm:$0xff]
  %v678 = vld [vmem:[%s1 + $0x1400] sm:$0xff]
  %v679 = vld [vmem:[%s1 + $0x1408] sm:$0xff]
  %v680 = vld [vmem:[%s1 + $0x1410] sm:$0xff]
  %v681 = vld [vmem:[%s1 + $0x1418] sm:$0xff]
  %v682 = vld [vmem:[%s1 + $0x1420] sm:$0xff]
  %v683 = vld [vmem:[%s1 + $0x1428] sm:$0xff]
  %v684 = vld [vmem:[%s1 + $0x1430] sm:$0xff]
  %v685 = vld [vmem:[%s1 + $0x1438] sm:$0xff]
  %v686 = vld [vmem:[%s1 + $0x1440] sm:$0xff]
  %v687 = vld [vmem:[%s1 + $0x1448] sm:$0xff]
  %v688 = vld [vmem:[%s1 + $0x1450] sm:$0xff]
  %v689 = vld [vmem:[%s1 + $0x1458] sm:$0xff]
  %v690 = vld [vmem:[%s1 + $0x1460] sm:$0xff]
  %v691 = vld [vmem:[%s1 + $0x1468] sm:$0xff]
  %v692 = vld [vmem:[%s1 + $0x1470] sm:$0xff]
  %v693 = vld [vmem:[%s1 + $0x1478] sm:$0xff]
  %v694 = vld [vmem:[%s1 + $0x1480] sm:$0xff]
  %v695 = vld [vmem:[%s1 + $0x1488] sm:$0xff]
  %v696 = vld [vmem:[%s1 + $0x1490] sm:$0xff]
  %v697 = vld [vmem:[%s1 + $0x1498] sm:$0xff]
  %v698 = vld [vmem:[%s1 + $0x14a0] sm:$0xff]
  %v699 = vld [vmem:[%s1 + $0x14a8] sm:$0xff]
  %v700 = vld [vmem:[%s1 + $0x14b0] sm:$0xff]
  %v701 = vld [vmem:[%s1 + $0x14b8] sm:$0xff]
  %v702 = vld [vmem:[%s1 + $0x14c0] sm:$0xff]
  %v703 = vld [vmem:[%s1 + $0x14c8] sm:$0xff]
  %v704 = vld [vmem:[%s1 + $0x14d0] sm:$0xff]
  %v705 = vld [vmem:[%s1 + $0x14d8] sm:$0xff]
  %v706 = vld [vmem:[%s1 + $0x14e0] sm:$0xff]
  %v707 = vld [vmem:[%s1 + $0x14e8] sm:$0xff]
  %v708 = vld [vmem:[%s1 + $0x14f0] sm:$0xff]
  %v709 = vld [vmem:[%s1 + $0x14f8] sm:$0xff]
  %v710 = vld [vmem:[%s1 + $0x1500] sm:$0xff]
  %v711 = vld [vmem:[%s1 + $0x1508] sm:$0xff]
  %v712 = vld [vmem:[%s1 + $0x1510] sm:$0xff]
  %v713 = vld [vmem:[%s1 + $0x1518] sm:$0xff]
  %v714 = vld [vmem:[%s1 + $0x1520] sm:$0xff]
  %v715 = vld [vmem:[%s1 + $0x1528] sm:$0xff]
  %v716 = vld [vmem:[%s1 + $0x1530] sm:$0xff]
  %v717 = vld [vmem:[%s1 + $0x1538] sm:$0xff]
  %v718 = vld [vmem:[%s1 + $0x1540] sm:$0xff]
  %v719 = vld [vmem:[%s1 + $0x1548] sm:$0xff]
  %v720 = vld [vmem:[%s1 + $0x1550] sm:$0xff]
  %v721 = vld [vmem:[%s1 + $0x1558] sm:$0xff]
  %v722 = vld [vmem:[%s1 + $0x1560] sm:$0xff]
  %v723 = vld [vmem:[%s1 + $0x1568] sm:$0xff]
  %v724 = vld [vmem:[%s1 + $0x1570] sm:$0xff]
  %v725 = vld [vmem:[%s1 + $0x1578] sm:$0xff]
  %v726 = vld [vmem:[%s1 + $0x1580] sm:$0xff]
  %v727 = vld [vmem:[%s1 + $0x1588] sm:$0xff]
  %v728 = vld [vmem:[%s1 + $0x1590] sm:$0xff]
  %v729 = vld [vmem:[%s1 + $0x1598] sm:$0xff]
  %v730 = vld [vmem:[%s1 + $0x15a0] sm:$0xff]
  %v731 = vld [vmem:[%s1 + $0x15a8] sm:$0xff]
  %v732 = vld [vmem:[%s1 + $0x15b0] sm:$0xff]
  %v733 = vld [vmem:[%s1 + $0x15b8] sm:$0xff]
  %v734 = vld [vmem:[%s1 + $0x15c0] sm:$0xff]
  %v735 = vld [vmem:[%s1 + $0x15c8] sm:$0xff]
  %v736 = vld [vmem:[%s1 + $0x15d0] sm:$0xff]
  %v737 = vld [vmem:[%s1 + $0x15d8] sm:$0xff]
  %v738 = vld [vmem:[%s1 + $0x15e0] sm:$0xff]
  %v739 = vld [vmem:[%s1 + $0x15e8] sm:$0xff]
  %v740 = vld [vmem:[%s1 + $0x15f0] sm:$0xff]
  %v741 = vld [vmem:[%s1 + $0x15f8] sm:$0xff]
  %v742 = vld [vmem:[%s1 + $0x1600] sm:$0xff]
  %v743 = vld [vmem:[%s1 + $0x1608] sm:$0xff]
  %v744 = vld [vmem:[%s1 + $0x1610] sm:$0xff]
  %v745 = vld [vmem:[%s1 + $0x1618] sm:$0xff]
  %v746 = vld [vmem:[%s1 + $0x1620] sm:$0xff]
  %v747 = vld [vmem:[%s1 + $0x1628] sm:$0xff]
  %v748 = vld [vmem:[%s1 + $0x1630] sm:$0xff]
  %v749 = vld [vmem:[%s1 + $0x1638] sm:$0xff]
  %v750 = vld [vmem:[%s1 + $0x1640] sm:$0xff]
  %v751 = vld [vmem:[%s1 + $0x1648] sm:$0xff]
  %v752 = vld [vmem:[%s1 + $0x1650] sm:$0xff]
  %v753 = vld [vmem:[%s1 + $0x1658] sm:$0xff]
  %v754 = vld [vmem:[%s1 + $0x1660] sm:$0xff]
  %v755 = vld [vmem:[%s1 + $0x1668] sm:$0xff]
  %v756 = vld [vmem:[%s1 + $0x1670] sm:$0xff]
  %v757 = vld [vmem:[%s1 + $0x1678] sm:$0xff]
  %v758 = vld [vmem:[%s1 + $0x1680] sm:$0xff]
  %v759 = vld [vmem:[%s1 + $0x1688] sm:$0xff]
  %v760 = vld [vmem:[%s1 + $0x1690] sm:$0xff]
  %v761 = vld [vmem:[%s1 + $0x1698] sm:$0xff]
  %v762 = vld [vmem:[%s1 + $0x16a0] sm:$0xff]
  %v763 = vld [vmem:[%s1 + $0x16a8] sm:$0xff]
  %v764 = vld [vmem:[%s1 + $0x16b0] sm:$0xff]
  %v765 = vld [vmem:[%s1 + $0x16b8] sm:$0xff]
  %v766 = vld [vmem:[%s1 + $0x16c0] sm:$0xff]
  %v767 = vld [vmem:[%s1 + $0x16c8] sm:$0xff]
  %v768 = vld [vmem:[%s1 + $0x16d0] sm:$0xff]
  %v769 = vld [vmem:[%s1 + $0x16d8] sm:$0xff]
  %v770 = vld [vmem:[%s1 + $0x16e0] sm:$0xff]
  %v771 = vld [vmem:[%s1 + $0x16e8] sm:$0xff]
  %v772 = vld [vmem:[%s1 + $0x16f0] sm:$0xff]
  %v773 = vld [vmem:[%s1 + $0x16f8] sm:$0xff]
  %v774 = vld [vmem:[%s1 + $0x1700] sm:$0xff]
  %v775 = vld [vmem:[%s1 + $0x1708] sm:$0xff]
  %v776 = vld [vmem:[%s1 + $0x1710] sm:$0xff]
  %v777 = vld [vmem:[%s1 + $0x1718] sm:$0xff]
  %v778 = vld [vmem:[%s1 + $0x1720] sm:$0xff]
  %v779 = vld [vmem:[%s1 + $0x1728] sm:$0xff]
  %v780 = vld [vmem:[%s1 + $0x1730] sm:$0xff]
  %v781 = vld [vmem:[%s1 + $0x1738] sm:$0xff]
  %v782 = vld [vmem:[%s1 + $0x1740] sm:$0xff]
  %v783 = vld [vmem:[%s1 + $0x1748] sm:$0xff]
  %v784 = vld [vmem:[%s1 + $0x1750] sm:$0xff]
  %v785 = vld [vmem:[%s1 + $0x1758] sm:$0xff]
  %v786 = vld [vmem:[%s1 + $0x1760] sm:$0xff]
  %v787 = vld [vmem:[%s1 + $0x1768] sm:$0xff]
  %v788 = vld [vmem:[%s1 + $0x1770] sm:$0xff]
  %v789 = vld [vmem:[%s1 + $0x1778] sm:$0xff]
  %v790 = vld [vmem:[%s1 + $0x1780] sm:$0xff]
  %v791 = vld [vmem:[%s1 + $0x1788] sm:$0xff]
  %v792 = vld [vmem:[%s1 + $0x1790] sm:$0xff]
  %v793 = vld [vmem:[%s1 + $0x1798] sm:$0xff]
  %v794 = vld [vmem:[%s1 + $0x17a0] sm:$0xff]
  %v795 = vld [vmem:[%s1 + $0x17a8] sm:$0xff]
  %v796 = vld [vmem:[%s1 + $0x17b0] sm:$0xff]
  %v797 = vld [vmem:[%s1 + $0x17b8] sm:$0xff]
  %v798 = vld [vmem:[%s1 + $0x17c0] sm:$0xff]
  %v799 = vld [vmem:[%s1 + $0x17c8] sm:$0xff]
  %v800 = vld [vmem:[%s1 + $0x17d0] sm:$0xff]
  %v801 = vld [vmem:[%s1 + $0x17d8] sm:$0xff]
  %v802 = vld [vmem:[%s1 + $0x17e0] sm:$0xff]
  %v803 = vld [vmem:[%s1 + $0x17e8] sm:$0xff]
  %v804 = vld [vmem:[%s1 + $0x17f0] sm:$0xff]
  %v805 = vld [vmem:[%s1 + $0x17f8] sm:$0xff]
  %v806 = vld [vmem:[%s2] sm:$0xf]
  %v808 = vperm.slane %v806, 0
  %v809 = vperm.slane %v806, 1
  %v810 = vperm.slane %v806, 2
  %v811 = vperm.slane %v806, 3
  %v840 = vunpack.c.l.b16 %v14
  %v841 = vunpack.c.h.b16 %v14
  %v842 = vunpack.c.l.b16 %v15
  %v843 = vunpack.c.h.b16 %v15
  %v844 = vunpack.c.l.b16 %v16
  %v845 = vunpack.c.h.b16 %v16
  %v846 = vunpack.c.l.b16 %v17
  %v847 = vunpack.c.h.b16 %v17
  %v848 = vunpack.c.l.b16 %v18
  %v849 = vunpack.c.h.b16 %v18
  %v850 = vunpack.c.l.b16 %v19
  %v851 = vunpack.c.h.b16 %v19
  %v852 = vunpack.c.l.b16 %v20
  %v853 = vunpack.c.h.b16 %v20
  %v854 = vunpack.c.l.b16 %v21
  %v855 = vunpack.c.h.b16 %v21
  %v856 = vunpack.c.l.b16 %v22
  %v857 = vunpack.c.h.b16 %v22
  %v858 = vunpack.c.l.b16 %v23
  %v859 = vunpack.c.h.b16 %v23
  %v860 = vunpack.c.l.b16 %v24
  %v861 = vunpack.c.h.b16 %v24
  %v862 = vunpack.c.l.b16 %v25
  %v863 = vunpack.c.h.b16 %v25
  %v864 = vunpack.c.l.b16 %v26
  %v865 = vunpack.c.h.b16 %v26
  %v866 = vunpack.c.l.b16 %v27
  %v867 = vunpack.c.h.b16 %v27
  %v868 = vunpack.c.l.b16 %v28
  %v869 = vunpack.c.h.b16 %v28
  %v870 = vunpack.c.l.b16 %v29
  %v871 = vunpack.c.h.b16 %v29
  %v872 = vunpack.c.l.b16 %v30
  %v873 = vunpack.c.h.b16 %v30
  %v874 = vunpack.c.l.b16 %v31
  %v875 = vunpack.c.h.b16 %v31
  %v876 = vunpack.c.l.b16 %v32
  %v877 = vunpack.c.h.b16 %v32
  %v878 = vunpack.c.l.b16 %v33
  %v879 = vunpack.c.h.b16 %v33
  %v880 = vunpack.c.l.b16 %v34
  %v881 = vunpack.c.h.b16 %v34
  %v882 = vunpack.c.l.b16 %v35
  %v883 = vunpack.c.h.b16 %v35
  %v884 = vunpack.c.l.b16 %v36
  %v885 = vunpack.c.h.b16 %v36
  %v886 = vunpack.c.l.b16 %v37
  %v887 = vunpack.c.h.b16 %v37
  %v888 = vpack.c.b16 %v864, %v840
  %v889 = vpack.c.b16 %v865, %v841
  %v890 = vpack.c.b16 %v866, %v842
  %v891 = vpack.c.b16 %v867, %v843
  %v892 = vpack.c.b16 %v868, %v844
  %v893 = vpack.c.b16 %v869, %v845
  %v894 = vpack.c.b16 %v870, %v846
  %v895 = vpack.c.b16 %v871, %v847
  %v896 = vpack.c.b16 %v872, %v848
  %v897 = vpack.c.b16 %v873, %v849
  %v898 = vpack.c.b16 %v874, %v850
  %v899 = vpack.c.b16 %v875, %v851
  %v900 = vpack.c.b16 %v876, %v852
  %v901 = vpack.c.b16 %v877, %v853
  %v902 = vpack.c.b16 %v878, %v854
  %v903 = vpack.c.b16 %v879, %v855
  %v904 = vpack.c.b16 %v880, %v856
  %v905 = vpack.c.b16 %v881, %v857
  %v906 = vpack.c.b16 %v882, %v858
  %v907 = vpack.c.b16 %v883, %v859
  %v908 = vpack.c.b16 %v884, %v860
  %v909 = vpack.c.b16 %v885, %v861
  %v910 = vpack.c.b16 %v886, %v862
  %v911 = vpack.c.b16 %v887, %v863
  %v1704 = vunpack.c.l.b16 %v38
  %v1705 = vunpack.c.h.b16 %v38
  %v1706 = vunpack.c.l.b16 %v39
  %v1707 = vunpack.c.h.b16 %v39
  %v1708 = vunpack.c.l.b16 %v40
  %v1709 = vunpack.c.h.b16 %v40
  %v1710 = vunpack.c.l.b16 %v41
  %v1711 = vunpack.c.h.b16 %v41
  %v1712 = vunpack.c.l.b16 %v42
  %v1713 = vunpack.c.h.b16 %v42
  %v1714 = vunpack.c.l.b16 %v43
  %v1715 = vunpack.c.h.b16 %v43
  %v1716 = vunpack.c.l.b16 %v44
  %v1717 = vunpack.c.h.b16 %v44
  %v1718 = vunpack.c.l.b16 %v45
  %v1719 = vunpack.c.h.b16 %v45
  %v1720 = vunpack.c.l.b16 %v46
  %v1721 = vunpack.c.h.b16 %v46
  %v1722 = vunpack.c.l.b16 %v47
  %v1723 = vunpack.c.h.b16 %v47
  %v1724 = vunpack.c.l.b16 %v48
  %v1725 = vunpack.c.h.b16 %v48
  %v1726 = vunpack.c.l.b16 %v49
  %v1727 = vunpack.c.h.b16 %v49
  %v1728 = vunpack.c.l.b16 %v50
  %v1729 = vunpack.c.h.b16 %v50
  %v1730 = vunpack.c.l.b16 %v51
  %v1731 = vunpack.c.h.b16 %v51
  %v1732 = vunpack.c.l.b16 %v52
  %v1733 = vunpack.c.h.b16 %v52
  %v1734 = vunpack.c.l.b16 %v53
  %v1735 = vunpack.c.h.b16 %v53
  %v1736 = vunpack.c.l.b16 %v54
  %v1737 = vunpack.c.h.b16 %v54
  %v1738 = vunpack.c.l.b16 %v55
  %v1739 = vunpack.c.h.b16 %v55
  %v1740 = vunpack.c.l.b16 %v56
  %v1741 = vunpack.c.h.b16 %v56
  %v1742 = vunpack.c.l.b16 %v57
  %v1743 = vunpack.c.h.b16 %v57
  %v1744 = vunpack.c.l.b16 %v58
  %v1745 = vunpack.c.h.b16 %v58
  %v1746 = vunpack.c.l.b16 %v59
  %v1747 = vunpack.c.h.b16 %v59
  %v1748 = vunpack.c.l.b16 %v60
  %v1749 = vunpack.c.h.b16 %v60
  %v1750 = vunpack.c.l.b16 %v61
  %v1751 = vunpack.c.h.b16 %v61
  %v1752 = vunpack.c.l.b16 %v62
  %v1753 = vunpack.c.h.b16 %v62
  %v1754 = vunpack.c.l.b16 %v63
  %v1755 = vunpack.c.h.b16 %v63
  %v1756 = vunpack.c.l.b16 %v64
  %v1757 = vunpack.c.h.b16 %v64
  %v1758 = vunpack.c.l.b16 %v65
  %v1759 = vunpack.c.h.b16 %v65
  %v1760 = vunpack.c.l.b16 %v66
  %v1761 = vunpack.c.h.b16 %v66
  %v1762 = vunpack.c.l.b16 %v67
  %v1763 = vunpack.c.h.b16 %v67
  %v1764 = vunpack.c.l.b16 %v68
  %v1765 = vunpack.c.h.b16 %v68
  %v1766 = vunpack.c.l.b16 %v69
  %v1767 = vunpack.c.h.b16 %v69
  %v1768 = vunpack.c.l.b16 %v70
  %v1769 = vunpack.c.h.b16 %v70
  %v1770 = vunpack.c.l.b16 %v71
  %v1771 = vunpack.c.h.b16 %v71
  %v1772 = vunpack.c.l.b16 %v72
  %v1773 = vunpack.c.h.b16 %v72
  %v1774 = vunpack.c.l.b16 %v73
  %v1775 = vunpack.c.h.b16 %v73
  %v1776 = vunpack.c.l.b16 %v74
  %v1777 = vunpack.c.h.b16 %v74
  %v1778 = vunpack.c.l.b16 %v75
  %v1779 = vunpack.c.h.b16 %v75
  %v1780 = vunpack.c.l.b16 %v76
  %v1781 = vunpack.c.h.b16 %v76
  %v1782 = vunpack.c.l.b16 %v77
  %v1783 = vunpack.c.h.b16 %v77
  %v1784 = vunpack.c.l.b16 %v78
  %v1785 = vunpack.c.h.b16 %v78
  %v1786 = vunpack.c.l.b16 %v79
  %v1787 = vunpack.c.h.b16 %v79
  %v1788 = vunpack.c.l.b16 %v80
  %v1789 = vunpack.c.h.b16 %v80
  %v1790 = vunpack.c.l.b16 %v81
  %v1791 = vunpack.c.h.b16 %v81
  %v1792 = vunpack.c.l.b16 %v82
  %v1793 = vunpack.c.h.b16 %v82
  %v1794 = vunpack.c.l.b16 %v83
  %v1795 = vunpack.c.h.b16 %v83
  %v1796 = vunpack.c.l.b16 %v84
  %v1797 = vunpack.c.h.b16 %v84
  %v1798 = vunpack.c.l.b16 %v85
  %v1799 = vunpack.c.h.b16 %v85
  %v1800 = vunpack.c.l.b16 %v86
  %v1801 = vunpack.c.h.b16 %v86
  %v1802 = vunpack.c.l.b16 %v87
  %v1803 = vunpack.c.h.b16 %v87
  %v1804 = vunpack.c.l.b16 %v88
  %v1805 = vunpack.c.h.b16 %v88
  %v1806 = vunpack.c.l.b16 %v89
  %v1807 = vunpack.c.h.b16 %v89
  %v1808 = vunpack.c.l.b16 %v90
  %v1809 = vunpack.c.h.b16 %v90
  %v1810 = vunpack.c.l.b16 %v91
  %v1811 = vunpack.c.h.b16 %v91
  %v1812 = vunpack.c.l.b16 %v92
  %v1813 = vunpack.c.h.b16 %v92
  %v1814 = vunpack.c.l.b16 %v93
  %v1815 = vunpack.c.h.b16 %v93
  %v1816 = vunpack.c.l.b16 %v94
  %v1817 = vunpack.c.h.b16 %v94
  %v1818 = vunpack.c.l.b16 %v95
  %v1819 = vunpack.c.h.b16 %v95
  %v1820 = vunpack.c.l.b16 %v96
  %v1821 = vunpack.c.h.b16 %v96
  %v1822 = vunpack.c.l.b16 %v97
  %v1823 = vunpack.c.h.b16 %v97
  %v1824 = vunpack.c.l.b16 %v98
  %v1825 = vunpack.c.h.b16 %v98
  %v1826 = vunpack.c.l.b16 %v99
  %v1827 = vunpack.c.h.b16 %v99
  %v1828 = vunpack.c.l.b16 %v100
  %v1829 = vunpack.c.h.b16 %v100
  %v1830 = vunpack.c.l.b16 %v101
  %v1831 = vunpack.c.h.b16 %v101
  %v1832 = vunpack.c.l.b16 %v102
  %v1833 = vunpack.c.h.b16 %v102
  %v1834 = vunpack.c.l.b16 %v103
  %v1835 = vunpack.c.h.b16 %v103
  %v1836 = vunpack.c.l.b16 %v104
  %v1837 = vunpack.c.h.b16 %v104
  %v1838 = vunpack.c.l.b16 %v105
  %v1839 = vunpack.c.h.b16 %v105
  %v1840 = vunpack.c.l.b16 %v106
  %v1841 = vunpack.c.h.b16 %v106
  %v1842 = vunpack.c.l.b16 %v107
  %v1843 = vunpack.c.h.b16 %v107
  %v1844 = vunpack.c.l.b16 %v108
  %v1845 = vunpack.c.h.b16 %v108
  %v1846 = vunpack.c.l.b16 %v109
  %v1847 = vunpack.c.h.b16 %v109
  %v1848 = vunpack.c.l.b16 %v110
  %v1849 = vunpack.c.h.b16 %v110
  %v1850 = vunpack.c.l.b16 %v111
  %v1851 = vunpack.c.h.b16 %v111
  %v1852 = vunpack.c.l.b16 %v112
  %v1853 = vunpack.c.h.b16 %v112
  %v1854 = vunpack.c.l.b16 %v113
  %v1855 = vunpack.c.h.b16 %v113
  %v1856 = vunpack.c.l.b16 %v114
  %v1857 = vunpack.c.h.b16 %v114
  %v1858 = vunpack.c.l.b16 %v115
  %v1859 = vunpack.c.h.b16 %v115
  %v1860 = vunpack.c.l.b16 %v116
  %v1861 = vunpack.c.h.b16 %v116
  %v1862 = vunpack.c.l.b16 %v117
  %v1863 = vunpack.c.h.b16 %v117
  %v1864 = vunpack.c.l.b16 %v118
  %v1865 = vunpack.c.h.b16 %v118
  %v1866 = vunpack.c.l.b16 %v119
  %v1867 = vunpack.c.h.b16 %v119
  %v1868 = vunpack.c.l.b16 %v120
  %v1869 = vunpack.c.h.b16 %v120
  %v1870 = vunpack.c.l.b16 %v121
  %v1871 = vunpack.c.h.b16 %v121
  %v1872 = vunpack.c.l.b16 %v122
  %v1873 = vunpack.c.h.b16 %v122
  %v1874 = vunpack.c.l.b16 %v123
  %v1875 = vunpack.c.h.b16 %v123
  %v1876 = vunpack.c.l.b16 %v124
  %v1877 = vunpack.c.h.b16 %v124
  %v1878 = vunpack.c.l.b16 %v125
  %v1879 = vunpack.c.h.b16 %v125
  %v1880 = vunpack.c.l.b16 %v126
  %v1881 = vunpack.c.h.b16 %v126
  %v1882 = vunpack.c.l.b16 %v127
  %v1883 = vunpack.c.h.b16 %v127
  %v1884 = vunpack.c.l.b16 %v128
  %v1885 = vunpack.c.h.b16 %v128
  %v1886 = vunpack.c.l.b16 %v129
  %v1887 = vunpack.c.h.b16 %v129
  %v1888 = vunpack.c.l.b16 %v130
  %v1889 = vunpack.c.h.b16 %v130
  %v1890 = vunpack.c.l.b16 %v131
  %v1891 = vunpack.c.h.b16 %v131
  %v1892 = vunpack.c.l.b16 %v132
  %v1893 = vunpack.c.h.b16 %v132
  %v1894 = vunpack.c.l.b16 %v133
  %v1895 = vunpack.c.h.b16 %v133
  %v1896 = vunpack.c.l.b16 %v134
  %v1897 = vunpack.c.h.b16 %v134
  %v1898 = vunpack.c.l.b16 %v135
  %v1899 = vunpack.c.h.b16 %v135
  %v1900 = vunpack.c.l.b16 %v136
  %v1901 = vunpack.c.h.b16 %v136
  %v1902 = vunpack.c.l.b16 %v137
  %v1903 = vunpack.c.h.b16 %v137
  %v1904 = vunpack.c.l.b16 %v138
  %v1905 = vunpack.c.h.b16 %v138
  %v1906 = vunpack.c.l.b16 %v139
  %v1907 = vunpack.c.h.b16 %v139
  %v1908 = vunpack.c.l.b16 %v140
  %v1909 = vunpack.c.h.b16 %v140
  %v1910 = vunpack.c.l.b16 %v141
  %v1911 = vunpack.c.h.b16 %v141
  %v1912 = vunpack.c.l.b16 %v142
  %v1913 = vunpack.c.h.b16 %v142
  %v1914 = vunpack.c.l.b16 %v143
  %v1915 = vunpack.c.h.b16 %v143
  %v1916 = vunpack.c.l.b16 %v144
  %v1917 = vunpack.c.h.b16 %v144
  %v1918 = vunpack.c.l.b16 %v145
  %v1919 = vunpack.c.h.b16 %v145
  %v1920 = vunpack.c.l.b16 %v146
  %v1921 = vunpack.c.h.b16 %v146
  %v1922 = vunpack.c.l.b16 %v147
  %v1923 = vunpack.c.h.b16 %v147
  %v1924 = vunpack.c.l.b16 %v148
  %v1925 = vunpack.c.h.b16 %v148
  %v1926 = vunpack.c.l.b16 %v149
  %v1927 = vunpack.c.h.b16 %v149
  %v1928 = vunpack.c.l.b16 %v150
  %v1929 = vunpack.c.h.b16 %v150
  %v1930 = vunpack.c.l.b16 %v151
  %v1931 = vunpack.c.h.b16 %v151
  %v1932 = vunpack.c.l.b16 %v152
  %v1933 = vunpack.c.h.b16 %v152
  %v1934 = vunpack.c.l.b16 %v153
  %v1935 = vunpack.c.h.b16 %v153
  %v1936 = vunpack.c.l.b16 %v154
  %v1937 = vunpack.c.h.b16 %v154
  %v1938 = vunpack.c.l.b16 %v155
  %v1939 = vunpack.c.h.b16 %v155
  %v1940 = vunpack.c.l.b16 %v156
  %v1941 = vunpack.c.h.b16 %v156
  %v1942 = vunpack.c.l.b16 %v157
  %v1943 = vunpack.c.h.b16 %v157
  %v1944 = vunpack.c.l.b16 %v158
  %v1945 = vunpack.c.h.b16 %v158
  %v1946 = vunpack.c.l.b16 %v159
  %v1947 = vunpack.c.h.b16 %v159
  %v1948 = vunpack.c.l.b16 %v160
  %v1949 = vunpack.c.h.b16 %v160
  %v1950 = vunpack.c.l.b16 %v161
  %v1951 = vunpack.c.h.b16 %v161
  %v1952 = vunpack.c.l.b16 %v162
  %v1953 = vunpack.c.h.b16 %v162
  %v1954 = vunpack.c.l.b16 %v163
  %v1955 = vunpack.c.h.b16 %v163
  %v1956 = vunpack.c.l.b16 %v164
  %v1957 = vunpack.c.h.b16 %v164
  %v1958 = vunpack.c.l.b16 %v165
  %v1959 = vunpack.c.h.b16 %v165
  %v1960 = vunpack.c.l.b16 %v166
  %v1961 = vunpack.c.h.b16 %v166
  %v1962 = vunpack.c.l.b16 %v167
  %v1963 = vunpack.c.h.b16 %v167
  %v1964 = vunpack.c.l.b16 %v168
  %v1965 = vunpack.c.h.b16 %v168
  %v1966 = vunpack.c.l.b16 %v169
  %v1967 = vunpack.c.h.b16 %v169
  %v1968 = vunpack.c.l.b16 %v170
  %v1969 = vunpack.c.h.b16 %v170
  %v1970 = vunpack.c.l.b16 %v171
  %v1971 = vunpack.c.h.b16 %v171
  %v1972 = vunpack.c.l.b16 %v172
  %v1973 = vunpack.c.h.b16 %v172
  %v1974 = vunpack.c.l.b16 %v173
  %v1975 = vunpack.c.h.b16 %v173
  %v1976 = vunpack.c.l.b16 %v174
  %v1977 = vunpack.c.h.b16 %v174
  %v1978 = vunpack.c.l.b16 %v175
  %v1979 = vunpack.c.h.b16 %v175
  %v1980 = vunpack.c.l.b16 %v176
  %v1981 = vunpack.c.h.b16 %v176
  %v1982 = vunpack.c.l.b16 %v177
  %v1983 = vunpack.c.h.b16 %v177
  %v1984 = vunpack.c.l.b16 %v178
  %v1985 = vunpack.c.h.b16 %v178
  %v1986 = vunpack.c.l.b16 %v179
  %v1987 = vunpack.c.h.b16 %v179
  %v1988 = vunpack.c.l.b16 %v180
  %v1989 = vunpack.c.h.b16 %v180
  %v1990 = vunpack.c.l.b16 %v181
  %v1991 = vunpack.c.h.b16 %v181
  %v1992 = vunpack.c.l.b16 %v182
  %v1993 = vunpack.c.h.b16 %v182
  %v1994 = vunpack.c.l.b16 %v183
  %v1995 = vunpack.c.h.b16 %v183
  %v1996 = vunpack.c.l.b16 %v184
  %v1997 = vunpack.c.h.b16 %v184
  %v1998 = vunpack.c.l.b16 %v185
  %v1999 = vunpack.c.h.b16 %v185
  %v2000 = vunpack.c.l.b16 %v186
  %v2001 = vunpack.c.h.b16 %v186
  %v2002 = vunpack.c.l.b16 %v187
  %v2003 = vunpack.c.h.b16 %v187
  %v2004 = vunpack.c.l.b16 %v188
  %v2005 = vunpack.c.h.b16 %v188
  %v2006 = vunpack.c.l.b16 %v189
  %v2007 = vunpack.c.h.b16 %v189
  %v2008 = vunpack.c.l.b16 %v190
  %v2009 = vunpack.c.h.b16 %v190
  %v2010 = vunpack.c.l.b16 %v191
  %v2011 = vunpack.c.h.b16 %v191
  %v2012 = vunpack.c.l.b16 %v192
  %v2013 = vunpack.c.h.b16 %v192
  %v2014 = vunpack.c.l.b16 %v193
  %v2015 = vunpack.c.h.b16 %v193
  %v2016 = vunpack.c.l.b16 %v194
  %v2017 = vunpack.c.h.b16 %v194
  %v2018 = vunpack.c.l.b16 %v195
  %v2019 = vunpack.c.h.b16 %v195
  %v2020 = vunpack.c.l.b16 %v196
  %v2021 = vunpack.c.h.b16 %v196
  %v2022 = vunpack.c.l.b16 %v197
  %v2023 = vunpack.c.h.b16 %v197
  %v2024 = vunpack.c.l.b16 %v198
  %v2025 = vunpack.c.h.b16 %v198
  %v2026 = vunpack.c.l.b16 %v199
  %v2027 = vunpack.c.h.b16 %v199
  %v2028 = vunpack.c.l.b16 %v200
  %v2029 = vunpack.c.h.b16 %v200
  %v2030 = vunpack.c.l.b16 %v201
  %v2031 = vunpack.c.h.b16 %v201
  %v2032 = vunpack.c.l.b16 %v202
  %v2033 = vunpack.c.h.b16 %v202
  %v2034 = vunpack.c.l.b16 %v203
  %v2035 = vunpack.c.h.b16 %v203
  %v2036 = vunpack.c.l.b16 %v204
  %v2037 = vunpack.c.h.b16 %v204
  %v2038 = vunpack.c.l.b16 %v205
  %v2039 = vunpack.c.h.b16 %v205
  %v2040 = vunpack.c.l.b16 %v206
  %v2041 = vunpack.c.h.b16 %v206
  %v2042 = vunpack.c.l.b16 %v207
  %v2043 = vunpack.c.h.b16 %v207
  %v2044 = vunpack.c.l.b16 %v208
  %v2045 = vunpack.c.h.b16 %v208
  %v2046 = vunpack.c.l.b16 %v209
  %v2047 = vunpack.c.h.b16 %v209
  %v2048 = vunpack.c.l.b16 %v210
  %v2049 = vunpack.c.h.b16 %v210
  %v2050 = vunpack.c.l.b16 %v211
  %v2051 = vunpack.c.h.b16 %v211
  %v2052 = vunpack.c.l.b16 %v212
  %v2053 = vunpack.c.h.b16 %v212
  %v2054 = vunpack.c.l.b16 %v213
  %v2055 = vunpack.c.h.b16 %v213
  %v2056 = vunpack.c.l.b16 %v214
  %v2057 = vunpack.c.h.b16 %v214
  %v2058 = vunpack.c.l.b16 %v215
  %v2059 = vunpack.c.h.b16 %v215
  %v2060 = vunpack.c.l.b16 %v216
  %v2061 = vunpack.c.h.b16 %v216
  %v2062 = vunpack.c.l.b16 %v217
  %v2063 = vunpack.c.h.b16 %v217
  %v2064 = vunpack.c.l.b16 %v218
  %v2065 = vunpack.c.h.b16 %v218
  %v2066 = vunpack.c.l.b16 %v219
  %v2067 = vunpack.c.h.b16 %v219
  %v2068 = vunpack.c.l.b16 %v220
  %v2069 = vunpack.c.h.b16 %v220
  %v2070 = vunpack.c.l.b16 %v221
  %v2071 = vunpack.c.h.b16 %v221
  %v2072 = vunpack.c.l.b16 %v222
  %v2073 = vunpack.c.h.b16 %v222
  %v2074 = vunpack.c.l.b16 %v223
  %v2075 = vunpack.c.h.b16 %v223
  %v2076 = vunpack.c.l.b16 %v224
  %v2077 = vunpack.c.h.b16 %v224
  %v2078 = vunpack.c.l.b16 %v225
  %v2079 = vunpack.c.h.b16 %v225
  %v2080 = vunpack.c.l.b16 %v226
  %v2081 = vunpack.c.h.b16 %v226
  %v2082 = vunpack.c.l.b16 %v227
  %v2083 = vunpack.c.h.b16 %v227
  %v2084 = vunpack.c.l.b16 %v228
  %v2085 = vunpack.c.h.b16 %v228
  %v2086 = vunpack.c.l.b16 %v229
  %v2087 = vunpack.c.h.b16 %v229
  %v2088 = vunpack.c.l.b16 %v230
  %v2089 = vunpack.c.h.b16 %v230
  %v2090 = vunpack.c.l.b16 %v231
  %v2091 = vunpack.c.h.b16 %v231
  %v2092 = vunpack.c.l.b16 %v232
  %v2093 = vunpack.c.h.b16 %v232
  %v2094 = vunpack.c.l.b16 %v233
  %v2095 = vunpack.c.h.b16 %v233
  %v2096 = vunpack.c.l.b16 %v234
  %v2097 = vunpack.c.h.b16 %v234
  %v2098 = vunpack.c.l.b16 %v235
  %v2099 = vunpack.c.h.b16 %v235
  %v2100 = vunpack.c.l.b16 %v236
  %v2101 = vunpack.c.h.b16 %v236
  %v2102 = vunpack.c.l.b16 %v237
  %v2103 = vunpack.c.h.b16 %v237
  %v2104 = vunpack.c.l.b16 %v238
  %v2105 = vunpack.c.h.b16 %v238
  %v2106 = vunpack.c.l.b16 %v239
  %v2107 = vunpack.c.h.b16 %v239
  %v2108 = vunpack.c.l.b16 %v240
  %v2109 = vunpack.c.h.b16 %v240
  %v2110 = vunpack.c.l.b16 %v241
  %v2111 = vunpack.c.h.b16 %v241
  %v2112 = vunpack.c.l.b16 %v242
  %v2113 = vunpack.c.h.b16 %v242
  %v2114 = vunpack.c.l.b16 %v243
  %v2115 = vunpack.c.h.b16 %v243
  %v2116 = vunpack.c.l.b16 %v244
  %v2117 = vunpack.c.h.b16 %v244
  %v2118 = vunpack.c.l.b16 %v245
  %v2119 = vunpack.c.h.b16 %v245
  %v2120 = vunpack.c.l.b16 %v246
  %v2121 = vunpack.c.h.b16 %v246
  %v2122 = vunpack.c.l.b16 %v247
  %v2123 = vunpack.c.h.b16 %v247
  %v2124 = vunpack.c.l.b16 %v248
  %v2125 = vunpack.c.h.b16 %v248
  %v2126 = vunpack.c.l.b16 %v249
  %v2127 = vunpack.c.h.b16 %v249
  %v2128 = vunpack.c.l.b16 %v250
  %v2129 = vunpack.c.h.b16 %v250
  %v2130 = vunpack.c.l.b16 %v251
  %v2131 = vunpack.c.h.b16 %v251
  %v2132 = vunpack.c.l.b16 %v252
  %v2133 = vunpack.c.h.b16 %v252
  %v2134 = vunpack.c.l.b16 %v253
  %v2135 = vunpack.c.h.b16 %v253
  %v2136 = vunpack.c.l.b16 %v254
  %v2137 = vunpack.c.h.b16 %v254
  %v2138 = vunpack.c.l.b16 %v255
  %v2139 = vunpack.c.h.b16 %v255
  %v2140 = vunpack.c.l.b16 %v256
  %v2141 = vunpack.c.h.b16 %v256
  %v2142 = vunpack.c.l.b16 %v257
  %v2143 = vunpack.c.h.b16 %v257
  %v2144 = vunpack.c.l.b16 %v258
  %v2145 = vunpack.c.h.b16 %v258
  %v2146 = vunpack.c.l.b16 %v259
  %v2147 = vunpack.c.h.b16 %v259
  %v2148 = vunpack.c.l.b16 %v260
  %v2149 = vunpack.c.h.b16 %v260
  %v2150 = vunpack.c.l.b16 %v261
  %v2151 = vunpack.c.h.b16 %v261
  %v2152 = vunpack.c.l.b16 %v262
  %v2153 = vunpack.c.h.b16 %v262
  %v2154 = vunpack.c.l.b16 %v263
  %v2155 = vunpack.c.h.b16 %v263
  %v2156 = vunpack.c.l.b16 %v264
  %v2157 = vunpack.c.h.b16 %v264
  %v2158 = vunpack.c.l.b16 %v265
  %v2159 = vunpack.c.h.b16 %v265
  %v2160 = vunpack.c.l.b16 %v266
  %v2161 = vunpack.c.h.b16 %v266
  %v2162 = vunpack.c.l.b16 %v267
  %v2163 = vunpack.c.h.b16 %v267
  %v2164 = vunpack.c.l.b16 %v268
  %v2165 = vunpack.c.h.b16 %v268
  %v2166 = vunpack.c.l.b16 %v269
  %v2167 = vunpack.c.h.b16 %v269
  %v2168 = vunpack.c.l.b16 %v270
  %v2169 = vunpack.c.h.b16 %v270
  %v2170 = vunpack.c.l.b16 %v271
  %v2171 = vunpack.c.h.b16 %v271
  %v2172 = vunpack.c.l.b16 %v272
  %v2173 = vunpack.c.h.b16 %v272
  %v2174 = vunpack.c.l.b16 %v273
  %v2175 = vunpack.c.h.b16 %v273
  %v2176 = vunpack.c.l.b16 %v274
  %v2177 = vunpack.c.h.b16 %v274
  %v2178 = vunpack.c.l.b16 %v275
  %v2179 = vunpack.c.h.b16 %v275
  %v2180 = vunpack.c.l.b16 %v276
  %v2181 = vunpack.c.h.b16 %v276
  %v2182 = vunpack.c.l.b16 %v277
  %v2183 = vunpack.c.h.b16 %v277
  %v2184 = vunpack.c.l.b16 %v278
  %v2185 = vunpack.c.h.b16 %v278
  %v2186 = vunpack.c.l.b16 %v279
  %v2187 = vunpack.c.h.b16 %v279
  %v2188 = vunpack.c.l.b16 %v280
  %v2189 = vunpack.c.h.b16 %v280
  %v2190 = vunpack.c.l.b16 %v281
  %v2191 = vunpack.c.h.b16 %v281
  %v2192 = vunpack.c.l.b16 %v282
  %v2193 = vunpack.c.h.b16 %v282
  %v2194 = vunpack.c.l.b16 %v283
  %v2195 = vunpack.c.h.b16 %v283
  %v2196 = vunpack.c.l.b16 %v284
  %v2197 = vunpack.c.h.b16 %v284
  %v2198 = vunpack.c.l.b16 %v285
  %v2199 = vunpack.c.h.b16 %v285
  %v2200 = vunpack.c.l.b16 %v286
  %v2201 = vunpack.c.h.b16 %v286
  %v2202 = vunpack.c.l.b16 %v287
  %v2203 = vunpack.c.h.b16 %v287
  %v2204 = vunpack.c.l.b16 %v288
  %v2205 = vunpack.c.h.b16 %v288
  %v2206 = vunpack.c.l.b16 %v289
  %v2207 = vunpack.c.h.b16 %v289
  %v2208 = vunpack.c.l.b16 %v290
  %v2209 = vunpack.c.h.b16 %v290
  %v2210 = vunpack.c.l.b16 %v291
  %v2211 = vunpack.c.h.b16 %v291
  %v2212 = vunpack.c.l.b16 %v292
  %v2213 = vunpack.c.h.b16 %v292
  %v2214 = vunpack.c.l.b16 %v293
  %v2215 = vunpack.c.h.b16 %v293
  %v2216 = vunpack.c.l.b16 %v294
  %v2217 = vunpack.c.h.b16 %v294
  %v2218 = vunpack.c.l.b16 %v295
  %v2219 = vunpack.c.h.b16 %v295
  %v2220 = vunpack.c.l.b16 %v296
  %v2221 = vunpack.c.h.b16 %v296
  %v2222 = vunpack.c.l.b16 %v297
  %v2223 = vunpack.c.h.b16 %v297
  %v2224 = vunpack.c.l.b16 %v298
  %v2225 = vunpack.c.h.b16 %v298
  %v2226 = vunpack.c.l.b16 %v299
  %v2227 = vunpack.c.h.b16 %v299
  %v2228 = vunpack.c.l.b16 %v300
  %v2229 = vunpack.c.h.b16 %v300
  %v2230 = vunpack.c.l.b16 %v301
  %v2231 = vunpack.c.h.b16 %v301
  %v2232 = vunpack.c.l.b16 %v302
  %v2233 = vunpack.c.h.b16 %v302
  %v2234 = vunpack.c.l.b16 %v303
  %v2235 = vunpack.c.h.b16 %v303
  %v2236 = vunpack.c.l.b16 %v304
  %v2237 = vunpack.c.h.b16 %v304
  %v2238 = vunpack.c.l.b16 %v305
  %v2239 = vunpack.c.h.b16 %v305
  %v2240 = vunpack.c.l.b16 %v306
  %v2241 = vunpack.c.h.b16 %v306
  %v2242 = vunpack.c.l.b16 %v307
  %v2243 = vunpack.c.h.b16 %v307
  %v2244 = vunpack.c.l.b16 %v308
  %v2245 = vunpack.c.h.b16 %v308
  %v2246 = vunpack.c.l.b16 %v309
  %v2247 = vunpack.c.h.b16 %v309
  %v2248 = vunpack.c.l.b16 %v310
  %v2249 = vunpack.c.h.b16 %v310
  %v2250 = vunpack.c.l.b16 %v311
  %v2251 = vunpack.c.h.b16 %v311
  %v2252 = vunpack.c.l.b16 %v312
  %v2253 = vunpack.c.h.b16 %v312
  %v2254 = vunpack.c.l.b16 %v313
  %v2255 = vunpack.c.h.b16 %v313
  %v2256 = vunpack.c.l.b16 %v314
  %v2257 = vunpack.c.h.b16 %v314
  %v2258 = vunpack.c.l.b16 %v315
  %v2259 = vunpack.c.h.b16 %v315
  %v2260 = vunpack.c.l.b16 %v316
  %v2261 = vunpack.c.h.b16 %v316
  %v2262 = vunpack.c.l.b16 %v317
  %v2263 = vunpack.c.h.b16 %v317
  %v2264 = vunpack.c.l.b16 %v318
  %v2265 = vunpack.c.h.b16 %v318
  %v2266 = vunpack.c.l.b16 %v319
  %v2267 = vunpack.c.h.b16 %v319
  %v2268 = vunpack.c.l.b16 %v320
  %v2269 = vunpack.c.h.b16 %v320
  %v2270 = vunpack.c.l.b16 %v321
  %v2271 = vunpack.c.h.b16 %v321
  %v2272 = vunpack.c.l.b16 %v322
  %v2273 = vunpack.c.h.b16 %v322
  %v2274 = vunpack.c.l.b16 %v323
  %v2275 = vunpack.c.h.b16 %v323
  %v2276 = vunpack.c.l.b16 %v324
  %v2277 = vunpack.c.h.b16 %v324
  %v2278 = vunpack.c.l.b16 %v325
  %v2279 = vunpack.c.h.b16 %v325
  %v2280 = vunpack.c.l.b16 %v326
  %v2281 = vunpack.c.h.b16 %v326
  %v2282 = vunpack.c.l.b16 %v327
  %v2283 = vunpack.c.h.b16 %v327
  %v2284 = vunpack.c.l.b16 %v328
  %v2285 = vunpack.c.h.b16 %v328
  %v2286 = vunpack.c.l.b16 %v329
  %v2287 = vunpack.c.h.b16 %v329
  %v2288 = vunpack.c.l.b16 %v330
  %v2289 = vunpack.c.h.b16 %v330
  %v2290 = vunpack.c.l.b16 %v331
  %v2291 = vunpack.c.h.b16 %v331
  %v2292 = vunpack.c.l.b16 %v332
  %v2293 = vunpack.c.h.b16 %v332
  %v2294 = vunpack.c.l.b16 %v333
  %v2295 = vunpack.c.h.b16 %v333
  %v2296 = vunpack.c.l.b16 %v334
  %v2297 = vunpack.c.h.b16 %v334
  %v2298 = vunpack.c.l.b16 %v335
  %v2299 = vunpack.c.h.b16 %v335
  %v2300 = vunpack.c.l.b16 %v336
  %v2301 = vunpack.c.h.b16 %v336
  %v2302 = vunpack.c.l.b16 %v337
  %v2303 = vunpack.c.h.b16 %v337
  %v2304 = vunpack.c.l.b16 %v338
  %v2305 = vunpack.c.h.b16 %v338
  %v2306 = vunpack.c.l.b16 %v339
  %v2307 = vunpack.c.h.b16 %v339
  %v2308 = vunpack.c.l.b16 %v340
  %v2309 = vunpack.c.h.b16 %v340
  %v2310 = vunpack.c.l.b16 %v341
  %v2311 = vunpack.c.h.b16 %v341
  %v2312 = vunpack.c.l.b16 %v342
  %v2313 = vunpack.c.h.b16 %v342
  %v2314 = vunpack.c.l.b16 %v343
  %v2315 = vunpack.c.h.b16 %v343
  %v2316 = vunpack.c.l.b16 %v344
  %v2317 = vunpack.c.h.b16 %v344
  %v2318 = vunpack.c.l.b16 %v345
  %v2319 = vunpack.c.h.b16 %v345
  %v2320 = vunpack.c.l.b16 %v346
  %v2321 = vunpack.c.h.b16 %v346
  %v2322 = vunpack.c.l.b16 %v347
  %v2323 = vunpack.c.h.b16 %v347
  %v2324 = vunpack.c.l.b16 %v348
  %v2325 = vunpack.c.h.b16 %v348
  %v2326 = vunpack.c.l.b16 %v349
  %v2327 = vunpack.c.h.b16 %v349
  %v2328 = vunpack.c.l.b16 %v350
  %v2329 = vunpack.c.h.b16 %v350
  %v2330 = vunpack.c.l.b16 %v351
  %v2331 = vunpack.c.h.b16 %v351
  %v2332 = vunpack.c.l.b16 %v352
  %v2333 = vunpack.c.h.b16 %v352
  %v2334 = vunpack.c.l.b16 %v353
  %v2335 = vunpack.c.h.b16 %v353
  %v2336 = vunpack.c.l.b16 %v354
  %v2337 = vunpack.c.h.b16 %v354
  %v2338 = vunpack.c.l.b16 %v355
  %v2339 = vunpack.c.h.b16 %v355
  %v2340 = vunpack.c.l.b16 %v356
  %v2341 = vunpack.c.h.b16 %v356
  %v2342 = vunpack.c.l.b16 %v357
  %v2343 = vunpack.c.h.b16 %v357
  %v2344 = vunpack.c.l.b16 %v358
  %v2345 = vunpack.c.h.b16 %v358
  %v2346 = vunpack.c.l.b16 %v359
  %v2347 = vunpack.c.h.b16 %v359
  %v2348 = vunpack.c.l.b16 %v360
  %v2349 = vunpack.c.h.b16 %v360
  %v2350 = vunpack.c.l.b16 %v361
  %v2351 = vunpack.c.h.b16 %v361
  %v2352 = vunpack.c.l.b16 %v362
  %v2353 = vunpack.c.h.b16 %v362
  %v2354 = vunpack.c.l.b16 %v363
  %v2355 = vunpack.c.h.b16 %v363
  %v2356 = vunpack.c.l.b16 %v364
  %v2357 = vunpack.c.h.b16 %v364
  %v2358 = vunpack.c.l.b16 %v365
  %v2359 = vunpack.c.h.b16 %v365
  %v2360 = vunpack.c.l.b16 %v366
  %v2361 = vunpack.c.h.b16 %v366
  %v2362 = vunpack.c.l.b16 %v367
  %v2363 = vunpack.c.h.b16 %v367
  %v2364 = vunpack.c.l.b16 %v368
  %v2365 = vunpack.c.h.b16 %v368
  %v2366 = vunpack.c.l.b16 %v369
  %v2367 = vunpack.c.h.b16 %v369
  %v2368 = vunpack.c.l.b16 %v370
  %v2369 = vunpack.c.h.b16 %v370
  %v2370 = vunpack.c.l.b16 %v371
  %v2371 = vunpack.c.h.b16 %v371
  %v2372 = vunpack.c.l.b16 %v372
  %v2373 = vunpack.c.h.b16 %v372
  %v2374 = vunpack.c.l.b16 %v373
  %v2375 = vunpack.c.h.b16 %v373
  %v2376 = vunpack.c.l.b16 %v374
  %v2377 = vunpack.c.h.b16 %v374
  %v2378 = vunpack.c.l.b16 %v375
  %v2379 = vunpack.c.h.b16 %v375
  %v2380 = vunpack.c.l.b16 %v376
  %v2381 = vunpack.c.h.b16 %v376
  %v2382 = vunpack.c.l.b16 %v377
  %v2383 = vunpack.c.h.b16 %v377
  %v2384 = vunpack.c.l.b16 %v378
  %v2385 = vunpack.c.h.b16 %v378
  %v2386 = vunpack.c.l.b16 %v379
  %v2387 = vunpack.c.h.b16 %v379
  %v2388 = vunpack.c.l.b16 %v380
  %v2389 = vunpack.c.h.b16 %v380
  %v2390 = vunpack.c.l.b16 %v381
  %v2391 = vunpack.c.h.b16 %v381
  %v2392 = vunpack.c.l.b16 %v382
  %v2393 = vunpack.c.h.b16 %v382
  %v2394 = vunpack.c.l.b16 %v383
  %v2395 = vunpack.c.h.b16 %v383
  %v2396 = vunpack.c.l.b16 %v384
  %v2397 = vunpack.c.h.b16 %v384
  %v2398 = vunpack.c.l.b16 %v385
  %v2399 = vunpack.c.h.b16 %v385
  %v2400 = vunpack.c.l.b16 %v386
  %v2401 = vunpack.c.h.b16 %v386
  %v2402 = vunpack.c.l.b16 %v387
  %v2403 = vunpack.c.h.b16 %v387
  %v2404 = vunpack.c.l.b16 %v388
  %v2405 = vunpack.c.h.b16 %v388
  %v2406 = vunpack.c.l.b16 %v389
  %v2407 = vunpack.c.h.b16 %v389
  %v2408 = vunpack.c.l.b16 %v390
  %v2409 = vunpack.c.h.b16 %v390
  %v2410 = vunpack.c.l.b16 %v391
  %v2411 = vunpack.c.h.b16 %v391
  %v2412 = vunpack.c.l.b16 %v392
  %v2413 = vunpack.c.h.b16 %v392
  %v2414 = vunpack.c.l.b16 %v393
  %v2415 = vunpack.c.h.b16 %v393
  %v2416 = vunpack.c.l.b16 %v394
  %v2417 = vunpack.c.h.b16 %v394
  %v2418 = vunpack.c.l.b16 %v395
  %v2419 = vunpack.c.h.b16 %v395
  %v2420 = vunpack.c.l.b16 %v396
  %v2421 = vunpack.c.h.b16 %v396
  %v2422 = vunpack.c.l.b16 %v397
  %v2423 = vunpack.c.h.b16 %v397
  %v2424 = vunpack.c.l.b16 %v398
  %v2425 = vunpack.c.h.b16 %v398
  %v2426 = vunpack.c.l.b16 %v399
  %v2427 = vunpack.c.h.b16 %v399
  %v2428 = vunpack.c.l.b16 %v400
  %v2429 = vunpack.c.h.b16 %v400
  %v2430 = vunpack.c.l.b16 %v401
  %v2431 = vunpack.c.h.b16 %v401
  %v2432 = vunpack.c.l.b16 %v402
  %v2433 = vunpack.c.h.b16 %v402
  %v2434 = vunpack.c.l.b16 %v403
  %v2435 = vunpack.c.h.b16 %v403
  %v2436 = vunpack.c.l.b16 %v404
  %v2437 = vunpack.c.h.b16 %v404
  %v2438 = vunpack.c.l.b16 %v405
  %v2439 = vunpack.c.h.b16 %v405
  %v2440 = vunpack.c.l.b16 %v406
  %v2441 = vunpack.c.h.b16 %v406
  %v2442 = vunpack.c.l.b16 %v407
  %v2443 = vunpack.c.h.b16 %v407
  %v2444 = vunpack.c.l.b16 %v408
  %v2445 = vunpack.c.h.b16 %v408
  %v2446 = vunpack.c.l.b16 %v409
  %v2447 = vunpack.c.h.b16 %v409
  %v2448 = vunpack.c.l.b16 %v410
  %v2449 = vunpack.c.h.b16 %v410
  %v2450 = vunpack.c.l.b16 %v411
  %v2451 = vunpack.c.h.b16 %v411
  %v2452 = vunpack.c.l.b16 %v412
  %v2453 = vunpack.c.h.b16 %v412
  %v2454 = vunpack.c.l.b16 %v413
  %v2455 = vunpack.c.h.b16 %v413
  %v2456 = vunpack.c.l.b16 %v414
  %v2457 = vunpack.c.h.b16 %v414
  %v2458 = vunpack.c.l.b16 %v415
  %v2459 = vunpack.c.h.b16 %v415
  %v2460 = vunpack.c.l.b16 %v416
  %v2461 = vunpack.c.h.b16 %v416
  %v2462 = vunpack.c.l.b16 %v417
  %v2463 = vunpack.c.h.b16 %v417
  %v2464 = vunpack.c.l.b16 %v418
  %v2465 = vunpack.c.h.b16 %v418
  %v2466 = vunpack.c.l.b16 %v419
  %v2467 = vunpack.c.h.b16 %v419
  %v2468 = vunpack.c.l.b16 %v420
  %v2469 = vunpack.c.h.b16 %v420
  %v2470 = vunpack.c.l.b16 %v421
  %v2471 = vunpack.c.h.b16 %v421
  %v2472 = vunpack.c.l.b16 %v422
  %v2473 = vunpack.c.h.b16 %v422
  %v2474 = vunpack.c.l.b16 %v423
  %v2475 = vunpack.c.h.b16 %v423
  %v2476 = vunpack.c.l.b16 %v424
  %v2477 = vunpack.c.h.b16 %v424
  %v2478 = vunpack.c.l.b16 %v425
  %v2479 = vunpack.c.h.b16 %v425
  %v2480 = vunpack.c.l.b16 %v426
  %v2481 = vunpack.c.h.b16 %v426
  %v2482 = vunpack.c.l.b16 %v427
  %v2483 = vunpack.c.h.b16 %v427
  %v2484 = vunpack.c.l.b16 %v428
  %v2485 = vunpack.c.h.b16 %v428
  %v2486 = vunpack.c.l.b16 %v429
  %v2487 = vunpack.c.h.b16 %v429
  %v2488 = vunpack.c.l.b16 %v430
  %v2489 = vunpack.c.h.b16 %v430
  %v2490 = vunpack.c.l.b16 %v431
  %v2491 = vunpack.c.h.b16 %v431
  %v2492 = vunpack.c.l.b16 %v432
  %v2493 = vunpack.c.h.b16 %v432
  %v2494 = vunpack.c.l.b16 %v433
  %v2495 = vunpack.c.h.b16 %v433
  %v2496 = vunpack.c.l.b16 %v434
  %v2497 = vunpack.c.h.b16 %v434
  %v2498 = vunpack.c.l.b16 %v435
  %v2499 = vunpack.c.h.b16 %v435
  %v2500 = vunpack.c.l.b16 %v436
  %v2501 = vunpack.c.h.b16 %v436
  %v2502 = vunpack.c.l.b16 %v437
  %v2503 = vunpack.c.h.b16 %v437
  %v2504 = vunpack.c.l.b16 %v438
  %v2505 = vunpack.c.h.b16 %v438
  %v2506 = vunpack.c.l.b16 %v439
  %v2507 = vunpack.c.h.b16 %v439
  %v2508 = vunpack.c.l.b16 %v440
  %v2509 = vunpack.c.h.b16 %v440
  %v2510 = vunpack.c.l.b16 %v441
  %v2511 = vunpack.c.h.b16 %v441
  %v2512 = vunpack.c.l.b16 %v442
  %v2513 = vunpack.c.h.b16 %v442
  %v2514 = vunpack.c.l.b16 %v443
  %v2515 = vunpack.c.h.b16 %v443
  %v2516 = vunpack.c.l.b16 %v444
  %v2517 = vunpack.c.h.b16 %v444
  %v2518 = vunpack.c.l.b16 %v445
  %v2519 = vunpack.c.h.b16 %v445
  %v2520 = vunpack.c.l.b16 %v446
  %v2521 = vunpack.c.h.b16 %v446
  %v2522 = vunpack.c.l.b16 %v447
  %v2523 = vunpack.c.h.b16 %v447
  %v2524 = vunpack.c.l.b16 %v448
  %v2525 = vunpack.c.h.b16 %v448
  %v2526 = vunpack.c.l.b16 %v449
  %v2527 = vunpack.c.h.b16 %v449
  %v2528 = vunpack.c.l.b16 %v450
  %v2529 = vunpack.c.h.b16 %v450
  %v2530 = vunpack.c.l.b16 %v451
  %v2531 = vunpack.c.h.b16 %v451
  %v2532 = vunpack.c.l.b16 %v452
  %v2533 = vunpack.c.h.b16 %v452
  %v2534 = vunpack.c.l.b16 %v453
  %v2535 = vunpack.c.h.b16 %v453
  %v2536 = vunpack.c.l.b16 %v454
  %v2537 = vunpack.c.h.b16 %v454
  %v2538 = vunpack.c.l.b16 %v455
  %v2539 = vunpack.c.h.b16 %v455
  %v2540 = vunpack.c.l.b16 %v456
  %v2541 = vunpack.c.h.b16 %v456
  %v2542 = vunpack.c.l.b16 %v457
  %v2543 = vunpack.c.h.b16 %v457
  %v2544 = vunpack.c.l.b16 %v458
  %v2545 = vunpack.c.h.b16 %v458
  %v2546 = vunpack.c.l.b16 %v459
  %v2547 = vunpack.c.h.b16 %v459
  %v2548 = vunpack.c.l.b16 %v460
  %v2549 = vunpack.c.h.b16 %v460
  %v2550 = vunpack.c.l.b16 %v461
  %v2551 = vunpack.c.h.b16 %v461
  %v2552 = vunpack.c.l.b16 %v462
  %v2553 = vunpack.c.h.b16 %v462
  %v2554 = vunpack.c.l.b16 %v463
  %v2555 = vunpack.c.h.b16 %v463
  %v2556 = vunpack.c.l.b16 %v464
  %v2557 = vunpack.c.h.b16 %v464
  %v2558 = vunpack.c.l.b16 %v465
  %v2559 = vunpack.c.h.b16 %v465
  %v2560 = vunpack.c.l.b16 %v466
  %v2561 = vunpack.c.h.b16 %v466
  %v2562 = vunpack.c.l.b16 %v467
  %v2563 = vunpack.c.h.b16 %v467
  %v2564 = vunpack.c.l.b16 %v468
  %v2565 = vunpack.c.h.b16 %v468
  %v2566 = vunpack.c.l.b16 %v469
  %v2567 = vunpack.c.h.b16 %v469
  %v2568 = vunpack.c.l.b16 %v470
  %v2569 = vunpack.c.h.b16 %v470
  %v2570 = vunpack.c.l.b16 %v471
  %v2571 = vunpack.c.h.b16 %v471
  %v2572 = vunpack.c.l.b16 %v472
  %v2573 = vunpack.c.h.b16 %v472
  %v2574 = vunpack.c.l.b16 %v473
  %v2575 = vunpack.c.h.b16 %v473
  %v2576 = vunpack.c.l.b16 %v474
  %v2577 = vunpack.c.h.b16 %v474
  %v2578 = vunpack.c.l.b16 %v475
  %v2579 = vunpack.c.h.b16 %v475
  %v2580 = vunpack.c.l.b16 %v476
  %v2581 = vunpack.c.h.b16 %v476
  %v2582 = vunpack.c.l.b16 %v477
  %v2583 = vunpack.c.h.b16 %v477
  %v2584 = vunpack.c.l.b16 %v478
  %v2585 = vunpack.c.h.b16 %v478
  %v2586 = vunpack.c.l.b16 %v479
  %v2587 = vunpack.c.h.b16 %v479
  %v2588 = vunpack.c.l.b16 %v480
  %v2589 = vunpack.c.h.b16 %v480
  %v2590 = vunpack.c.l.b16 %v481
  %v2591 = vunpack.c.h.b16 %v481
  %v2592 = vunpack.c.l.b16 %v482
  %v2593 = vunpack.c.h.b16 %v482
  %v2594 = vunpack.c.l.b16 %v483
  %v2595 = vunpack.c.h.b16 %v483
  %v2596 = vunpack.c.l.b16 %v484
  %v2597 = vunpack.c.h.b16 %v484
  %v2598 = vunpack.c.l.b16 %v485
  %v2599 = vunpack.c.h.b16 %v485
  %v2600 = vunpack.c.l.b16 %v486
  %v2601 = vunpack.c.h.b16 %v486
  %v2602 = vunpack.c.l.b16 %v487
  %v2603 = vunpack.c.h.b16 %v487
  %v2604 = vunpack.c.l.b16 %v488
  %v2605 = vunpack.c.h.b16 %v488
  %v2606 = vunpack.c.l.b16 %v489
  %v2607 = vunpack.c.h.b16 %v489
  %v2608 = vunpack.c.l.b16 %v490
  %v2609 = vunpack.c.h.b16 %v490
  %v2610 = vunpack.c.l.b16 %v491
  %v2611 = vunpack.c.h.b16 %v491
  %v2612 = vunpack.c.l.b16 %v492
  %v2613 = vunpack.c.h.b16 %v492
  %v2614 = vunpack.c.l.b16 %v493
  %v2615 = vunpack.c.h.b16 %v493
  %v2616 = vunpack.c.l.b16 %v494
  %v2617 = vunpack.c.h.b16 %v494
  %v2618 = vunpack.c.l.b16 %v495
  %v2619 = vunpack.c.h.b16 %v495
  %v2620 = vunpack.c.l.b16 %v496
  %v2621 = vunpack.c.h.b16 %v496
  %v2622 = vunpack.c.l.b16 %v497
  %v2623 = vunpack.c.h.b16 %v497
  %v2624 = vunpack.c.l.b16 %v498
  %v2625 = vunpack.c.h.b16 %v498
  %v2626 = vunpack.c.l.b16 %v499
  %v2627 = vunpack.c.h.b16 %v499
  %v2628 = vunpack.c.l.b16 %v500
  %v2629 = vunpack.c.h.b16 %v500
  %v2630 = vunpack.c.l.b16 %v501
  %v2631 = vunpack.c.h.b16 %v501
  %v2632 = vunpack.c.l.b16 %v502
  %v2633 = vunpack.c.h.b16 %v502
  %v2634 = vunpack.c.l.b16 %v503
  %v2635 = vunpack.c.h.b16 %v503
  %v2636 = vunpack.c.l.b16 %v504
  %v2637 = vunpack.c.h.b16 %v504
  %v2638 = vunpack.c.l.b16 %v505
  %v2639 = vunpack.c.h.b16 %v505
  %v2640 = vunpack.c.l.b16 %v506
  %v2641 = vunpack.c.h.b16 %v506
  %v2642 = vunpack.c.l.b16 %v507
  %v2643 = vunpack.c.h.b16 %v507
  %v2644 = vunpack.c.l.b16 %v508
  %v2645 = vunpack.c.h.b16 %v508
  %v2646 = vunpack.c.l.b16 %v509
  %v2647 = vunpack.c.h.b16 %v509
  %v2648 = vunpack.c.l.b16 %v510
  %v2649 = vunpack.c.h.b16 %v510
  %v2650 = vunpack.c.l.b16 %v511
  %v2651 = vunpack.c.h.b16 %v511
  %v2652 = vunpack.c.l.b16 %v512
  %v2653 = vunpack.c.h.b16 %v512
  %v2654 = vunpack.c.l.b16 %v513
  %v2655 = vunpack.c.h.b16 %v513
  %v2656 = vunpack.c.l.b16 %v514
  %v2657 = vunpack.c.h.b16 %v514
  %v2658 = vunpack.c.l.b16 %v515
  %v2659 = vunpack.c.h.b16 %v515
  %v2660 = vunpack.c.l.b16 %v516
  %v2661 = vunpack.c.h.b16 %v516
  %v2662 = vunpack.c.l.b16 %v517
  %v2663 = vunpack.c.h.b16 %v517
  %v2664 = vunpack.c.l.b16 %v518
  %v2665 = vunpack.c.h.b16 %v518
  %v2666 = vunpack.c.l.b16 %v519
  %v2667 = vunpack.c.h.b16 %v519
  %v2668 = vunpack.c.l.b16 %v520
  %v2669 = vunpack.c.h.b16 %v520
  %v2670 = vunpack.c.l.b16 %v521
  %v2671 = vunpack.c.h.b16 %v521
  %v2672 = vunpack.c.l.b16 %v522
  %v2673 = vunpack.c.h.b16 %v522
  %v2674 = vunpack.c.l.b16 %v523
  %v2675 = vunpack.c.h.b16 %v523
  %v2676 = vunpack.c.l.b16 %v524
  %v2677 = vunpack.c.h.b16 %v524
  %v2678 = vunpack.c.l.b16 %v525
  %v2679 = vunpack.c.h.b16 %v525
  %v2680 = vunpack.c.l.b16 %v526
  %v2681 = vunpack.c.h.b16 %v526
  %v2682 = vunpack.c.l.b16 %v527
  %v2683 = vunpack.c.h.b16 %v527
  %v2684 = vunpack.c.l.b16 %v528
  %v2685 = vunpack.c.h.b16 %v528
  %v2686 = vunpack.c.l.b16 %v529
  %v2687 = vunpack.c.h.b16 %v529
  %v2688 = vunpack.c.l.b16 %v530
  %v2689 = vunpack.c.h.b16 %v530
  %v2690 = vunpack.c.l.b16 %v531
  %v2691 = vunpack.c.h.b16 %v531
  %v2692 = vunpack.c.l.b16 %v532
  %v2693 = vunpack.c.h.b16 %v532
  %v2694 = vunpack.c.l.b16 %v533
  %v2695 = vunpack.c.h.b16 %v533
  %v2696 = vunpack.c.l.b16 %v534
  %v2697 = vunpack.c.h.b16 %v534
  %v2698 = vunpack.c.l.b16 %v535
  %v2699 = vunpack.c.h.b16 %v535
  %v2700 = vunpack.c.l.b16 %v536
  %v2701 = vunpack.c.h.b16 %v536
  %v2702 = vunpack.c.l.b16 %v537
  %v2703 = vunpack.c.h.b16 %v537
  %v2704 = vunpack.c.l.b16 %v538
  %v2705 = vunpack.c.h.b16 %v538
  %v2706 = vunpack.c.l.b16 %v539
  %v2707 = vunpack.c.h.b16 %v539
  %v2708 = vunpack.c.l.b16 %v540
  %v2709 = vunpack.c.h.b16 %v540
  %v2710 = vunpack.c.l.b16 %v541
  %v2711 = vunpack.c.h.b16 %v541
  %v2712 = vunpack.c.l.b16 %v542
  %v2713 = vunpack.c.h.b16 %v542
  %v2714 = vunpack.c.l.b16 %v543
  %v2715 = vunpack.c.h.b16 %v543
  %v2716 = vunpack.c.l.b16 %v544
  %v2717 = vunpack.c.h.b16 %v544
  %v2718 = vunpack.c.l.b16 %v545
  %v2719 = vunpack.c.h.b16 %v545
  %v2720 = vunpack.c.l.b16 %v546
  %v2721 = vunpack.c.h.b16 %v546
  %v2722 = vunpack.c.l.b16 %v547
  %v2723 = vunpack.c.h.b16 %v547
  %v2724 = vunpack.c.l.b16 %v548
  %v2725 = vunpack.c.h.b16 %v548
  %v2726 = vunpack.c.l.b16 %v549
  %v2727 = vunpack.c.h.b16 %v549
  %v2728 = vunpack.c.l.b16 %v550
  %v2729 = vunpack.c.h.b16 %v550
  %v2730 = vunpack.c.l.b16 %v551
  %v2731 = vunpack.c.h.b16 %v551
  %v2732 = vunpack.c.l.b16 %v552
  %v2733 = vunpack.c.h.b16 %v552
  %v2734 = vunpack.c.l.b16 %v553
  %v2735 = vunpack.c.h.b16 %v553
  %v2736 = vunpack.c.l.b16 %v554
  %v2737 = vunpack.c.h.b16 %v554
  %v2738 = vunpack.c.l.b16 %v555
  %v2739 = vunpack.c.h.b16 %v555
  %v2740 = vunpack.c.l.b16 %v556
  %v2741 = vunpack.c.h.b16 %v556
  %v2742 = vunpack.c.l.b16 %v557
  %v2743 = vunpack.c.h.b16 %v557
  %v2744 = vunpack.c.l.b16 %v558
  %v2745 = vunpack.c.h.b16 %v558
  %v2746 = vunpack.c.l.b16 %v559
  %v2747 = vunpack.c.h.b16 %v559
  %v2748 = vunpack.c.l.b16 %v560
  %v2749 = vunpack.c.h.b16 %v560
  %v2750 = vunpack.c.l.b16 %v561
  %v2751 = vunpack.c.h.b16 %v561
  %v2752 = vunpack.c.l.b16 %v562
  %v2753 = vunpack.c.h.b16 %v562
  %v2754 = vunpack.c.l.b16 %v563
  %v2755 = vunpack.c.h.b16 %v563
  %v2756 = vunpack.c.l.b16 %v564
  %v2757 = vunpack.c.h.b16 %v564
  %v2758 = vunpack.c.l.b16 %v565
  %v2759 = vunpack.c.h.b16 %v565
  %v2760 = vunpack.c.l.b16 %v566
  %v2761 = vunpack.c.h.b16 %v566
  %v2762 = vunpack.c.l.b16 %v567
  %v2763 = vunpack.c.h.b16 %v567
  %v2764 = vunpack.c.l.b16 %v568
  %v2765 = vunpack.c.h.b16 %v568
  %v2766 = vunpack.c.l.b16 %v569
  %v2767 = vunpack.c.h.b16 %v569
  %v2768 = vunpack.c.l.b16 %v570
  %v2769 = vunpack.c.h.b16 %v570
  %v2770 = vunpack.c.l.b16 %v571
  %v2771 = vunpack.c.h.b16 %v571
  %v2772 = vunpack.c.l.b16 %v572
  %v2773 = vunpack.c.h.b16 %v572
  %v2774 = vunpack.c.l.b16 %v573
  %v2775 = vunpack.c.h.b16 %v573
  %v2776 = vunpack.c.l.b16 %v574
  %v2777 = vunpack.c.h.b16 %v574
  %v2778 = vunpack.c.l.b16 %v575
  %v2779 = vunpack.c.h.b16 %v575
  %v2780 = vunpack.c.l.b16 %v576
  %v2781 = vunpack.c.h.b16 %v576
  %v2782 = vunpack.c.l.b16 %v577
  %v2783 = vunpack.c.h.b16 %v577
  %v2784 = vunpack.c.l.b16 %v578
  %v2785 = vunpack.c.h.b16 %v578
  %v2786 = vunpack.c.l.b16 %v579
  %v2787 = vunpack.c.h.b16 %v579
  %v2788 = vunpack.c.l.b16 %v580
  %v2789 = vunpack.c.h.b16 %v580
  %v2790 = vunpack.c.l.b16 %v581
  %v2791 = vunpack.c.h.b16 %v581
  %v2792 = vunpack.c.l.b16 %v582
  %v2793 = vunpack.c.h.b16 %v582
  %v2794 = vunpack.c.l.b16 %v583
  %v2795 = vunpack.c.h.b16 %v583
  %v2796 = vunpack.c.l.b16 %v584
  %v2797 = vunpack.c.h.b16 %v584
  %v2798 = vunpack.c.l.b16 %v585
  %v2799 = vunpack.c.h.b16 %v585
  %v2800 = vunpack.c.l.b16 %v586
  %v2801 = vunpack.c.h.b16 %v586
  %v2802 = vunpack.c.l.b16 %v587
  %v2803 = vunpack.c.h.b16 %v587
  %v2804 = vunpack.c.l.b16 %v588
  %v2805 = vunpack.c.h.b16 %v588
  %v2806 = vunpack.c.l.b16 %v589
  %v2807 = vunpack.c.h.b16 %v589
  %v2808 = vunpack.c.l.b16 %v590
  %v2809 = vunpack.c.h.b16 %v590
  %v2810 = vunpack.c.l.b16 %v591
  %v2811 = vunpack.c.h.b16 %v591
  %v2812 = vunpack.c.l.b16 %v592
  %v2813 = vunpack.c.h.b16 %v592
  %v2814 = vunpack.c.l.b16 %v593
  %v2815 = vunpack.c.h.b16 %v593
  %v2816 = vunpack.c.l.b16 %v594
  %v2817 = vunpack.c.h.b16 %v594
  %v2818 = vunpack.c.l.b16 %v595
  %v2819 = vunpack.c.h.b16 %v595
  %v2820 = vunpack.c.l.b16 %v596
  %v2821 = vunpack.c.h.b16 %v596
  %v2822 = vunpack.c.l.b16 %v597
  %v2823 = vunpack.c.h.b16 %v597
  %v2824 = vunpack.c.l.b16 %v598
  %v2825 = vunpack.c.h.b16 %v598
  %v2826 = vunpack.c.l.b16 %v599
  %v2827 = vunpack.c.h.b16 %v599
  %v2828 = vunpack.c.l.b16 %v600
  %v2829 = vunpack.c.h.b16 %v600
  %v2830 = vunpack.c.l.b16 %v601
  %v2831 = vunpack.c.h.b16 %v601
  %v2832 = vunpack.c.l.b16 %v602
  %v2833 = vunpack.c.h.b16 %v602
  %v2834 = vunpack.c.l.b16 %v603
  %v2835 = vunpack.c.h.b16 %v603
  %v2836 = vunpack.c.l.b16 %v604
  %v2837 = vunpack.c.h.b16 %v604
  %v2838 = vunpack.c.l.b16 %v605
  %v2839 = vunpack.c.h.b16 %v605
  %v2840 = vunpack.c.l.b16 %v606
  %v2841 = vunpack.c.h.b16 %v606
  %v2842 = vunpack.c.l.b16 %v607
  %v2843 = vunpack.c.h.b16 %v607
  %v2844 = vunpack.c.l.b16 %v608
  %v2845 = vunpack.c.h.b16 %v608
  %v2846 = vunpack.c.l.b16 %v609
  %v2847 = vunpack.c.h.b16 %v609
  %v2848 = vunpack.c.l.b16 %v610
  %v2849 = vunpack.c.h.b16 %v610
  %v2850 = vunpack.c.l.b16 %v611
  %v2851 = vunpack.c.h.b16 %v611
  %v2852 = vunpack.c.l.b16 %v612
  %v2853 = vunpack.c.h.b16 %v612
  %v2854 = vunpack.c.l.b16 %v613
  %v2855 = vunpack.c.h.b16 %v613
  %v2856 = vunpack.c.l.b16 %v614
  %v2857 = vunpack.c.h.b16 %v614
  %v2858 = vunpack.c.l.b16 %v615
  %v2859 = vunpack.c.h.b16 %v615
  %v2860 = vunpack.c.l.b16 %v616
  %v2861 = vunpack.c.h.b16 %v616
  %v2862 = vunpack.c.l.b16 %v617
  %v2863 = vunpack.c.h.b16 %v617
  %v2864 = vunpack.c.l.b16 %v618
  %v2865 = vunpack.c.h.b16 %v618
  %v2866 = vunpack.c.l.b16 %v619
  %v2867 = vunpack.c.h.b16 %v619
  %v2868 = vunpack.c.l.b16 %v620
  %v2869 = vunpack.c.h.b16 %v620
  %v2870 = vunpack.c.l.b16 %v621
  %v2871 = vunpack.c.h.b16 %v621
  %v2872 = vunpack.c.l.b16 %v622
  %v2873 = vunpack.c.h.b16 %v622
  %v2874 = vunpack.c.l.b16 %v623
  %v2875 = vunpack.c.h.b16 %v623
  %v2876 = vunpack.c.l.b16 %v624
  %v2877 = vunpack.c.h.b16 %v624
  %v2878 = vunpack.c.l.b16 %v625
  %v2879 = vunpack.c.h.b16 %v625
  %v2880 = vunpack.c.l.b16 %v626
  %v2881 = vunpack.c.h.b16 %v626
  %v2882 = vunpack.c.l.b16 %v627
  %v2883 = vunpack.c.h.b16 %v627
  %v2884 = vunpack.c.l.b16 %v628
  %v2885 = vunpack.c.h.b16 %v628
  %v2886 = vunpack.c.l.b16 %v629
  %v2887 = vunpack.c.h.b16 %v629
  %v2888 = vunpack.c.l.b16 %v630
  %v2889 = vunpack.c.h.b16 %v630
  %v2890 = vunpack.c.l.b16 %v631
  %v2891 = vunpack.c.h.b16 %v631
  %v2892 = vunpack.c.l.b16 %v632
  %v2893 = vunpack.c.h.b16 %v632
  %v2894 = vunpack.c.l.b16 %v633
  %v2895 = vunpack.c.h.b16 %v633
  %v2896 = vunpack.c.l.b16 %v634
  %v2897 = vunpack.c.h.b16 %v634
  %v2898 = vunpack.c.l.b16 %v635
  %v2899 = vunpack.c.h.b16 %v635
  %v2900 = vunpack.c.l.b16 %v636
  %v2901 = vunpack.c.h.b16 %v636
  %v2902 = vunpack.c.l.b16 %v637
  %v2903 = vunpack.c.h.b16 %v637
  %v2904 = vunpack.c.l.b16 %v638
  %v2905 = vunpack.c.h.b16 %v638
  %v2906 = vunpack.c.l.b16 %v639
  %v2907 = vunpack.c.h.b16 %v639
  %v2908 = vunpack.c.l.b16 %v640
  %v2909 = vunpack.c.h.b16 %v640
  %v2910 = vunpack.c.l.b16 %v641
  %v2911 = vunpack.c.h.b16 %v641
  %v2912 = vunpack.c.l.b16 %v642
  %v2913 = vunpack.c.h.b16 %v642
  %v2914 = vunpack.c.l.b16 %v643
  %v2915 = vunpack.c.h.b16 %v643
  %v2916 = vunpack.c.l.b16 %v644
  %v2917 = vunpack.c.h.b16 %v644
  %v2918 = vunpack.c.l.b16 %v645
  %v2919 = vunpack.c.h.b16 %v645
  %v2920 = vunpack.c.l.b16 %v646
  %v2921 = vunpack.c.h.b16 %v646
  %v2922 = vunpack.c.l.b16 %v647
  %v2923 = vunpack.c.h.b16 %v647
  %v2924 = vunpack.c.l.b16 %v648
  %v2925 = vunpack.c.h.b16 %v648
  %v2926 = vunpack.c.l.b16 %v649
  %v2927 = vunpack.c.h.b16 %v649
  %v2928 = vunpack.c.l.b16 %v650
  %v2929 = vunpack.c.h.b16 %v650
  %v2930 = vunpack.c.l.b16 %v651
  %v2931 = vunpack.c.h.b16 %v651
  %v2932 = vunpack.c.l.b16 %v652
  %v2933 = vunpack.c.h.b16 %v652
  %v2934 = vunpack.c.l.b16 %v653
  %v2935 = vunpack.c.h.b16 %v653
  %v2936 = vunpack.c.l.b16 %v654
  %v2937 = vunpack.c.h.b16 %v654
  %v2938 = vunpack.c.l.b16 %v655
  %v2939 = vunpack.c.h.b16 %v655
  %v2940 = vunpack.c.l.b16 %v656
  %v2941 = vunpack.c.h.b16 %v656
  %v2942 = vunpack.c.l.b16 %v657
  %v2943 = vunpack.c.h.b16 %v657
  %v2944 = vunpack.c.l.b16 %v658
  %v2945 = vunpack.c.h.b16 %v658
  %v2946 = vunpack.c.l.b16 %v659
  %v2947 = vunpack.c.h.b16 %v659
  %v2948 = vunpack.c.l.b16 %v660
  %v2949 = vunpack.c.h.b16 %v660
  %v2950 = vunpack.c.l.b16 %v661
  %v2951 = vunpack.c.h.b16 %v661
  %v2952 = vunpack.c.l.b16 %v662
  %v2953 = vunpack.c.h.b16 %v662
  %v2954 = vunpack.c.l.b16 %v663
  %v2955 = vunpack.c.h.b16 %v663
  %v2956 = vunpack.c.l.b16 %v664
  %v2957 = vunpack.c.h.b16 %v664
  %v2958 = vunpack.c.l.b16 %v665
  %v2959 = vunpack.c.h.b16 %v665
  %v2960 = vunpack.c.l.b16 %v666
  %v2961 = vunpack.c.h.b16 %v666
  %v2962 = vunpack.c.l.b16 %v667
  %v2963 = vunpack.c.h.b16 %v667
  %v2964 = vunpack.c.l.b16 %v668
  %v2965 = vunpack.c.h.b16 %v668
  %v2966 = vunpack.c.l.b16 %v669
  %v2967 = vunpack.c.h.b16 %v669
  %v2968 = vunpack.c.l.b16 %v670
  %v2969 = vunpack.c.h.b16 %v670
  %v2970 = vunpack.c.l.b16 %v671
  %v2971 = vunpack.c.h.b16 %v671
  %v2972 = vunpack.c.l.b16 %v672
  %v2973 = vunpack.c.h.b16 %v672
  %v2974 = vunpack.c.l.b16 %v673
  %v2975 = vunpack.c.h.b16 %v673
  %v2976 = vunpack.c.l.b16 %v674
  %v2977 = vunpack.c.h.b16 %v674
  %v2978 = vunpack.c.l.b16 %v675
  %v2979 = vunpack.c.h.b16 %v675
  %v2980 = vunpack.c.l.b16 %v676
  %v2981 = vunpack.c.h.b16 %v676
  %v2982 = vunpack.c.l.b16 %v677
  %v2983 = vunpack.c.h.b16 %v677
  %v2984 = vunpack.c.l.b16 %v678
  %v2985 = vunpack.c.h.b16 %v678
  %v2986 = vunpack.c.l.b16 %v679
  %v2987 = vunpack.c.h.b16 %v679
  %v2988 = vunpack.c.l.b16 %v680
  %v2989 = vunpack.c.h.b16 %v680
  %v2990 = vunpack.c.l.b16 %v681
  %v2991 = vunpack.c.h.b16 %v681
  %v2992 = vunpack.c.l.b16 %v682
  %v2993 = vunpack.c.h.b16 %v682
  %v2994 = vunpack.c.l.b16 %v683
  %v2995 = vunpack.c.h.b16 %v683
  %v2996 = vunpack.c.l.b16 %v684
  %v2997 = vunpack.c.h.b16 %v684
  %v2998 = vunpack.c.l.b16 %v685
  %v2999 = vunpack.c.h.b16 %v685
  %v3000 = vunpack.c.l.b16 %v686
  %v3001 = vunpack.c.h.b16 %v686
  %v3002 = vunpack.c.l.b16 %v687
  %v3003 = vunpack.c.h.b16 %v687
  %v3004 = vunpack.c.l.b16 %v688
  %v3005 = vunpack.c.h.b16 %v688
  %v3006 = vunpack.c.l.b16 %v689
  %v3007 = vunpack.c.h.b16 %v689
  %v3008 = vunpack.c.l.b16 %v690
  %v3009 = vunpack.c.h.b16 %v690
  %v3010 = vunpack.c.l.b16 %v691
  %v3011 = vunpack.c.h.b16 %v691
  %v3012 = vunpack.c.l.b16 %v692
  %v3013 = vunpack.c.h.b16 %v692
  %v3014 = vunpack.c.l.b16 %v693
  %v3015 = vunpack.c.h.b16 %v693
  %v3016 = vunpack.c.l.b16 %v694
  %v3017 = vunpack.c.h.b16 %v694
  %v3018 = vunpack.c.l.b16 %v695
  %v3019 = vunpack.c.h.b16 %v695
  %v3020 = vunpack.c.l.b16 %v696
  %v3021 = vunpack.c.h.b16 %v696
  %v3022 = vunpack.c.l.b16 %v697
  %v3023 = vunpack.c.h.b16 %v697
  %v3024 = vunpack.c.l.b16 %v698
  %v3025 = vunpack.c.h.b16 %v698
  %v3026 = vunpack.c.l.b16 %v699
  %v3027 = vunpack.c.h.b16 %v699
  %v3028 = vunpack.c.l.b16 %v700
  %v3029 = vunpack.c.h.b16 %v700
  %v3030 = vunpack.c.l.b16 %v701
  %v3031 = vunpack.c.h.b16 %v701
  %v3032 = vunpack.c.l.b16 %v702
  %v3033 = vunpack.c.h.b16 %v702
  %v3034 = vunpack.c.l.b16 %v703
  %v3035 = vunpack.c.h.b16 %v703
  %v3036 = vunpack.c.l.b16 %v704
  %v3037 = vunpack.c.h.b16 %v704
  %v3038 = vunpack.c.l.b16 %v705
  %v3039 = vunpack.c.h.b16 %v705
  %v3040 = vunpack.c.l.b16 %v706
  %v3041 = vunpack.c.h.b16 %v706
  %v3042 = vunpack.c.l.b16 %v707
  %v3043 = vunpack.c.h.b16 %v707
  %v3044 = vunpack.c.l.b16 %v708
  %v3045 = vunpack.c.h.b16 %v708
  %v3046 = vunpack.c.l.b16 %v709
  %v3047 = vunpack.c.h.b16 %v709
  %v3048 = vunpack.c.l.b16 %v710
  %v3049 = vunpack.c.h.b16 %v710
  %v3050 = vunpack.c.l.b16 %v711
  %v3051 = vunpack.c.h.b16 %v711
  %v3052 = vunpack.c.l.b16 %v712
  %v3053 = vunpack.c.h.b16 %v712
  %v3054 = vunpack.c.l.b16 %v713
  %v3055 = vunpack.c.h.b16 %v713
  %v3056 = vunpack.c.l.b16 %v714
  %v3057 = vunpack.c.h.b16 %v714
  %v3058 = vunpack.c.l.b16 %v715
  %v3059 = vunpack.c.h.b16 %v715
  %v3060 = vunpack.c.l.b16 %v716
  %v3061 = vunpack.c.h.b16 %v716
  %v3062 = vunpack.c.l.b16 %v717
  %v3063 = vunpack.c.h.b16 %v717
  %v3064 = vunpack.c.l.b16 %v718
  %v3065 = vunpack.c.h.b16 %v718
  %v3066 = vunpack.c.l.b16 %v719
  %v3067 = vunpack.c.h.b16 %v719
  %v3068 = vunpack.c.l.b16 %v720
  %v3069 = vunpack.c.h.b16 %v720
  %v3070 = vunpack.c.l.b16 %v721
  %v3071 = vunpack.c.h.b16 %v721
  %v3072 = vunpack.c.l.b16 %v722
  %v3073 = vunpack.c.h.b16 %v722
  %v3074 = vunpack.c.l.b16 %v723
  %v3075 = vunpack.c.h.b16 %v723
  %v3076 = vunpack.c.l.b16 %v724
  %v3077 = vunpack.c.h.b16 %v724
  %v3078 = vunpack.c.l.b16 %v725
  %v3079 = vunpack.c.h.b16 %v725
  %v3080 = vunpack.c.l.b16 %v726
  %v3081 = vunpack.c.h.b16 %v726
  %v3082 = vunpack.c.l.b16 %v727
  %v3083 = vunpack.c.h.b16 %v727
  %v3084 = vunpack.c.l.b16 %v728
  %v3085 = vunpack.c.h.b16 %v728
  %v3086 = vunpack.c.l.b16 %v729
  %v3087 = vunpack.c.h.b16 %v729
  %v3088 = vunpack.c.l.b16 %v730
  %v3089 = vunpack.c.h.b16 %v730
  %v3090 = vunpack.c.l.b16 %v731
  %v3091 = vunpack.c.h.b16 %v731
  %v3092 = vunpack.c.l.b16 %v732
  %v3093 = vunpack.c.h.b16 %v732
  %v3094 = vunpack.c.l.b16 %v733
  %v3095 = vunpack.c.h.b16 %v733
  %v3096 = vunpack.c.l.b16 %v734
  %v3097 = vunpack.c.h.b16 %v734
  %v3098 = vunpack.c.l.b16 %v735
  %v3099 = vunpack.c.h.b16 %v735
  %v3100 = vunpack.c.l.b16 %v736
  %v3101 = vunpack.c.h.b16 %v736
  %v3102 = vunpack.c.l.b16 %v737
  %v3103 = vunpack.c.h.b16 %v737
  %v3104 = vunpack.c.l.b16 %v738
  %v3105 = vunpack.c.h.b16 %v738
  %v3106 = vunpack.c.l.b16 %v739
  %v3107 = vunpack.c.h.b16 %v739
  %v3108 = vunpack.c.l.b16 %v740
  %v3109 = vunpack.c.h.b16 %v740
  %v3110 = vunpack.c.l.b16 %v741
  %v3111 = vunpack.c.h.b16 %v741
  %v3112 = vunpack.c.l.b16 %v742
  %v3113 = vunpack.c.h.b16 %v742
  %v3114 = vunpack.c.l.b16 %v743
  %v3115 = vunpack.c.h.b16 %v743
  %v3116 = vunpack.c.l.b16 %v744
  %v3117 = vunpack.c.h.b16 %v744
  %v3118 = vunpack.c.l.b16 %v745
  %v3119 = vunpack.c.h.b16 %v745
  %v3120 = vunpack.c.l.b16 %v746
  %v3121 = vunpack.c.h.b16 %v746
  %v3122 = vunpack.c.l.b16 %v747
  %v3123 = vunpack.c.h.b16 %v747
  %v3124 = vunpack.c.l.b16 %v748
  %v3125 = vunpack.c.h.b16 %v748
  %v3126 = vunpack.c.l.b16 %v749
  %v3127 = vunpack.c.h.b16 %v749
  %v3128 = vunpack.c.l.b16 %v750
  %v3129 = vunpack.c.h.b16 %v750
  %v3130 = vunpack.c.l.b16 %v751
  %v3131 = vunpack.c.h.b16 %v751
  %v3132 = vunpack.c.l.b16 %v752
  %v3133 = vunpack.c.h.b16 %v752
  %v3134 = vunpack.c.l.b16 %v753
  %v3135 = vunpack.c.h.b16 %v753
  %v3136 = vunpack.c.l.b16 %v754
  %v3137 = vunpack.c.h.b16 %v754
  %v3138 = vunpack.c.l.b16 %v755
  %v3139 = vunpack.c.h.b16 %v755
  %v3140 = vunpack.c.l.b16 %v756
  %v3141 = vunpack.c.h.b16 %v756
  %v3142 = vunpack.c.l.b16 %v757
  %v3143 = vunpack.c.h.b16 %v757
  %v3144 = vunpack.c.l.b16 %v758
  %v3145 = vunpack.c.h.b16 %v758
  %v3146 = vunpack.c.l.b16 %v759
  %v3147 = vunpack.c.h.b16 %v759
  %v3148 = vunpack.c.l.b16 %v760
  %v3149 = vunpack.c.h.b16 %v760
  %v3150 = vunpack.c.l.b16 %v761
  %v3151 = vunpack.c.h.b16 %v761
  %v3152 = vunpack.c.l.b16 %v762
  %v3153 = vunpack.c.h.b16 %v762
  %v3154 = vunpack.c.l.b16 %v763
  %v3155 = vunpack.c.h.b16 %v763
  %v3156 = vunpack.c.l.b16 %v764
  %v3157 = vunpack.c.h.b16 %v764
  %v3158 = vunpack.c.l.b16 %v765
  %v3159 = vunpack.c.h.b16 %v765
  %v3160 = vunpack.c.l.b16 %v766
  %v3161 = vunpack.c.h.b16 %v766
  %v3162 = vunpack.c.l.b16 %v767
  %v3163 = vunpack.c.h.b16 %v767
  %v3164 = vunpack.c.l.b16 %v768
  %v3165 = vunpack.c.h.b16 %v768
  %v3166 = vunpack.c.l.b16 %v769
  %v3167 = vunpack.c.h.b16 %v769
  %v3168 = vunpack.c.l.b16 %v770
  %v3169 = vunpack.c.h.b16 %v770
  %v3170 = vunpack.c.l.b16 %v771
  %v3171 = vunpack.c.h.b16 %v771
  %v3172 = vunpack.c.l.b16 %v772
  %v3173 = vunpack.c.h.b16 %v772
  %v3174 = vunpack.c.l.b16 %v773
  %v3175 = vunpack.c.h.b16 %v773
  %v3176 = vunpack.c.l.b16 %v774
  %v3177 = vunpack.c.h.b16 %v774
  %v3178 = vunpack.c.l.b16 %v775
  %v3179 = vunpack.c.h.b16 %v775
  %v3180 = vunpack.c.l.b16 %v776
  %v3181 = vunpack.c.h.b16 %v776
  %v3182 = vunpack.c.l.b16 %v777
  %v3183 = vunpack.c.h.b16 %v777
  %v3184 = vunpack.c.l.b16 %v778
  %v3185 = vunpack.c.h.b16 %v778
  %v3186 = vunpack.c.l.b16 %v779
  %v3187 = vunpack.c.h.b16 %v779
  %v3188 = vunpack.c.l.b16 %v780
  %v3189 = vunpack.c.h.b16 %v780
  %v3190 = vunpack.c.l.b16 %v781
  %v3191 = vunpack.c.h.b16 %v781
  %v3192 = vunpack.c.l.b16 %v782
  %v3193 = vunpack.c.h.b16 %v782
  %v3194 = vunpack.c.l.b16 %v783
  %v3195 = vunpack.c.h.b16 %v783
  %v3196 = vunpack.c.l.b16 %v784
  %v3197 = vunpack.c.h.b16 %v784
  %v3198 = vunpack.c.l.b16 %v785
  %v3199 = vunpack.c.h.b16 %v785
  %v3200 = vunpack.c.l.b16 %v786
  %v3201 = vunpack.c.h.b16 %v786
  %v3202 = vunpack.c.l.b16 %v787
  %v3203 = vunpack.c.h.b16 %v787
  %v3204 = vunpack.c.l.b16 %v788
  %v3205 = vunpack.c.h.b16 %v788
  %v3206 = vunpack.c.l.b16 %v789
  %v3207 = vunpack.c.h.b16 %v789
  %v3208 = vunpack.c.l.b16 %v790
  %v3209 = vunpack.c.h.b16 %v790
  %v3210 = vunpack.c.l.b16 %v791
  %v3211 = vunpack.c.h.b16 %v791
  %v3212 = vunpack.c.l.b16 %v792
  %v3213 = vunpack.c.h.b16 %v792
  %v3214 = vunpack.c.l.b16 %v793
  %v3215 = vunpack.c.h.b16 %v793
  %v3216 = vunpack.c.l.b16 %v794
  %v3217 = vunpack.c.h.b16 %v794
  %v3218 = vunpack.c.l.b16 %v795
  %v3219 = vunpack.c.h.b16 %v795
  %v3220 = vunpack.c.l.b16 %v796
  %v3221 = vunpack.c.h.b16 %v796
  %v3222 = vunpack.c.l.b16 %v797
  %v3223 = vunpack.c.h.b16 %v797
  %v3224 = vunpack.c.l.b16 %v798
  %v3225 = vunpack.c.h.b16 %v798
  %v3226 = vunpack.c.l.b16 %v799
  %v3227 = vunpack.c.h.b16 %v799
  %v3228 = vunpack.c.l.b16 %v800
  %v3229 = vunpack.c.h.b16 %v800
  %v3230 = vunpack.c.l.b16 %v801
  %v3231 = vunpack.c.h.b16 %v801
  %v3232 = vunpack.c.l.b16 %v802
  %v3233 = vunpack.c.h.b16 %v802
  %v3234 = vunpack.c.l.b16 %v803
  %v3235 = vunpack.c.h.b16 %v803
  %v3236 = vunpack.c.l.b16 %v804
  %v3237 = vunpack.c.h.b16 %v804
  %v3238 = vunpack.c.l.b16 %v805
  %v3239 = vunpack.c.h.b16 %v805
  %v3240 = vpack.c.b16 %v1708, %v1704
  %v3241 = vpack.c.b16 %v1709, %v1705
  %v3242 = vpack.c.b16 %v1710, %v1706
  %v3243 = vpack.c.b16 %v1711, %v1707
  %v3244 = vpack.c.b16 %v1716, %v1712
  %v3245 = vpack.c.b16 %v1717, %v1713
  %v3246 = vpack.c.b16 %v1718, %v1714
  %v3247 = vpack.c.b16 %v1719, %v1715
  %v3248 = vpack.c.b16 %v1724, %v1720
  %v3249 = vpack.c.b16 %v1725, %v1721
  %v3250 = vpack.c.b16 %v1726, %v1722
  %v3251 = vpack.c.b16 %v1727, %v1723
  %v3252 = vpack.c.b16 %v1732, %v1728
  %v3253 = vpack.c.b16 %v1733, %v1729
  %v3254 = vpack.c.b16 %v1734, %v1730
  %v3255 = vpack.c.b16 %v1735, %v1731
  %v3256 = vpack.c.b16 %v1740, %v1736
  %v3257 = vpack.c.b16 %v1741, %v1737
  %v3258 = vpack.c.b16 %v1742, %v1738
  %v3259 = vpack.c.b16 %v1743, %v1739
  %v3260 = vpack.c.b16 %v1748, %v1744
  %v3261 = vpack.c.b16 %v1749, %v1745
  %v3262 = vpack.c.b16 %v1750, %v1746
  %v3263 = vpack.c.b16 %v1751, %v1747
  %v3264 = vpack.c.b16 %v1756, %v1752
  %v3265 = vpack.c.b16 %v1757, %v1753
  %v3266 = vpack.c.b16 %v1758, %v1754
  %v3267 = vpack.c.b16 %v1759, %v1755
  %v3268 = vpack.c.b16 %v1764, %v1760
  %v3269 = vpack.c.b16 %v1765, %v1761
  %v3270 = vpack.c.b16 %v1766, %v1762
  %v3271 = vpack.c.b16 %v1767, %v1763
  %v3272 = vpack.c.b16 %v1772, %v1768
  %v3273 = vpack.c.b16 %v1773, %v1769
  %v3274 = vpack.c.b16 %v1774, %v1770
  %v3275 = vpack.c.b16 %v1775, %v1771
  %v3276 = vpack.c.b16 %v1780, %v1776
  %v3277 = vpack.c.b16 %v1781, %v1777
  %v3278 = vpack.c.b16 %v1782, %v1778
  %v3279 = vpack.c.b16 %v1783, %v1779
  %v3280 = vpack.c.b16 %v1788, %v1784
  %v3281 = vpack.c.b16 %v1789, %v1785
  %v3282 = vpack.c.b16 %v1790, %v1786
  %v3283 = vpack.c.b16 %v1791, %v1787
  %v3284 = vpack.c.b16 %v1796, %v1792
  %v3285 = vpack.c.b16 %v1797, %v1793
  %v3286 = vpack.c.b16 %v1798, %v1794
  %v3287 = vpack.c.b16 %v1799, %v1795
  %v3288 = vpack.c.b16 %v1804, %v1800
  %v3289 = vpack.c.b16 %v1805, %v1801
  %v3290 = vpack.c.b16 %v1806, %v1802
  %v3291 = vpack.c.b16 %v1807, %v1803
  %v3292 = vpack.c.b16 %v1812, %v1808
  %v3293 = vpack.c.b16 %v1813, %v1809
  %v3294 = vpack.c.b16 %v1814, %v1810
  %v3295 = vpack.c.b16 %v1815, %v1811
  %v3296 = vpack.c.b16 %v1820, %v1816
  %v3297 = vpack.c.b16 %v1821, %v1817
  %v3298 = vpack.c.b16 %v1822, %v1818
  %v3299 = vpack.c.b16 %v1823, %v1819
  %v3300 = vpack.c.b16 %v1828, %v1824
  %v3301 = vpack.c.b16 %v1829, %v1825
  %v3302 = vpack.c.b16 %v1830, %v1826
  %v3303 = vpack.c.b16 %v1831, %v1827
  %v3304 = vpack.c.b16 %v1836, %v1832
  %v3305 = vpack.c.b16 %v1837, %v1833
  %v3306 = vpack.c.b16 %v1838, %v1834
  %v3307 = vpack.c.b16 %v1839, %v1835
  %v3308 = vpack.c.b16 %v1844, %v1840
  %v3309 = vpack.c.b16 %v1845, %v1841
  %v3310 = vpack.c.b16 %v1846, %v1842
  %v3311 = vpack.c.b16 %v1847, %v1843
  %v3312 = vpack.c.b16 %v1852, %v1848
  %v3313 = vpack.c.b16 %v1853, %v1849
  %v3314 = vpack.c.b16 %v1854, %v1850
  %v3315 = vpack.c.b16 %v1855, %v1851
  %v3316 = vpack.c.b16 %v1860, %v1856
  %v3317 = vpack.c.b16 %v1861, %v1857
  %v3318 = vpack.c.b16 %v1862, %v1858
  %v3319 = vpack.c.b16 %v1863, %v1859
  %v3320 = vpack.c.b16 %v1868, %v1864
  %v3321 = vpack.c.b16 %v1869, %v1865
  %v3322 = vpack.c.b16 %v1870, %v1866
  %v3323 = vpack.c.b16 %v1871, %v1867
  %v3324 = vpack.c.b16 %v1876, %v1872
  %v3325 = vpack.c.b16 %v1877, %v1873
  %v3326 = vpack.c.b16 %v1878, %v1874
  %v3327 = vpack.c.b16 %v1879, %v1875
  %v3328 = vpack.c.b16 %v1884, %v1880
  %v3329 = vpack.c.b16 %v1885, %v1881
  %v3330 = vpack.c.b16 %v1886, %v1882
  %v3331 = vpack.c.b16 %v1887, %v1883
  %v3332 = vpack.c.b16 %v1892, %v1888
  %v3333 = vpack.c.b16 %v1893, %v1889
  %v3334 = vpack.c.b16 %v1894, %v1890
  %v3335 = vpack.c.b16 %v1895, %v1891
  %v3336 = vpack.c.b16 %v1900, %v1896
  %v3337 = vpack.c.b16 %v1901, %v1897
  %v3338 = vpack.c.b16 %v1902, %v1898
  %v3339 = vpack.c.b16 %v1903, %v1899
  %v3340 = vpack.c.b16 %v1908, %v1904
  %v3341 = vpack.c.b16 %v1909, %v1905
  %v3342 = vpack.c.b16 %v1910, %v1906
  %v3343 = vpack.c.b16 %v1911, %v1907
  %v3344 = vpack.c.b16 %v1916, %v1912
  %v3345 = vpack.c.b16 %v1917, %v1913
  %v3346 = vpack.c.b16 %v1918, %v1914
  %v3347 = vpack.c.b16 %v1919, %v1915
  %v3348 = vpack.c.b16 %v1924, %v1920
  %v3349 = vpack.c.b16 %v1925, %v1921
  %v3350 = vpack.c.b16 %v1926, %v1922
  %v3351 = vpack.c.b16 %v1927, %v1923
  %v3352 = vpack.c.b16 %v1932, %v1928
  %v3353 = vpack.c.b16 %v1933, %v1929
  %v3354 = vpack.c.b16 %v1934, %v1930
  %v3355 = vpack.c.b16 %v1935, %v1931
  %v3356 = vpack.c.b16 %v1940, %v1936
  %v3357 = vpack.c.b16 %v1941, %v1937
  %v3358 = vpack.c.b16 %v1942, %v1938
  %v3359 = vpack.c.b16 %v1943, %v1939
  %v3360 = vpack.c.b16 %v1948, %v1944
  %v3361 = vpack.c.b16 %v1949, %v1945
  %v3362 = vpack.c.b16 %v1950, %v1946
  %v3363 = vpack.c.b16 %v1951, %v1947
  %v3364 = vpack.c.b16 %v1956, %v1952
  %v3365 = vpack.c.b16 %v1957, %v1953
  %v3366 = vpack.c.b16 %v1958, %v1954
  %v3367 = vpack.c.b16 %v1959, %v1955
  %v3368 = vpack.c.b16 %v1964, %v1960
  %v3369 = vpack.c.b16 %v1965, %v1961
  %v3370 = vpack.c.b16 %v1966, %v1962
  %v3371 = vpack.c.b16 %v1967, %v1963
  %v3372 = vpack.c.b16 %v1972, %v1968
  %v3373 = vpack.c.b16 %v1973, %v1969
  %v3374 = vpack.c.b16 %v1974, %v1970
  %v3375 = vpack.c.b16 %v1975, %v1971
  %v3376 = vpack.c.b16 %v1980, %v1976
  %v3377 = vpack.c.b16 %v1981, %v1977
  %v3378 = vpack.c.b16 %v1982, %v1978
  %v3379 = vpack.c.b16 %v1983, %v1979
  %v3380 = vpack.c.b16 %v1988, %v1984
  %v3381 = vpack.c.b16 %v1989, %v1985
  %v3382 = vpack.c.b16 %v1990, %v1986
  %v3383 = vpack.c.b16 %v1991, %v1987
  %v3384 = vpack.c.b16 %v1996, %v1992
  %v3385 = vpack.c.b16 %v1997, %v1993
  %v3386 = vpack.c.b16 %v1998, %v1994
  %v3387 = vpack.c.b16 %v1999, %v1995
  %v3388 = vpack.c.b16 %v2004, %v2000
  %v3389 = vpack.c.b16 %v2005, %v2001
  %v3390 = vpack.c.b16 %v2006, %v2002
  %v3391 = vpack.c.b16 %v2007, %v2003
  %v3392 = vpack.c.b16 %v2012, %v2008
  %v3393 = vpack.c.b16 %v2013, %v2009
  %v3394 = vpack.c.b16 %v2014, %v2010
  %v3395 = vpack.c.b16 %v2015, %v2011
  %v3396 = vpack.c.b16 %v2020, %v2016
  %v3397 = vpack.c.b16 %v2021, %v2017
  %v3398 = vpack.c.b16 %v2022, %v2018
  %v3399 = vpack.c.b16 %v2023, %v2019
  %v3400 = vpack.c.b16 %v2028, %v2024
  %v3401 = vpack.c.b16 %v2029, %v2025
  %v3402 = vpack.c.b16 %v2030, %v2026
  %v3403 = vpack.c.b16 %v2031, %v2027
  %v3404 = vpack.c.b16 %v2036, %v2032
  %v3405 = vpack.c.b16 %v2037, %v2033
  %v3406 = vpack.c.b16 %v2038, %v2034
  %v3407 = vpack.c.b16 %v2039, %v2035
  %v3408 = vpack.c.b16 %v2044, %v2040
  %v3409 = vpack.c.b16 %v2045, %v2041
  %v3410 = vpack.c.b16 %v2046, %v2042
  %v3411 = vpack.c.b16 %v2047, %v2043
  %v3412 = vpack.c.b16 %v2052, %v2048
  %v3413 = vpack.c.b16 %v2053, %v2049
  %v3414 = vpack.c.b16 %v2054, %v2050
  %v3415 = vpack.c.b16 %v2055, %v2051
  %v3416 = vpack.c.b16 %v2060, %v2056
  %v3417 = vpack.c.b16 %v2061, %v2057
  %v3418 = vpack.c.b16 %v2062, %v2058
  %v3419 = vpack.c.b16 %v2063, %v2059
  %v3420 = vpack.c.b16 %v2068, %v2064
  %v3421 = vpack.c.b16 %v2069, %v2065
  %v3422 = vpack.c.b16 %v2070, %v2066
  %v3423 = vpack.c.b16 %v2071, %v2067
  %v3424 = vpack.c.b16 %v2076, %v2072
  %v3425 = vpack.c.b16 %v2077, %v2073
  %v3426 = vpack.c.b16 %v2078, %v2074
  %v3427 = vpack.c.b16 %v2079, %v2075
  %v3428 = vpack.c.b16 %v2084, %v2080
  %v3429 = vpack.c.b16 %v2085, %v2081
  %v3430 = vpack.c.b16 %v2086, %v2082
  %v3431 = vpack.c.b16 %v2087, %v2083
  %v3432 = vpack.c.b16 %v2092, %v2088
  %v3433 = vpack.c.b16 %v2093, %v2089
  %v3434 = vpack.c.b16 %v2094, %v2090
  %v3435 = vpack.c.b16 %v2095, %v2091
  %v3436 = vpack.c.b16 %v2100, %v2096
  %v3437 = vpack.c.b16 %v2101, %v2097
  %v3438 = vpack.c.b16 %v2102, %v2098
  %v3439 = vpack.c.b16 %v2103, %v2099
  %v3440 = vpack.c.b16 %v2108, %v2104
  %v3441 = vpack.c.b16 %v2109, %v2105
  %v3442 = vpack.c.b16 %v2110, %v2106
  %v3443 = vpack.c.b16 %v2111, %v2107
  %v3444 = vpack.c.b16 %v2116, %v2112
  %v3445 = vpack.c.b16 %v2117, %v2113
  %v3446 = vpack.c.b16 %v2118, %v2114
  %v3447 = vpack.c.b16 %v2119, %v2115
  %v3448 = vpack.c.b16 %v2124, %v2120
  %v3449 = vpack.c.b16 %v2125, %v2121
  %v3450 = vpack.c.b16 %v2126, %v2122
  %v3451 = vpack.c.b16 %v2127, %v2123
  %v3452 = vpack.c.b16 %v2132, %v2128
  %v3453 = vpack.c.b16 %v2133, %v2129
  %v3454 = vpack.c.b16 %v2134, %v2130
  %v3455 = vpack.c.b16 %v2135, %v2131
  %v3456 = vpack.c.b16 %v2140, %v2136
  %v3457 = vpack.c.b16 %v2141, %v2137
  %v3458 = vpack.c.b16 %v2142, %v2138
  %v3459 = vpack.c.b16 %v2143, %v2139
  %v3460 = vpack.c.b16 %v2148, %v2144
  %v3461 = vpack.c.b16 %v2149, %v2145
  %v3462 = vpack.c.b16 %v2150, %v2146
  %v3463 = vpack.c.b16 %v2151, %v2147
  %v3464 = vpack.c.b16 %v2156, %v2152
  %v3465 = vpack.c.b16 %v2157, %v2153
  %v3466 = vpack.c.b16 %v2158, %v2154
  %v3467 = vpack.c.b16 %v2159, %v2155
  %v3468 = vpack.c.b16 %v2164, %v2160
  %v3469 = vpack.c.b16 %v2165, %v2161
  %v3470 = vpack.c.b16 %v2166, %v2162
  %v3471 = vpack.c.b16 %v2167, %v2163
  %v3472 = vpack.c.b16 %v2172, %v2168
  %v3473 = vpack.c.b16 %v2173, %v2169
  %v3474 = vpack.c.b16 %v2174, %v2170
  %v3475 = vpack.c.b16 %v2175, %v2171
  %v3476 = vpack.c.b16 %v2180, %v2176
  %v3477 = vpack.c.b16 %v2181, %v2177
  %v3478 = vpack.c.b16 %v2182, %v2178
  %v3479 = vpack.c.b16 %v2183, %v2179
  %v3480 = vpack.c.b16 %v2188, %v2184
  %v3481 = vpack.c.b16 %v2189, %v2185
  %v3482 = vpack.c.b16 %v2190, %v2186
  %v3483 = vpack.c.b16 %v2191, %v2187
  %v3484 = vpack.c.b16 %v2196, %v2192
  %v3485 = vpack.c.b16 %v2197, %v2193
  %v3486 = vpack.c.b16 %v2198, %v2194
  %v3487 = vpack.c.b16 %v2199, %v2195
  %v3488 = vpack.c.b16 %v2204, %v2200
  %v3489 = vpack.c.b16 %v2205, %v2201
  %v3490 = vpack.c.b16 %v2206, %v2202
  %v3491 = vpack.c.b16 %v2207, %v2203
  %v3492 = vpack.c.b16 %v2212, %v2208
  %v3493 = vpack.c.b16 %v2213, %v2209
  %v3494 = vpack.c.b16 %v2214, %v2210
  %v3495 = vpack.c.b16 %v2215, %v2211
  %v3496 = vpack.c.b16 %v2220, %v2216
  %v3497 = vpack.c.b16 %v2221, %v2217
  %v3498 = vpack.c.b16 %v2222, %v2218
  %v3499 = vpack.c.b16 %v2223, %v2219
  %v3500 = vpack.c.b16 %v2228, %v2224
  %v3501 = vpack.c.b16 %v2229, %v2225
  %v3502 = vpack.c.b16 %v2230, %v2226
  %v3503 = vpack.c.b16 %v2231, %v2227
  %v3504 = vpack.c.b16 %v2236, %v2232
  %v3505 = vpack.c.b16 %v2237, %v2233
  %v3506 = vpack.c.b16 %v2238, %v2234
  %v3507 = vpack.c.b16 %v2239, %v2235
  %v3508 = vpack.c.b16 %v2244, %v2240
  %v3509 = vpack.c.b16 %v2245, %v2241
  %v3510 = vpack.c.b16 %v2246, %v2242
  %v3511 = vpack.c.b16 %v2247, %v2243
  %v3512 = vpack.c.b16 %v2252, %v2248
  %v3513 = vpack.c.b16 %v2253, %v2249
  %v3514 = vpack.c.b16 %v2254, %v2250
  %v3515 = vpack.c.b16 %v2255, %v2251
  %v3516 = vpack.c.b16 %v2260, %v2256
  %v3517 = vpack.c.b16 %v2261, %v2257
  %v3518 = vpack.c.b16 %v2262, %v2258
  %v3519 = vpack.c.b16 %v2263, %v2259
  %v3520 = vpack.c.b16 %v2268, %v2264
  %v3521 = vpack.c.b16 %v2269, %v2265
  %v3522 = vpack.c.b16 %v2270, %v2266
  %v3523 = vpack.c.b16 %v2271, %v2267
  %v3524 = vpack.c.b16 %v2276, %v2272
  %v3525 = vpack.c.b16 %v2277, %v2273
  %v3526 = vpack.c.b16 %v2278, %v2274
  %v3527 = vpack.c.b16 %v2279, %v2275
  %v3528 = vpack.c.b16 %v2284, %v2280
  %v3529 = vpack.c.b16 %v2285, %v2281
  %v3530 = vpack.c.b16 %v2286, %v2282
  %v3531 = vpack.c.b16 %v2287, %v2283
  %v3532 = vpack.c.b16 %v2292, %v2288
  %v3533 = vpack.c.b16 %v2293, %v2289
  %v3534 = vpack.c.b16 %v2294, %v2290
  %v3535 = vpack.c.b16 %v2295, %v2291
  %v3536 = vpack.c.b16 %v2300, %v2296
  %v3537 = vpack.c.b16 %v2301, %v2297
  %v3538 = vpack.c.b16 %v2302, %v2298
  %v3539 = vpack.c.b16 %v2303, %v2299
  %v3540 = vpack.c.b16 %v2308, %v2304
  %v3541 = vpack.c.b16 %v2309, %v2305
  %v3542 = vpack.c.b16 %v2310, %v2306
  %v3543 = vpack.c.b16 %v2311, %v2307
  %v3544 = vpack.c.b16 %v2316, %v2312
  %v3545 = vpack.c.b16 %v2317, %v2313
  %v3546 = vpack.c.b16 %v2318, %v2314
  %v3547 = vpack.c.b16 %v2319, %v2315
  %v3548 = vpack.c.b16 %v2324, %v2320
  %v3549 = vpack.c.b16 %v2325, %v2321
  %v3550 = vpack.c.b16 %v2326, %v2322
  %v3551 = vpack.c.b16 %v2327, %v2323
  %v3552 = vpack.c.b16 %v2332, %v2328
  %v3553 = vpack.c.b16 %v2333, %v2329
  %v3554 = vpack.c.b16 %v2334, %v2330
  %v3555 = vpack.c.b16 %v2335, %v2331
  %v3556 = vpack.c.b16 %v2340, %v2336
  %v3557 = vpack.c.b16 %v2341, %v2337
  %v3558 = vpack.c.b16 %v2342, %v2338
  %v3559 = vpack.c.b16 %v2343, %v2339
  %v3560 = vpack.c.b16 %v2348, %v2344
  %v3561 = vpack.c.b16 %v2349, %v2345
  %v3562 = vpack.c.b16 %v2350, %v2346
  %v3563 = vpack.c.b16 %v2351, %v2347
  %v3564 = vpack.c.b16 %v2356, %v2352
  %v3565 = vpack.c.b16 %v2357, %v2353
  %v3566 = vpack.c.b16 %v2358, %v2354
  %v3567 = vpack.c.b16 %v2359, %v2355
  %v3568 = vpack.c.b16 %v2364, %v2360
  %v3569 = vpack.c.b16 %v2365, %v2361
  %v3570 = vpack.c.b16 %v2366, %v2362
  %v3571 = vpack.c.b16 %v2367, %v2363
  %v3572 = vpack.c.b16 %v2372, %v2368
  %v3573 = vpack.c.b16 %v2373, %v2369
  %v3574 = vpack.c.b16 %v2374, %v2370
  %v3575 = vpack.c.b16 %v2375, %v2371
  %v3576 = vpack.c.b16 %v2380, %v2376
  %v3577 = vpack.c.b16 %v2381, %v2377
  %v3578 = vpack.c.b16 %v2382, %v2378
  %v3579 = vpack.c.b16 %v2383, %v2379
  %v3580 = vpack.c.b16 %v2388, %v2384
  %v3581 = vpack.c.b16 %v2389, %v2385
  %v3582 = vpack.c.b16 %v2390, %v2386
  %v3583 = vpack.c.b16 %v2391, %v2387
  %v3584 = vpack.c.b16 %v2396, %v2392
  %v3585 = vpack.c.b16 %v2397, %v2393
  %v3586 = vpack.c.b16 %v2398, %v2394
  %v3587 = vpack.c.b16 %v2399, %v2395
  %v3588 = vpack.c.b16 %v2404, %v2400
  %v3589 = vpack.c.b16 %v2405, %v2401
  %v3590 = vpack.c.b16 %v2406, %v2402
  %v3591 = vpack.c.b16 %v2407, %v2403
  %v3592 = vpack.c.b16 %v2412, %v2408
  %v3593 = vpack.c.b16 %v2413, %v2409
  %v3594 = vpack.c.b16 %v2414, %v2410
  %v3595 = vpack.c.b16 %v2415, %v2411
  %v3596 = vpack.c.b16 %v2420, %v2416
  %v3597 = vpack.c.b16 %v2421, %v2417
  %v3598 = vpack.c.b16 %v2422, %v2418
  %v3599 = vpack.c.b16 %v2423, %v2419
  %v3600 = vpack.c.b16 %v2428, %v2424
  %v3601 = vpack.c.b16 %v2429, %v2425
  %v3602 = vpack.c.b16 %v2430, %v2426
  %v3603 = vpack.c.b16 %v2431, %v2427
  %v3604 = vpack.c.b16 %v2436, %v2432
  %v3605 = vpack.c.b16 %v2437, %v2433
  %v3606 = vpack.c.b16 %v2438, %v2434
  %v3607 = vpack.c.b16 %v2439, %v2435
  %v3608 = vpack.c.b16 %v2444, %v2440
  %v3609 = vpack.c.b16 %v2445, %v2441
  %v3610 = vpack.c.b16 %v2446, %v2442
  %v3611 = vpack.c.b16 %v2447, %v2443
  %v3612 = vpack.c.b16 %v2452, %v2448
  %v3613 = vpack.c.b16 %v2453, %v2449
  %v3614 = vpack.c.b16 %v2454, %v2450
  %v3615 = vpack.c.b16 %v2455, %v2451
  %v3616 = vpack.c.b16 %v2460, %v2456
  %v3617 = vpack.c.b16 %v2461, %v2457
  %v3618 = vpack.c.b16 %v2462, %v2458
  %v3619 = vpack.c.b16 %v2463, %v2459
  %v3620 = vpack.c.b16 %v2468, %v2464
  %v3621 = vpack.c.b16 %v2469, %v2465
  %v3622 = vpack.c.b16 %v2470, %v2466
  %v3623 = vpack.c.b16 %v2471, %v2467
  %v3624 = vpack.c.b16 %v2476, %v2472
  %v3625 = vpack.c.b16 %v2477, %v2473
  %v3626 = vpack.c.b16 %v2478, %v2474
  %v3627 = vpack.c.b16 %v2479, %v2475
  %v3628 = vpack.c.b16 %v2484, %v2480
  %v3629 = vpack.c.b16 %v2485, %v2481
  %v3630 = vpack.c.b16 %v2486, %v2482
  %v3631 = vpack.c.b16 %v2487, %v2483
  %v3632 = vpack.c.b16 %v2492, %v2488
  %v3633 = vpack.c.b16 %v2493, %v2489
  %v3634 = vpack.c.b16 %v2494, %v2490
  %v3635 = vpack.c.b16 %v2495, %v2491
  %v3636 = vpack.c.b16 %v2500, %v2496
  %v3637 = vpack.c.b16 %v2501, %v2497
  %v3638 = vpack.c.b16 %v2502, %v2498
  %v3639 = vpack.c.b16 %v2503, %v2499
  %v3640 = vpack.c.b16 %v2508, %v2504
  %v3641 = vpack.c.b16 %v2509, %v2505
  %v3642 = vpack.c.b16 %v2510, %v2506
  %v3643 = vpack.c.b16 %v2511, %v2507
  %v3644 = vpack.c.b16 %v2516, %v2512
  %v3645 = vpack.c.b16 %v2517, %v2513
  %v3646 = vpack.c.b16 %v2518, %v2514
  %v3647 = vpack.c.b16 %v2519, %v2515
  %v3648 = vpack.c.b16 %v2524, %v2520
  %v3649 = vpack.c.b16 %v2525, %v2521
  %v3650 = vpack.c.b16 %v2526, %v2522
  %v3651 = vpack.c.b16 %v2527, %v2523
  %v3652 = vpack.c.b16 %v2532, %v2528
  %v3653 = vpack.c.b16 %v2533, %v2529
  %v3654 = vpack.c.b16 %v2534, %v2530
  %v3655 = vpack.c.b16 %v2535, %v2531
  %v3656 = vpack.c.b16 %v2540, %v2536
  %v3657 = vpack.c.b16 %v2541, %v2537
  %v3658 = vpack.c.b16 %v2542, %v2538
  %v3659 = vpack.c.b16 %v2543, %v2539
  %v3660 = vpack.c.b16 %v2548, %v2544
  %v3661 = vpack.c.b16 %v2549, %v2545
  %v3662 = vpack.c.b16 %v2550, %v2546
  %v3663 = vpack.c.b16 %v2551, %v2547
  %v3664 = vpack.c.b16 %v2556, %v2552
  %v3665 = vpack.c.b16 %v2557, %v2553
  %v3666 = vpack.c.b16 %v2558, %v2554
  %v3667 = vpack.c.b16 %v2559, %v2555
  %v3668 = vpack.c.b16 %v2564, %v2560
  %v3669 = vpack.c.b16 %v2565, %v2561
  %v3670 = vpack.c.b16 %v2566, %v2562
  %v3671 = vpack.c.b16 %v2567, %v2563
  %v3672 = vpack.c.b16 %v2572, %v2568
  %v3673 = vpack.c.b16 %v2573, %v2569
  %v3674 = vpack.c.b16 %v2574, %v2570
  %v3675 = vpack.c.b16 %v2575, %v2571
  %v3676 = vpack.c.b16 %v2580, %v2576
  %v3677 = vpack.c.b16 %v2581, %v2577
  %v3678 = vpack.c.b16 %v2582, %v2578
  %v3679 = vpack.c.b16 %v2583, %v2579
  %v3680 = vpack.c.b16 %v2588, %v2584
  %v3681 = vpack.c.b16 %v2589, %v2585
  %v3682 = vpack.c.b16 %v2590, %v2586
  %v3683 = vpack.c.b16 %v2591, %v2587
  %v3684 = vpack.c.b16 %v2596, %v2592
  %v3685 = vpack.c.b16 %v2597, %v2593
  %v3686 = vpack.c.b16 %v2598, %v2594
  %v3687 = vpack.c.b16 %v2599, %v2595
  %v3688 = vpack.c.b16 %v2604, %v2600
  %v3689 = vpack.c.b16 %v2605, %v2601
  %v3690 = vpack.c.b16 %v2606, %v2602
  %v3691 = vpack.c.b16 %v2607, %v2603
  %v3692 = vpack.c.b16 %v2612, %v2608
  %v3693 = vpack.c.b16 %v2613, %v2609
  %v3694 = vpack.c.b16 %v2614, %v2610
  %v3695 = vpack.c.b16 %v2615, %v2611
  %v3696 = vpack.c.b16 %v2620, %v2616
  %v3697 = vpack.c.b16 %v2621, %v2617
  %v3698 = vpack.c.b16 %v2622, %v2618
  %v3699 = vpack.c.b16 %v2623, %v2619
  %v3700 = vpack.c.b16 %v2628, %v2624
  %v3701 = vpack.c.b16 %v2629, %v2625
  %v3702 = vpack.c.b16 %v2630, %v2626
  %v3703 = vpack.c.b16 %v2631, %v2627
  %v3704 = vpack.c.b16 %v2636, %v2632
  %v3705 = vpack.c.b16 %v2637, %v2633
  %v3706 = vpack.c.b16 %v2638, %v2634
  %v3707 = vpack.c.b16 %v2639, %v2635
  %v3708 = vpack.c.b16 %v2644, %v2640
  %v3709 = vpack.c.b16 %v2645, %v2641
  %v3710 = vpack.c.b16 %v2646, %v2642
  %v3711 = vpack.c.b16 %v2647, %v2643
  %v3712 = vpack.c.b16 %v2652, %v2648
  %v3713 = vpack.c.b16 %v2653, %v2649
  %v3714 = vpack.c.b16 %v2654, %v2650
  %v3715 = vpack.c.b16 %v2655, %v2651
  %v3716 = vpack.c.b16 %v2660, %v2656
  %v3717 = vpack.c.b16 %v2661, %v2657
  %v3718 = vpack.c.b16 %v2662, %v2658
  %v3719 = vpack.c.b16 %v2663, %v2659
  %v3720 = vpack.c.b16 %v2668, %v2664
  %v3721 = vpack.c.b16 %v2669, %v2665
  %v3722 = vpack.c.b16 %v2670, %v2666
  %v3723 = vpack.c.b16 %v2671, %v2667
  %v3724 = vpack.c.b16 %v2676, %v2672
  %v3725 = vpack.c.b16 %v2677, %v2673
  %v3726 = vpack.c.b16 %v2678, %v2674
  %v3727 = vpack.c.b16 %v2679, %v2675
  %v3728 = vpack.c.b16 %v2684, %v2680
  %v3729 = vpack.c.b16 %v2685, %v2681
  %v3730 = vpack.c.b16 %v2686, %v2682
  %v3731 = vpack.c.b16 %v2687, %v2683
  %v3732 = vpack.c.b16 %v2692, %v2688
  %v3733 = vpack.c.b16 %v2693, %v2689
  %v3734 = vpack.c.b16 %v2694, %v2690
  %v3735 = vpack.c.b16 %v2695, %v2691
  %v3736 = vpack.c.b16 %v2700, %v2696
  %v3737 = vpack.c.b16 %v2701, %v2697
  %v3738 = vpack.c.b16 %v2702, %v2698
  %v3739 = vpack.c.b16 %v2703, %v2699
  %v3740 = vpack.c.b16 %v2708, %v2704
  %v3741 = vpack.c.b16 %v2709, %v2705
  %v3742 = vpack.c.b16 %v2710, %v2706
  %v3743 = vpack.c.b16 %v2711, %v2707
  %v3744 = vpack.c.b16 %v2716, %v2712
  %v3745 = vpack.c.b16 %v2717, %v2713
  %v3746 = vpack.c.b16 %v2718, %v2714
  %v3747 = vpack.c.b16 %v2719, %v2715
  %v3748 = vpack.c.b16 %v2724, %v2720
  %v3749 = vpack.c.b16 %v2725, %v2721
  %v3750 = vpack.c.b16 %v2726, %v2722
  %v3751 = vpack.c.b16 %v2727, %v2723
  %v3752 = vpack.c.b16 %v2732, %v2728
  %v3753 = vpack.c.b16 %v2733, %v2729
  %v3754 = vpack.c.b16 %v2734, %v2730
  %v3755 = vpack.c.b16 %v2735, %v2731
  %v3756 = vpack.c.b16 %v2740, %v2736
  %v3757 = vpack.c.b16 %v2741, %v2737
  %v3758 = vpack.c.b16 %v2742, %v2738
  %v3759 = vpack.c.b16 %v2743, %v2739
  %v3760 = vpack.c.b16 %v2748, %v2744
  %v3761 = vpack.c.b16 %v2749, %v2745
  %v3762 = vpack.c.b16 %v2750, %v2746
  %v3763 = vpack.c.b16 %v2751, %v2747
  %v3764 = vpack.c.b16 %v2756, %v2752
  %v3765 = vpack.c.b16 %v2757, %v2753
  %v3766 = vpack.c.b16 %v2758, %v2754
  %v3767 = vpack.c.b16 %v2759, %v2755
  %v3768 = vpack.c.b16 %v2764, %v2760
  %v3769 = vpack.c.b16 %v2765, %v2761
  %v3770 = vpack.c.b16 %v2766, %v2762
  %v3771 = vpack.c.b16 %v2767, %v2763
  %v3772 = vpack.c.b16 %v2772, %v2768
  %v3773 = vpack.c.b16 %v2773, %v2769
  %v3774 = vpack.c.b16 %v2774, %v2770
  %v3775 = vpack.c.b16 %v2775, %v2771
  %v3776 = vpack.c.b16 %v2780, %v2776
  %v3777 = vpack.c.b16 %v2781, %v2777
  %v3778 = vpack.c.b16 %v2782, %v2778
  %v3779 = vpack.c.b16 %v2783, %v2779
  %v3780 = vpack.c.b16 %v2788, %v2784
  %v3781 = vpack.c.b16 %v2789, %v2785
  %v3782 = vpack.c.b16 %v2790, %v2786
  %v3783 = vpack.c.b16 %v2791, %v2787
  %v3784 = vpack.c.b16 %v2796, %v2792
  %v3785 = vpack.c.b16 %v2797, %v2793
  %v3786 = vpack.c.b16 %v2798, %v2794
  %v3787 = vpack.c.b16 %v2799, %v2795
  %v3788 = vpack.c.b16 %v2804, %v2800
  %v3789 = vpack.c.b16 %v2805, %v2801
  %v3790 = vpack.c.b16 %v2806, %v2802
  %v3791 = vpack.c.b16 %v2807, %v2803
  %v3792 = vpack.c.b16 %v2812, %v2808
  %v3793 = vpack.c.b16 %v2813, %v2809
  %v3794 = vpack.c.b16 %v2814, %v2810
  %v3795 = vpack.c.b16 %v2815, %v2811
  %v3796 = vpack.c.b16 %v2820, %v2816
  %v3797 = vpack.c.b16 %v2821, %v2817
  %v3798 = vpack.c.b16 %v2822, %v2818
  %v3799 = vpack.c.b16 %v2823, %v2819
  %v3800 = vpack.c.b16 %v2828, %v2824
  %v3801 = vpack.c.b16 %v2829, %v2825
  %v3802 = vpack.c.b16 %v2830, %v2826
  %v3803 = vpack.c.b16 %v2831, %v2827
  %v3804 = vpack.c.b16 %v2836, %v2832
  %v3805 = vpack.c.b16 %v2837, %v2833
  %v3806 = vpack.c.b16 %v2838, %v2834
  %v3807 = vpack.c.b16 %v2839, %v2835
  %v3808 = vpack.c.b16 %v2844, %v2840
  %v3809 = vpack.c.b16 %v2845, %v2841
  %v3810 = vpack.c.b16 %v2846, %v2842
  %v3811 = vpack.c.b16 %v2847, %v2843
  %v3812 = vpack.c.b16 %v2852, %v2848
  %v3813 = vpack.c.b16 %v2853, %v2849
  %v3814 = vpack.c.b16 %v2854, %v2850
  %v3815 = vpack.c.b16 %v2855, %v2851
  %v3816 = vpack.c.b16 %v2860, %v2856
  %v3817 = vpack.c.b16 %v2861, %v2857
  %v3818 = vpack.c.b16 %v2862, %v2858
  %v3819 = vpack.c.b16 %v2863, %v2859
  %v3820 = vpack.c.b16 %v2868, %v2864
  %v3821 = vpack.c.b16 %v2869, %v2865
  %v3822 = vpack.c.b16 %v2870, %v2866
  %v3823 = vpack.c.b16 %v2871, %v2867
  %v3824 = vpack.c.b16 %v2876, %v2872
  %v3825 = vpack.c.b16 %v2877, %v2873
  %v3826 = vpack.c.b16 %v2878, %v2874
  %v3827 = vpack.c.b16 %v2879, %v2875
  %v3828 = vpack.c.b16 %v2884, %v2880
  %v3829 = vpack.c.b16 %v2885, %v2881
  %v3830 = vpack.c.b16 %v2886, %v2882
  %v3831 = vpack.c.b16 %v2887, %v2883
  %v3832 = vpack.c.b16 %v2892, %v2888
  %v3833 = vpack.c.b16 %v2893, %v2889
  %v3834 = vpack.c.b16 %v2894, %v2890
  %v3835 = vpack.c.b16 %v2895, %v2891
  %v3836 = vpack.c.b16 %v2900, %v2896
  %v3837 = vpack.c.b16 %v2901, %v2897
  %v3838 = vpack.c.b16 %v2902, %v2898
  %v3839 = vpack.c.b16 %v2903, %v2899
  %v3840 = vpack.c.b16 %v2908, %v2904
  %v3841 = vpack.c.b16 %v2909, %v2905
  %v3842 = vpack.c.b16 %v2910, %v2906
  %v3843 = vpack.c.b16 %v2911, %v2907
  %v3844 = vpack.c.b16 %v2916, %v2912
  %v3845 = vpack.c.b16 %v2917, %v2913
  %v3846 = vpack.c.b16 %v2918, %v2914
  %v3847 = vpack.c.b16 %v2919, %v2915
  %v3848 = vpack.c.b16 %v2924, %v2920
  %v3849 = vpack.c.b16 %v2925, %v2921
  %v3850 = vpack.c.b16 %v2926, %v2922
  %v3851 = vpack.c.b16 %v2927, %v2923
  %v3852 = vpack.c.b16 %v2932, %v2928
  %v3853 = vpack.c.b16 %v2933, %v2929
  %v3854 = vpack.c.b16 %v2934, %v2930
  %v3855 = vpack.c.b16 %v2935, %v2931
  %v3856 = vpack.c.b16 %v2940, %v2936
  %v3857 = vpack.c.b16 %v2941, %v2937
  %v3858 = vpack.c.b16 %v2942, %v2938
  %v3859 = vpack.c.b16 %v2943, %v2939
  %v3860 = vpack.c.b16 %v2948, %v2944
  %v3861 = vpack.c.b16 %v2949, %v2945
  %v3862 = vpack.c.b16 %v2950, %v2946
  %v3863 = vpack.c.b16 %v2951, %v2947
  %v3864 = vpack.c.b16 %v2956, %v2952
  %v3865 = vpack.c.b16 %v2957, %v2953
  %v3866 = vpack.c.b16 %v2958, %v2954
  %v3867 = vpack.c.b16 %v2959, %v2955
  %v3868 = vpack.c.b16 %v2964, %v2960
  %v3869 = vpack.c.b16 %v2965, %v2961
  %v3870 = vpack.c.b16 %v2966, %v2962
  %v3871 = vpack.c.b16 %v2967, %v2963
  %v3872 = vpack.c.b16 %v2972, %v2968
  %v3873 = vpack.c.b16 %v2973, %v2969
  %v3874 = vpack.c.b16 %v2974, %v2970
  %v3875 = vpack.c.b16 %v2975, %v2971
  %v3876 = vpack.c.b16 %v2980, %v2976
  %v3877 = vpack.c.b16 %v2981, %v2977
  %v3878 = vpack.c.b16 %v2982, %v2978
  %v3879 = vpack.c.b16 %v2983, %v2979
  %v3880 = vpack.c.b16 %v2988, %v2984
  %v3881 = vpack.c.b16 %v2989, %v2985
  %v3882 = vpack.c.b16 %v2990, %v2986
  %v3883 = vpack.c.b16 %v2991, %v2987
  %v3884 = vpack.c.b16 %v2996, %v2992
  %v3885 = vpack.c.b16 %v2997, %v2993
  %v3886 = vpack.c.b16 %v2998, %v2994
  %v3887 = vpack.c.b16 %v2999, %v2995
  %v3888 = vpack.c.b16 %v3004, %v3000
  %v3889 = vpack.c.b16 %v3005, %v3001
  %v3890 = vpack.c.b16 %v3006, %v3002
  %v3891 = vpack.c.b16 %v3007, %v3003
  %v3892 = vpack.c.b16 %v3012, %v3008
  %v3893 = vpack.c.b16 %v3013, %v3009
  %v3894 = vpack.c.b16 %v3014, %v3010
  %v3895 = vpack.c.b16 %v3015, %v3011
  %v3896 = vpack.c.b16 %v3020, %v3016
  %v3897 = vpack.c.b16 %v3021, %v3017
  %v3898 = vpack.c.b16 %v3022, %v3018
  %v3899 = vpack.c.b16 %v3023, %v3019
  %v3900 = vpack.c.b16 %v3028, %v3024
  %v3901 = vpack.c.b16 %v3029, %v3025
  %v3902 = vpack.c.b16 %v3030, %v3026
  %v3903 = vpack.c.b16 %v3031, %v3027
  %v3904 = vpack.c.b16 %v3036, %v3032
  %v3905 = vpack.c.b16 %v3037, %v3033
  %v3906 = vpack.c.b16 %v3038, %v3034
  %v3907 = vpack.c.b16 %v3039, %v3035
  %v3908 = vpack.c.b16 %v3044, %v3040
  %v3909 = vpack.c.b16 %v3045, %v3041
  %v3910 = vpack.c.b16 %v3046, %v3042
  %v3911 = vpack.c.b16 %v3047, %v3043
  %v3912 = vpack.c.b16 %v3052, %v3048
  %v3913 = vpack.c.b16 %v3053, %v3049
  %v3914 = vpack.c.b16 %v3054, %v3050
  %v3915 = vpack.c.b16 %v3055, %v3051
  %v3916 = vpack.c.b16 %v3060, %v3056
  %v3917 = vpack.c.b16 %v3061, %v3057
  %v3918 = vpack.c.b16 %v3062, %v3058
  %v3919 = vpack.c.b16 %v3063, %v3059
  %v3920 = vpack.c.b16 %v3068, %v3064
  %v3921 = vpack.c.b16 %v3069, %v3065
  %v3922 = vpack.c.b16 %v3070, %v3066
  %v3923 = vpack.c.b16 %v3071, %v3067
  %v3924 = vpack.c.b16 %v3076, %v3072
  %v3925 = vpack.c.b16 %v3077, %v3073
  %v3926 = vpack.c.b16 %v3078, %v3074
  %v3927 = vpack.c.b16 %v3079, %v3075
  %v3928 = vpack.c.b16 %v3084, %v3080
  %v3929 = vpack.c.b16 %v3085, %v3081
  %v3930 = vpack.c.b16 %v3086, %v3082
  %v3931 = vpack.c.b16 %v3087, %v3083
  %v3932 = vpack.c.b16 %v3092, %v3088
  %v3933 = vpack.c.b16 %v3093, %v3089
  %v3934 = vpack.c.b16 %v3094, %v3090
  %v3935 = vpack.c.b16 %v3095, %v3091
  %v3936 = vpack.c.b16 %v3100, %v3096
  %v3937 = vpack.c.b16 %v3101, %v3097
  %v3938 = vpack.c.b16 %v3102, %v3098
  %v3939 = vpack.c.b16 %v3103, %v3099
  %v3940 = vpack.c.b16 %v3108, %v3104
  %v3941 = vpack.c.b16 %v3109, %v3105
  %v3942 = vpack.c.b16 %v3110, %v3106
  %v3943 = vpack.c.b16 %v3111, %v3107
  %v3944 = vpack.c.b16 %v3116, %v3112
  %v3945 = vpack.c.b16 %v3117, %v3113
  %v3946 = vpack.c.b16 %v3118, %v3114
  %v3947 = vpack.c.b16 %v3119, %v3115
  %v3948 = vpack.c.b16 %v3124, %v3120
  %v3949 = vpack.c.b16 %v3125, %v3121
  %v3950 = vpack.c.b16 %v3126, %v3122
  %v3951 = vpack.c.b16 %v3127, %v3123
  %v3952 = vpack.c.b16 %v3132, %v3128
  %v3953 = vpack.c.b16 %v3133, %v3129
  %v3954 = vpack.c.b16 %v3134, %v3130
  %v3955 = vpack.c.b16 %v3135, %v3131
  %v3956 = vpack.c.b16 %v3140, %v3136
  %v3957 = vpack.c.b16 %v3141, %v3137
  %v3958 = vpack.c.b16 %v3142, %v3138
  %v3959 = vpack.c.b16 %v3143, %v3139
  %v3960 = vpack.c.b16 %v3148, %v3144
  %v3961 = vpack.c.b16 %v3149, %v3145
  %v3962 = vpack.c.b16 %v3150, %v3146
  %v3963 = vpack.c.b16 %v3151, %v3147
  %v3964 = vpack.c.b16 %v3156, %v3152
  %v3965 = vpack.c.b16 %v3157, %v3153
  %v3966 = vpack.c.b16 %v3158, %v3154
  %v3967 = vpack.c.b16 %v3159, %v3155
  %v3968 = vpack.c.b16 %v3164, %v3160
  %v3969 = vpack.c.b16 %v3165, %v3161
  %v3970 = vpack.c.b16 %v3166, %v3162
  %v3971 = vpack.c.b16 %v3167, %v3163
  %v3972 = vpack.c.b16 %v3172, %v3168
  %v3973 = vpack.c.b16 %v3173, %v3169
  %v3974 = vpack.c.b16 %v3174, %v3170
  %v3975 = vpack.c.b16 %v3175, %v3171
  %v3976 = vpack.c.b16 %v3180, %v3176
  %v3977 = vpack.c.b16 %v3181, %v3177
  %v3978 = vpack.c.b16 %v3182, %v3178
  %v3979 = vpack.c.b16 %v3183, %v3179
  %v3980 = vpack.c.b16 %v3188, %v3184
  %v3981 = vpack.c.b16 %v3189, %v3185
  %v3982 = vpack.c.b16 %v3190, %v3186
  %v3983 = vpack.c.b16 %v3191, %v3187
  %v3984 = vpack.c.b16 %v3196, %v3192
  %v3985 = vpack.c.b16 %v3197, %v3193
  %v3986 = vpack.c.b16 %v3198, %v3194
  %v3987 = vpack.c.b16 %v3199, %v3195
  %v3988 = vpack.c.b16 %v3204, %v3200
  %v3989 = vpack.c.b16 %v3205, %v3201
  %v3990 = vpack.c.b16 %v3206, %v3202
  %v3991 = vpack.c.b16 %v3207, %v3203
  %v3992 = vpack.c.b16 %v3212, %v3208
  %v3993 = vpack.c.b16 %v3213, %v3209
  %v3994 = vpack.c.b16 %v3214, %v3210
  %v3995 = vpack.c.b16 %v3215, %v3211
  %v3996 = vpack.c.b16 %v3220, %v3216
  %v3997 = vpack.c.b16 %v3221, %v3217
  %v3998 = vpack.c.b16 %v3222, %v3218
  %v3999 = vpack.c.b16 %v3223, %v3219
  %v4000 = vpack.c.b16 %v3228, %v3224
  %v4001 = vpack.c.b16 %v3229, %v3225
  %v4002 = vpack.c.b16 %v3230, %v3226
  %v4003 = vpack.c.b16 %v3231, %v3227
  %v4004 = vpack.c.b16 %v3236, %v3232
  %v4005 = vpack.c.b16 %v3237, %v3233
  %v4006 = vpack.c.b16 %v3238, %v3234
  %v4007 = vpack.c.b16 %v3239, %v3235
  %4776 = vmatpush.bf16.msra.mxu0 %v3268
  %4777 = vmatpush.bf16.msra.mxu0 %v3264
  %4778 = vmatpush.bf16.msra.mxu0 %v3260
  %4779 = vmatpush.bf16.msra.mxu0 %v3256
  %4780 = vmatpush.bf16.msra.mxu0 %v3252
  %4781 = vmatpush.bf16.msra.mxu0 %v3248
  %4782 = vmatpush.bf16.msra.mxu0 %v3244
  %4783 = vmatpush.bf16.msra.mxu0 %v3240
  %4784 = vmatmul.bf16.gmra.mxu0 %v888
  %v4785 = vpop.f32.mrf.mxu0
  %v4786 = vadd.f32 %v808, %v4785
  %v4787 = vpop.f32.mrf.mxu0
  %v4788 = vadd.f32 %v808, %v4787
  %4789 = vdwg.mxu0
  %4790 = vmatpush.bf16.msra.mxu0 %v3300
  %4791 = vmatpush.bf16.msra.mxu0 %v3296
  %4792 = vmatpush.bf16.msra.mxu0 %v3292
  %4793 = vmatpush.bf16.msra.mxu0 %v3288
  %4794 = vmatpush.bf16.msra.mxu0 %v3284
  %4795 = vmatpush.bf16.msra.mxu0 %v3280
  %4796 = vmatpush.bf16.msra.mxu0 %v3276
  %4797 = vmatpush.bf16.msra.mxu0 %v3272
  %4798 = vmatmul.bf16.gmra.mxu0 %v889
  %v4799 = vpop.f32.mrf.mxu0
  %v4800 = vadd.f32 %v4786, %v4799
  %v4801 = vpop.f32.mrf.mxu0
  %v4802 = vadd.f32 %v4788, %v4801
  %4803 = vdwg.mxu0
  %4804 = vmatpush.bf16.msra.mxu0 %v3332
  %4805 = vmatpush.bf16.msra.mxu0 %v3328
  %4806 = vmatpush.bf16.msra.mxu0 %v3324
  %4807 = vmatpush.bf16.msra.mxu0 %v3320
  %4808 = vmatpush.bf16.msra.mxu0 %v3316
  %4809 = vmatpush.bf16.msra.mxu0 %v3312
  %4810 = vmatpush.bf16.msra.mxu0 %v3308
  %4811 = vmatpush.bf16.msra.mxu0 %v3304
  %4812 = vmatmul.bf16.gmra.mxu0 %v890
  %v4813 = vpop.f32.mrf.mxu0
  %v4814 = vadd.f32 %v4800, %v4813
  %v4815 = vpop.f32.mrf.mxu0
  %v4816 = vadd.f32 %v4802, %v4815
  %4817 = vdwg.mxu0
  %4818 = vmatpush.bf16.msra.mxu0 %v3364
  %4819 = vmatpush.bf16.msra.mxu0 %v3360
  %4820 = vmatpush.bf16.msra.mxu0 %v3356
  %4821 = vmatpush.bf16.msra.mxu0 %v3352
  %4822 = vmatpush.bf16.msra.mxu0 %v3348
  %4823 = vmatpush.bf16.msra.mxu0 %v3344
  %4824 = vmatpush.bf16.msra.mxu0 %v3340
  %4825 = vmatpush.bf16.msra.mxu0 %v3336
  %4826 = vmatmul.bf16.gmra.mxu0 %v891
  %v4827 = vpop.f32.mrf.mxu0
  %v4828 = vadd.f32 %v4814, %v4827
  %v4829 = vpop.f32.mrf.mxu0
  %v4830 = vadd.f32 %v4816, %v4829
  %4831 = vdwg.mxu0
  %4832 = vmatpush.bf16.msra.mxu0 %v3396
  %4833 = vmatpush.bf16.msra.mxu0 %v3392
  %4834 = vmatpush.bf16.msra.mxu0 %v3388
  %4835 = vmatpush.bf16.msra.mxu0 %v3384
  %4836 = vmatpush.bf16.msra.mxu0 %v3380
  %4837 = vmatpush.bf16.msra.mxu0 %v3376
  %4838 = vmatpush.bf16.msra.mxu0 %v3372
  %4839 = vmatpush.bf16.msra.mxu0 %v3368
  %4840 = vmatmul.bf16.gmra.mxu0 %v892
  %v4841 = vpop.f32.mrf.mxu0
  %v4842 = vadd.f32 %v4828, %v4841
  %v4843 = vpop.f32.mrf.mxu0
  %v4844 = vadd.f32 %v4830, %v4843
  %4845 = vdwg.mxu0
  %4846 = vmatpush.bf16.msra.mxu0 %v3428
  %4847 = vmatpush.bf16.msra.mxu0 %v3424
  %4848 = vmatpush.bf16.msra.mxu0 %v3420
  %4849 = vmatpush.bf16.msra.mxu0 %v3416
  %4850 = vmatpush.bf16.msra.mxu0 %v3412
  %4851 = vmatpush.bf16.msra.mxu0 %v3408
  %4852 = vmatpush.bf16.msra.mxu0 %v3404
  %4853 = vmatpush.bf16.msra.mxu0 %v3400
  %4854 = vmatmul.bf16.gmra.mxu0 %v893
  %v4855 = vpop.f32.mrf.mxu0
  %v4856 = vadd.f32 %v4842, %v4855
  %v4857 = vpop.f32.mrf.mxu0
  %v4858 = vadd.f32 %v4844, %v4857
  %4859 = vdwg.mxu0
  %4860 = vmatpush.bf16.msra.mxu0 %v3460
  %4861 = vmatpush.bf16.msra.mxu0 %v3456
  %4862 = vmatpush.bf16.msra.mxu0 %v3452
  %4863 = vmatpush.bf16.msra.mxu0 %v3448
  %4864 = vmatpush.bf16.msra.mxu0 %v3444
  %4865 = vmatpush.bf16.msra.mxu0 %v3440
  %4866 = vmatpush.bf16.msra.mxu0 %v3436
  %4867 = vmatpush.bf16.msra.mxu0 %v3432
  %4868 = vmatmul.bf16.gmra.mxu0 %v894
  %v4869 = vpop.f32.mrf.mxu0
  %v4870 = vadd.f32 %v4856, %v4869
  %v4871 = vpop.f32.mrf.mxu0
  %v4872 = vadd.f32 %v4858, %v4871
  %4873 = vdwg.mxu0
  %4874 = vmatpush.bf16.msra.mxu0 %v3492
  %4875 = vmatpush.bf16.msra.mxu0 %v3488
  %4876 = vmatpush.bf16.msra.mxu0 %v3484
  %4877 = vmatpush.bf16.msra.mxu0 %v3480
  %4878 = vmatpush.bf16.msra.mxu0 %v3476
  %4879 = vmatpush.bf16.msra.mxu0 %v3472
  %4880 = vmatpush.bf16.msra.mxu0 %v3468
  %4881 = vmatpush.bf16.msra.mxu0 %v3464
  %4882 = vmatmul.bf16.gmra.mxu0 %v895
  %v4883 = vpop.f32.mrf.mxu0
  %v4884 = vadd.f32 %v4870, %v4883
  %v4885 = vpop.f32.mrf.mxu0
  %v4886 = vadd.f32 %v4872, %v4885
  %4887 = vdwg.mxu0
  %4888 = vmatpush.bf16.msra.mxu0 %v3524
  %4889 = vmatpush.bf16.msra.mxu0 %v3520
  %4890 = vmatpush.bf16.msra.mxu0 %v3516
  %4891 = vmatpush.bf16.msra.mxu0 %v3512
  %4892 = vmatpush.bf16.msra.mxu0 %v3508
  %4893 = vmatpush.bf16.msra.mxu0 %v3504
  %4894 = vmatpush.bf16.msra.mxu0 %v3500
  %4895 = vmatpush.bf16.msra.mxu0 %v3496
  %4896 = vmatmul.bf16.gmra.mxu0 %v896
  %v4897 = vpop.f32.mrf.mxu0
  %v4898 = vadd.f32 %v4884, %v4897
  %v4899 = vpop.f32.mrf.mxu0
  %v4900 = vadd.f32 %v4886, %v4899
  %4901 = vdwg.mxu0
  %4902 = vmatpush.bf16.msra.mxu0 %v3556
  %4903 = vmatpush.bf16.msra.mxu0 %v3552
  %4904 = vmatpush.bf16.msra.mxu0 %v3548
  %4905 = vmatpush.bf16.msra.mxu0 %v3544
  %4906 = vmatpush.bf16.msra.mxu0 %v3540
  %4907 = vmatpush.bf16.msra.mxu0 %v3536
  %4908 = vmatpush.bf16.msra.mxu0 %v3532
  %4909 = vmatpush.bf16.msra.mxu0 %v3528
  %4910 = vmatmul.bf16.gmra.mxu0 %v897
  %v4911 = vpop.f32.mrf.mxu0
  %v4912 = vadd.f32 %v4898, %v4911
  %v4913 = vpop.f32.mrf.mxu0
  %v4914 = vadd.f32 %v4900, %v4913
  %4915 = vdwg.mxu0
  %4916 = vmatpush.bf16.msra.mxu0 %v3588
  %4917 = vmatpush.bf16.msra.mxu0 %v3584
  %4918 = vmatpush.bf16.msra.mxu0 %v3580
  %4919 = vmatpush.bf16.msra.mxu0 %v3576
  %4920 = vmatpush.bf16.msra.mxu0 %v3572
  %4921 = vmatpush.bf16.msra.mxu0 %v3568
  %4922 = vmatpush.bf16.msra.mxu0 %v3564
  %4923 = vmatpush.bf16.msra.mxu0 %v3560
  %4924 = vmatmul.bf16.gmra.mxu0 %v898
  %v4925 = vpop.f32.mrf.mxu0
  %v4926 = vadd.f32 %v4912, %v4925
  %v4927 = vpop.f32.mrf.mxu0
  %v4928 = vadd.f32 %v4914, %v4927
  %4929 = vdwg.mxu0
  %4930 = vmatpush.bf16.msra.mxu0 %v3620
  %4931 = vmatpush.bf16.msra.mxu0 %v3616
  %4932 = vmatpush.bf16.msra.mxu0 %v3612
  %4933 = vmatpush.bf16.msra.mxu0 %v3608
  %4934 = vmatpush.bf16.msra.mxu0 %v3604
  %4935 = vmatpush.bf16.msra.mxu0 %v3600
  %4936 = vmatpush.bf16.msra.mxu0 %v3596
  %4937 = vmatpush.bf16.msra.mxu0 %v3592
  %4938 = vmatmul.bf16.gmra.mxu0 %v899
  %v4939 = vpop.f32.mrf.mxu0
  %v4940 = vadd.f32 %v4926, %v4939
  %v4941 = vpop.f32.mrf.mxu0
  %v4942 = vadd.f32 %v4928, %v4941
  %4943 = vdwg.mxu0
  %4944 = vmatpush.bf16.msra.mxu0 %v3652
  %4945 = vmatpush.bf16.msra.mxu0 %v3648
  %4946 = vmatpush.bf16.msra.mxu0 %v3644
  %4947 = vmatpush.bf16.msra.mxu0 %v3640
  %4948 = vmatpush.bf16.msra.mxu0 %v3636
  %4949 = vmatpush.bf16.msra.mxu0 %v3632
  %4950 = vmatpush.bf16.msra.mxu0 %v3628
  %4951 = vmatpush.bf16.msra.mxu0 %v3624
  %4952 = vmatmul.bf16.gmra.mxu0 %v900
  %v4953 = vpop.f32.mrf.mxu0
  %v4954 = vadd.f32 %v4940, %v4953
  %v4955 = vpop.f32.mrf.mxu0
  %v4956 = vadd.f32 %v4942, %v4955
  %4957 = vdwg.mxu0
  %4958 = vmatpush.bf16.msra.mxu0 %v3684
  %4959 = vmatpush.bf16.msra.mxu0 %v3680
  %4960 = vmatpush.bf16.msra.mxu0 %v3676
  %4961 = vmatpush.bf16.msra.mxu0 %v3672
  %4962 = vmatpush.bf16.msra.mxu0 %v3668
  %4963 = vmatpush.bf16.msra.mxu0 %v3664
  %4964 = vmatpush.bf16.msra.mxu0 %v3660
  %4965 = vmatpush.bf16.msra.mxu0 %v3656
  %4966 = vmatmul.bf16.gmra.mxu0 %v901
  %v4967 = vpop.f32.mrf.mxu0
  %v4968 = vadd.f32 %v4954, %v4967
  %v4969 = vpop.f32.mrf.mxu0
  %v4970 = vadd.f32 %v4956, %v4969
  %4971 = vdwg.mxu0
  %4972 = vmatpush.bf16.msra.mxu0 %v3716
  %4973 = vmatpush.bf16.msra.mxu0 %v3712
  %4974 = vmatpush.bf16.msra.mxu0 %v3708
  %4975 = vmatpush.bf16.msra.mxu0 %v3704
  %4976 = vmatpush.bf16.msra.mxu0 %v3700
  %4977 = vmatpush.bf16.msra.mxu0 %v3696
  %4978 = vmatpush.bf16.msra.mxu0 %v3692
  %4979 = vmatpush.bf16.msra.mxu0 %v3688
  %4980 = vmatmul.bf16.gmra.mxu0 %v902
  %v4981 = vpop.f32.mrf.mxu0
  %v4982 = vadd.f32 %v4968, %v4981
  %v4983 = vpop.f32.mrf.mxu0
  %v4984 = vadd.f32 %v4970, %v4983
  %4985 = vdwg.mxu0
  %4986 = vmatpush.bf16.msra.mxu0 %v3748
  %4987 = vmatpush.bf16.msra.mxu0 %v3744
  %4988 = vmatpush.bf16.msra.mxu0 %v3740
  %4989 = vmatpush.bf16.msra.mxu0 %v3736
  %4990 = vmatpush.bf16.msra.mxu0 %v3732
  %4991 = vmatpush.bf16.msra.mxu0 %v3728
  %4992 = vmatpush.bf16.msra.mxu0 %v3724
  %4993 = vmatpush.bf16.msra.mxu0 %v3720
  %4994 = vmatmul.bf16.gmra.mxu0 %v903
  %v4995 = vpop.f32.mrf.mxu0
  %v4996 = vadd.f32 %v4982, %v4995
  %v4997 = vpop.f32.mrf.mxu0
  %v4998 = vadd.f32 %v4984, %v4997
  %4999 = vdwg.mxu0
  %5000 = vmatpush.bf16.msra.mxu0 %v3780
  %5001 = vmatpush.bf16.msra.mxu0 %v3776
  %5002 = vmatpush.bf16.msra.mxu0 %v3772
  %5003 = vmatpush.bf16.msra.mxu0 %v3768
  %5004 = vmatpush.bf16.msra.mxu0 %v3764
  %5005 = vmatpush.bf16.msra.mxu0 %v3760
  %5006 = vmatpush.bf16.msra.mxu0 %v3756
  %5007 = vmatpush.bf16.msra.mxu0 %v3752
  %5008 = vmatmul.bf16.gmra.mxu0 %v904
  %v5009 = vpop.f32.mrf.mxu0
  %v5010 = vadd.f32 %v4996, %v5009
  %v5011 = vpop.f32.mrf.mxu0
  %v5012 = vadd.f32 %v4998, %v5011
  %5013 = vdwg.mxu0
  %5014 = vmatpush.bf16.msra.mxu0 %v3812
  %5015 = vmatpush.bf16.msra.mxu0 %v3808
  %5016 = vmatpush.bf16.msra.mxu0 %v3804
  %5017 = vmatpush.bf16.msra.mxu0 %v3800
  %5018 = vmatpush.bf16.msra.mxu0 %v3796
  %5019 = vmatpush.bf16.msra.mxu0 %v3792
  %5020 = vmatpush.bf16.msra.mxu0 %v3788
  %5021 = vmatpush.bf16.msra.mxu0 %v3784
  %5022 = vmatmul.bf16.gmra.mxu0 %v905
  %v5023 = vpop.f32.mrf.mxu0
  %v5024 = vadd.f32 %v5010, %v5023
  %v5025 = vpop.f32.mrf.mxu0
  %v5026 = vadd.f32 %v5012, %v5025
  %5027 = vdwg.mxu0
  %5028 = vmatpush.bf16.msra.mxu0 %v3844
  %5029 = vmatpush.bf16.msra.mxu0 %v3840
  %5030 = vmatpush.bf16.msra.mxu0 %v3836
  %5031 = vmatpush.bf16.msra.mxu0 %v3832
  %5032 = vmatpush.bf16.msra.mxu0 %v3828
  %5033 = vmatpush.bf16.msra.mxu0 %v3824
  %5034 = vmatpush.bf16.msra.mxu0 %v3820
  %5035 = vmatpush.bf16.msra.mxu0 %v3816
  %5036 = vmatmul.bf16.gmra.mxu0 %v906
  %v5037 = vpop.f32.mrf.mxu0
  %v5038 = vadd.f32 %v5024, %v5037
  %v5039 = vpop.f32.mrf.mxu0
  %v5040 = vadd.f32 %v5026, %v5039
  %5041 = vdwg.mxu0
  %5042 = vmatpush.bf16.msra.mxu0 %v3876
  %5043 = vmatpush.bf16.msra.mxu0 %v3872
  %5044 = vmatpush.bf16.msra.mxu0 %v3868
  %5045 = vmatpush.bf16.msra.mxu0 %v3864
  %5046 = vmatpush.bf16.msra.mxu0 %v3860
  %5047 = vmatpush.bf16.msra.mxu0 %v3856
  %5048 = vmatpush.bf16.msra.mxu0 %v3852
  %5049 = vmatpush.bf16.msra.mxu0 %v3848
  %5050 = vmatmul.bf16.gmra.mxu0 %v907
  %v5051 = vpop.f32.mrf.mxu0
  %v5052 = vadd.f32 %v5038, %v5051
  %v5053 = vpop.f32.mrf.mxu0
  %v5054 = vadd.f32 %v5040, %v5053
  %5055 = vdwg.mxu0
  %5056 = vmatpush.bf16.msra.mxu0 %v3908
  %5057 = vmatpush.bf16.msra.mxu0 %v3904
  %5058 = vmatpush.bf16.msra.mxu0 %v3900
  %5059 = vmatpush.bf16.msra.mxu0 %v3896
  %5060 = vmatpush.bf16.msra.mxu0 %v3892
  %5061 = vmatpush.bf16.msra.mxu0 %v3888
  %5062 = vmatpush.bf16.msra.mxu0 %v3884
  %5063 = vmatpush.bf16.msra.mxu0 %v3880
  %5064 = vmatmul.bf16.gmra.mxu0 %v908
  %v5065 = vpop.f32.mrf.mxu0
  %v5066 = vadd.f32 %v5052, %v5065
  %v5067 = vpop.f32.mrf.mxu0
  %v5068 = vadd.f32 %v5054, %v5067
  %5069 = vdwg.mxu0
  %5070 = vmatpush.bf16.msra.mxu0 %v3940
  %5071 = vmatpush.bf16.msra.mxu0 %v3936
  %5072 = vmatpush.bf16.msra.mxu0 %v3932
  %5073 = vmatpush.bf16.msra.mxu0 %v3928
  %5074 = vmatpush.bf16.msra.mxu0 %v3924
  %5075 = vmatpush.bf16.msra.mxu0 %v3920
  %5076 = vmatpush.bf16.msra.mxu0 %v3916
  %5077 = vmatpush.bf16.msra.mxu0 %v3912
  %5078 = vmatmul.bf16.gmra.mxu0 %v909
  %v5079 = vpop.f32.mrf.mxu0
  %v5080 = vadd.f32 %v5066, %v5079
  %v5081 = vpop.f32.mrf.mxu0
  %v5082 = vadd.f32 %v5068, %v5081
  %5083 = vdwg.mxu0
  %5084 = vmatpush.bf16.msra.mxu0 %v3972
  %5085 = vmatpush.bf16.msra.mxu0 %v3968
  %5086 = vmatpush.bf16.msra.mxu0 %v3964
  %5087 = vmatpush.bf16.msra.mxu0 %v3960
  %5088 = vmatpush.bf16.msra.mxu0 %v3956
  %5089 = vmatpush.bf16.msra.mxu0 %v3952
  %5090 = vmatpush.bf16.msra.mxu0 %v3948
  %5091 = vmatpush.bf16.msra.mxu0 %v3944
  %5092 = vmatmul.bf16.gmra.mxu0 %v910
  %v5093 = vpop.f32.mrf.mxu0
  %v5094 = vadd.f32 %v5080, %v5093
  %v5095 = vpop.f32.mrf.mxu0
  %v5096 = vadd.f32 %v5082, %v5095
  %5097 = vdwg.mxu0
  %5098 = vmatpush.bf16.msra.mxu0 %v4004
  %5099 = vmatpush.bf16.msra.mxu0 %v4000
  %5100 = vmatpush.bf16.msra.mxu0 %v3996
  %5101 = vmatpush.bf16.msra.mxu0 %v3992
  %5102 = vmatpush.bf16.msra.mxu0 %v3988
  %5103 = vmatpush.bf16.msra.mxu0 %v3984
  %5104 = vmatpush.bf16.msra.mxu0 %v3980
  %5105 = vmatpush.bf16.msra.mxu0 %v3976
  %5106 = vmatmul.bf16.gmra.mxu0 %v911
  %v5107 = vpop.f32.mrf.mxu0
  %v5108 = vadd.f32 %v5094, %v5107
  %v5109 = vpop.f32.mrf.mxu0
  %v5110 = vadd.f32 %v5096, %v5109
  %5111 = vdwg.mxu0
  %5112 = vmatpush.bf16.msra.mxu0 %v3269
  %5113 = vmatpush.bf16.msra.mxu0 %v3265
  %5114 = vmatpush.bf16.msra.mxu0 %v3261
  %5115 = vmatpush.bf16.msra.mxu0 %v3257
  %5116 = vmatpush.bf16.msra.mxu0 %v3253
  %5117 = vmatpush.bf16.msra.mxu0 %v3249
  %5118 = vmatpush.bf16.msra.mxu0 %v3245
  %5119 = vmatpush.bf16.msra.mxu0 %v3241
  %5120 = vmatmul.bf16.gmra.mxu0 %v888
  %v5121 = vpop.f32.mrf.mxu0
  %v5122 = vadd.f32 %v809, %v5121
  %v5123 = vpop.f32.mrf.mxu0
  %v5124 = vadd.f32 %v809, %v5123
  %5125 = vdwg.mxu0
  %5126 = vmatpush.bf16.msra.mxu0 %v3301
  %5127 = vmatpush.bf16.msra.mxu0 %v3297
  %5128 = vmatpush.bf16.msra.mxu0 %v3293
  %5129 = vmatpush.bf16.msra.mxu0 %v3289
  %5130 = vmatpush.bf16.msra.mxu0 %v3285
  %5131 = vmatpush.bf16.msra.mxu0 %v3281
  %5132 = vmatpush.bf16.msra.mxu0 %v3277
  %5133 = vmatpush.bf16.msra.mxu0 %v3273
  %5134 = vmatmul.bf16.gmra.mxu0 %v889
  %v5135 = vpop.f32.mrf.mxu0
  %v5136 = vadd.f32 %v5122, %v5135
  %v5137 = vpop.f32.mrf.mxu0
  %v5138 = vadd.f32 %v5124, %v5137
  %5139 = vdwg.mxu0
  %5140 = vmatpush.bf16.msra.mxu0 %v3333
  %5141 = vmatpush.bf16.msra.mxu0 %v3329
  %5142 = vmatpush.bf16.msra.mxu0 %v3325
  %5143 = vmatpush.bf16.msra.mxu0 %v3321
  %5144 = vmatpush.bf16.msra.mxu0 %v3317
  %5145 = vmatpush.bf16.msra.mxu0 %v3313
  %5146 = vmatpush.bf16.msra.mxu0 %v3309
  %5147 = vmatpush.bf16.msra.mxu0 %v3305
  %5148 = vmatmul.bf16.gmra.mxu0 %v890
  %v5149 = vpop.f32.mrf.mxu0
  %v5150 = vadd.f32 %v5136, %v5149
  %v5151 = vpop.f32.mrf.mxu0
  %v5152 = vadd.f32 %v5138, %v5151
  %5153 = vdwg.mxu0
  %5154 = vmatpush.bf16.msra.mxu0 %v3365
  %5155 = vmatpush.bf16.msra.mxu0 %v3361
  %5156 = vmatpush.bf16.msra.mxu0 %v3357
  %5157 = vmatpush.bf16.msra.mxu0 %v3353
  %5158 = vmatpush.bf16.msra.mxu0 %v3349
  %5159 = vmatpush.bf16.msra.mxu0 %v3345
  %5160 = vmatpush.bf16.msra.mxu0 %v3341
  %5161 = vmatpush.bf16.msra.mxu0 %v3337
  %5162 = vmatmul.bf16.gmra.mxu0 %v891
  %v5163 = vpop.f32.mrf.mxu0
  %v5164 = vadd.f32 %v5150, %v5163
  %v5165 = vpop.f32.mrf.mxu0
  %v5166 = vadd.f32 %v5152, %v5165
  %5167 = vdwg.mxu0
  %5168 = vmatpush.bf16.msra.mxu0 %v3397
  %5169 = vmatpush.bf16.msra.mxu0 %v3393
  %5170 = vmatpush.bf16.msra.mxu0 %v3389
  %5171 = vmatpush.bf16.msra.mxu0 %v3385
  %5172 = vmatpush.bf16.msra.mxu0 %v3381
  %5173 = vmatpush.bf16.msra.mxu0 %v3377
  %5174 = vmatpush.bf16.msra.mxu0 %v3373
  %5175 = vmatpush.bf16.msra.mxu0 %v3369
  %5176 = vmatmul.bf16.gmra.mxu0 %v892
  %v5177 = vpop.f32.mrf.mxu0
  %v5178 = vadd.f32 %v5164, %v5177
  %v5179 = vpop.f32.mrf.mxu0
  %v5180 = vadd.f32 %v5166, %v5179
  %5181 = vdwg.mxu0
  %5182 = vmatpush.bf16.msra.mxu0 %v3429
  %5183 = vmatpush.bf16.msra.mxu0 %v3425
  %5184 = vmatpush.bf16.msra.mxu0 %v3421
  %5185 = vmatpush.bf16.msra.mxu0 %v3417
  %5186 = vmatpush.bf16.msra.mxu0 %v3413
  %5187 = vmatpush.bf16.msra.mxu0 %v3409
  %5188 = vmatpush.bf16.msra.mxu0 %v3405
  %5189 = vmatpush.bf16.msra.mxu0 %v3401
  %5190 = vmatmul.bf16.gmra.mxu0 %v893
  %v5191 = vpop.f32.mrf.mxu0
  %v5192 = vadd.f32 %v5178, %v5191
  %v5193 = vpop.f32.mrf.mxu0
  %v5194 = vadd.f32 %v5180, %v5193
  %5195 = vdwg.mxu0
  %5196 = vmatpush.bf16.msra.mxu0 %v3461
  %5197 = vmatpush.bf16.msra.mxu0 %v3457
  %5198 = vmatpush.bf16.msra.mxu0 %v3453
  %5199 = vmatpush.bf16.msra.mxu0 %v3449
  %5200 = vmatpush.bf16.msra.mxu0 %v3445
  %5201 = vmatpush.bf16.msra.mxu0 %v3441
  %5202 = vmatpush.bf16.msra.mxu0 %v3437
  %5203 = vmatpush.bf16.msra.mxu0 %v3433
  %5204 = vmatmul.bf16.gmra.mxu0 %v894
  %v5205 = vpop.f32.mrf.mxu0
  %v5206 = vadd.f32 %v5192, %v5205
  %v5207 = vpop.f32.mrf.mxu0
  %v5208 = vadd.f32 %v5194, %v5207
  %5209 = vdwg.mxu0
  %5210 = vmatpush.bf16.msra.mxu0 %v3493
  %5211 = vmatpush.bf16.msra.mxu0 %v3489
  %5212 = vmatpush.bf16.msra.mxu0 %v3485
  %5213 = vmatpush.bf16.msra.mxu0 %v3481
  %5214 = vmatpush.bf16.msra.mxu0 %v3477
  %5215 = vmatpush.bf16.msra.mxu0 %v3473
  %5216 = vmatpush.bf16.msra.mxu0 %v3469
  %5217 = vmatpush.bf16.msra.mxu0 %v3465
  %5218 = vmatmul.bf16.gmra.mxu0 %v895
  %v5219 = vpop.f32.mrf.mxu0
  %v5220 = vadd.f32 %v5206, %v5219
  %v5221 = vpop.f32.mrf.mxu0
  %v5222 = vadd.f32 %v5208, %v5221
  %5223 = vdwg.mxu0
  %5224 = vmatpush.bf16.msra.mxu0 %v3525
  %5225 = vmatpush.bf16.msra.mxu0 %v3521
  %5226 = vmatpush.bf16.msra.mxu0 %v3517
  %5227 = vmatpush.bf16.msra.mxu0 %v3513
  %5228 = vmatpush.bf16.msra.mxu0 %v3509
  %5229 = vmatpush.bf16.msra.mxu0 %v3505
  %5230 = vmatpush.bf16.msra.mxu0 %v3501
  %5231 = vmatpush.bf16.msra.mxu0 %v3497
  %5232 = vmatmul.bf16.gmra.mxu0 %v896
  %v5233 = vpop.f32.mrf.mxu0
  %v5234 = vadd.f32 %v5220, %v5233
  %v5235 = vpop.f32.mrf.mxu0
  %v5236 = vadd.f32 %v5222, %v5235
  %5237 = vdwg.mxu0
  %5238 = vmatpush.bf16.msra.mxu0 %v3557
  %5239 = vmatpush.bf16.msra.mxu0 %v3553
  %5240 = vmatpush.bf16.msra.mxu0 %v3549
  %5241 = vmatpush.bf16.msra.mxu0 %v3545
  %5242 = vmatpush.bf16.msra.mxu0 %v3541
  %5243 = vmatpush.bf16.msra.mxu0 %v3537
  %5244 = vmatpush.bf16.msra.mxu0 %v3533
  %5245 = vmatpush.bf16.msra.mxu0 %v3529
  %5246 = vmatmul.bf16.gmra.mxu0 %v897
  %v5247 = vpop.f32.mrf.mxu0
  %v5248 = vadd.f32 %v5234, %v5247
  %v5249 = vpop.f32.mrf.mxu0
  %v5250 = vadd.f32 %v5236, %v5249
  %5251 = vdwg.mxu0
  %5252 = vmatpush.bf16.msra.mxu0 %v3589
  %5253 = vmatpush.bf16.msra.mxu0 %v3585
  %5254 = vmatpush.bf16.msra.mxu0 %v3581
  %5255 = vmatpush.bf16.msra.mxu0 %v3577
  %5256 = vmatpush.bf16.msra.mxu0 %v3573
  %5257 = vmatpush.bf16.msra.mxu0 %v3569
  %5258 = vmatpush.bf16.msra.mxu0 %v3565
  %5259 = vmatpush.bf16.msra.mxu0 %v3561
  %5260 = vmatmul.bf16.gmra.mxu0 %v898
  %v5261 = vpop.f32.mrf.mxu0
  %v5262 = vadd.f32 %v5248, %v5261
  %v5263 = vpop.f32.mrf.mxu0
  %v5264 = vadd.f32 %v5250, %v5263
  %5265 = vdwg.mxu0
  %5266 = vmatpush.bf16.msra.mxu0 %v3621
  %5267 = vmatpush.bf16.msra.mxu0 %v3617
  %5268 = vmatpush.bf16.msra.mxu0 %v3613
  %5269 = vmatpush.bf16.msra.mxu0 %v3609
  %5270 = vmatpush.bf16.msra.mxu0 %v3605
  %5271 = vmatpush.bf16.msra.mxu0 %v3601
  %5272 = vmatpush.bf16.msra.mxu0 %v3597
  %5273 = vmatpush.bf16.msra.mxu0 %v3593
  %5274 = vmatmul.bf16.gmra.mxu0 %v899
  %v5275 = vpop.f32.mrf.mxu0
  %v5276 = vadd.f32 %v5262, %v5275
  %v5277 = vpop.f32.mrf.mxu0
  %v5278 = vadd.f32 %v5264, %v5277
  %5279 = vdwg.mxu0
  %5280 = vmatpush.bf16.msra.mxu0 %v3653
  %5281 = vmatpush.bf16.msra.mxu0 %v3649
  %5282 = vmatpush.bf16.msra.mxu0 %v3645
  %5283 = vmatpush.bf16.msra.mxu0 %v3641
  %5284 = vmatpush.bf16.msra.mxu0 %v3637
  %5285 = vmatpush.bf16.msra.mxu0 %v3633
  %5286 = vmatpush.bf16.msra.mxu0 %v3629
  %5287 = vmatpush.bf16.msra.mxu0 %v3625
  %5288 = vmatmul.bf16.gmra.mxu0 %v900
  %v5289 = vpop.f32.mrf.mxu0
  %v5290 = vadd.f32 %v5276, %v5289
  %v5291 = vpop.f32.mrf.mxu0
  %v5292 = vadd.f32 %v5278, %v5291
  %5293 = vdwg.mxu0
  %5294 = vmatpush.bf16.msra.mxu0 %v3685
  %5295 = vmatpush.bf16.msra.mxu0 %v3681
  %5296 = vmatpush.bf16.msra.mxu0 %v3677
  %5297 = vmatpush.bf16.msra.mxu0 %v3673
  %5298 = vmatpush.bf16.msra.mxu0 %v3669
  %5299 = vmatpush.bf16.msra.mxu0 %v3665
  %5300 = vmatpush.bf16.msra.mxu0 %v3661
  %5301 = vmatpush.bf16.msra.mxu0 %v3657
  %5302 = vmatmul.bf16.gmra.mxu0 %v901
  %v5303 = vpop.f32.mrf.mxu0
  %v5304 = vadd.f32 %v5290, %v5303
  %v5305 = vpop.f32.mrf.mxu0
  %v5306 = vadd.f32 %v5292, %v5305
  %5307 = vdwg.mxu0
  %5308 = vmatpush.bf16.msra.mxu0 %v3717
  %5309 = vmatpush.bf16.msra.mxu0 %v3713
  %5310 = vmatpush.bf16.msra.mxu0 %v3709
  %5311 = vmatpush.bf16.msra.mxu0 %v3705
  %5312 = vmatpush.bf16.msra.mxu0 %v3701
  %5313 = vmatpush.bf16.msra.mxu0 %v3697
  %5314 = vmatpush.bf16.msra.mxu0 %v3693
  %5315 = vmatpush.bf16.msra.mxu0 %v3689
  %5316 = vmatmul.bf16.gmra.mxu0 %v902
  %v5317 = vpop.f32.mrf.mxu0
  %v5318 = vadd.f32 %v5304, %v5317
  %v5319 = vpop.f32.mrf.mxu0
  %v5320 = vadd.f32 %v5306, %v5319
  %5321 = vdwg.mxu0
  %5322 = vmatpush.bf16.msra.mxu0 %v3749
  %5323 = vmatpush.bf16.msra.mxu0 %v3745
  %5324 = vmatpush.bf16.msra.mxu0 %v3741
  %5325 = vmatpush.bf16.msra.mxu0 %v3737
  %5326 = vmatpush.bf16.msra.mxu0 %v3733
  %5327 = vmatpush.bf16.msra.mxu0 %v3729
  %5328 = vmatpush.bf16.msra.mxu0 %v3725
  %5329 = vmatpush.bf16.msra.mxu0 %v3721
  %5330 = vmatmul.bf16.gmra.mxu0 %v903
  %v5331 = vpop.f32.mrf.mxu0
  %v5332 = vadd.f32 %v5318, %v5331
  %v5333 = vpop.f32.mrf.mxu0
  %v5334 = vadd.f32 %v5320, %v5333
  %5335 = vdwg.mxu0
  %5336 = vmatpush.bf16.msra.mxu0 %v3781
  %5337 = vmatpush.bf16.msra.mxu0 %v3777
  %5338 = vmatpush.bf16.msra.mxu0 %v3773
  %5339 = vmatpush.bf16.msra.mxu0 %v3769
  %5340 = vmatpush.bf16.msra.mxu0 %v3765
  %5341 = vmatpush.bf16.msra.mxu0 %v3761
  %5342 = vmatpush.bf16.msra.mxu0 %v3757
  %5343 = vmatpush.bf16.msra.mxu0 %v3753
  %5344 = vmatmul.bf16.gmra.mxu0 %v904
  %v5345 = vpop.f32.mrf.mxu0
  %v5346 = vadd.f32 %v5332, %v5345
  %v5347 = vpop.f32.mrf.mxu0
  %v5348 = vadd.f32 %v5334, %v5347
  %5349 = vdwg.mxu0
  %5350 = vmatpush.bf16.msra.mxu0 %v3813
  %5351 = vmatpush.bf16.msra.mxu0 %v3809
  %5352 = vmatpush.bf16.msra.mxu0 %v3805
  %5353 = vmatpush.bf16.msra.mxu0 %v3801
  %5354 = vmatpush.bf16.msra.mxu0 %v3797
  %5355 = vmatpush.bf16.msra.mxu0 %v3793
  %5356 = vmatpush.bf16.msra.mxu0 %v3789
  %5357 = vmatpush.bf16.msra.mxu0 %v3785
  %5358 = vmatmul.bf16.gmra.mxu0 %v905
  %v5359 = vpop.f32.mrf.mxu0
  %v5360 = vadd.f32 %v5346, %v5359
  %v5361 = vpop.f32.mrf.mxu0
  %v5362 = vadd.f32 %v5348, %v5361
  %5363 = vdwg.mxu0
  %5364 = vmatpush.bf16.msra.mxu0 %v3845
  %5365 = vmatpush.bf16.msra.mxu0 %v3841
  %5366 = vmatpush.bf16.msra.mxu0 %v3837
  %5367 = vmatpush.bf16.msra.mxu0 %v3833
  %5368 = vmatpush.bf16.msra.mxu0 %v3829
  %5369 = vmatpush.bf16.msra.mxu0 %v3825
  %5370 = vmatpush.bf16.msra.mxu0 %v3821
  %5371 = vmatpush.bf16.msra.mxu0 %v3817
  %5372 = vmatmul.bf16.gmra.mxu0 %v906
  %v5373 = vpop.f32.mrf.mxu0
  %v5374 = vadd.f32 %v5360, %v5373
  %v5375 = vpop.f32.mrf.mxu0
  %v5376 = vadd.f32 %v5362, %v5375
  %5377 = vdwg.mxu0
  %5378 = vmatpush.bf16.msra.mxu0 %v3877
  %5379 = vmatpush.bf16.msra.mxu0 %v3873
  %5380 = vmatpush.bf16.msra.mxu0 %v3869
  %5381 = vmatpush.bf16.msra.mxu0 %v3865
  %5382 = vmatpush.bf16.msra.mxu0 %v3861
  %5383 = vmatpush.bf16.msra.mxu0 %v3857
  %5384 = vmatpush.bf16.msra.mxu0 %v3853
  %5385 = vmatpush.bf16.msra.mxu0 %v3849
  %5386 = vmatmul.bf16.gmra.mxu0 %v907
  %v5387 = vpop.f32.mrf.mxu0
  %v5388 = vadd.f32 %v5374, %v5387
  %v5389 = vpop.f32.mrf.mxu0
  %v5390 = vadd.f32 %v5376, %v5389
  %5391 = vdwg.mxu0
  %5392 = vmatpush.bf16.msra.mxu0 %v3909
  %5393 = vmatpush.bf16.msra.mxu0 %v3905
  %5394 = vmatpush.bf16.msra.mxu0 %v3901
  %5395 = vmatpush.bf16.msra.mxu0 %v3897
  %5396 = vmatpush.bf16.msra.mxu0 %v3893
  %5397 = vmatpush.bf16.msra.mxu0 %v3889
  %5398 = vmatpush.bf16.msra.mxu0 %v3885
  %5399 = vmatpush.bf16.msra.mxu0 %v3881
  %5400 = vmatmul.bf16.gmra.mxu0 %v908
  %v5401 = vpop.f32.mrf.mxu0
  %v5402 = vadd.f32 %v5388, %v5401
  %v5403 = vpop.f32.mrf.mxu0
  %v5404 = vadd.f32 %v5390, %v5403
  %5405 = vdwg.mxu0
  %5406 = vmatpush.bf16.msra.mxu0 %v3941
  %5407 = vmatpush.bf16.msra.mxu0 %v3937
  %5408 = vmatpush.bf16.msra.mxu0 %v3933
  %5409 = vmatpush.bf16.msra.mxu0 %v3929
  %5410 = vmatpush.bf16.msra.mxu0 %v3925
  %5411 = vmatpush.bf16.msra.mxu0 %v3921
  %5412 = vmatpush.bf16.msra.mxu0 %v3917
  %5413 = vmatpush.bf16.msra.mxu0 %v3913
  %5414 = vmatmul.bf16.gmra.mxu0 %v909
  %v5415 = vpop.f32.mrf.mxu0
  %v5416 = vadd.f32 %v5402, %v5415
  %v5417 = vpop.f32.mrf.mxu0
  %v5418 = vadd.f32 %v5404, %v5417
  %5419 = vdwg.mxu0
  %5420 = vmatpush.bf16.msra.mxu0 %v3973
  %5421 = vmatpush.bf16.msra.mxu0 %v3969
  %5422 = vmatpush.bf16.msra.mxu0 %v3965
  %5423 = vmatpush.bf16.msra.mxu0 %v3961
  %5424 = vmatpush.bf16.msra.mxu0 %v3957
  %5425 = vmatpush.bf16.msra.mxu0 %v3953
  %5426 = vmatpush.bf16.msra.mxu0 %v3949
  %5427 = vmatpush.bf16.msra.mxu0 %v3945
  %5428 = vmatmul.bf16.gmra.mxu0 %v910
  %v5429 = vpop.f32.mrf.mxu0
  %v5430 = vadd.f32 %v5416, %v5429
  %v5431 = vpop.f32.mrf.mxu0
  %v5432 = vadd.f32 %v5418, %v5431
  %5433 = vdwg.mxu0
  %5434 = vmatpush.bf16.msra.mxu0 %v4005
  %5435 = vmatpush.bf16.msra.mxu0 %v4001
  %5436 = vmatpush.bf16.msra.mxu0 %v3997
  %5437 = vmatpush.bf16.msra.mxu0 %v3993
  %5438 = vmatpush.bf16.msra.mxu0 %v3989
  %5439 = vmatpush.bf16.msra.mxu0 %v3985
  %5440 = vmatpush.bf16.msra.mxu0 %v3981
  %5441 = vmatpush.bf16.msra.mxu0 %v3977
  %5442 = vmatmul.bf16.gmra.mxu0 %v911
  %v5443 = vpop.f32.mrf.mxu0
  %v5444 = vadd.f32 %v5430, %v5443
  %v5445 = vpop.f32.mrf.mxu0
  %v5446 = vadd.f32 %v5432, %v5445
  %5447 = vdwg.mxu0
  %5448 = vmatpush.bf16.msra.mxu0 %v3270
  %5449 = vmatpush.bf16.msra.mxu0 %v3266
  %5450 = vmatpush.bf16.msra.mxu0 %v3262
  %5451 = vmatpush.bf16.msra.mxu0 %v3258
  %5452 = vmatpush.bf16.msra.mxu0 %v3254
  %5453 = vmatpush.bf16.msra.mxu0 %v3250
  %5454 = vmatpush.bf16.msra.mxu0 %v3246
  %5455 = vmatpush.bf16.msra.mxu0 %v3242
  %5456 = vmatmul.bf16.gmra.mxu0 %v888
  %v5457 = vpop.f32.mrf.mxu0
  %v5458 = vadd.f32 %v810, %v5457
  %v5459 = vpop.f32.mrf.mxu0
  %v5460 = vadd.f32 %v810, %v5459
  %5461 = vdwg.mxu0
  %5462 = vmatpush.bf16.msra.mxu0 %v3302
  %5463 = vmatpush.bf16.msra.mxu0 %v3298
  %5464 = vmatpush.bf16.msra.mxu0 %v3294
  %5465 = vmatpush.bf16.msra.mxu0 %v3290
  %5466 = vmatpush.bf16.msra.mxu0 %v3286
  %5467 = vmatpush.bf16.msra.mxu0 %v3282
  %5468 = vmatpush.bf16.msra.mxu0 %v3278
  %5469 = vmatpush.bf16.msra.mxu0 %v3274
  %5470 = vmatmul.bf16.gmra.mxu0 %v889
  %v5471 = vpop.f32.mrf.mxu0
  %v5472 = vadd.f32 %v5458, %v5471
  %v5473 = vpop.f32.mrf.mxu0
  %v5474 = vadd.f32 %v5460, %v5473
  %5475 = vdwg.mxu0
  %5476 = vmatpush.bf16.msra.mxu0 %v3334
  %5477 = vmatpush.bf16.msra.mxu0 %v3330
  %5478 = vmatpush.bf16.msra.mxu0 %v3326
  %5479 = vmatpush.bf16.msra.mxu0 %v3322
  %5480 = vmatpush.bf16.msra.mxu0 %v3318
  %5481 = vmatpush.bf16.msra.mxu0 %v3314
  %5482 = vmatpush.bf16.msra.mxu0 %v3310
  %5483 = vmatpush.bf16.msra.mxu0 %v3306
  %5484 = vmatmul.bf16.gmra.mxu0 %v890
  %v5485 = vpop.f32.mrf.mxu0
  %v5486 = vadd.f32 %v5472, %v5485
  %v5487 = vpop.f32.mrf.mxu0
  %v5488 = vadd.f32 %v5474, %v5487
  %5489 = vdwg.mxu0
  %5490 = vmatpush.bf16.msra.mxu0 %v3366
  %5491 = vmatpush.bf16.msra.mxu0 %v3362
  %5492 = vmatpush.bf16.msra.mxu0 %v3358
  %5493 = vmatpush.bf16.msra.mxu0 %v3354
  %5494 = vmatpush.bf16.msra.mxu0 %v3350
  %5495 = vmatpush.bf16.msra.mxu0 %v3346
  %5496 = vmatpush.bf16.msra.mxu0 %v3342
  %5497 = vmatpush.bf16.msra.mxu0 %v3338
  %5498 = vmatmul.bf16.gmra.mxu0 %v891
  %v5499 = vpop.f32.mrf.mxu0
  %v5500 = vadd.f32 %v5486, %v5499
  %v5501 = vpop.f32.mrf.mxu0
  %v5502 = vadd.f32 %v5488, %v5501
  %5503 = vdwg.mxu0
  %5504 = vmatpush.bf16.msra.mxu0 %v3398
  %5505 = vmatpush.bf16.msra.mxu0 %v3394
  %5506 = vmatpush.bf16.msra.mxu0 %v3390
  %5507 = vmatpush.bf16.msra.mxu0 %v3386
  %5508 = vmatpush.bf16.msra.mxu0 %v3382
  %5509 = vmatpush.bf16.msra.mxu0 %v3378
  %5510 = vmatpush.bf16.msra.mxu0 %v3374
  %5511 = vmatpush.bf16.msra.mxu0 %v3370
  %5512 = vmatmul.bf16.gmra.mxu0 %v892
  %v5513 = vpop.f32.mrf.mxu0
  %v5514 = vadd.f32 %v5500, %v5513
  %v5515 = vpop.f32.mrf.mxu0
  %v5516 = vadd.f32 %v5502, %v5515
  %5517 = vdwg.mxu0
  %5518 = vmatpush.bf16.msra.mxu0 %v3430
  %5519 = vmatpush.bf16.msra.mxu0 %v3426
  %5520 = vmatpush.bf16.msra.mxu0 %v3422
  %5521 = vmatpush.bf16.msra.mxu0 %v3418
  %5522 = vmatpush.bf16.msra.mxu0 %v3414
  %5523 = vmatpush.bf16.msra.mxu0 %v3410
  %5524 = vmatpush.bf16.msra.mxu0 %v3406
  %5525 = vmatpush.bf16.msra.mxu0 %v3402
  %5526 = vmatmul.bf16.gmra.mxu0 %v893
  %v5527 = vpop.f32.mrf.mxu0
  %v5528 = vadd.f32 %v5514, %v5527
  %v5529 = vpop.f32.mrf.mxu0
  %v5530 = vadd.f32 %v5516, %v5529
  %5531 = vdwg.mxu0
  %5532 = vmatpush.bf16.msra.mxu0 %v3462
  %5533 = vmatpush.bf16.msra.mxu0 %v3458
  %5534 = vmatpush.bf16.msra.mxu0 %v3454
  %5535 = vmatpush.bf16.msra.mxu0 %v3450
  %5536 = vmatpush.bf16.msra.mxu0 %v3446
  %5537 = vmatpush.bf16.msra.mxu0 %v3442
  %5538 = vmatpush.bf16.msra.mxu0 %v3438
  %5539 = vmatpush.bf16.msra.mxu0 %v3434
  %5540 = vmatmul.bf16.gmra.mxu0 %v894
  %v5541 = vpop.f32.mrf.mxu0
  %v5542 = vadd.f32 %v5528, %v5541
  %v5543 = vpop.f32.mrf.mxu0
  %v5544 = vadd.f32 %v5530, %v5543
  %5545 = vdwg.mxu0
  %5546 = vmatpush.bf16.msra.mxu0 %v3494
  %5547 = vmatpush.bf16.msra.mxu0 %v3490
  %5548 = vmatpush.bf16.msra.mxu0 %v3486
  %5549 = vmatpush.bf16.msra.mxu0 %v3482
  %5550 = vmatpush.bf16.msra.mxu0 %v3478
  %5551 = vmatpush.bf16.msra.mxu0 %v3474
  %5552 = vmatpush.bf16.msra.mxu0 %v3470
  %5553 = vmatpush.bf16.msra.mxu0 %v3466
  %5554 = vmatmul.bf16.gmra.mxu0 %v895
  %v5555 = vpop.f32.mrf.mxu0
  %v5556 = vadd.f32 %v5542, %v5555
  %v5557 = vpop.f32.mrf.mxu0
  %v5558 = vadd.f32 %v5544, %v5557
  %5559 = vdwg.mxu0
  %5560 = vmatpush.bf16.msra.mxu0 %v3526
  %5561 = vmatpush.bf16.msra.mxu0 %v3522
  %5562 = vmatpush.bf16.msra.mxu0 %v3518
  %5563 = vmatpush.bf16.msra.mxu0 %v3514
  %5564 = vmatpush.bf16.msra.mxu0 %v3510
  %5565 = vmatpush.bf16.msra.mxu0 %v3506
  %5566 = vmatpush.bf16.msra.mxu0 %v3502
  %5567 = vmatpush.bf16.msra.mxu0 %v3498
  %5568 = vmatmul.bf16.gmra.mxu0 %v896
  %v5569 = vpop.f32.mrf.mxu0
  %v5570 = vadd.f32 %v5556, %v5569
  %v5571 = vpop.f32.mrf.mxu0
  %v5572 = vadd.f32 %v5558, %v5571
  %5573 = vdwg.mxu0
  %5574 = vmatpush.bf16.msra.mxu0 %v3558
  %5575 = vmatpush.bf16.msra.mxu0 %v3554
  %5576 = vmatpush.bf16.msra.mxu0 %v3550
  %5577 = vmatpush.bf16.msra.mxu0 %v3546
  %5578 = vmatpush.bf16.msra.mxu0 %v3542
  %5579 = vmatpush.bf16.msra.mxu0 %v3538
  %5580 = vmatpush.bf16.msra.mxu0 %v3534
  %5581 = vmatpush.bf16.msra.mxu0 %v3530
  %5582 = vmatmul.bf16.gmra.mxu0 %v897
  %v5583 = vpop.f32.mrf.mxu0
  %v5584 = vadd.f32 %v5570, %v5583
  %v5585 = vpop.f32.mrf.mxu0
  %v5586 = vadd.f32 %v5572, %v5585
  %5587 = vdwg.mxu0
  %5588 = vmatpush.bf16.msra.mxu0 %v3590
  %5589 = vmatpush.bf16.msra.mxu0 %v3586
  %5590 = vmatpush.bf16.msra.mxu0 %v3582
  %5591 = vmatpush.bf16.msra.mxu0 %v3578
  %5592 = vmatpush.bf16.msra.mxu0 %v3574
  %5593 = vmatpush.bf16.msra.mxu0 %v3570
  %5594 = vmatpush.bf16.msra.mxu0 %v3566
  %5595 = vmatpush.bf16.msra.mxu0 %v3562
  %5596 = vmatmul.bf16.gmra.mxu0 %v898
  %v5597 = vpop.f32.mrf.mxu0
  %v5598 = vadd.f32 %v5584, %v5597
  %v5599 = vpop.f32.mrf.mxu0
  %v5600 = vadd.f32 %v5586, %v5599
  %5601 = vdwg.mxu0
  %5602 = vmatpush.bf16.msra.mxu0 %v3622
  %5603 = vmatpush.bf16.msra.mxu0 %v3618
  %5604 = vmatpush.bf16.msra.mxu0 %v3614
  %5605 = vmatpush.bf16.msra.mxu0 %v3610
  %5606 = vmatpush.bf16.msra.mxu0 %v3606
  %5607 = vmatpush.bf16.msra.mxu0 %v3602
  %5608 = vmatpush.bf16.msra.mxu0 %v3598
  %5609 = vmatpush.bf16.msra.mxu0 %v3594
  %5610 = vmatmul.bf16.gmra.mxu0 %v899
  %v5611 = vpop.f32.mrf.mxu0
  %v5612 = vadd.f32 %v5598, %v5611
  %v5613 = vpop.f32.mrf.mxu0
  %v5614 = vadd.f32 %v5600, %v5613
  %5615 = vdwg.mxu0
  %5616 = vmatpush.bf16.msra.mxu0 %v3654
  %5617 = vmatpush.bf16.msra.mxu0 %v3650
  %5618 = vmatpush.bf16.msra.mxu0 %v3646
  %5619 = vmatpush.bf16.msra.mxu0 %v3642
  %5620 = vmatpush.bf16.msra.mxu0 %v3638
  %5621 = vmatpush.bf16.msra.mxu0 %v3634
  %5622 = vmatpush.bf16.msra.mxu0 %v3630
  %5623 = vmatpush.bf16.msra.mxu0 %v3626
  %5624 = vmatmul.bf16.gmra.mxu0 %v900
  %v5625 = vpop.f32.mrf.mxu0
  %v5626 = vadd.f32 %v5612, %v5625
  %v5627 = vpop.f32.mrf.mxu0
  %v5628 = vadd.f32 %v5614, %v5627
  %5629 = vdwg.mxu0
  %5630 = vmatpush.bf16.msra.mxu0 %v3686
  %5631 = vmatpush.bf16.msra.mxu0 %v3682
  %5632 = vmatpush.bf16.msra.mxu0 %v3678
  %5633 = vmatpush.bf16.msra.mxu0 %v3674
  %5634 = vmatpush.bf16.msra.mxu0 %v3670
  %5635 = vmatpush.bf16.msra.mxu0 %v3666
  %5636 = vmatpush.bf16.msra.mxu0 %v3662
  %5637 = vmatpush.bf16.msra.mxu0 %v3658
  %5638 = vmatmul.bf16.gmra.mxu0 %v901
  %v5639 = vpop.f32.mrf.mxu0
  %v5640 = vadd.f32 %v5626, %v5639
  %v5641 = vpop.f32.mrf.mxu0
  %v5642 = vadd.f32 %v5628, %v5641
  %5643 = vdwg.mxu0
  %5644 = vmatpush.bf16.msra.mxu0 %v3718
  %5645 = vmatpush.bf16.msra.mxu0 %v3714
  %5646 = vmatpush.bf16.msra.mxu0 %v3710
  %5647 = vmatpush.bf16.msra.mxu0 %v3706
  %5648 = vmatpush.bf16.msra.mxu0 %v3702
  %5649 = vmatpush.bf16.msra.mxu0 %v3698
  %5650 = vmatpush.bf16.msra.mxu0 %v3694
  %5651 = vmatpush.bf16.msra.mxu0 %v3690
  %5652 = vmatmul.bf16.gmra.mxu0 %v902
  %v5653 = vpop.f32.mrf.mxu0
  %v5654 = vadd.f32 %v5640, %v5653
  %v5655 = vpop.f32.mrf.mxu0
  %v5656 = vadd.f32 %v5642, %v5655
  %5657 = vdwg.mxu0
  %5658 = vmatpush.bf16.msra.mxu0 %v3750
  %5659 = vmatpush.bf16.msra.mxu0 %v3746
  %5660 = vmatpush.bf16.msra.mxu0 %v3742
  %5661 = vmatpush.bf16.msra.mxu0 %v3738
  %5662 = vmatpush.bf16.msra.mxu0 %v3734
  %5663 = vmatpush.bf16.msra.mxu0 %v3730
  %5664 = vmatpush.bf16.msra.mxu0 %v3726
  %5665 = vmatpush.bf16.msra.mxu0 %v3722
  %5666 = vmatmul.bf16.gmra.mxu0 %v903
  %v5667 = vpop.f32.mrf.mxu0
  %v5668 = vadd.f32 %v5654, %v5667
  %v5669 = vpop.f32.mrf.mxu0
  %v5670 = vadd.f32 %v5656, %v5669
  %5671 = vdwg.mxu0
  %5672 = vmatpush.bf16.msra.mxu0 %v3782
  %5673 = vmatpush.bf16.msra.mxu0 %v3778
  %5674 = vmatpush.bf16.msra.mxu0 %v3774
  %5675 = vmatpush.bf16.msra.mxu0 %v3770
  %5676 = vmatpush.bf16.msra.mxu0 %v3766
  %5677 = vmatpush.bf16.msra.mxu0 %v3762
  %5678 = vmatpush.bf16.msra.mxu0 %v3758
  %5679 = vmatpush.bf16.msra.mxu0 %v3754
  %5680 = vmatmul.bf16.gmra.mxu0 %v904
  %v5681 = vpop.f32.mrf.mxu0
  %v5682 = vadd.f32 %v5668, %v5681
  %v5683 = vpop.f32.mrf.mxu0
  %v5684 = vadd.f32 %v5670, %v5683
  %5685 = vdwg.mxu0
  %5686 = vmatpush.bf16.msra.mxu0 %v3814
  %5687 = vmatpush.bf16.msra.mxu0 %v3810
  %5688 = vmatpush.bf16.msra.mxu0 %v3806
  %5689 = vmatpush.bf16.msra.mxu0 %v3802
  %5690 = vmatpush.bf16.msra.mxu0 %v3798
  %5691 = vmatpush.bf16.msra.mxu0 %v3794
  %5692 = vmatpush.bf16.msra.mxu0 %v3790
  %5693 = vmatpush.bf16.msra.mxu0 %v3786
  %5694 = vmatmul.bf16.gmra.mxu0 %v905
  %v5695 = vpop.f32.mrf.mxu0
  %v5696 = vadd.f32 %v5682, %v5695
  %v5697 = vpop.f32.mrf.mxu0
  %v5698 = vadd.f32 %v5684, %v5697
  %5699 = vdwg.mxu0
  %5700 = vmatpush.bf16.msra.mxu0 %v3846
  %5701 = vmatpush.bf16.msra.mxu0 %v3842
  %5702 = vmatpush.bf16.msra.mxu0 %v3838
  %5703 = vmatpush.bf16.msra.mxu0 %v3834
  %5704 = vmatpush.bf16.msra.mxu0 %v3830
  %5705 = vmatpush.bf16.msra.mxu0 %v3826
  %5706 = vmatpush.bf16.msra.mxu0 %v3822
  %5707 = vmatpush.bf16.msra.mxu0 %v3818
  %5708 = vmatmul.bf16.gmra.mxu0 %v906
  %v5709 = vpop.f32.mrf.mxu0
  %v5710 = vadd.f32 %v5696, %v5709
  %v5711 = vpop.f32.mrf.mxu0
  %v5712 = vadd.f32 %v5698, %v5711
  %5713 = vdwg.mxu0
  %5714 = vmatpush.bf16.msra.mxu0 %v3878
  %5715 = vmatpush.bf16.msra.mxu0 %v3874
  %5716 = vmatpush.bf16.msra.mxu0 %v3870
  %5717 = vmatpush.bf16.msra.mxu0 %v3866
  %5718 = vmatpush.bf16.msra.mxu0 %v3862
  %5719 = vmatpush.bf16.msra.mxu0 %v3858
  %5720 = vmatpush.bf16.msra.mxu0 %v3854
  %5721 = vmatpush.bf16.msra.mxu0 %v3850
  %5722 = vmatmul.bf16.gmra.mxu0 %v907
  %v5723 = vpop.f32.mrf.mxu0
  %v5724 = vadd.f32 %v5710, %v5723
  %v5725 = vpop.f32.mrf.mxu0
  %v5726 = vadd.f32 %v5712, %v5725
  %5727 = vdwg.mxu0
  %5728 = vmatpush.bf16.msra.mxu0 %v3910
  %5729 = vmatpush.bf16.msra.mxu0 %v3906
  %5730 = vmatpush.bf16.msra.mxu0 %v3902
  %5731 = vmatpush.bf16.msra.mxu0 %v3898
  %5732 = vmatpush.bf16.msra.mxu0 %v3894
  %5733 = vmatpush.bf16.msra.mxu0 %v3890
  %5734 = vmatpush.bf16.msra.mxu0 %v3886
  %5735 = vmatpush.bf16.msra.mxu0 %v3882
  %5736 = vmatmul.bf16.gmra.mxu0 %v908
  %v5737 = vpop.f32.mrf.mxu0
  %v5738 = vadd.f32 %v5724, %v5737
  %v5739 = vpop.f32.mrf.mxu0
  %v5740 = vadd.f32 %v5726, %v5739
  %5741 = vdwg.mxu0
  %5742 = vmatpush.bf16.msra.mxu0 %v3942
  %5743 = vmatpush.bf16.msra.mxu0 %v3938
  %5744 = vmatpush.bf16.msra.mxu0 %v3934
  %5745 = vmatpush.bf16.msra.mxu0 %v3930
  %5746 = vmatpush.bf16.msra.mxu0 %v3926
  %5747 = vmatpush.bf16.msra.mxu0 %v3922
  %5748 = vmatpush.bf16.msra.mxu0 %v3918
  %5749 = vmatpush.bf16.msra.mxu0 %v3914
  %5750 = vmatmul.bf16.gmra.mxu0 %v909
  %v5751 = vpop.f32.mrf.mxu0
  %v5752 = vadd.f32 %v5738, %v5751
  %v5753 = vpop.f32.mrf.mxu0
  %v5754 = vadd.f32 %v5740, %v5753
  %5755 = vdwg.mxu0
  %5756 = vmatpush.bf16.msra.mxu0 %v3974
  %5757 = vmatpush.bf16.msra.mxu0 %v3970
  %5758 = vmatpush.bf16.msra.mxu0 %v3966
  %5759 = vmatpush.bf16.msra.mxu0 %v3962
  %5760 = vmatpush.bf16.msra.mxu0 %v3958
  %5761 = vmatpush.bf16.msra.mxu0 %v3954
  %5762 = vmatpush.bf16.msra.mxu0 %v3950
  %5763 = vmatpush.bf16.msra.mxu0 %v3946
  %5764 = vmatmul.bf16.gmra.mxu0 %v910
  %v5765 = vpop.f32.mrf.mxu0
  %v5766 = vadd.f32 %v5752, %v5765
  %v5767 = vpop.f32.mrf.mxu0
  %v5768 = vadd.f32 %v5754, %v5767
  %5769 = vdwg.mxu0
  %5770 = vmatpush.bf16.msra.mxu0 %v4006
  %5771 = vmatpush.bf16.msra.mxu0 %v4002
  %5772 = vmatpush.bf16.msra.mxu0 %v3998
  %5773 = vmatpush.bf16.msra.mxu0 %v3994
  %5774 = vmatpush.bf16.msra.mxu0 %v3990
  %5775 = vmatpush.bf16.msra.mxu0 %v3986
  %5776 = vmatpush.bf16.msra.mxu0 %v3982
  %5777 = vmatpush.bf16.msra.mxu0 %v3978
  %5778 = vmatmul.bf16.gmra.mxu0 %v911
  %v5779 = vpop.f32.mrf.mxu0
  %v5780 = vadd.f32 %v5766, %v5779
  %v5781 = vpop.f32.mrf.mxu0
  %v5782 = vadd.f32 %v5768, %v5781
  %5783 = vdwg.mxu0
  %5784 = vmatpush.bf16.msra.mxu0 %v3271
  %5785 = vmatpush.bf16.msra.mxu0 %v3267
  %5786 = vmatpush.bf16.msra.mxu0 %v3263
  %5787 = vmatpush.bf16.msra.mxu0 %v3259
  %5788 = vmatpush.bf16.msra.mxu0 %v3255
  %5789 = vmatpush.bf16.msra.mxu0 %v3251
  %5790 = vmatpush.bf16.msra.mxu0 %v3247
  %5791 = vmatpush.bf16.msra.mxu0 %v3243
  %5792 = vmatmul.bf16.gmra.mxu0 %v888
  %v5793 = vpop.f32.mrf.mxu0
  %v5794 = vadd.f32 %v811, %v5793
  %v5795 = vpop.f32.mrf.mxu0
  %v5796 = vadd.f32 %v811, %v5795
  %5797 = vdwg.mxu0
  %5798 = vmatpush.bf16.msra.mxu0 %v3303
  %5799 = vmatpush.bf16.msra.mxu0 %v3299
  %5800 = vmatpush.bf16.msra.mxu0 %v3295
  %5801 = vmatpush.bf16.msra.mxu0 %v3291
  %5802 = vmatpush.bf16.msra.mxu0 %v3287
  %5803 = vmatpush.bf16.msra.mxu0 %v3283
  %5804 = vmatpush.bf16.msra.mxu0 %v3279
  %5805 = vmatpush.bf16.msra.mxu0 %v3275
  %5806 = vmatmul.bf16.gmra.mxu0 %v889
  %v5807 = vpop.f32.mrf.mxu0
  %v5808 = vadd.f32 %v5794, %v5807
  %v5809 = vpop.f32.mrf.mxu0
  %v5810 = vadd.f32 %v5796, %v5809
  %5811 = vdwg.mxu0
  %5812 = vmatpush.bf16.msra.mxu0 %v3335
  %5813 = vmatpush.bf16.msra.mxu0 %v3331
  %5814 = vmatpush.bf16.msra.mxu0 %v3327
  %5815 = vmatpush.bf16.msra.mxu0 %v3323
  %5816 = vmatpush.bf16.msra.mxu0 %v3319
  %5817 = vmatpush.bf16.msra.mxu0 %v3315
  %5818 = vmatpush.bf16.msra.mxu0 %v3311
  %5819 = vmatpush.bf16.msra.mxu0 %v3307
  %5820 = vmatmul.bf16.gmra.mxu0 %v890
  %v5821 = vpop.f32.mrf.mxu0
  %v5822 = vadd.f32 %v5808, %v5821
  %v5823 = vpop.f32.mrf.mxu0
  %v5824 = vadd.f32 %v5810, %v5823
  %5825 = vdwg.mxu0
  %5826 = vmatpush.bf16.msra.mxu0 %v3367
  %5827 = vmatpush.bf16.msra.mxu0 %v3363
  %5828 = vmatpush.bf16.msra.mxu0 %v3359
  %5829 = vmatpush.bf16.msra.mxu0 %v3355
  %5830 = vmatpush.bf16.msra.mxu0 %v3351
  %5831 = vmatpush.bf16.msra.mxu0 %v3347
  %5832 = vmatpush.bf16.msra.mxu0 %v3343
  %5833 = vmatpush.bf16.msra.mxu0 %v3339
  %5834 = vmatmul.bf16.gmra.mxu0 %v891
  %v5835 = vpop.f32.mrf.mxu0
  %v5836 = vadd.f32 %v5822, %v5835
  %v5837 = vpop.f32.mrf.mxu0
  %v5838 = vadd.f32 %v5824, %v5837
  %5839 = vdwg.mxu0
  %5840 = vmatpush.bf16.msra.mxu0 %v3399
  %5841 = vmatpush.bf16.msra.mxu0 %v3395
  %5842 = vmatpush.bf16.msra.mxu0 %v3391
  %5843 = vmatpush.bf16.msra.mxu0 %v3387
  %5844 = vmatpush.bf16.msra.mxu0 %v3383
  %5845 = vmatpush.bf16.msra.mxu0 %v3379
  %5846 = vmatpush.bf16.msra.mxu0 %v3375
  %5847 = vmatpush.bf16.msra.mxu0 %v3371
  %5848 = vmatmul.bf16.gmra.mxu0 %v892
  %v5849 = vpop.f32.mrf.mxu0
  %v5850 = vadd.f32 %v5836, %v5849
  %v5851 = vpop.f32.mrf.mxu0
  %v5852 = vadd.f32 %v5838, %v5851
  %5853 = vdwg.mxu0
  %5854 = vmatpush.bf16.msra.mxu0 %v3431
  %5855 = vmatpush.bf16.msra.mxu0 %v3427
  %5856 = vmatpush.bf16.msra.mxu0 %v3423
  %5857 = vmatpush.bf16.msra.mxu0 %v3419
  %5858 = vmatpush.bf16.msra.mxu0 %v3415
  %5859 = vmatpush.bf16.msra.mxu0 %v3411
  %5860 = vmatpush.bf16.msra.mxu0 %v3407
  %5861 = vmatpush.bf16.msra.mxu0 %v3403
  %5862 = vmatmul.bf16.gmra.mxu0 %v893
  %v5863 = vpop.f32.mrf.mxu0
  %v5864 = vadd.f32 %v5850, %v5863
  %v5865 = vpop.f32.mrf.mxu0
  %v5866 = vadd.f32 %v5852, %v5865
  %5867 = vdwg.mxu0
  %5868 = vmatpush.bf16.msra.mxu0 %v3463
  %5869 = vmatpush.bf16.msra.mxu0 %v3459
  %5870 = vmatpush.bf16.msra.mxu0 %v3455
  %5871 = vmatpush.bf16.msra.mxu0 %v3451
  %5872 = vmatpush.bf16.msra.mxu0 %v3447
  %5873 = vmatpush.bf16.msra.mxu0 %v3443
  %5874 = vmatpush.bf16.msra.mxu0 %v3439
  %5875 = vmatpush.bf16.msra.mxu0 %v3435
  %5876 = vmatmul.bf16.gmra.mxu0 %v894
  %v5877 = vpop.f32.mrf.mxu0
  %v5878 = vadd.f32 %v5864, %v5877
  %v5879 = vpop.f32.mrf.mxu0
  %v5880 = vadd.f32 %v5866, %v5879
  %5881 = vdwg.mxu0
  %5882 = vmatpush.bf16.msra.mxu0 %v3495
  %5883 = vmatpush.bf16.msra.mxu0 %v3491
  %5884 = vmatpush.bf16.msra.mxu0 %v3487
  %5885 = vmatpush.bf16.msra.mxu0 %v3483
  %5886 = vmatpush.bf16.msra.mxu0 %v3479
  %5887 = vmatpush.bf16.msra.mxu0 %v3475
  %5888 = vmatpush.bf16.msra.mxu0 %v3471
  %5889 = vmatpush.bf16.msra.mxu0 %v3467
  %5890 = vmatmul.bf16.gmra.mxu0 %v895
  %v5891 = vpop.f32.mrf.mxu0
  %v5892 = vadd.f32 %v5878, %v5891
  %v5893 = vpop.f32.mrf.mxu0
  %v5894 = vadd.f32 %v5880, %v5893
  %5895 = vdwg.mxu0
  %5896 = vmatpush.bf16.msra.mxu0 %v3527
  %5897 = vmatpush.bf16.msra.mxu0 %v3523
  %5898 = vmatpush.bf16.msra.mxu0 %v3519
  %5899 = vmatpush.bf16.msra.mxu0 %v3515
  %5900 = vmatpush.bf16.msra.mxu0 %v3511
  %5901 = vmatpush.bf16.msra.mxu0 %v3507
  %5902 = vmatpush.bf16.msra.mxu0 %v3503
  %5903 = vmatpush.bf16.msra.mxu0 %v3499
  %5904 = vmatmul.bf16.gmra.mxu0 %v896
  %v5905 = vpop.f32.mrf.mxu0
  %v5906 = vadd.f32 %v5892, %v5905
  %v5907 = vpop.f32.mrf.mxu0
  %v5908 = vadd.f32 %v5894, %v5907
  %5909 = vdwg.mxu0
  %5910 = vmatpush.bf16.msra.mxu0 %v3559
  %5911 = vmatpush.bf16.msra.mxu0 %v3555
  %5912 = vmatpush.bf16.msra.mxu0 %v3551
  %5913 = vmatpush.bf16.msra.mxu0 %v3547
  %5914 = vmatpush.bf16.msra.mxu0 %v3543
  %5915 = vmatpush.bf16.msra.mxu0 %v3539
  %5916 = vmatpush.bf16.msra.mxu0 %v3535
  %5917 = vmatpush.bf16.msra.mxu0 %v3531
  %5918 = vmatmul.bf16.gmra.mxu0 %v897
  %v5919 = vpop.f32.mrf.mxu0
  %v5920 = vadd.f32 %v5906, %v5919
  %v5921 = vpop.f32.mrf.mxu0
  %v5922 = vadd.f32 %v5908, %v5921
  %5923 = vdwg.mxu0
  %5924 = vmatpush.bf16.msra.mxu0 %v3591
  %5925 = vmatpush.bf16.msra.mxu0 %v3587
  %5926 = vmatpush.bf16.msra.mxu0 %v3583
  %5927 = vmatpush.bf16.msra.mxu0 %v3579
  %5928 = vmatpush.bf16.msra.mxu0 %v3575
  %5929 = vmatpush.bf16.msra.mxu0 %v3571
  %5930 = vmatpush.bf16.msra.mxu0 %v3567
  %5931 = vmatpush.bf16.msra.mxu0 %v3563
  %5932 = vmatmul.bf16.gmra.mxu0 %v898
  %v5933 = vpop.f32.mrf.mxu0
  %v5934 = vadd.f32 %v5920, %v5933
  %v5935 = vpop.f32.mrf.mxu0
  %v5936 = vadd.f32 %v5922, %v5935
  %5937 = vdwg.mxu0
  %5938 = vmatpush.bf16.msra.mxu0 %v3623
  %5939 = vmatpush.bf16.msra.mxu0 %v3619
  %5940 = vmatpush.bf16.msra.mxu0 %v3615
  %5941 = vmatpush.bf16.msra.mxu0 %v3611
  %5942 = vmatpush.bf16.msra.mxu0 %v3607
  %5943 = vmatpush.bf16.msra.mxu0 %v3603
  %5944 = vmatpush.bf16.msra.mxu0 %v3599
  %5945 = vmatpush.bf16.msra.mxu0 %v3595
  %5946 = vmatmul.bf16.gmra.mxu0 %v899
  %v5947 = vpop.f32.mrf.mxu0
  %v5948 = vadd.f32 %v5934, %v5947
  %v5949 = vpop.f32.mrf.mxu0
  %v5950 = vadd.f32 %v5936, %v5949
  %5951 = vdwg.mxu0
  %5952 = vmatpush.bf16.msra.mxu0 %v3655
  %5953 = vmatpush.bf16.msra.mxu0 %v3651
  %5954 = vmatpush.bf16.msra.mxu0 %v3647
  %5955 = vmatpush.bf16.msra.mxu0 %v3643
  %5956 = vmatpush.bf16.msra.mxu0 %v3639
  %5957 = vmatpush.bf16.msra.mxu0 %v3635
  %5958 = vmatpush.bf16.msra.mxu0 %v3631
  %5959 = vmatpush.bf16.msra.mxu0 %v3627
  %5960 = vmatmul.bf16.gmra.mxu0 %v900
  %v5961 = vpop.f32.mrf.mxu0
  %v5962 = vadd.f32 %v5948, %v5961
  %v5963 = vpop.f32.mrf.mxu0
  %v5964 = vadd.f32 %v5950, %v5963
  %5965 = vdwg.mxu0
  %5966 = vmatpush.bf16.msra.mxu0 %v3687
  %5967 = vmatpush.bf16.msra.mxu0 %v3683
  %5968 = vmatpush.bf16.msra.mxu0 %v3679
  %5969 = vmatpush.bf16.msra.mxu0 %v3675
  %5970 = vmatpush.bf16.msra.mxu0 %v3671
  %5971 = vmatpush.bf16.msra.mxu0 %v3667
  %5972 = vmatpush.bf16.msra.mxu0 %v3663
  %5973 = vmatpush.bf16.msra.mxu0 %v3659
  %5974 = vmatmul.bf16.gmra.mxu0 %v901
  %v5975 = vpop.f32.mrf.mxu0
  %v5976 = vadd.f32 %v5962, %v5975
  %v5977 = vpop.f32.mrf.mxu0
  %v5978 = vadd.f32 %v5964, %v5977
  %5979 = vdwg.mxu0
  %5980 = vmatpush.bf16.msra.mxu0 %v3719
  %5981 = vmatpush.bf16.msra.mxu0 %v3715
  %5982 = vmatpush.bf16.msra.mxu0 %v3711
  %5983 = vmatpush.bf16.msra.mxu0 %v3707
  %5984 = vmatpush.bf16.msra.mxu0 %v3703
  %5985 = vmatpush.bf16.msra.mxu0 %v3699
  %5986 = vmatpush.bf16.msra.mxu0 %v3695
  %5987 = vmatpush.bf16.msra.mxu0 %v3691
  %5988 = vmatmul.bf16.gmra.mxu0 %v902
  %v5989 = vpop.f32.mrf.mxu0
  %v5990 = vadd.f32 %v5976, %v5989
  %v5991 = vpop.f32.mrf.mxu0
  %v5992 = vadd.f32 %v5978, %v5991
  %5993 = vdwg.mxu0
  %5994 = vmatpush.bf16.msra.mxu0 %v3751
  %5995 = vmatpush.bf16.msra.mxu0 %v3747
  %5996 = vmatpush.bf16.msra.mxu0 %v3743
  %5997 = vmatpush.bf16.msra.mxu0 %v3739
  %5998 = vmatpush.bf16.msra.mxu0 %v3735
  %5999 = vmatpush.bf16.msra.mxu0 %v3731
  %6000 = vmatpush.bf16.msra.mxu0 %v3727
  %6001 = vmatpush.bf16.msra.mxu0 %v3723
  %6002 = vmatmul.bf16.gmra.mxu0 %v903
  %v6003 = vpop.f32.mrf.mxu0
  %v6004 = vadd.f32 %v5990, %v6003
  %v6005 = vpop.f32.mrf.mxu0
  %v6006 = vadd.f32 %v5992, %v6005
  %6007 = vdwg.mxu0
  %6008 = vmatpush.bf16.msra.mxu0 %v3783
  %6009 = vmatpush.bf16.msra.mxu0 %v3779
  %6010 = vmatpush.bf16.msra.mxu0 %v3775
  %6011 = vmatpush.bf16.msra.mxu0 %v3771
  %6012 = vmatpush.bf16.msra.mxu0 %v3767
  %6013 = vmatpush.bf16.msra.mxu0 %v3763
  %6014 = vmatpush.bf16.msra.mxu0 %v3759
  %6015 = vmatpush.bf16.msra.mxu0 %v3755
  %6016 = vmatmul.bf16.gmra.mxu0 %v904
  %v6017 = vpop.f32.mrf.mxu0
  %v6018 = vadd.f32 %v6004, %v6017
  %v6019 = vpop.f32.mrf.mxu0
  %v6020 = vadd.f32 %v6006, %v6019
  %6021 = vdwg.mxu0
  %6022 = vmatpush.bf16.msra.mxu0 %v3815
  %6023 = vmatpush.bf16.msra.mxu0 %v3811
  %6024 = vmatpush.bf16.msra.mxu0 %v3807
  %6025 = vmatpush.bf16.msra.mxu0 %v3803
  %6026 = vmatpush.bf16.msra.mxu0 %v3799
  %6027 = vmatpush.bf16.msra.mxu0 %v3795
  %6028 = vmatpush.bf16.msra.mxu0 %v3791
  %6029 = vmatpush.bf16.msra.mxu0 %v3787
  %6030 = vmatmul.bf16.gmra.mxu0 %v905
  %v6031 = vpop.f32.mrf.mxu0
  %v6032 = vadd.f32 %v6018, %v6031
  %v6033 = vpop.f32.mrf.mxu0
  %v6034 = vadd.f32 %v6020, %v6033
  %6035 = vdwg.mxu0
  %6036 = vmatpush.bf16.msra.mxu0 %v3847
  %6037 = vmatpush.bf16.msra.mxu0 %v3843
  %6038 = vmatpush.bf16.msra.mxu0 %v3839
  %6039 = vmatpush.bf16.msra.mxu0 %v3835
  %6040 = vmatpush.bf16.msra.mxu0 %v3831
  %6041 = vmatpush.bf16.msra.mxu0 %v3827
  %6042 = vmatpush.bf16.msra.mxu0 %v3823
  %6043 = vmatpush.bf16.msra.mxu0 %v3819
  %6044 = vmatmul.bf16.gmra.mxu0 %v906
  %v6045 = vpop.f32.mrf.mxu0
  %v6046 = vadd.f32 %v6032, %v6045
  %v6047 = vpop.f32.mrf.mxu0
  %v6048 = vadd.f32 %v6034, %v6047
  %6049 = vdwg.mxu0
  %6050 = vmatpush.bf16.msra.mxu0 %v3879
  %6051 = vmatpush.bf16.msra.mxu0 %v3875
  %6052 = vmatpush.bf16.msra.mxu0 %v3871
  %6053 = vmatpush.bf16.msra.mxu0 %v3867
  %6054 = vmatpush.bf16.msra.mxu0 %v3863
  %6055 = vmatpush.bf16.msra.mxu0 %v3859
  %6056 = vmatpush.bf16.msra.mxu0 %v3855
  %6057 = vmatpush.bf16.msra.mxu0 %v3851
  %6058 = vmatmul.bf16.gmra.mxu0 %v907
  %v6059 = vpop.f32.mrf.mxu0
  %v6060 = vadd.f32 %v6046, %v6059
  %v6061 = vpop.f32.mrf.mxu0
  %v6062 = vadd.f32 %v6048, %v6061
  %6063 = vdwg.mxu0
  %6064 = vmatpush.bf16.msra.mxu0 %v3911
  %6065 = vmatpush.bf16.msra.mxu0 %v3907
  %6066 = vmatpush.bf16.msra.mxu0 %v3903
  %6067 = vmatpush.bf16.msra.mxu0 %v3899
  %6068 = vmatpush.bf16.msra.mxu0 %v3895
  %6069 = vmatpush.bf16.msra.mxu0 %v3891
  %6070 = vmatpush.bf16.msra.mxu0 %v3887
  %6071 = vmatpush.bf16.msra.mxu0 %v3883
  %6072 = vmatmul.bf16.gmra.mxu0 %v908
  %v6073 = vpop.f32.mrf.mxu0
  %v6074 = vadd.f32 %v6060, %v6073
  %v6075 = vpop.f32.mrf.mxu0
  %v6076 = vadd.f32 %v6062, %v6075
  %6077 = vdwg.mxu0
  %6078 = vmatpush.bf16.msra.mxu0 %v3943
  %6079 = vmatpush.bf16.msra.mxu0 %v3939
  %6080 = vmatpush.bf16.msra.mxu0 %v3935
  %6081 = vmatpush.bf16.msra.mxu0 %v3931
  %6082 = vmatpush.bf16.msra.mxu0 %v3927
  %6083 = vmatpush.bf16.msra.mxu0 %v3923
  %6084 = vmatpush.bf16.msra.mxu0 %v3919
  %6085 = vmatpush.bf16.msra.mxu0 %v3915
  %6086 = vmatmul.bf16.gmra.mxu0 %v909
  %v6087 = vpop.f32.mrf.mxu0
  %v6088 = vadd.f32 %v6074, %v6087
  %v6089 = vpop.f32.mrf.mxu0
  %v6090 = vadd.f32 %v6076, %v6089
  %6091 = vdwg.mxu0
  %6092 = vmatpush.bf16.msra.mxu0 %v3975
  %6093 = vmatpush.bf16.msra.mxu0 %v3971
  %6094 = vmatpush.bf16.msra.mxu0 %v3967
  %6095 = vmatpush.bf16.msra.mxu0 %v3963
  %6096 = vmatpush.bf16.msra.mxu0 %v3959
  %6097 = vmatpush.bf16.msra.mxu0 %v3955
  %6098 = vmatpush.bf16.msra.mxu0 %v3951
  %6099 = vmatpush.bf16.msra.mxu0 %v3947
  %6100 = vmatmul.bf16.gmra.mxu0 %v910
  %v6101 = vpop.f32.mrf.mxu0
  %v6102 = vadd.f32 %v6088, %v6101
  %v6103 = vpop.f32.mrf.mxu0
  %v6104 = vadd.f32 %v6090, %v6103
  %6105 = vdwg.mxu0
  %6106 = vmatpush.bf16.msra.mxu0 %v4007
  %6107 = vmatpush.bf16.msra.mxu0 %v4003
  %6108 = vmatpush.bf16.msra.mxu0 %v3999
  %6109 = vmatpush.bf16.msra.mxu0 %v3995
  %6110 = vmatpush.bf16.msra.mxu0 %v3991
  %6111 = vmatpush.bf16.msra.mxu0 %v3987
  %6112 = vmatpush.bf16.msra.mxu0 %v3983
  %6113 = vmatpush.bf16.msra.mxu0 %v3979
  %6114 = vmatmul.bf16.gmra.mxu0 %v911
  %v6115 = vpop.f32.mrf.mxu0
  %v6116 = vadd.f32 %v6102, %v6115
  %v6117 = vpop.f32.mrf.mxu0
  %v6118 = vadd.f32 %v6104, %v6117
  %6119 = vdwg.mxu0
  %v6120 = vpack.c.bf16 %v5444, %v5108
  %v6121 = vpack.c.bf16 %v6116, %v5780
  %v6122 = vpack.c.bf16 %v5446, %v5110
  %v6123 = vpack.c.bf16 %v6118, %v5782
  %6124 = vst [vmem:[%s3] sm:$0xff] %v6120
  %6125 = vst [vmem:[%s3 + $0x8] sm:$0xff] %v6121
  %6126 = vst [vmem:[%s3 + $0x10] sm:$0xff] %v6122
  %6127 = vst [vmem:[%s3 + $0x18] sm:$0xff] %v6123
  // Predicated region
  $region14: #{detector_backbone_with_fpn_forward.11} parent=0 // pred_check
    _
  $region15: #{detector_backbone_with_fpn_forward.11} parent=0 // pred_check_branch
    %6129 = sbr.rel (0) target = $region17
  $region16: #{detector_backbone_with_fpn_forward.11} parent=0 // pred_region
    _
  $region17: #{detector_backbone_with_fpn_forward.11} parent=0 // pred_fallthru
    _
  // Predicated region
  $region18: #{detector_backbone_with_fpn_forward.11} parent=0 // pred_check
    _
  $region19: #{detector_backbone_with_fpn_forward.11} parent=0 // pred_check_branch
    %6131 = sbr.rel (0) target = $region21
  $region20: #{detector_backbone_with_fpn_forward.11} parent=0 // pred_region
    _
  $region21: #{detector_backbone_with_fpn_forward.11} parent=0 // pred_fallthru
    _

// kernel: detector_backbone_with_fpn_forward.15
$region0: #{detector_backbone_with_fpn_forward.15}
  #allocation0 [shape = 'u32[]', space=smem, size = 0x4, offset = 0x4, fixed_abs, tag = 'smem constant byte address 0x4 - core index']
  #allocation1 [shape = 'u32[72,128]{1,0:T(1,128)}', space=vmem, size = 0x9000, scoped, tag = 'internal scratch']
  %s0 = inlined_call_operand.vmem [shape: bf16[2,96,384], index: 0, kind: input, shape index: {}]
  %s1 = inlined_call_operand.vmem [shape: bf16[3,384,128], index: 1, kind: input, shape index: {}]
  %s2 = inlined_call_operand.vmem [shape: f32[1,128], index: 2, kind: input, shape index: {}]
  %s3 = inlined_call_operand.vmem [shape: bf16[2,64,128], index: 3, kind: output, shape index: {}]
  %s4 = sld [smem:[#allocation0]]
  $region45: #{detector_backbone_with_fpn_forward.15} parent=0
    _
  %s6 = ssub.s32 1, %s4
  %s7 = scalar_select 0, %s6, %s4
  loop: start=0, step=1, limit=4
  $region2: #{detector_backbone_with_fpn_forward.15} parent=0 // loop_pre_header
    _
  $region3: #{detector_backbone_with_fpn_forward.15} parent=0 // loop_header
    %s9 = sphi 0, %s13
    %p10 = scmp.ge.s32.totalorder %s9, 4
    %s19 = sphi 0, %s21
    %s22 = sphi 0, %s19
    %s23 = sphi 0, %s22
    %s39 = sphi 0, %s23
    %s43 = sphi 0, %s43
    %s45 = sphi 0, %s43
    %s46 = sphi 0, %s45
    %s60 = sphi 0, %s46
    %s64 = sphi 0, %s64
    %s66 = sphi 0, %s64
    %s67 = sphi 0, %s66
    %s81 = sphi 0, %s67
    %s87 = sphi 0, %s89
    %s90 = sphi 0, %s87
    %s91 = sphi 0, %s90
    %s107 = sphi 0, %s91
  $region4: #{detector_backbone_with_fpn_forward.15} parent=0 // loop_header_branch
    %12 = sbr.rel (%p10) target = $region8
  $region5: #{detector_backbone_with_fpn_forward.15} parent=0 // loop_body
    %s14 = ssub.s32 %s9, 1
    %s15 = ssub.s32 %s9, 2
    %s16 = sadd.s32 %s9, 1
    %s17 = ssub.s32 %s9, %s16
    %p18 = scmp.eq.s32.totalorder %s17, 0
    %s20 = sadd.s32 %s19, 1
    %s21 = scalar_select %p18, %s19, %s20
    %p24 = pneg %p18
    %p25 = scmp.eq.s32.totalorder %s9, 1
    %p26 = por %p24, %p25
    %p27 = scmp.ne.s32.totalorder %s19, %s22
    %p28 = scmp.eq.s32.totalorder %s9, 0
    %p29 = por %p27, %p28
    %p30 = scmp.ne.s32.totalorder %s19, %s22
    %p31 = scmp.eq.s32.totalorder %s14, 1
    %p32 = por %p30, %p31
    %p33 = scmp.ne.s32.totalorder %s22, %s23
    %p34 = scmp.eq.s32.totalorder %s14, 0
    %p35 = por %p33, %p34
    %p36 = scmp.ne.s32.totalorder %s22, %s23
    %p37 = scmp.eq.s32.totalorder %s15, 1
    %p38 = por %p36, %p37
    %p40 = scmp.ne.s32.totalorder %s23, %s39
    %p41 = scmp.eq.s32.totalorder %s15, 0
    %p42 = por %p40, %p41
    %s44 = sadd.s32 %s43, 1
    %p47 = scmp.eq.s32.totalorder %s9, 1
    %p48 = scmp.ne.s32.totalorder %s43, %s45
    %p49 = scmp.eq.s32.totalorder %s9, 0
    %p50 = por %p48, %p49
    %p51 = scmp.ne.s32.totalorder %s43, %s45
    %p52 = scmp.eq.s32.totalorder %s14, 1
    %p53 = por %p51, %p52
    %p54 = scmp.ne.s32.totalorder %s45, %s46
    %p55 = scmp.eq.s32.totalorder %s14, 0
    %p56 = por %p54, %p55
    %p57 = scmp.ne.s32.totalorder %s45, %s46
    %p58 = scmp.eq.s32.totalorder %s15, 1
    %p59 = por %p57, %p58
    %p61 = scmp.ne.s32.totalorder %s46, %s60
    %p62 = scmp.eq.s32.totalorder %s15, 0
    %p63 = por %p61, %p62
    %s65 = sadd.s32 %s64, 1
    %p68 = scmp.eq.s32.totalorder %s9, 1
    %p69 = scmp.ne.s32.totalorder %s64, %s66
    %p70 = scmp.eq.s32.totalorder %s9, 0
    %p71 = por %p69, %p70
    %p72 = scmp.ne.s32.totalorder %s64, %s66
    %p73 = scmp.eq.s32.totalorder %s14, 1
    %p74 = por %p72, %p73
    %p75 = scmp.ne.s32.totalorder %s66, %s67
    %p76 = scmp.eq.s32.totalorder %s14, 0
    %p77 = por %p75, %p76
    %p78 = scmp.ne.s32.totalorder %s66, %s67
    %p79 = scmp.eq.s32.totalorder %s15, 1
    %p80 = por %p78, %p79
    %p82 = scmp.ne.s32.totalorder %s67, %s81
    %p83 = scmp.eq.s32.totalorder %s15, 0
    %p84 = por %p82, %p83
    %s85 = ssub.s32 %s9, %s16
    %p86 = scmp.eq.s32.totalorder %s85, 0
    %s88 = sadd.s32 %s87, 1
    %s89 = scalar_select %p86, %s87, %s88
    %p92 = pneg %p86
    %p93 = scmp.eq.s32.totalorder %s9, 1
    %p94 = por %p92, %p93
    %p95 = scmp.ne.s32.totalorder %s87, %s90
    %p96 = scmp.eq.s32.totalorder %s9, 0
    %p97 = por %p95, %p96
    %p98 = scmp.ne.s32.totalorder %s87, %s90
    %p99 = scmp.eq.s32.totalorder %s14, 1
    %p100 = por %p98, %p99
    %p101 = scmp.ne.s32.totalorder %s90, %s91
    %p102 = scmp.eq.s32.totalorder %s14, 0
    %p103 = por %p101, %p102
    %p104 = scmp.ne.s32.totalorder %s90, %s91
    %p105 = scmp.eq.s32.totalorder %s15, 1
    %p106 = por %p104, %p105
    %p108 = scmp.ne.s32.totalorder %s91, %s107
    %p109 = scmp.eq.s32.totalorder %s15, 0
    %p110 = por %p108, %p109
    %p111 = scmp.le.s32.totalorder 1, %s9
    %p112 = scmp.lt.s32.totalorder %s9, 3
    %p113 = pnand %p111, %p112
    %p114 = pneg %p113
    // Predicated region
    $region9: #{detector_backbone_with_fpn_forward.15} parent=5 // pred_check
      _
    $region10: #{detector_backbone_with_fpn_forward.15} parent=5 // pred_check_branch
      %116 = sbr.rel (%p113) target = $region12
    $region11: #{detector_backbone_with_fpn_forward.15} parent=5 // pred_region
      %s117 = ssub.s32 %s9, 1
      // Predicated region
      $region13: #{detector_backbone_with_fpn_forward.15} parent=11 // pred_check
        %p118 = pneg %p56
      $region14: #{detector_backbone_with_fpn_forward.15} parent=11 // pred_check_branch
        %120 = sbr.rel (%p118) target = $region16
      $region15: #{detector_backbone_with_fpn_forward.15} parent=11 // pred_region
        _
      $region16: #{detector_backbone_with_fpn_forward.15} parent=11 // pred_fallthru
        _
      // Predicated region
      $region17: #{detector_backbone_with_fpn_forward.15} parent=11 // pred_check
        %p121 = pneg %p77
      $region18: #{detector_backbone_with_fpn_forward.15} parent=11 // pred_check_branch
        %123 = sbr.rel (%p121) target = $region20
      $region19: #{detector_backbone_with_fpn_forward.15} parent=11 // pred_region
        _
      $region20: #{detector_backbone_with_fpn_forward.15} parent=11 // pred_fallthru
        _
    $region12: #{detector_backbone_with_fpn_forward.15} parent=5 // pred_fallthru
      _
    %p124 = scmp.lt.s32.totalorder %s9, 2
    // Predicated region
    $region21: #{detector_backbone_with_fpn_forward.15} parent=5 // pred_check
      %p125 = pneg %p124
    $region22: #{detector_backbone_with_fpn_forward.15} parent=5 // pred_check_branch
      %127 = sbr.rel (%p125) target = $region24
    $region23: #{detector_backbone_with_fpn_forward.15} parent=5 // pred_region
      // Predicated region
      $region25: #{detector_backbone_with_fpn_forward.15} parent=23 // pred_check
        %p128 = pneg %p29
      $region26: #{detector_backbone_with_fpn_forward.15} parent=23 // pred_check_branch
        %130 = sbr.rel (%p128) target = $region28
      $region27: #{detector_backbone_with_fpn_forward.15} parent=23 // pred_region
        %p131 = scmp.lt.s32.totalorder %s9, 1
        %s132 = scalar_select %p131, %s9, 1
        %s133 = smul.addr %s132, 36
        %s134 = smul.addr %s133, 4
        %s135 = scalar_lea.vmem %s0, %s134
      $region28: #{detector_backbone_with_fpn_forward.15} parent=23 // pred_fallthru
        _
    $region24: #{detector_backbone_with_fpn_forward.15} parent=5 // pred_fallthru
      _
    %p136 = scmp.le.s32.totalorder 1, %s9
    %p137 = scmp.lt.s32.totalorder %s9, 3
    %p138 = pnand %p136, %p137
    %p139 = pneg %p138
    // Predicated region
    $region29: #{detector_backbone_with_fpn_forward.15} parent=5 // pred_check
      _
    $region30: #{detector_backbone_with_fpn_forward.15} parent=5 // pred_check_branch
      %141 = sbr.rel (%p138) target = $region32
    $region31: #{detector_backbone_with_fpn_forward.15} parent=5 // pred_region
      %s142 = ssub.s32 %s9, 1
      %p143 = scmp.lt.s32.totalorder %s14, 1
      %s144 = scalar_select %p143, %s14, 1
      %s145 = smul.addr %s144, 36
      %s146 = smul.addr %s145, 4
      %s147 = scalar_lea.vmem %s0, %s146
      %p148 = pneg %p35
      %p149 = pneg %p32
      %p150 = pneg %p56
      %p151 = pneg %p53
      %p152 = pneg %p77
      %p153 = pneg %p74
      %p154 = pneg %p103
      %p155 = pneg %p100
      %p156 = scmp.lt.s32.totalorder %s14, 1
      %s157 = scalar_select %p156, %s14, 1
      %s158 = smul.addr %s157, 8
      %s159 = smul.addr %s158, 4
      %s160 = scalar_lea.vmem %s3, %s159
      %p161 = scmp.lt.s32.totalorder %s14, 1
      %s162 = scalar_select %p161, %s14, 1
      %s163 = smul.addr %s162, 36
      %s164 = smul.addr %s163, 4
      %s165 = scalar_lea.vmem %s0, %s164
      %p166 = scmp.lt.s32.totalorder %s14, 1
      %s167 = scalar_select %p166, %s14, 1
      %s168 = smul.addr %s167, 8
      %s169 = smul.addr %s168, 4
      %s170 = scalar_lea.vmem %s3, %s169
      %v171 = vld [vmem:[%s165] sm:$0xff]
      %v172 = vld [vmem:[%s165 + $0x8] sm:$0xf]
      %v173 = vld [vmem:[%s165 + $0xc] sm:$0xff]
      %v174 = vld [vmem:[%s165 + $0x14] sm:$0xf]
      %v175 = vld [vmem:[%s165 + $0x18] sm:$0xff]
      %v176 = vld [vmem:[%s165 + $0x20] sm:$0xf]
      %v177 = vld [vmem:[%s165 + $0x24] sm:$0xff]
      %v178 = vld [vmem:[%s165 + $0x2c] sm:$0xf]
      %v179 = vld [vmem:[%s165 + $0x30] sm:$0xff]
      %v180 = vld [vmem:[%s165 + $0x38] sm:$0xf]
      %v181 = vld [vmem:[%s165 + $0x3c] sm:$0xff]
      %v182 = vld [vmem:[%s165 + $0x44] sm:$0xf]
      %v183 = vld [vmem:[%s165 + $0x48] sm:$0xff]
      %v184 = vld [vmem:[%s165 + $0x50] sm:$0xf]
      %v185 = vld [vmem:[%s165 + $0x54] sm:$0xff]
      %v186 = vld [vmem:[%s165 + $0x5c] sm:$0xf]
      %v187 = vld [vmem:[%s1] sm:$0xf]
      %v188 = vld [vmem:[%s1 + $0x4] sm:$0xf]
      %v189 = vld [vmem:[%s1 + $0x8] sm:$0xf]
      %v190 = vld [vmem:[%s1 + $0xc] sm:$0xf]
      %v191 = vld [vmem:[%s1 + $0x10] sm:$0xf]
      %v192 = vld [vmem:[%s1 + $0x14] sm:$0xf]
      %v193 = vld [vmem:[%s1 + $0x18] sm:$0xf]
      %v194 = vld [vmem:[%s1 + $0x1c] sm:$0xf]
      %v195 = vld [vmem:[%s1 + $0x20] sm:$0xf]
      %v196 = vld [vmem:[%s1 + $0x24] sm:$0xf]
      %v197 = vld [vmem:[%s1 + $0x28] sm:$0xf]
      %v198 = vld [vmem:[%s1 + $0x2c] sm:$0xf]
      %v199 = vld [vmem:[%s1 + $0x30] sm:$0xf]
      %v200 = vld [vmem:[%s1 + $0x34] sm:$0xf]
      %v201 = vld [vmem:[%s1 + $0x38] sm:$0xf]
      %v202 = vld [vmem:[%s1 + $0x3c] sm:$0xf]
      %v203 = vld [vmem:[%s1 + $0x40] sm:$0xf]
      %v204 = vld [vmem:[%s1 + $0x44] sm:$0xf]
      %v205 = vld [vmem:[%s1 + $0x48] sm:$0xf]
      %v206 = vld [vmem:[%s1 + $0x4c] sm:$0xf]
      %v207 = vld [vmem:[%s1 + $0x50] sm:$0xf]
      %v208 = vld [vmem:[%s1 + $0x54] sm:$0xf]
      %v209 = vld [vmem:[%s1 + $0x58] sm:$0xf]
      %v210 = vld [vmem:[%s1 + $0x5c] sm:$0xf]
      %v211 = vld [vmem:[%s1 + $0x60] sm:$0xf]
      %v212 = vld [vmem:[%s1 + $0x64] sm:$0xf]
      %v213 = vld [vmem:[%s1 + $0x68] sm:$0xf]
      %v214 = vld [vmem:[%s1 + $0x6c] sm:$0xf]
      %v215 = vld [vmem:[%s1 + $0x70] sm:$0xf]
      %v216 = vld [vmem:[%s1 + $0x74] sm:$0xf]
      %v217 = vld [vmem:[%s1 + $0x78] sm:$0xf]
      %v218 = vld [vmem:[%s1 + $0x7c] sm:$0xf]
      %v219 = vld [vmem:[%s1 + $0x80] sm:$0xf]
      %v220 = vld [vmem:[%s1 + $0x84] sm:$0xf]
      %v221 = vld [vmem:[%s1 + $0x88] sm:$0xf]
      %v222 = vld [vmem:[%s1 + $0x8c] sm:$0xf]
      %v223 = vld [vmem:[%s1 + $0x90] sm:$0xf]
      %v224 = vld [vmem:[%s1 + $0x94] sm:$0xf]
      %v225 = vld [vmem:[%s1 + $0x98] sm:$0xf]
      %v226 = vld [vmem:[%s1 + $0x9c] sm:$0xf]
      %v227 = vld [vmem:[%s1 + $0xa0] sm:$0xf]
      %v228 = vld [vmem:[%s1 + $0xa4] sm:$0xf]
      %v229 = vld [vmem:[%s1 + $0xa8] sm:$0xf]
      %v230 = vld [vmem:[%s1 + $0xac] sm:$0xf]
      %v231 = vld [vmem:[%s1 + $0xb0] sm:$0xf]
      %v232 = vld [vmem:[%s1 + $0xb4] sm:$0xf]
      %v233 = vld [vmem:[%s1 + $0xb8] sm:$0xf]
      %v234 = vld [vmem:[%s1 + $0xbc] sm:$0xf]
      %v235 = vld [vmem:[%s165 + $0x60] sm:$0xff]
      %v236 = vld [vmem:[%s165 + $0x68] sm:$0xf]
      %v237 = vld [vmem:[%s165 + $0x6c] sm:$0xff]
      %v238 = vld [vmem:[%s165 + $0x74] sm:$0xf]
      %s239 = scalar_lea.vmem %s1, 192
      %v240 = vld [vmem:[%s239] sm:$0xf]
      %v241 = vld [vmem:[%s239 + $0x4] sm:$0xf]
      %v242 = vld [vmem:[%s239 + $0x8] sm:$0xf]
      %v243 = vld [vmem:[%s239 + $0xc] sm:$0xf]
      %v244 = vld [vmem:[%s239 + $0x10] sm:$0xf]
      %v245 = vld [vmem:[%s239 + $0x14] sm:$0xf]
      %v246 = vld [vmem:[%s239 + $0x18] sm:$0xf]
      %v247 = vld [vmem:[%s239 + $0x1c] sm:$0xf]
      %v248 = vld [vmem:[%s239 + $0x20] sm:$0xf]
      %v249 = vld [vmem:[%s239 + $0x24] sm:$0xf]
      %v250 = vld [vmem:[%s239 + $0x28] sm:$0xf]
      %v251 = vld [vmem:[%s239 + $0x2c] sm:$0xf]
      %v252 = vld [vmem:[%s239 + $0x30] sm:$0xf]
      %v253 = vld [vmem:[%s239 + $0x34] sm:$0xf]
      %v254 = vld [vmem:[%s239 + $0x38] sm:$0xf]
      %v255 = vld [vmem:[%s239 + $0x3c] sm:$0xf]
      %v256 = vld [vmem:[%s239 + $0x40] sm:$0xf]
      %v257 = vld [vmem:[%s239 + $0x44] sm:$0xf]
      %v258 = vld [vmem:[%s239 + $0x48] sm:$0xf]
      %v259 = vld [vmem:[%s239 + $0x4c] sm:$0xf]
      %v260 = vld [vmem:[%s239 + $0x50] sm:$0xf]
      %v261 = vld [vmem:[%s239 + $0x54] sm:$0xf]
      %v262 = vld [vmem:[%s239 + $0x58] sm:$0xf]
      %v263 = vld [vmem:[%s239 + $0x5c] sm:$0xf]
      %v264 = vld [vmem:[%s239 + $0x60] sm:$0xf]
      %v265 = vld [vmem:[%s239 + $0x64] sm:$0xf]
      %v266 = vld [vmem:[%s239 + $0x68] sm:$0xf]
      %v267 = vld [vmem:[%s239 + $0x6c] sm:$0xf]
      %v268 = vld [vmem:[%s239 + $0x70] sm:$0xf]
      %v269 = vld [vmem:[%s239 + $0x74] sm:$0xf]
      %v270 = vld [vmem:[%s239 + $0x78] sm:$0xf]
      %v271 = vld [vmem:[%s239 + $0x7c] sm:$0xf]
      %v272 = vld [vmem:[%s239 + $0x80] sm:$0xf]
      %v273 = vld [vmem:[%s239 + $0x84] sm:$0xf]
      %v274 = vld [vmem:[%s239 + $0x88] sm:$0xf]
      %v275 = vld [vmem:[%s239 + $0x8c] sm:$0xf]
      %v276 = vld [vmem:[%s239 + $0x90] sm:$0xf]
      %v277 = vld [vmem:[%s239 + $0x94] sm:$0xf]
      %v278 = vld [vmem:[%s239 + $0x98] sm:$0xf]
      %v279 = vld [vmem:[%s239 + $0x9c] sm:$0xf]
      %v280 = vld [vmem:[%s239 + $0xa0] sm:$0xf]
      %v281 = vld [vmem:[%s239 + $0xa4] sm:$0xf]
      %v282 = vld [vmem:[%s239 + $0xa8] sm:$0xf]
      %v283 = vld [vmem:[%s239 + $0xac] sm:$0xf]
      %v284 = vld [vmem:[%s239 + $0xb0] sm:$0xf]
      %v285 = vld [vmem:[%s239 + $0xb4] sm:$0xf]
      %v286 = vld [vmem:[%s239 + $0xb8] sm:$0xf]
      %v287 = vld [vmem:[%s239 + $0xbc] sm:$0xf]
      %v304 = vunpack.c.l.b16 %v175
      %v305 = vunpack.c.h.b16 %v175
      %v306 = vunpack.c.l.b16 %v176
      %v307 = vunpack.c.l.b16 %v177
      %v308 = vunpack.c.h.b16 %v177
      %v309 = vunpack.c.l.b16 %v178
      %v310 = vunpack.c.l.b16 %v179
      %v311 = vunpack.c.h.b16 %v179
      %v312 = vunpack.c.l.b16 %v180
      %v313 = vunpack.c.l.b16 %v181
      %v314 = vunpack.c.h.b16 %v181
      %v315 = vunpack.c.l.b16 %v182
      %v316 = vunpack.c.l.b16 %v183
      %v317 = vunpack.c.h.b16 %v183
      %v318 = vunpack.c.l.b16 %v184
      %v319 = vunpack.c.l.b16 %v185
      %v320 = vunpack.c.h.b16 %v185
      %v321 = vunpack.c.l.b16 %v186
      %v322 = vunpack.c.l.b16 %v235
      %v323 = vunpack.c.h.b16 %v235
      %v324 = vunpack.c.l.b16 %v236
      %v325 = vunpack.c.l.b16 %v237
      %v326 = vunpack.c.h.b16 %v237
      %v327 = vunpack.c.l.b16 %v238
      %v328 = vpack.c.b16 %v307, %v304
      %v329 = vpack.c.b16 %v308, %v305
      %v330 = vpack.c.b16 %v309, %v306
      %v331 = vpack.c.b16 %v313, %v310
      %v332 = vpack.c.b16 %v314, %v311
      %v333 = vpack.c.b16 %v315, %v312
      %v334 = vpack.c.b16 %v319, %v316
      %v335 = vpack.c.b16 %v320, %v317
      %v336 = vpack.c.b16 %v321, %v318
      %v337 = vpack.c.b16 %v325, %v322
      %v338 = vpack.c.b16 %v326, %v323
      %v339 = vpack.c.b16 %v327, %v324
      %v400 = vunpack.c.l.b16 %v240
      %v401 = vunpack.c.l.b16 %v241
      %v402 = vunpack.c.l.b16 %v242
      %v403 = vunpack.c.l.b16 %v243
      %v404 = vunpack.c.l.b16 %v244
      %v405 = vunpack.c.l.b16 %v245
      %v406 = vunpack.c.l.b16 %v246
      %v407 = vunpack.c.l.b16 %v247
      %v408 = vunpack.c.l.b16 %v248
      %v409 = vunpack.c.l.b16 %v249
      %v410 = vunpack.c.l.b16 %v250
      %v411 = vunpack.c.l.b16 %v251
      %v412 = vunpack.c.l.b16 %v252
      %v413 = vunpack.c.l.b16 %v253
      %v414 = vunpack.c.l.b16 %v254
      %v415 = vunpack.c.l.b16 %v255
      %v416 = vunpack.c.l.b16 %v256
      %v417 = vunpack.c.l.b16 %v257
      %v418 = vunpack.c.l.b16 %v258
      %v419 = vunpack.c.l.b16 %v259
      %v420 = vunpack.c.l.b16 %v260
      %v421 = vunpack.c.l.b16 %v261
      %v422 = vunpack.c.l.b16 %v262
      %v423 = vunpack.c.l.b16 %v263
      %v424 = vunpack.c.l.b16 %v264
      %v425 = vunpack.c.l.b16 %v265
      %v426 = vunpack.c.l.b16 %v266
      %v427 = vunpack.c.l.b16 %v267
      %v428 = vunpack.c.l.b16 %v268
      %v429 = vunpack.c.l.b16 %v269
      %v430 = vunpack.c.l.b16 %v270
      %v431 = vunpack.c.l.b16 %v271
      %v432 = vunpack.c.l.b16 %v272
      %v433 = vunpack.c.l.b16 %v273
      %v434 = vunpack.c.l.b16 %v274
      %v435 = vunpack.c.l.b16 %v275
      %v436 = vunpack.c.l.b16 %v276
      %v437 = vunpack.c.l.b16 %v277
      %v438 = vunpack.c.l.b16 %v278
      %v439 = vunpack.c.l.b16 %v279
      %v440 = vunpack.c.l.b16 %v280
      %v441 = vunpack.c.l.b16 %v281
      %v442 = vunpack.c.l.b16 %v282
      %v443 = vunpack.c.l.b16 %v283
      %v444 = vunpack.c.l.b16 %v284
      %v445 = vunpack.c.l.b16 %v285
      %v446 = vunpack.c.l.b16 %v286
      %v447 = vunpack.c.l.b16 %v287
      %v448 = vpack.c.b16 %v401, %v400
      %v449 = vpack.c.b16 %v403, %v402
      %v450 = vpack.c.b16 %v405, %v404
      %v451 = vpack.c.b16 %v407, %v406
      %v452 = vpack.c.b16 %v409, %v408
      %v453 = vpack.c.b16 %v411, %v410
      %v454 = vpack.c.b16 %v413, %v412
      %v455 = vpack.c.b16 %v415, %v414
      %v456 = vpack.c.b16 %v417, %v416
      %v457 = vpack.c.b16 %v419, %v418
      %v458 = vpack.c.b16 %v421, %v420
      %v459 = vpack.c.b16 %v423, %v422
      %v460 = vpack.c.b16 %v425, %v424
      %v461 = vpack.c.b16 %v427, %v426
      %v462 = vpack.c.b16 %v429, %v428
      %v463 = vpack.c.b16 %v431, %v430
      %v464 = vpack.c.b16 %v433, %v432
      %v465 = vpack.c.b16 %v435, %v434
      %v466 = vpack.c.b16 %v437, %v436
      %v467 = vpack.c.b16 %v439, %v438
      %v468 = vpack.c.b16 %v441, %v440
      %v469 = vpack.c.b16 %v443, %v442
      %v470 = vpack.c.b16 %v445, %v444
      %v471 = vpack.c.b16 %v447, %v446
      %496 = vmatpush.bf16.msra.mxu0 %v455
      %497 = vmatpush.bf16.msra.mxu0 %v454
      %498 = vmatpush.bf16.msra.mxu0 %v453
      %499 = vmatpush.bf16.msra.mxu0 %v452
      %500 = vmatpush.bf16.msra.mxu0 %v451
      %501 = vmatpush.bf16.msra.mxu0 %v450
      %502 = vmatpush.bf16.msra.mxu0 %v449
      %503 = vmatpush.bf16.msra.mxu0 %v448
      %504 = vmatmul.bf16.gmra.mxu0 %v328
      %v505 = vpop.f32.mrf.mxu0
      %v506 = vadd.f32 0.0, %v505
      %v507 = vpop.f32.mrf.mxu0
      %v508 = vadd.f32 0.0, %v507
      %509 = vmatmul.bf16.gmra.mxu0 %v331
      %v510 = vpop.f32.mrf.mxu0
      %v511 = vadd.f32 0.0, %v510
      %v512 = vpop.f32.mrf.mxu0
      %v513 = vadd.f32 0.0, %v512
      %514 = vmatmul.bf16.gmra.mxu0 %v334
      %v515 = vpop.f32.mrf.mxu0
      %v516 = vadd.f32 0.0, %v515
      %v517 = vpop.f32.mrf.mxu0
      %v518 = vadd.f32 0.0, %v517
      %519 = vmatmul.bf16.gmra.mxu0 %v337
      %v520 = vpop.f32.mrf.mxu0
      %v521 = vadd.f32 0.0, %v520
      %v522 = vpop.f32.mrf.mxu0
      %v523 = vadd.f32 0.0, %v522
      %524 = vdwg.mxu0
      %525 = vmatpush.bf16.msra.mxu0 %v463
      %526 = vmatpush.bf16.msra.mxu0 %v462
      %527 = vmatpush.bf16.msra.mxu0 %v461
      %528 = vmatpush.bf16.msra.mxu0 %v460
      %529 = vmatpush.bf16.msra.mxu0 %v459
      %530 = vmatpush.bf16.msra.mxu0 %v458
      %531 = vmatpush.bf16.msra.mxu0 %v457
      %532 = vmatpush.bf16.msra.mxu0 %v456
      %533 = vmatmul.bf16.gmra.mxu0 %v329
      %v534 = vpop.f32.mrf.mxu0
      %v535 = vadd.f32 %v506, %v534
      %v536 = vpop.f32.mrf.mxu0
      %v537 = vadd.f32 %v508, %v536
      %538 = vmatmul.bf16.gmra.mxu0 %v332
      %v539 = vpop.f32.mrf.mxu0
      %v540 = vadd.f32 %v511, %v539
      %v541 = vpop.f32.mrf.mxu0
      %v542 = vadd.f32 %v513, %v541
      %543 = vmatmul.bf16.gmra.mxu0 %v335
      %v544 = vpop.f32.mrf.mxu0
      %v545 = vadd.f32 %v516, %v544
      %v546 = vpop.f32.mrf.mxu0
      %v547 = vadd.f32 %v518, %v546
      %548 = vmatmul.bf16.gmra.mxu0 %v338
      %v549 = vpop.f32.mrf.mxu0
      %v550 = vadd.f32 %v521, %v549
      %v551 = vpop.f32.mrf.mxu0
      %v552 = vadd.f32 %v523, %v551
      %553 = vdwg.mxu0
      %554 = vmatpush.bf16.msra.mxu0 %v471
      %555 = vmatpush.bf16.msra.mxu0 %v470
      %556 = vmatpush.bf16.msra.mxu0 %v469
      %557 = vmatpush.bf16.msra.mxu0 %v468
      %558 = vmatpush.bf16.msra.mxu0 %v467
      %559 = vmatpush.bf16.msra.mxu0 %v466
      %560 = vmatpush.bf16.msra.mxu0 %v465
      %561 = vmatpush.bf16.msra.mxu0 %v464
      %562 = vmatmul.bf16.gmra.mxu0 %v330
      %v563 = vpop.f32.mrf.mxu0
      %v564 = vadd.f32 %v535, %v563
      %v565 = vpop.f32.mrf.mxu0
      %v566 = vadd.f32 %v537, %v565
      %567 = vmatmul.bf16.gmra.mxu0 %v333
      %v568 = vpop.f32.mrf.mxu0
      %v569 = vadd.f32 %v540, %v568
      %v570 = vpop.f32.mrf.mxu0
      %v571 = vadd.f32 %v542, %v570
      %572 = vmatmul.bf16.gmra.mxu0 %v336
      %v573 = vpop.f32.mrf.mxu0
      %v574 = vadd.f32 %v545, %v573
      %v575 = vpop.f32.mrf.mxu0
      %v576 = vadd.f32 %v547, %v575
      %577 = vmatmul.bf16.gmra.mxu0 %v339
      %v578 = vpop.f32.mrf.mxu0
      %v579 = vadd.f32 %v550, %v578
      %v580 = vpop.f32.mrf.mxu0
      %v581 = vadd.f32 %v552, %v580
      %582 = vdwg.mxu0
      %v587 = vunpack.c.l.b16 %v171
      %v588 = vunpack.c.h.b16 %v171
      %v589 = vunpack.c.l.b16 %v172
      %v590 = vunpack.c.l.b16 %v173
      %v591 = vunpack.c.h.b16 %v173
      %v592 = vunpack.c.l.b16 %v174
      %v593 = vpack.c.b16 %v590, %v587
      %v594 = vpack.c.b16 %v591, %v588
      %v595 = vpack.c.b16 %v592, %v589
      %v647 = vunpack.c.l.b16 %v187
      %v648 = vunpack.c.l.b16 %v188
      %v649 = vunpack.c.l.b16 %v189
      %v650 = vunpack.c.l.b16 %v190
      %v651 = vunpack.c.l.b16 %v191
      %v652 = vunpack.c.l.b16 %v192
      %v653 = vunpack.c.l.b16 %v193
      %v654 = vunpack.c.l.b16 %v194
      %v655 = vunpack.c.l.b16 %v195
      %v656 = vunpack.c.l.b16 %v196
      %v657 = vunpack.c.l.b16 %v197
      %v658 = vunpack.c.l.b16 %v198
      %v659 = vunpack.c.l.b16 %v199
      %v660 = vunpack.c.l.b16 %v200
      %v661 = vunpack.c.l.b16 %v201
      %v662 = vunpack.c.l.b16 %v202
      %v663 = vunpack.c.l.b16 %v203
      %v664 = vunpack.c.l.b16 %v204
      %v665 = vunpack.c.l.b16 %v205
      %v666 = vunpack.c.l.b16 %v206
      %v667 = vunpack.c.l.b16 %v207
      %v668 = vunpack.c.l.b16 %v208
      %v669 = vunpack.c.l.b16 %v209
      %v670 = vunpack.c.l.b16 %v210
      %v671 = vunpack.c.l.b16 %v211
      %v672 = vunpack.c.l.b16 %v212
      %v673 = vunpack.c.l.b16 %v213
      %v674 = vunpack.c.l.b16 %v214
      %v675 = vunpack.c.l.b16 %v215
      %v676 = vunpack.c.l.b16 %v216
      %v677 = vunpack.c.l.b16 %v217
      %v678 = vunpack.c.l.b16 %v218
      %v679 = vunpack.c.l.b16 %v219
      %v680 = vunpack.c.l.b16 %v220
      %v681 = vunpack.c.l.b16 %v221
      %v682 = vunpack.c.l.b16 %v222
      %v683 = vunpack.c.l.b16 %v223
      %v684 = vunpack.c.l.b16 %v224
      %v685 = vunpack.c.l.b16 %v225
      %v686 = vunpack.c.l.b16 %v226
      %v687 = vunpack.c.l.b16 %v227
      %v688 = vunpack.c.l.b16 %v228
      %v689 = vunpack.c.l.b16 %v229
      %v690 = vunpack.c.l.b16 %v230
      %v691 = vunpack.c.l.b16 %v231
      %v692 = vunpack.c.l.b16 %v232
      %v693 = vunpack.c.l.b16 %v233
      %v694 = vunpack.c.l.b16 %v234
      %v695 = vpack.c.b16 %v648, %v647
      %v696 = vpack.c.b16 %v650, %v649
      %v697 = vpack.c.b16 %v652, %v651
      %v698 = vpack.c.b16 %v654, %v653
      %v699 = vpack.c.b16 %v656, %v655
      %v700 = vpack.c.b16 %v658, %v657
      %v701 = vpack.c.b16 %v660, %v659
      %v702 = vpack.c.b16 %v662, %v661
      %v703 = vpack.c.b16 %v664, %v663
      %v704 = vpack.c.b16 %v666, %v665
      %v705 = vpack.c.b16 %v668, %v667
      %v706 = vpack.c.b16 %v670, %v669
      %v707 = vpack.c.b16 %v672, %v671
      %v708 = vpack.c.b16 %v674, %v673
      %v709 = vpack.c.b16 %v676, %v675
      %v710 = vpack.c.b16 %v678, %v677
      %v711 = vpack.c.b16 %v680, %v679
      %v712 = vpack.c.b16 %v682, %v681
      %v713 = vpack.c.b16 %v684, %v683
      %v714 = vpack.c.b16 %v686, %v685
      %v715 = vpack.c.b16 %v688, %v687
      %v716 = vpack.c.b16 %v690, %v689
      %v717 = vpack.c.b16 %v692, %v691
      %v718 = vpack.c.b16 %v694, %v693
      %743 = vmatpush.bf16.msra.mxu0 %v702
      %744 = vmatpush.bf16.msra.mxu0 %v701
      %745 = vmatpush.bf16.msra.mxu0 %v700
      %746 = vmatpush.bf16.msra.mxu0 %v699
      %747 = vmatpush.bf16.msra.mxu0 %v698
      %748 = vmatpush.bf16.msra.mxu0 %v697
      %749 = vmatpush.bf16.msra.mxu0 %v696
      %750 = vmatpush.bf16.msra.mxu0 %v695
      %751 = vmatmul.bf16.gmra.mxu0 %v593
      %v752 = vpop.f32.mrf.mxu0
      %v753 = vadd.f32 %v564, %v752
      %v754 = vpop.f32.mrf.mxu0
      %v755 = vadd.f32 %v566, %v754
      %756 = vmatmul.bf16.gmra.mxu0 %v328
      %v757 = vpop.f32.mrf.mxu0
      %v758 = vadd.f32 %v569, %v757
      %v759 = vpop.f32.mrf.mxu0
      %v760 = vadd.f32 %v571, %v759
      %761 = vmatmul.bf16.gmra.mxu0 %v331
      %v762 = vpop.f32.mrf.mxu0
      %v763 = vadd.f32 %v574, %v762
      %v764 = vpop.f32.mrf.mxu0
      %v765 = vadd.f32 %v576, %v764
      %766 = vmatmul.bf16.gmra.mxu0 %v334
      %v767 = vpop.f32.mrf.mxu0
      %v768 = vadd.f32 %v579, %v767
      %v769 = vpop.f32.mrf.mxu0
      %v770 = vadd.f32 %v581, %v769
      %771 = vdwg.mxu0
      %772 = vmatpush.bf16.msra.mxu0 %v710
      %773 = vmatpush.bf16.msra.mxu0 %v709
      %774 = vmatpush.bf16.msra.mxu0 %v708
      %775 = vmatpush.bf16.msra.mxu0 %v707
      %776 = vmatpush.bf16.msra.mxu0 %v706
      %777 = vmatpush.bf16.msra.mxu0 %v705
      %778 = vmatpush.bf16.msra.mxu0 %v704
      %779 = vmatpush.bf16.msra.mxu0 %v703
      %780 = vmatmul.bf16.gmra.mxu0 %v594
      %v781 = vpop.f32.mrf.mxu0
      %v782 = vadd.f32 %v753, %v781
      %v783 = vpop.f32.mrf.mxu0
      %v784 = vadd.f32 %v755, %v783
      %785 = vmatmul.bf16.gmra.mxu0 %v329
      %v786 = vpop.f32.mrf.mxu0
      %v787 = vadd.f32 %v758, %v786
      %v788 = vpop.f32.mrf.mxu0
      %v789 = vadd.f32 %v760, %v788
      %790 = vmatmul.bf16.gmra.mxu0 %v332
      %v791 = vpop.f32.mrf.mxu0
      %v792 = vadd.f32 %v763, %v791
      %v793 = vpop.f32.mrf.mxu0
      %v794 = vadd.f32 %v765, %v793
      %795 = vmatmul.bf16.gmra.mxu0 %v335
      %v796 = vpop.f32.mrf.mxu0
      %v797 = vadd.f32 %v768, %v796
      %v798 = vpop.f32.mrf.mxu0
      %v799 = vadd.f32 %v770, %v798
      %800 = vdwg.mxu0
      %801 = vmatpush.bf16.msra.mxu0 %v718
      %802 = vmatpush.bf16.msra.mxu0 %v717
      %803 = vmatpush.bf16.msra.mxu0 %v716
      %804 = vmatpush.bf16.msra.mxu0 %v715
      %805 = vmatpush.bf16.msra.mxu0 %v714
      %806 = vmatpush.bf16.msra.mxu0 %v713
      %807 = vmatpush.bf16.msra.mxu0 %v712
      %808 = vmatpush.bf16.msra.mxu0 %v711
      %809 = vmatmul.bf16.gmra.mxu0 %v595
      %v810 = vpop.f32.mrf.mxu0
      %v811 = vadd.f32 %v782, %v810
      %v812 = vpop.f32.mrf.mxu0
      %v813 = vadd.f32 %v784, %v812
      %814 = vmatmul.bf16.gmra.mxu0 %v330
      %v815 = vpop.f32.mrf.mxu0
      %v816 = vadd.f32 %v787, %v815
      %v817 = vpop.f32.mrf.mxu0
      %v818 = vadd.f32 %v789, %v817
      %819 = vmatmul.bf16.gmra.mxu0 %v333
      %v820 = vpop.f32.mrf.mxu0
      %v821 = vadd.f32 %v792, %v820
      %v822 = vpop.f32.mrf.mxu0
      %v823 = vadd.f32 %v794, %v822
      %824 = vmatmul.bf16.gmra.mxu0 %v336
      %v825 = vpop.f32.mrf.mxu0
      %v826 = vadd.f32 %v797, %v825
      %v827 = vpop.f32.mrf.mxu0
      %v828 = vadd.f32 %v799, %v827
      %829 = vdwg.mxu0
      %v830 = vld [vmem:[%s165 + $0x30] sm:$0xff]
      %v831 = vld [vmem:[%s165 + $0x38] sm:$0xf]
      %v832 = vld [vmem:[%s165 + $0x3c] sm:$0xff]
      %v833 = vld [vmem:[%s165 + $0x44] sm:$0xf]
      %v834 = vld [vmem:[%s165 + $0x48] sm:$0xff]
      %v835 = vld [vmem:[%s165 + $0x50] sm:$0xf]
      %v836 = vld [vmem:[%s165 + $0x54] sm:$0xff]
      %v837 = vld [vmem:[%s165 + $0x5c] sm:$0xf]
      %v838 = vld [vmem:[%s165 + $0x60] sm:$0xff]
      %v839 = vld [vmem:[%s165 + $0x68] sm:$0xf]
      %v840 = vld [vmem:[%s165 + $0x6c] sm:$0xff]
      %v841 = vld [vmem:[%s165 + $0x74] sm:$0xf]
      %v842 = vld [vmem:[%s165 + $0x78] sm:$0xff]
      %v843 = vld [vmem:[%s165 + $0x80] sm:$0xf]
      %v844 = vld [vmem:[%s165 + $0x84] sm:$0xff]
      %v845 = vld [vmem:[%s165 + $0x8c] sm:$0xf]
      %s846 = scalar_lea.vmem %s1, 384
      %v847 = vld [vmem:[%s846] sm:$0xf]
      %v848 = vld [vmem:[%s846 + $0x4] sm:$0xf]
      %v849 = vld [vmem:[%s846 + $0x8] sm:$0xf]
      %v850 = vld [vmem:[%s846 + $0xc] sm:$0xf]
      %v851 = vld [vmem:[%s846 + $0x10] sm:$0xf]
      %v852 = vld [vmem:[%s846 + $0x14] sm:$0xf]
      %v853 = vld [vmem:[%s846 + $0x18] sm:$0xf]
      %v854 = vld [vmem:[%s846 + $0x1c] sm:$0xf]
      %v855 = vld [vmem:[%s846 + $0x20] sm:$0xf]
      %v856 = vld [vmem:[%s846 + $0x24] sm:$0xf]
      %v857 = vld [vmem:[%s846 + $0x28] sm:$0xf]
      %v858 = vld [vmem:[%s846 + $0x2c] sm:$0xf]
      %v859 = vld [vmem:[%s846 + $0x30] sm:$0xf]
      %v860 = vld [vmem:[%s846 + $0x34] sm:$0xf]
      %v861 = vld [vmem:[%s846 + $0x38] sm:$0xf]
      %v862 = vld [vmem:[%s846 + $0x3c] sm:$0xf]
      %v863 = vld [vmem:[%s846 + $0x40] sm:$0xf]
      %v864 = vld [vmem:[%s846 + $0x44] sm:$0xf]
      %v865 = vld [vmem:[%s846 + $0x48] sm:$0xf]
      %v866 = vld [vmem:[%s846 + $0x4c] sm:$0xf]
      %v867 = vld [vmem:[%s846 + $0x50] sm:$0xf]
      %v868 = vld [vmem:[%s846 + $0x54] sm:$0xf]
      %v869 = vld [vmem:[%s846 + $0x58] sm:$0xf]
      %v870 = vld [vmem:[%s846 + $0x5c] sm:$0xf]
      %v871 = vld [vmem:[%s846 + $0x60] sm:$0xf]
      %v872 = vld [vmem:[%s846 + $0x64] sm:$0xf]
      %v873 = vld [vmem:[%s846 + $0x68] sm:$0xf]
      %v874 = vld [vmem:[%s846 + $0x6c] sm:$0xf]
      %v875 = vld [vmem:[%s846 + $0x70] sm:$0xf]
      %v876 = vld [vmem:[%s846 + $0x74] sm:$0xf]
      %v877 = vld [vmem:[%s846 + $0x78] sm:$0xf]
      %v878 = vld [vmem:[%s846 + $0x7c] sm:$0xf]
      %v879 = vld [vmem:[%s846 + $0x80] sm:$0xf]
      %v880 = vld [vmem:[%s846 + $0x84] sm:$0xf]
      %v881 = vld [vmem:[%s846 + $0x88] sm:$0xf]
      %v882 = vld [vmem:[%s846 + $0x8c] sm:$0xf]
      %v883 = vld [vmem:[%s846 + $0x90] sm:$0xf]
      %v884 = vld [vmem:[%s846 + $0x94] sm:$0xf]
      %v885 = vld [vmem:[%s846 + $0x98] sm:$0xf]
      %v886 = vld [vmem:[%s846 + $0x9c] sm:$0xf]
      %v887 = vld [vmem:[%s846 + $0xa0] sm:$0xf]
      %v888 = vld [vmem:[%s846 + $0xa4] sm:$0xf]
      %v889 = vld [vmem:[%s846 + $0xa8] sm:$0xf]
      %v890 = vld [vmem:[%s846 + $0xac] sm:$0xf]
      %v891 = vld [vmem:[%s846 + $0xb0] sm:$0xf]
      %v892 = vld [vmem:[%s846 + $0xb4] sm:$0xf]
      %v893 = vld [vmem:[%s846 + $0xb8] sm:$0xf]
      %v894 = vld [vmem:[%s846 + $0xbc] sm:$0xf]
      %v911 = vunpack.c.l.b16 %v830
      %v912 = vunpack.c.h.b16 %v830
      %v913 = vunpack.c.l.b16 %v831
      %v914 = vunpack.c.l.b16 %v832
      %v915 = vunpack.c.h.b16 %v832
      %v916 = vunpack.c.l.b16 %v833
      %v917 = vunpack.c.l.b16 %v834
      %v918 = vunpack.c.h.b16 %v834
      %v919 = vunpack.c.l.b16 %v835
      %v920 = vunpack.c.l.b16 %v836
      %v921 = vunpack.c.h.b16 %v836
      %v922 = vunpack.c.l.b16 %v837
      %v923 = vunpack.c.l.b16 %v838
      %v924 = vunpack.c.h.b16 %v838
      %v925 = vunpack.c.l.b16 %v839
      %v926 = vunpack.c.l.b16 %v840
      %v927 = vunpack.c.h.b16 %v840
      %v928 = vunpack.c.l.b16 %v841
      %v929 = vunpack.c.l.b16 %v842
      %v930 = vunpack.c.h.b16 %v842
      %v931 = vunpack.c.l.b16 %v843
      %v932 = vunpack.c.l.b16 %v844
      %v933 = vunpack.c.h.b16 %v844
      %v934 = vunpack.c.l.b16 %v845
      %v935 = vpack.c.b16 %v914, %v911
      %v936 = vpack.c.b16 %v915, %v912
      %v937 = vpack.c.b16 %v916, %v913
      %v938 = vpack.c.b16 %v920, %v917
      %v939 = vpack.c.b16 %v921, %v918
      %v940 = vpack.c.b16 %v922, %v919
      %v941 = vpack.c.b16 %v926, %v923
      %v942 = vpack.c.b16 %v927, %v924
      %v943 = vpack.c.b16 %v928, %v925
      %v944 = vpack.c.b16 %v932, %v929
      %v945 = vpack.c.b16 %v933, %v930
      %v946 = vpack.c.b16 %v934, %v931
      %v1007 = vunpack.c.l.b16 %v847
      %v1008 = vunpack.c.l.b16 %v848
      %v1009 = vunpack.c.l.b16 %v849
      %v1010 = vunpack.c.l.b16 %v850
      %v1011 = vunpack.c.l.b16 %v851
      %v1012 = vunpack.c.l.b16 %v852
      %v1013 = vunpack.c.l.b16 %v853
      %v1014 = vunpack.c.l.b16 %v854
      %v1015 = vunpack.c.l.b16 %v855
      %v1016 = vunpack.c.l.b16 %v856
      %v1017 = vunpack.c.l.b16 %v857
      %v1018 = vunpack.c.l.b16 %v858
      %v1019 = vunpack.c.l.b16 %v859
      %v1020 = vunpack.c.l.b16 %v860
      %v1021 = vunpack.c.l.b16 %v861
      %v1022 = vunpack.c.l.b16 %v862
      %v1023 = vunpack.c.l.b16 %v863
      %v1024 = vunpack.c.l.b16 %v864
      %v1025 = vunpack.c.l.b16 %v865
      %v1026 = vunpack.c.l.b16 %v866
      %v1027 = vunpack.c.l.b16 %v867
      %v1028 = vunpack.c.l.b16 %v868
      %v1029 = vunpack.c.l.b16 %v869
      %v1030 = vunpack.c.l.b16 %v870
      %v1031 = vunpack.c.l.b16 %v871
      %v1032 = vunpack.c.l.b16 %v872
      %v1033 = vunpack.c.l.b16 %v873
      %v1034 = vunpack.c.l.b16 %v874
      %v1035 = vunpack.c.l.b16 %v875
      %v1036 = vunpack.c.l.b16 %v876
      %v1037 = vunpack.c.l.b16 %v877
      %v1038 = vunpack.c.l.b16 %v878
      %v1039 = vunpack.c.l.b16 %v879
      %v1040 = vunpack.c.l.b16 %v880
      %v1041 = vunpack.c.l.b16 %v881
      %v1042 = vunpack.c.l.b16 %v882
      %v1043 = vunpack.c.l.b16 %v883
      %v1044 = vunpack.c.l.b16 %v884
      %v1045 = vunpack.c.l.b16 %v885
      %v1046 = vunpack.c.l.b16 %v886
      %v1047 = vunpack.c.l.b16 %v887
      %v1048 = vunpack.c.l.b16 %v888
      %v1049 = vunpack.c.l.b16 %v889
      %v1050 = vunpack.c.l.b16 %v890
      %v1051 = vunpack.c.l.b16 %v891
      %v1052 = vunpack.c.l.b16 %v892
      %v1053 = vunpack.c.l.b16 %v893
      %v1054 = vunpack.c.l.b16 %v894
      %v1055 = vpack.c.b16 %v1008, %v1007
      %v1056 = vpack.c.b16 %v1010, %v1009
      %v1057 = vpack.c.b16 %v1012, %v1011
      %v1058 = vpack.c.b16 %v1014, %v1013
      %v1059 = vpack.c.b16 %v1016, %v1015
      %v1060 = vpack.c.b16 %v1018, %v1017
      %v1061 = vpack.c.b16 %v1020, %v1019
      %v1062 = vpack.c.b16 %v1022, %v1021
      %v1063 = vpack.c.b16 %v1024, %v1023
      %v1064 = vpack.c.b16 %v1026, %v1025
      %v1065 = vpack.c.b16 %v1028, %v1027
      %v1066 = vpack.c.b16 %v1030, %v1029
      %v1067 = vpack.c.b16 %v1032, %v1031
      %v1068 = vpack.c.b16 %v1034, %v1033
      %v1069 = vpack.c.b16 %v1036, %v1035
      %v1070 = vpack.c.b16 %v1038, %v1037
      %v1071 = vpack.c.b16 %v1040, %v1039
      %v1072 = vpack.c.b16 %v1042, %v1041
      %v1073 = vpack.c.b16 %v1044, %v1043
      %v1074 = vpack.c.b16 %v1046, %v1045
      %v1075 = vpack.c.b16 %v1048, %v1047
      %v1076 = vpack.c.b16 %v1050, %v1049
      %v1077 = vpack.c.b16 %v1052, %v1051
      %v1078 = vpack.c.b16 %v1054, %v1053
      %1103 = vmatpush.bf16.msra.mxu0 %v1062
      %1104 = vmatpush.bf16.msra.mxu0 %v1061
      %1105 = vmatpush.bf16.msra.mxu0 %v1060
      %1106 = vmatpush.bf16.msra.mxu0 %v1059
      %1107 = vmatpush.bf16.msra.mxu0 %v1058
      %1108 = vmatpush.bf16.msra.mxu0 %v1057
      %1109 = vmatpush.bf16.msra.mxu0 %v1056
      %1110 = vmatpush.bf16.msra.mxu0 %v1055
      %1111 = vmatmul.bf16.gmra.mxu0 %v935
      %v1112 = vpop.f32.mrf.mxu0
      %v1113 = vadd.f32 0.0, %v1112
      %v1114 = vpop.f32.mrf.mxu0
      %v1115 = vadd.f32 0.0, %v1114
      %1116 = vmatmul.bf16.gmra.mxu0 %v938
      %v1117 = vpop.f32.mrf.mxu0
      %v1118 = vadd.f32 0.0, %v1117
      %v1119 = vpop.f32.mrf.mxu0
      %v1120 = vadd.f32 0.0, %v1119
      %1121 = vmatmul.bf16.gmra.mxu0 %v941
      %v1122 = vpop.f32.mrf.mxu0
      %v1123 = vadd.f32 0.0, %v1122
      %v1124 = vpop.f32.mrf.mxu0
      %v1125 = vadd.f32 0.0, %v1124
      %1126 = vmatmul.bf16.gmra.mxu0 %v944
      %v1127 = vpop.f32.mrf.mxu0
      %v1128 = vadd.f32 0.0, %v1127
      %v1129 = vpop.f32.mrf.mxu0
      %v1130 = vadd.f32 0.0, %v1129
      %1131 = vdwg.mxu0
      %1132 = vmatpush.bf16.msra.mxu0 %v1070
      %1133 = vmatpush.bf16.msra.mxu0 %v1069
      %1134 = vmatpush.bf16.msra.mxu0 %v1068
      %1135 = vmatpush.bf16.msra.mxu0 %v1067
      %1136 = vmatpush.bf16.msra.mxu0 %v1066
      %1137 = vmatpush.bf16.msra.mxu0 %v1065
      %1138 = vmatpush.bf16.msra.mxu0 %v1064
      %1139 = vmatpush.bf16.msra.mxu0 %v1063
      %1140 = vmatmul.bf16.gmra.mxu0 %v936
      %v1141 = vpop.f32.mrf.mxu0
      %v1142 = vadd.f32 %v1113, %v1141
      %v1143 = vpop.f32.mrf.mxu0
      %v1144 = vadd.f32 %v1115, %v1143
      %1145 = vmatmul.bf16.gmra.mxu0 %v939
      %v1146 = vpop.f32.mrf.mxu0
      %v1147 = vadd.f32 %v1118, %v1146
      %v1148 = vpop.f32.mrf.mxu0
      %v1149 = vadd.f32 %v1120, %v1148
      %1150 = vmatmul.bf16.gmra.mxu0 %v942
      %v1151 = vpop.f32.mrf.mxu0
      %v1152 = vadd.f32 %v1123, %v1151
      %v1153 = vpop.f32.mrf.mxu0
      %v1154 = vadd.f32 %v1125, %v1153
      %1155 = vmatmul.bf16.gmra.mxu0 %v945
      %v1156 = vpop.f32.mrf.mxu0
      %v1157 = vadd.f32 %v1128, %v1156
      %v1158 = vpop.f32.mrf.mxu0
      %v1159 = vadd.f32 %v1130, %v1158
      %1160 = vdwg.mxu0
      %1161 = vmatpush.bf16.msra.mxu0 %v1078
      %1162 = vmatpush.bf16.msra.mxu0 %v1077
      %1163 = vmatpush.bf16.msra.mxu0 %v1076
      %1164 = vmatpush.bf16.msra.mxu0 %v1075
      %1165 = vmatpush.bf16.msra.mxu0 %v1074
      %1166 = vmatpush.bf16.msra.mxu0 %v1073
      %1167 = vmatpush.bf16.msra.mxu0 %v1072
      %1168 = vmatpush.bf16.msra.mxu0 %v1071
      %1169 = vmatmul.bf16.gmra.mxu0 %v937
      %v1170 = vpop.f32.mrf.mxu0
      %v1171 = vadd.f32 %v1142, %v1170
      %v1172 = vpop.f32.mrf.mxu0
      %v1173 = vadd.f32 %v1144, %v1172
      %1174 = vmatmul.bf16.gmra.mxu0 %v940
      %v1175 = vpop.f32.mrf.mxu0
      %v1176 = vadd.f32 %v1147, %v1175
      %v1177 = vpop.f32.mrf.mxu0
      %v1178 = vadd.f32 %v1149, %v1177
      %1179 = vmatmul.bf16.gmra.mxu0 %v943
      %v1180 = vpop.f32.mrf.mxu0
      %v1181 = vadd.f32 %v1152, %v1180
      %v1182 = vpop.f32.mrf.mxu0
      %v1183 = vadd.f32 %v1154, %v1182
      %1184 = vmatmul.bf16.gmra.mxu0 %v946
      %v1185 = vpop.f32.mrf.mxu0
      %v1186 = vadd.f32 %v1157, %v1185
      %v1187 = vpop.f32.mrf.mxu0
      %v1188 = vadd.f32 %v1159, %v1187
      %1189 = vdwg.mxu0
      %v1190 = vadd.f32 %v811, %v1171
      %v1191 = vadd.f32 %v813, %v1173
      %v1192 = vadd.f32 %v816, %v1176
      %v1193 = vadd.f32 %v818, %v1178
      %v1194 = vadd.f32 %v821, %v1181
      %v1195 = vadd.f32 %v823, %v1183
      %v1196 = vadd.f32 %v826, %v1186
      %v1197 = vadd.f32 %v828, %v1188
      %v1198 = vld [vmem:[%s2] sm:$0x1]
      %v1200 = vperm.slane %v1198, 0
      %v1202 = vadd.f32 %v1190, %v1200
      %v1203 = vadd.f32 %v1191, %v1200
      %v1204 = vadd.f32 %v1192, %v1200
      %v1205 = vadd.f32 %v1193, %v1200
      %v1206 = vadd.f32 %v1194, %v1200
      %v1207 = vadd.f32 %v1195, %v1200
      %v1208 = vadd.f32 %v1196, %v1200
      %v1209 = vadd.f32 %v1197, %v1200
      %v1210 = vpack.c.bf16 %v1202, %v1202
      %v1211 = vpack.c.bf16 %v1203, %v1203
      %v1212 = vpack.c.bf16 %v1204, %v1204
      %v1213 = vpack.c.bf16 %v1205, %v1205
      %v1214 = vpack.c.bf16 %v1206, %v1206
      %v1215 = vpack.c.bf16 %v1207, %v1207
      %v1216 = vpack.c.bf16 %v1208, %v1208
      %v1217 = vpack.c.bf16 %v1209, %v1209
      %1218 = vst [vmem:[%s170] sm:$0xf] %v1210
      %1219 = vst [vmem:[%s170 + $0x4] sm:$0xf] %v1211
      %1220 = vst [vmem:[%s170 + $0x8] sm:$0xf] %v1212
      %1221 = vst [vmem:[%s170 + $0xc] sm:$0xf] %v1213
      %1222 = vst [vmem:[%s170 + $0x10] sm:$0xf] %v1214
      %1223 = vst [vmem:[%s170 + $0x14] sm:$0xf] %v1215
      %1224 = vst [vmem:[%s170 + $0x18] sm:$0xf] %v1216
      %1225 = vst [vmem:[%s170 + $0x1c] sm:$0xf] %v1217
      %p1226 = scmp.lt.s32.totalorder %s14, 1
      %s1227 = scalar_select %p1226, %s14, 1
      %s1228 = smul.addr %s1227, 8
      %s1229 = smul.addr %s1228, 4
      %s1230 = scalar_lea.vmem %s3, %s1229
      // Predicated region
      $region33: #{detector_backbone_with_fpn_forward.15} parent=31 // pred_check
        %p1231 = pneg %p100
      $region34: #{detector_backbone_with_fpn_forward.15} parent=31 // pred_check_branch
        %1233 = sbr.rel (%p1231) target = $region36
      $region35: #{detector_backbone_with_fpn_forward.15} parent=31 // pred_region
        _
      $region36: #{detector_backbone_with_fpn_forward.15} parent=31 // pred_fallthru
        _
    $region32: #{detector_backbone_with_fpn_forward.15} parent=5 // pred_fallthru
      _
    %p1234 = scmp.le.s32.totalorder 2, %s9
    // Predicated region
    $region37: #{detector_backbone_with_fpn_forward.15} parent=5 // pred_check
      %p1235 = pneg %p1234
    $region38: #{detector_backbone_with_fpn_forward.15} parent=5 // pred_check_branch
      %1237 = sbr.rel (%p1235) target = $region40
    $region39: #{detector_backbone_with_fpn_forward.15} parent=5 // pred_region
      %s1238 = ssub.s32 %s9, 2
      // Predicated region
      $region41: #{detector_backbone_with_fpn_forward.15} parent=39 // pred_check
        %p1239 = pneg %p106
      $region42: #{detector_backbone_with_fpn_forward.15} parent=39 // pred_check_branch
        %1241 = sbr.rel (%p1239) target = $region44
      $region43: #{detector_backbone_with_fpn_forward.15} parent=39 // pred_region
        %p1242 = scmp.lt.s32.totalorder %s15, 1
        %s1243 = scalar_select %p1242, %s15, 1
        %s1244 = smul.addr %s1243, 8
        %s1245 = smul.addr %s1244, 4
        %s1246 = scalar_lea.vmem %s3, %s1245
      $region44: #{detector_backbone_with_fpn_forward.15} parent=39 // pred_fallthru
        _
    $region40: #{detector_backbone_with_fpn_forward.15} parent=5 // pred_fallthru
      _
  $region6: #{detector_backbone_with_fpn_forward.15} parent=0 // loop_footer
    %s13 = sadd.s32 1, %s9
  $region7: #{detector_backbone_with_fpn_forward.15} parent=0 // loop_footer_branch
    %8 = sbr.rel target = $region3
  $region8: #{detector_backbone_with_fpn_forward.15} parent=0 // loop_exit
    _

// kernel: detector_backbone_with_fpn_forward.17
$region0: #{detector_backbone_with_fpn_forward.17}
  #allocation0 [shape = 'u32[]', space=smem, size = 0x4, offset = 0x4, fixed_abs, tag = 'smem constant byte address 0x4 - core index']
  #allocation1 [shape = 'u32[72,128]{1,0:T(1,128)}', space=vmem, size = 0x9000, scoped, tag = 'internal scratch']
  %s0 = inlined_call_operand.vmem [shape: bf16[2,160,384], index: 0, kind: input, shape index: {}]
  %s1 = inlined_call_operand.vmem [shape: bf16[3,384,128], index: 1, kind: input, shape index: {}]
  %s2 = inlined_call_operand.vmem [shape: f32[1,128], index: 2, kind: input, shape index: {}]
  %s3 = inlined_call_operand.vmem [shape: bf16[2,128,128], index: 3, kind: output, shape index: {}]
  %s4 = sld [smem:[#allocation0]]
  $region45: #{detector_backbone_with_fpn_forward.17} parent=0
    _
  %s6 = ssub.s32 1, %s4
  %s7 = scalar_select 0, %s6, %s4
  loop: start=0, step=1, limit=4
  $region2: #{detector_backbone_with_fpn_forward.17} parent=0 // loop_pre_header
    _
  $region3: #{detector_backbone_with_fpn_forward.17} parent=0 // loop_header
    %s9 = sphi 0, %s13
    %p10 = scmp.ge.s32.totalorder %s9, 4
    %s19 = sphi 0, %s21
    %s22 = sphi 0, %s19
    %s23 = sphi 0, %s22
    %s39 = sphi 0, %s23
    %s43 = sphi 0, %s43
    %s45 = sphi 0, %s43
    %s46 = sphi 0, %s45
    %s60 = sphi 0, %s46
    %s64 = sphi 0, %s64
    %s66 = sphi 0, %s64
    %s67 = sphi 0, %s66
    %s81 = sphi 0, %s67
    %s87 = sphi 0, %s89
    %s90 = sphi 0, %s87
    %s91 = sphi 0, %s90
    %s107 = sphi 0, %s91
  $region4: #{detector_backbone_with_fpn_forward.17} parent=0 // loop_header_branch
    %12 = sbr.rel (%p10) target = $region8
  $region5: #{detector_backbone_with_fpn_forward.17} parent=0 // loop_body
    %s14 = ssub.s32 %s9, 1
    %s15 = ssub.s32 %s9, 2
    %s16 = sadd.s32 %s9, 1
    %s17 = ssub.s32 %s9, %s16
    %p18 = scmp.eq.s32.totalorder %s17, 0
    %s20 = sadd.s32 %s19, 1
    %s21 = scalar_select %p18, %s19, %s20
    %p24 = pneg %p18
    %p25 = scmp.eq.s32.totalorder %s9, 1
    %p26 = por %p24, %p25
    %p27 = scmp.ne.s32.totalorder %s19, %s22
    %p28 = scmp.eq.s32.totalorder %s9, 0
    %p29 = por %p27, %p28
    %p30 = scmp.ne.s32.totalorder %s19, %s22
    %p31 = scmp.eq.s32.totalorder %s14, 1
    %p32 = por %p30, %p31
    %p33 = scmp.ne.s32.totalorder %s22, %s23
    %p34 = scmp.eq.s32.totalorder %s14, 0
    %p35 = por %p33, %p34
    %p36 = scmp.ne.s32.totalorder %s22, %s23
    %p37 = scmp.eq.s32.totalorder %s15, 1
    %p38 = por %p36, %p37
    %p40 = scmp.ne.s32.totalorder %s23, %s39
    %p41 = scmp.eq.s32.totalorder %s15, 0
    %p42 = por %p40, %p41
    %s44 = sadd.s32 %s43, 1
    %p47 = scmp.eq.s32.totalorder %s9, 1
    %p48 = scmp.ne.s32.totalorder %s43, %s45
    %p49 = scmp.eq.s32.totalorder %s9, 0
    %p50 = por %p48, %p49
    %p51 = scmp.ne.s32.totalorder %s43, %s45
    %p52 = scmp.eq.s32.totalorder %s14, 1
    %p53 = por %p51, %p52
    %p54 = scmp.ne.s32.totalorder %s45, %s46
    %p55 = scmp.eq.s32.totalorder %s14, 0
    %p56 = por %p54, %p55
    %p57 = scmp.ne.s32.totalorder %s45, %s46
    %p58 = scmp.eq.s32.totalorder %s15, 1
    %p59 = por %p57, %p58
    %p61 = scmp.ne.s32.totalorder %s46, %s60
    %p62 = scmp.eq.s32.totalorder %s15, 0
    %p63 = por %p61, %p62
    %s65 = sadd.s32 %s64, 1
    %p68 = scmp.eq.s32.totalorder %s9, 1
    %p69 = scmp.ne.s32.totalorder %s64, %s66
    %p70 = scmp.eq.s32.totalorder %s9, 0
    %p71 = por %p69, %p70
    %p72 = scmp.ne.s32.totalorder %s64, %s66
    %p73 = scmp.eq.s32.totalorder %s14, 1
    %p74 = por %p72, %p73
    %p75 = scmp.ne.s32.totalorder %s66, %s67
    %p76 = scmp.eq.s32.totalorder %s14, 0
    %p77 = por %p75, %p76
    %p78 = scmp.ne.s32.totalorder %s66, %s67
    %p79 = scmp.eq.s32.totalorder %s15, 1
    %p80 = por %p78, %p79
    %p82 = scmp.ne.s32.totalorder %s67, %s81
    %p83 = scmp.eq.s32.totalorder %s15, 0
    %p84 = por %p82, %p83
    %s85 = ssub.s32 %s9, %s16
    %p86 = scmp.eq.s32.totalorder %s85, 0
    %s88 = sadd.s32 %s87, 1
    %s89 = scalar_select %p86, %s87, %s88
    %p92 = pneg %p86
    %p93 = scmp.eq.s32.totalorder %s9, 1
    %p94 = por %p92, %p93
    %p95 = scmp.ne.s32.totalorder %s87, %s90
    %p96 = scmp.eq.s32.totalorder %s9, 0
    %p97 = por %p95, %p96
    %p98 = scmp.ne.s32.totalorder %s87, %s90
    %p99 = scmp.eq.s32.totalorder %s14, 1
    %p100 = por %p98, %p99
    %p101 = scmp.ne.s32.totalorder %s90, %s91
    %p102 = scmp.eq.s32.totalorder %s14, 0
    %p103 = por %p101, %p102
    %p104 = scmp.ne.s32.totalorder %s90, %s91
    %p105 = scmp.eq.s32.totalorder %s15, 1
    %p106 = por %p104, %p105
    %p108 = scmp.ne.s32.totalorder %s91, %s107
    %p109 = scmp.eq.s32.totalorder %s15, 0
    %p110 = por %p108, %p109
    %p111 = scmp.le.s32.totalorder 1, %s9
    %p112 = scmp.lt.s32.totalorder %s9, 3
    %p113 = pnand %p111, %p112
    %p114 = pneg %p113
    // Predicated region
    $region9: #{detector_backbone_with_fpn_forward.17} parent=5 // pred_check
      _
    $region10: #{detector_backbone_with_fpn_forward.17} parent=5 // pred_check_branch
      %116 = sbr.rel (%p113) target = $region12
    $region11: #{detector_backbone_with_fpn_forward.17} parent=5 // pred_region
      %s117 = ssub.s32 %s9, 1
      // Predicated region
      $region13: #{detector_backbone_with_fpn_forward.17} parent=11 // pred_check
        %p118 = pneg %p56
      $region14: #{detector_backbone_with_fpn_forward.17} parent=11 // pred_check_branch
        %120 = sbr.rel (%p118) target = $region16
      $region15: #{detector_backbone_with_fpn_forward.17} parent=11 // pred_region
        _
      $region16: #{detector_backbone_with_fpn_forward.17} parent=11 // pred_fallthru
        _
      // Predicated region
      $region17: #{detector_backbone_with_fpn_forward.17} parent=11 // pred_check
        %p121 = pneg %p77
      $region18: #{detector_backbone_with_fpn_forward.17} parent=11 // pred_check_branch
        %123 = sbr.rel (%p121) target = $region20
      $region19: #{detector_backbone_with_fpn_forward.17} parent=11 // pred_region
        _
      $region20: #{detector_backbone_with_fpn_forward.17} parent=11 // pred_fallthru
        _
    $region12: #{detector_backbone_with_fpn_forward.17} parent=5 // pred_fallthru
      _
    %p124 = scmp.lt.s32.totalorder %s9, 2
    // Predicated region
    $region21: #{detector_backbone_with_fpn_forward.17} parent=5 // pred_check
      %p125 = pneg %p124
    $region22: #{detector_backbone_with_fpn_forward.17} parent=5 // pred_check_branch
      %127 = sbr.rel (%p125) target = $region24
    $region23: #{detector_backbone_with_fpn_forward.17} parent=5 // pred_region
      // Predicated region
      $region25: #{detector_backbone_with_fpn_forward.17} parent=23 // pred_check
        %p128 = pneg %p29
      $region26: #{detector_backbone_with_fpn_forward.17} parent=23 // pred_check_branch
        %130 = sbr.rel (%p128) target = $region28
      $region27: #{detector_backbone_with_fpn_forward.17} parent=23 // pred_region
        %p131 = scmp.lt.s32.totalorder %s9, 1
        %s132 = scalar_select %p131, %s9, 1
        %s133 = smul.addr %s132, 60
        %s134 = smul.addr %s133, 4
        %s135 = scalar_lea.vmem %s0, %s134
      $region28: #{detector_backbone_with_fpn_forward.17} parent=23 // pred_fallthru
        _
    $region24: #{detector_backbone_with_fpn_forward.17} parent=5 // pred_fallthru
      _
    %p136 = scmp.le.s32.totalorder 1, %s9
    %p137 = scmp.lt.s32.totalorder %s9, 3
    %p138 = pnand %p136, %p137
    %p139 = pneg %p138
    // Predicated region
    $region29: #{detector_backbone_with_fpn_forward.17} parent=5 // pred_check
      _
    $region30: #{detector_backbone_with_fpn_forward.17} parent=5 // pred_check_branch
      %141 = sbr.rel (%p138) target = $region32
    $region31: #{detector_backbone_with_fpn_forward.17} parent=5 // pred_region
      %s142 = ssub.s32 %s9, 1
      %p143 = scmp.lt.s32.totalorder %s14, 1
      %s144 = scalar_select %p143, %s14, 1
      %s145 = smul.addr %s144, 60
      %s146 = smul.addr %s145, 4
      %s147 = scalar_lea.vmem %s0, %s146
      %p148 = pneg %p35
      %p149 = pneg %p32
      %p150 = pneg %p56
      %p151 = pneg %p53
      %p152 = pneg %p77
      %p153 = pneg %p74
      %p154 = pneg %p103
      %p155 = pneg %p100
      %p156 = scmp.lt.s32.totalorder %s14, 1
      %s157 = scalar_select %p156, %s14, 1
      %s158 = smul.addr %s157, 16
      %s159 = smul.addr %s158, 4
      %s160 = scalar_lea.vmem %s3, %s159
      %p161 = scmp.lt.s32.totalorder %s14, 1
      %s162 = scalar_select %p161, %s14, 1
      %s163 = smul.addr %s162, 60
      %s164 = smul.addr %s163, 4
      %s165 = scalar_lea.vmem %s0, %s164
      %p166 = scmp.lt.s32.totalorder %s14, 1
      %s167 = scalar_select %p166, %s14, 1
      %s168 = smul.addr %s167, 16
      %s169 = smul.addr %s168, 4
      %s170 = scalar_lea.vmem %s3, %s169
      %v171 = vld [vmem:[%s165] sm:$0xff]
      %v172 = vld [vmem:[%s165 + $0x8] sm:$0xf]
      %v173 = vld [vmem:[%s165 + $0xc] sm:$0xff]
      %v174 = vld [vmem:[%s165 + $0x14] sm:$0xf]
      %v175 = vld [vmem:[%s165 + $0x18] sm:$0xff]
      %v176 = vld [vmem:[%s165 + $0x20] sm:$0xf]
      %v177 = vld [vmem:[%s165 + $0x24] sm:$0xff]
      %v178 = vld [vmem:[%s165 + $0x2c] sm:$0xf]
      %v179 = vld [vmem:[%s165 + $0x30] sm:$0xff]
      %v180 = vld [vmem:[%s165 + $0x38] sm:$0xf]
      %v181 = vld [vmem:[%s165 + $0x3c] sm:$0xff]
      %v182 = vld [vmem:[%s165 + $0x44] sm:$0xf]
      %v183 = vld [vmem:[%s165 + $0x48] sm:$0xff]
      %v184 = vld [vmem:[%s165 + $0x50] sm:$0xf]
      %v185 = vld [vmem:[%s165 + $0x54] sm:$0xff]
      %v186 = vld [vmem:[%s165 + $0x5c] sm:$0xf]
      %v187 = vld [vmem:[%s165 + $0x60] sm:$0xff]
      %v188 = vld [vmem:[%s165 + $0x68] sm:$0xf]
      %v189 = vld [vmem:[%s165 + $0x6c] sm:$0xff]
      %v190 = vld [vmem:[%s165 + $0x74] sm:$0xf]
      %v191 = vld [vmem:[%s165 + $0x78] sm:$0xff]
      %v192 = vld [vmem:[%s165 + $0x80] sm:$0xf]
      %v193 = vld [vmem:[%s165 + $0x84] sm:$0xff]
      %v194 = vld [vmem:[%s165 + $0x8c] sm:$0xf]
      %v195 = vld [vmem:[%s165 + $0x90] sm:$0xff]
      %v196 = vld [vmem:[%s165 + $0x98] sm:$0xf]
      %v197 = vld [vmem:[%s165 + $0x9c] sm:$0xff]
      %v198 = vld [vmem:[%s165 + $0xa4] sm:$0xf]
      %v199 = vld [vmem:[%s165 + $0xa8] sm:$0xff]
      %v200 = vld [vmem:[%s165 + $0xb0] sm:$0xf]
      %v201 = vld [vmem:[%s165 + $0xb4] sm:$0xff]
      %v202 = vld [vmem:[%s165 + $0xbc] sm:$0xf]
      %v203 = vld [vmem:[%s1] sm:$0xf]
      %v204 = vld [vmem:[%s1 + $0x4] sm:$0xf]
      %v205 = vld [vmem:[%s1 + $0x8] sm:$0xf]
      %v206 = vld [vmem:[%s1 + $0xc] sm:$0xf]
      %v207 = vld [vmem:[%s1 + $0x10] sm:$0xf]
      %v208 = vld [vmem:[%s1 + $0x14] sm:$0xf]
      %v209 = vld [vmem:[%s1 + $0x18] sm:$0xf]
      %v210 = vld [vmem:[%s1 + $0x1c] sm:$0xf]
      %v211 = vld [vmem:[%s1 + $0x20] sm:$0xf]
      %v212 = vld [vmem:[%s1 + $0x24] sm:$0xf]
      %v213 = vld [vmem:[%s1 + $0x28] sm:$0xf]
      %v214 = vld [vmem:[%s1 + $0x2c] sm:$0xf]
      %v215 = vld [vmem:[%s1 + $0x30] sm:$0xf]
      %v216 = vld [vmem:[%s1 + $0x34] sm:$0xf]
      %v217 = vld [vmem:[%s1 + $0x38] sm:$0xf]
      %v218 = vld [vmem:[%s1 + $0x3c] sm:$0xf]
      %v219 = vld [vmem:[%s1 + $0x40] sm:$0xf]
      %v220 = vld [vmem:[%s1 + $0x44] sm:$0xf]
      %v221 = vld [vmem:[%s1 + $0x48] sm:$0xf]
      %v222 = vld [vmem:[%s1 + $0x4c] sm:$0xf]
      %v223 = vld [vmem:[%s1 + $0x50] sm:$0xf]
      %v224 = vld [vmem:[%s1 + $0x54] sm:$0xf]
      %v225 = vld [vmem:[%s1 + $0x58] sm:$0xf]
      %v226 = vld [vmem:[%s1 + $0x5c] sm:$0xf]
      %v227 = vld [vmem:[%s1 + $0x60] sm:$0xf]
      %v228 = vld [vmem:[%s1 + $0x64] sm:$0xf]
      %v229 = vld [vmem:[%s1 + $0x68] sm:$0xf]
      %v230 = vld [vmem:[%s1 + $0x6c] sm:$0xf]
      %v231 = vld [vmem:[%s1 + $0x70] sm:$0xf]
      %v232 = vld [vmem:[%s1 + $0x74] sm:$0xf]
      %v233 = vld [vmem:[%s1 + $0x78] sm:$0xf]
      %v234 = vld [vmem:[%s1 + $0x7c] sm:$0xf]
      %v235 = vld [vmem:[%s1 + $0x80] sm:$0xf]
      %v236 = vld [vmem:[%s1 + $0x84] sm:$0xf]
      %v237 = vld [vmem:[%s1 + $0x88] sm:$0xf]
      %v238 = vld [vmem:[%s1 + $0x8c] sm:$0xf]
      %v239 = vld [vmem:[%s1 + $0x90] sm:$0xf]
      %v240 = vld [vmem:[%s1 + $0x94] sm:$0xf]
      %v241 = vld [vmem:[%s1 + $0x98] sm:$0xf]
      %v242 = vld [vmem:[%s1 + $0x9c] sm:$0xf]
      %v243 = vld [vmem:[%s1 + $0xa0] sm:$0xf]
      %v244 = vld [vmem:[%s1 + $0xa4] sm:$0xf]
      %v245 = vld [vmem:[%s1 + $0xa8] sm:$0xf]
      %v246 = vld [vmem:[%s1 + $0xac] sm:$0xf]
      %v247 = vld [vmem:[%s1 + $0xb0] sm:$0xf]
      %v248 = vld [vmem:[%s1 + $0xb4] sm:$0xf]
      %v249 = vld [vmem:[%s1 + $0xb8] sm:$0xf]
      %v250 = vld [vmem:[%s1 + $0xbc] sm:$0xf]
      %v251 = vld [vmem:[%s165 + $0xc0] sm:$0xff]
      %v252 = vld [vmem:[%s165 + $0xc8] sm:$0xf]
      %v253 = vld [vmem:[%s165 + $0xcc] sm:$0xff]
      %v254 = vld [vmem:[%s165 + $0xd4] sm:$0xf]
      %s255 = scalar_lea.vmem %s1, 192
      %v256 = vld [vmem:[%s255] sm:$0xf]
      %v257 = vld [vmem:[%s255 + $0x4] sm:$0xf]
      %v258 = vld [vmem:[%s255 + $0x8] sm:$0xf]
      %v259 = vld [vmem:[%s255 + $0xc] sm:$0xf]
      %v260 = vld [vmem:[%s255 + $0x10] sm:$0xf]
      %v261 = vld [vmem:[%s255 + $0x14] sm:$0xf]
      %v262 = vld [vmem:[%s255 + $0x18] sm:$0xf]
      %v263 = vld [vmem:[%s255 + $0x1c] sm:$0xf]
      %v264 = vld [vmem:[%s255 + $0x20] sm:$0xf]
      %v265 = vld [vmem:[%s255 + $0x24] sm:$0xf]
      %v266 = vld [vmem:[%s255 + $0x28] sm:$0xf]
      %v267 = vld [vmem:[%s255 + $0x2c] sm:$0xf]
      %v268 = vld [vmem:[%s255 + $0x30] sm:$0xf]
      %v269 = vld [vmem:[%s255 + $0x34] sm:$0xf]
      %v270 = vld [vmem:[%s255 + $0x38] sm:$0xf]
      %v271 = vld [vmem:[%s255 + $0x3c] sm:$0xf]
      %v272 = vld [vmem:[%s255 + $0x40] sm:$0xf]
      %v273 = vld [vmem:[%s255 + $0x44] sm:$0xf]
      %v274 = vld [vmem:[%s255 + $0x48] sm:$0xf]
      %v275 = vld [vmem:[%s255 + $0x4c] sm:$0xf]
      %v276 = vld [vmem:[%s255 + $0x50] sm:$0xf]
      %v277 = vld [vmem:[%s255 + $0x54] sm:$0xf]
      %v278 = vld [vmem:[%s255 + $0x58] sm:$0xf]
      %v279 = vld [vmem:[%s255 + $0x5c] sm:$0xf]
      %v280 = vld [vmem:[%s255 + $0x60] sm:$0xf]
      %v281 = vld [vmem:[%s255 + $0x64] sm:$0xf]
      %v282 = vld [vmem:[%s255 + $0x68] sm:$0xf]
      %v283 = vld [vmem:[%s255 + $0x6c] sm:$0xf]
      %v284 = vld [vmem:[%s255 + $0x70] sm:$0xf]
      %v285 = vld [vmem:[%s255 + $0x74] sm:$0xf]
      %v286 = vld [vmem:[%s255 + $0x78] sm:$0xf]
      %v287 = vld [vmem:[%s255 + $0x7c] sm:$0xf]
      %v288 = vld [vmem:[%s255 + $0x80] sm:$0xf]
      %v289 = vld [vmem:[%s255 + $0x84] sm:$0xf]
      %v290 = vld [vmem:[%s255 + $0x88] sm:$0xf]
      %v291 = vld [vmem:[%s255 + $0x8c] sm:$0xf]
      %v292 = vld [vmem:[%s255 + $0x90] sm:$0xf]
      %v293 = vld [vmem:[%s255 + $0x94] sm:$0xf]
      %v294 = vld [vmem:[%s255 + $0x98] sm:$0xf]
      %v295 = vld [vmem:[%s255 + $0x9c] sm:$0xf]
      %v296 = vld [vmem:[%s255 + $0xa0] sm:$0xf]
      %v297 = vld [vmem:[%s255 + $0xa4] sm:$0xf]
      %v298 = vld [vmem:[%s255 + $0xa8] sm:$0xf]
      %v299 = vld [vmem:[%s255 + $0xac] sm:$0xf]
      %v300 = vld [vmem:[%s255 + $0xb0] sm:$0xf]
      %v301 = vld [vmem:[%s255 + $0xb4] sm:$0xf]
      %v302 = vld [vmem:[%s255 + $0xb8] sm:$0xf]
      %v303 = vld [vmem:[%s255 + $0xbc] sm:$0xf]
      %v336 = vunpack.c.l.b16 %v175
      %v337 = vunpack.c.h.b16 %v175
      %v338 = vunpack.c.l.b16 %v176
      %v339 = vunpack.c.l.b16 %v177
      %v340 = vunpack.c.h.b16 %v177
      %v341 = vunpack.c.l.b16 %v178
      %v342 = vunpack.c.l.b16 %v179
      %v343 = vunpack.c.h.b16 %v179
      %v344 = vunpack.c.l.b16 %v180
      %v345 = vunpack.c.l.b16 %v181
      %v346 = vunpack.c.h.b16 %v181
      %v347 = vunpack.c.l.b16 %v182
      %v348 = vunpack.c.l.b16 %v183
      %v349 = vunpack.c.h.b16 %v183
      %v350 = vunpack.c.l.b16 %v184
      %v351 = vunpack.c.l.b16 %v185
      %v352 = vunpack.c.h.b16 %v185
      %v353 = vunpack.c.l.b16 %v186
      %v354 = vunpack.c.l.b16 %v187
      %v355 = vunpack.c.h.b16 %v187
      %v356 = vunpack.c.l.b16 %v188
      %v357 = vunpack.c.l.b16 %v189
      %v358 = vunpack.c.h.b16 %v189
      %v359 = vunpack.c.l.b16 %v190
      %v360 = vunpack.c.l.b16 %v191
      %v361 = vunpack.c.h.b16 %v191
      %v362 = vunpack.c.l.b16 %v192
      %v363 = vunpack.c.l.b16 %v193
      %v364 = vunpack.c.h.b16 %v193
      %v365 = vunpack.c.l.b16 %v194
      %v366 = vunpack.c.l.b16 %v195
      %v367 = vunpack.c.h.b16 %v195
      %v368 = vunpack.c.l.b16 %v196
      %v369 = vunpack.c.l.b16 %v197
      %v370 = vunpack.c.h.b16 %v197
      %v371 = vunpack.c.l.b16 %v198
      %v372 = vunpack.c.l.b16 %v199
      %v373 = vunpack.c.h.b16 %v199
      %v374 = vunpack.c.l.b16 %v200
      %v375 = vunpack.c.l.b16 %v201
      %v376 = vunpack.c.h.b16 %v201
      %v377 = vunpack.c.l.b16 %v202
      %v378 = vunpack.c.l.b16 %v251
      %v379 = vunpack.c.h.b16 %v251
      %v380 = vunpack.c.l.b16 %v252
      %v381 = vunpack.c.l.b16 %v253
      %v382 = vunpack.c.h.b16 %v253
      %v383 = vunpack.c.l.b16 %v254
      %v384 = vpack.c.b16 %v339, %v336
      %v385 = vpack.c.b16 %v340, %v337
      %v386 = vpack.c.b16 %v341, %v338
      %v387 = vpack.c.b16 %v345, %v342
      %v388 = vpack.c.b16 %v346, %v343
      %v389 = vpack.c.b16 %v347, %v344
      %v390 = vpack.c.b16 %v351, %v348
      %v391 = vpack.c.b16 %v352, %v349
      %v392 = vpack.c.b16 %v353, %v350
      %v393 = vpack.c.b16 %v357, %v354
      %v394 = vpack.c.b16 %v358, %v355
      %v395 = vpack.c.b16 %v359, %v356
      %v396 = vpack.c.b16 %v363, %v360
      %v397 = vpack.c.b16 %v364, %v361
      %v398 = vpack.c.b16 %v365, %v362
      %v399 = vpack.c.b16 %v369, %v366
      %v400 = vpack.c.b16 %v370, %v367
      %v401 = vpack.c.b16 %v371, %v368
      %v402 = vpack.c.b16 %v375, %v372
      %v403 = vpack.c.b16 %v376, %v373
      %v404 = vpack.c.b16 %v377, %v374
      %v405 = vpack.c.b16 %v381, %v378
      %v406 = vpack.c.b16 %v382, %v379
      %v407 = vpack.c.b16 %v383, %v380
      %v480 = vunpack.c.l.b16 %v256
      %v481 = vunpack.c.l.b16 %v257
      %v482 = vunpack.c.l.b16 %v258
      %v483 = vunpack.c.l.b16 %v259
      %v484 = vunpack.c.l.b16 %v260
      %v485 = vunpack.c.l.b16 %v261
      %v486 = vunpack.c.l.b16 %v262
      %v487 = vunpack.c.l.b16 %v263
      %v488 = vunpack.c.l.b16 %v264
      %v489 = vunpack.c.l.b16 %v265
      %v490 = vunpack.c.l.b16 %v266
      %v491 = vunpack.c.l.b16 %v267
      %v492 = vunpack.c.l.b16 %v268
      %v493 = vunpack.c.l.b16 %v269
      %v494 = vunpack.c.l.b16 %v270
      %v495 = vunpack.c.l.b16 %v271
      %v496 = vunpack.c.l.b16 %v272
      %v497 = vunpack.c.l.b16 %v273
      %v498 = vunpack.c.l.b16 %v274
      %v499 = vunpack.c.l.b16 %v275
      %v500 = vunpack.c.l.b16 %v276
      %v501 = vunpack.c.l.b16 %v277
      %v502 = vunpack.c.l.b16 %v278
      %v503 = vunpack.c.l.b16 %v279
      %v504 = vunpack.c.l.b16 %v280
      %v505 = vunpack.c.l.b16 %v281
      %v506 = vunpack.c.l.b16 %v282
      %v507 = vunpack.c.l.b16 %v283
      %v508 = vunpack.c.l.b16 %v284
      %v509 = vunpack.c.l.b16 %v285
      %v510 = vunpack.c.l.b16 %v286
      %v511 = vunpack.c.l.b16 %v287
      %v512 = vunpack.c.l.b16 %v288
      %v513 = vunpack.c.l.b16 %v289
      %v514 = vunpack.c.l.b16 %v290
      %v515 = vunpack.c.l.b16 %v291
      %v516 = vunpack.c.l.b16 %v292
      %v517 = vunpack.c.l.b16 %v293
      %v518 = vunpack.c.l.b16 %v294
      %v519 = vunpack.c.l.b16 %v295
      %v520 = vunpack.c.l.b16 %v296
      %v521 = vunpack.c.l.b16 %v297
      %v522 = vunpack.c.l.b16 %v298
      %v523 = vunpack.c.l.b16 %v299
      %v524 = vunpack.c.l.b16 %v300
      %v525 = vunpack.c.l.b16 %v301
      %v526 = vunpack.c.l.b16 %v302
      %v527 = vunpack.c.l.b16 %v303
      %v528 = vpack.c.b16 %v481, %v480
      %v529 = vpack.c.b16 %v483, %v482
      %v530 = vpack.c.b16 %v485, %v484
      %v531 = vpack.c.b16 %v487, %v486
      %v532 = vpack.c.b16 %v489, %v488
      %v533 = vpack.c.b16 %v491, %v490
      %v534 = vpack.c.b16 %v493, %v492
      %v535 = vpack.c.b16 %v495, %v494
      %v536 = vpack.c.b16 %v497, %v496
      %v537 = vpack.c.b16 %v499, %v498
      %v538 = vpack.c.b16 %v501, %v500
      %v539 = vpack.c.b16 %v503, %v502
      %v540 = vpack.c.b16 %v505, %v504
      %v541 = vpack.c.b16 %v507, %v506
      %v542 = vpack.c.b16 %v509, %v508
      %v543 = vpack.c.b16 %v511, %v510
      %v544 = vpack.c.b16 %v513, %v512
      %v545 = vpack.c.b16 %v515, %v514
      %v546 = vpack.c.b16 %v517, %v516
      %v547 = vpack.c.b16 %v519, %v518
      %v548 = vpack.c.b16 %v521, %v520
      %v549 = vpack.c.b16 %v523, %v522
      %v550 = vpack.c.b16 %v525, %v524
      %v551 = vpack.c.b16 %v527, %v526
      %576 = vmatpush.bf16.msra.mxu0 %v535
      %577 = vmatpush.bf16.msra.mxu0 %v534
      %578 = vmatpush.bf16.msra.mxu0 %v533
      %579 = vmatpush.bf16.msra.mxu0 %v532
      %580 = vmatpush.bf16.msra.mxu0 %v531
      %581 = vmatpush.bf16.msra.mxu0 %v530
      %582 = vmatpush.bf16.msra.mxu0 %v529
      %583 = vmatpush.bf16.msra.mxu0 %v528
      %584 = vmatmul.bf16.gmra.mxu0 %v384
      %v585 = vpop.f32.mrf.mxu0
      %v586 = vadd.f32 0.0, %v585
      %v587 = vpop.f32.mrf.mxu0
      %v588 = vadd.f32 0.0, %v587
      %589 = vmatmul.bf16.gmra.mxu0 %v387
      %v590 = vpop.f32.mrf.mxu0
      %v591 = vadd.f32 0.0, %v590
      %v592 = vpop.f32.mrf.mxu0
      %v593 = vadd.f32 0.0, %v592
      %594 = vmatmul.bf16.gmra.mxu0 %v390
      %v595 = vpop.f32.mrf.mxu0
      %v596 = vadd.f32 0.0, %v595
      %v597 = vpop.f32.mrf.mxu0
      %v598 = vadd.f32 0.0, %v597
      %599 = vmatmul.bf16.gmra.mxu0 %v393
      %v600 = vpop.f32.mrf.mxu0
      %v601 = vadd.f32 0.0, %v600
      %v602 = vpop.f32.mrf.mxu0
      %v603 = vadd.f32 0.0, %v602
      %604 = vmatmul.bf16.gmra.mxu0 %v396
      %v605 = vpop.f32.mrf.mxu0
      %v606 = vadd.f32 0.0, %v605
      %v607 = vpop.f32.mrf.mxu0
      %v608 = vadd.f32 0.0, %v607
      %609 = vmatmul.bf16.gmra.mxu0 %v399
      %v610 = vpop.f32.mrf.mxu0
      %v611 = vadd.f32 0.0, %v610
      %v612 = vpop.f32.mrf.mxu0
      %v613 = vadd.f32 0.0, %v612
      %614 = vmatmul.bf16.gmra.mxu0 %v402
      %v615 = vpop.f32.mrf.mxu0
      %v616 = vadd.f32 0.0, %v615
      %v617 = vpop.f32.mrf.mxu0
      %v618 = vadd.f32 0.0, %v617
      %619 = vmatmul.bf16.gmra.mxu0 %v405
      %v620 = vpop.f32.mrf.mxu0
      %v621 = vadd.f32 0.0, %v620
      %v622 = vpop.f32.mrf.mxu0
      %v623 = vadd.f32 0.0, %v622
      %624 = vdwg.mxu0
      %625 = vmatpush.bf16.msra.mxu0 %v543
      %626 = vmatpush.bf16.msra.mxu0 %v542
      %627 = vmatpush.bf16.msra.mxu0 %v541
      %628 = vmatpush.bf16.msra.mxu0 %v540
      %629 = vmatpush.bf16.msra.mxu0 %v539
      %630 = vmatpush.bf16.msra.mxu0 %v538
      %631 = vmatpush.bf16.msra.mxu0 %v537
      %632 = vmatpush.bf16.msra.mxu0 %v536
      %633 = vmatmul.bf16.gmra.mxu0 %v385
      %v634 = vpop.f32.mrf.mxu0
      %v635 = vadd.f32 %v586, %v634
      %v636 = vpop.f32.mrf.mxu0
      %v637 = vadd.f32 %v588, %v636
      %638 = vmatmul.bf16.gmra.mxu0 %v388
      %v639 = vpop.f32.mrf.mxu0
      %v640 = vadd.f32 %v591, %v639
      %v641 = vpop.f32.mrf.mxu0
      %v642 = vadd.f32 %v593, %v641
      %643 = vmatmul.bf16.gmra.mxu0 %v391
      %v644 = vpop.f32.mrf.mxu0
      %v645 = vadd.f32 %v596, %v644
      %v646 = vpop.f32.mrf.mxu0
      %v647 = vadd.f32 %v598, %v646
      %648 = vmatmul.bf16.gmra.mxu0 %v394
      %v649 = vpop.f32.mrf.mxu0
      %v650 = vadd.f32 %v601, %v649
      %v651 = vpop.f32.mrf.mxu0
      %v652 = vadd.f32 %v603, %v651
      %653 = vmatmul.bf16.gmra.mxu0 %v397
      %v654 = vpop.f32.mrf.mxu0
      %v655 = vadd.f32 %v606, %v654
      %v656 = vpop.f32.mrf.mxu0
      %v657 = vadd.f32 %v608, %v656
      %658 = vmatmul.bf16.gmra.mxu0 %v400
      %v659 = vpop.f32.mrf.mxu0
      %v660 = vadd.f32 %v611, %v659
      %v661 = vpop.f32.mrf.mxu0
      %v662 = vadd.f32 %v613, %v661
      %663 = vmatmul.bf16.gmra.mxu0 %v403
      %v664 = vpop.f32.mrf.mxu0
      %v665 = vadd.f32 %v616, %v664
      %v666 = vpop.f32.mrf.mxu0
      %v667 = vadd.f32 %v618, %v666
      %668 = vmatmul.bf16.gmra.mxu0 %v406
      %v669 = vpop.f32.mrf.mxu0
      %v670 = vadd.f32 %v621, %v669
      %v671 = vpop.f32.mrf.mxu0
      %v672 = vadd.f32 %v623, %v671
      %673 = vdwg.mxu0
      %674 = vmatpush.bf16.msra.mxu0 %v551
      %675 = vmatpush.bf16.msra.mxu0 %v550
      %676 = vmatpush.bf16.msra.mxu0 %v549
      %677 = vmatpush.bf16.msra.mxu0 %v548
      %678 = vmatpush.bf16.msra.mxu0 %v547
      %679 = vmatpush.bf16.msra.mxu0 %v546
      %680 = vmatpush.bf16.msra.mxu0 %v545
      %681 = vmatpush.bf16.msra.mxu0 %v544
      %682 = vmatmul.bf16.gmra.mxu0 %v386
      %v683 = vpop.f32.mrf.mxu0
      %v684 = vadd.f32 %v635, %v683
      %v685 = vpop.f32.mrf.mxu0
      %v686 = vadd.f32 %v637, %v685
      %687 = vmatmul.bf16.gmra.mxu0 %v389
      %v688 = vpop.f32.mrf.mxu0
      %v689 = vadd.f32 %v640, %v688
      %v690 = vpop.f32.mrf.mxu0
      %v691 = vadd.f32 %v642, %v690
      %692 = vmatmul.bf16.gmra.mxu0 %v392
      %v693 = vpop.f32.mrf.mxu0
      %v694 = vadd.f32 %v645, %v693
      %v695 = vpop.f32.mrf.mxu0
      %v696 = vadd.f32 %v647, %v695
      %697 = vmatmul.bf16.gmra.mxu0 %v395
      %v698 = vpop.f32.mrf.mxu0
      %v699 = vadd.f32 %v650, %v698
      %v700 = vpop.f32.mrf.mxu0
      %v701 = vadd.f32 %v652, %v700
      %702 = vmatmul.bf16.gmra.mxu0 %v398
      %v703 = vpop.f32.mrf.mxu0
      %v704 = vadd.f32 %v655, %v703
      %v705 = vpop.f32.mrf.mxu0
      %v706 = vadd.f32 %v657, %v705
      %707 = vmatmul.bf16.gmra.mxu0 %v401
      %v708 = vpop.f32.mrf.mxu0
      %v709 = vadd.f32 %v660, %v708
      %v710 = vpop.f32.mrf.mxu0
      %v711 = vadd.f32 %v662, %v710
      %712 = vmatmul.bf16.gmra.mxu0 %v404
      %v713 = vpop.f32.mrf.mxu0
      %v714 = vadd.f32 %v665, %v713
      %v715 = vpop.f32.mrf.mxu0
      %v716 = vadd.f32 %v667, %v715
      %717 = vmatmul.bf16.gmra.mxu0 %v407
      %v718 = vpop.f32.mrf.mxu0
      %v719 = vadd.f32 %v670, %v718
      %v720 = vpop.f32.mrf.mxu0
      %v721 = vadd.f32 %v672, %v720
      %722 = vdwg.mxu0
      %v727 = vunpack.c.l.b16 %v171
      %v728 = vunpack.c.h.b16 %v171
      %v729 = vunpack.c.l.b16 %v172
      %v730 = vunpack.c.l.b16 %v173
      %v731 = vunpack.c.h.b16 %v173
      %v732 = vunpack.c.l.b16 %v174
      %v733 = vpack.c.b16 %v730, %v727
      %v734 = vpack.c.b16 %v731, %v728
      %v735 = vpack.c.b16 %v732, %v729
      %v787 = vunpack.c.l.b16 %v203
      %v788 = vunpack.c.l.b16 %v204
      %v789 = vunpack.c.l.b16 %v205
      %v790 = vunpack.c.l.b16 %v206
      %v791 = vunpack.c.l.b16 %v207
      %v792 = vunpack.c.l.b16 %v208
      %v793 = vunpack.c.l.b16 %v209
      %v794 = vunpack.c.l.b16 %v210
      %v795 = vunpack.c.l.b16 %v211
      %v796 = vunpack.c.l.b16 %v212
      %v797 = vunpack.c.l.b16 %v213
      %v798 = vunpack.c.l.b16 %v214
      %v799 = vunpack.c.l.b16 %v215
      %v800 = vunpack.c.l.b16 %v216
      %v801 = vunpack.c.l.b16 %v217
      %v802 = vunpack.c.l.b16 %v218
      %v803 = vunpack.c.l.b16 %v219
      %v804 = vunpack.c.l.b16 %v220
      %v805 = vunpack.c.l.b16 %v221
      %v806 = vunpack.c.l.b16 %v222
      %v807 = vunpack.c.l.b16 %v223
      %v808 = vunpack.c.l.b16 %v224
      %v809 = vunpack.c.l.b16 %v225
      %v810 = vunpack.c.l.b16 %v226
      %v811 = vunpack.c.l.b16 %v227
      %v812 = vunpack.c.l.b16 %v228
      %v813 = vunpack.c.l.b16 %v229
      %v814 = vunpack.c.l.b16 %v230
      %v815 = vunpack.c.l.b16 %v231
      %v816 = vunpack.c.l.b16 %v232
      %v817 = vunpack.c.l.b16 %v233
      %v818 = vunpack.c.l.b16 %v234
      %v819 = vunpack.c.l.b16 %v235
      %v820 = vunpack.c.l.b16 %v236
      %v821 = vunpack.c.l.b16 %v237
      %v822 = vunpack.c.l.b16 %v238
      %v823 = vunpack.c.l.b16 %v239
      %v824 = vunpack.c.l.b16 %v240
      %v825 = vunpack.c.l.b16 %v241
      %v826 = vunpack.c.l.b16 %v242
      %v827 = vunpack.c.l.b16 %v243
      %v828 = vunpack.c.l.b16 %v244
      %v829 = vunpack.c.l.b16 %v245
      %v830 = vunpack.c.l.b16 %v246
      %v831 = vunpack.c.l.b16 %v247
      %v832 = vunpack.c.l.b16 %v248
      %v833 = vunpack.c.l.b16 %v249
      %v834 = vunpack.c.l.b16 %v250
      %v835 = vpack.c.b16 %v788, %v787
      %v836 = vpack.c.b16 %v790, %v789
      %v837 = vpack.c.b16 %v792, %v791
      %v838 = vpack.c.b16 %v794, %v793
      %v839 = vpack.c.b16 %v796, %v795
      %v840 = vpack.c.b16 %v798, %v797
      %v841 = vpack.c.b16 %v800, %v799
      %v842 = vpack.c.b16 %v802, %v801
      %v843 = vpack.c.b16 %v804, %v803
      %v844 = vpack.c.b16 %v806, %v805
      %v845 = vpack.c.b16 %v808, %v807
      %v846 = vpack.c.b16 %v810, %v809
      %v847 = vpack.c.b16 %v812, %v811
      %v848 = vpack.c.b16 %v814, %v813
      %v849 = vpack.c.b16 %v816, %v815
      %v850 = vpack.c.b16 %v818, %v817
      %v851 = vpack.c.b16 %v820, %v819
      %v852 = vpack.c.b16 %v822, %v821
      %v853 = vpack.c.b16 %v824, %v823
      %v854 = vpack.c.b16 %v826, %v825
      %v855 = vpack.c.b16 %v828, %v827
      %v856 = vpack.c.b16 %v830, %v829
      %v857 = vpack.c.b16 %v832, %v831
      %v858 = vpack.c.b16 %v834, %v833
      %883 = vmatpush.bf16.msra.mxu0 %v842
      %884 = vmatpush.bf16.msra.mxu0 %v841
      %885 = vmatpush.bf16.msra.mxu0 %v840
      %886 = vmatpush.bf16.msra.mxu0 %v839
      %887 = vmatpush.bf16.msra.mxu0 %v838
      %888 = vmatpush.bf16.msra.mxu0 %v837
      %889 = vmatpush.bf16.msra.mxu0 %v836
      %890 = vmatpush.bf16.msra.mxu0 %v835
      %891 = vmatmul.bf16.gmra.mxu0 %v733
      %v892 = vpop.f32.mrf.mxu0
      %v893 = vadd.f32 %v684, %v892
      %v894 = vpop.f32.mrf.mxu0
      %v895 = vadd.f32 %v686, %v894
      %896 = vmatmul.bf16.gmra.mxu0 %v384
      %v897 = vpop.f32.mrf.mxu0
      %v898 = vadd.f32 %v689, %v897
      %v899 = vpop.f32.mrf.mxu0
      %v900 = vadd.f32 %v691, %v899
      %901 = vmatmul.bf16.gmra.mxu0 %v387
      %v902 = vpop.f32.mrf.mxu0
      %v903 = vadd.f32 %v694, %v902
      %v904 = vpop.f32.mrf.mxu0
      %v905 = vadd.f32 %v696, %v904
      %906 = vmatmul.bf16.gmra.mxu0 %v390
      %v907 = vpop.f32.mrf.mxu0
      %v908 = vadd.f32 %v699, %v907
      %v909 = vpop.f32.mrf.mxu0
      %v910 = vadd.f32 %v701, %v909
      %911 = vmatmul.bf16.gmra.mxu0 %v393
      %v912 = vpop.f32.mrf.mxu0
      %v913 = vadd.f32 %v704, %v912
      %v914 = vpop.f32.mrf.mxu0
      %v915 = vadd.f32 %v706, %v914
      %916 = vmatmul.bf16.gmra.mxu0 %v396
      %v917 = vpop.f32.mrf.mxu0
      %v918 = vadd.f32 %v709, %v917
      %v919 = vpop.f32.mrf.mxu0
      %v920 = vadd.f32 %v711, %v919
      %921 = vmatmul.bf16.gmra.mxu0 %v399
      %v922 = vpop.f32.mrf.mxu0
      %v923 = vadd.f32 %v714, %v922
      %v924 = vpop.f32.mrf.mxu0
      %v925 = vadd.f32 %v716, %v924
      %926 = vmatmul.bf16.gmra.mxu0 %v402
      %v927 = vpop.f32.mrf.mxu0
      %v928 = vadd.f32 %v719, %v927
      %v929 = vpop.f32.mrf.mxu0
      %v930 = vadd.f32 %v721, %v929
      %931 = vdwg.mxu0
      %932 = vmatpush.bf16.msra.mxu0 %v850
      %933 = vmatpush.bf16.msra.mxu0 %v849
      %934 = vmatpush.bf16.msra.mxu0 %v848
      %935 = vmatpush.bf16.msra.mxu0 %v847
      %936 = vmatpush.bf16.msra.mxu0 %v846
      %937 = vmatpush.bf16.msra.mxu0 %v845
      %938 = vmatpush.bf16.msra.mxu0 %v844
      %939 = vmatpush.bf16.msra.mxu0 %v843
      %940 = vmatmul.bf16.gmra.mxu0 %v734
      %v941 = vpop.f32.mrf.mxu0
      %v942 = vadd.f32 %v893, %v941
      %v943 = vpop.f32.mrf.mxu0
      %v944 = vadd.f32 %v895, %v943
      %945 = vmatmul.bf16.gmra.mxu0 %v385
      %v946 = vpop.f32.mrf.mxu0
      %v947 = vadd.f32 %v898, %v946
      %v948 = vpop.f32.mrf.mxu0
      %v949 = vadd.f32 %v900, %v948
      %950 = vmatmul.bf16.gmra.mxu0 %v388
      %v951 = vpop.f32.mrf.mxu0
      %v952 = vadd.f32 %v903, %v951
      %v953 = vpop.f32.mrf.mxu0
      %v954 = vadd.f32 %v905, %v953
      %955 = vmatmul.bf16.gmra.mxu0 %v391
      %v956 = vpop.f32.mrf.mxu0
      %v957 = vadd.f32 %v908, %v956
      %v958 = vpop.f32.mrf.mxu0
      %v959 = vadd.f32 %v910, %v958
      %960 = vmatmul.bf16.gmra.mxu0 %v394
      %v961 = vpop.f32.mrf.mxu0
      %v962 = vadd.f32 %v913, %v961
      %v963 = vpop.f32.mrf.mxu0
      %v964 = vadd.f32 %v915, %v963
      %965 = vmatmul.bf16.gmra.mxu0 %v397
      %v966 = vpop.f32.mrf.mxu0
      %v967 = vadd.f32 %v918, %v966
      %v968 = vpop.f32.mrf.mxu0
      %v969 = vadd.f32 %v920, %v968
      %970 = vmatmul.bf16.gmra.mxu0 %v400
      %v971 = vpop.f32.mrf.mxu0
      %v972 = vadd.f32 %v923, %v971
      %v973 = vpop.f32.mrf.mxu0
      %v974 = vadd.f32 %v925, %v973
      %975 = vmatmul.bf16.gmra.mxu0 %v403
      %v976 = vpop.f32.mrf.mxu0
      %v977 = vadd.f32 %v928, %v976
      %v978 = vpop.f32.mrf.mxu0
      %v979 = vadd.f32 %v930, %v978
      %980 = vdwg.mxu0
      %981 = vmatpush.bf16.msra.mxu0 %v858
      %982 = vmatpush.bf16.msra.mxu0 %v857
      %983 = vmatpush.bf16.msra.mxu0 %v856
      %984 = vmatpush.bf16.msra.mxu0 %v855
      %985 = vmatpush.bf16.msra.mxu0 %v854
      %986 = vmatpush.bf16.msra.mxu0 %v853
      %987 = vmatpush.bf16.msra.mxu0 %v852
      %988 = vmatpush.bf16.msra.mxu0 %v851
      %989 = vmatmul.bf16.gmra.mxu0 %v735
      %v990 = vpop.f32.mrf.mxu0
      %v991 = vadd.f32 %v942, %v990
      %v992 = vpop.f32.mrf.mxu0
      %v993 = vadd.f32 %v944, %v992
      %994 = vmatmul.bf16.gmra.mxu0 %v386
      %v995 = vpop.f32.mrf.mxu0
      %v996 = vadd.f32 %v947, %v995
      %v997 = vpop.f32.mrf.mxu0
      %v998 = vadd.f32 %v949, %v997
      %999 = vmatmul.bf16.gmra.mxu0 %v389
      %v1000 = vpop.f32.mrf.mxu0
      %v1001 = vadd.f32 %v952, %v1000
      %v1002 = vpop.f32.mrf.mxu0
      %v1003 = vadd.f32 %v954, %v1002
      %1004 = vmatmul.bf16.gmra.mxu0 %v392
      %v1005 = vpop.f32.mrf.mxu0
      %v1006 = vadd.f32 %v957, %v1005
      %v1007 = vpop.f32.mrf.mxu0
      %v1008 = vadd.f32 %v959, %v1007
      %1009 = vmatmul.bf16.gmra.mxu0 %v395
      %v1010 = vpop.f32.mrf.mxu0
      %v1011 = vadd.f32 %v962, %v1010
      %v1012 = vpop.f32.mrf.mxu0
      %v1013 = vadd.f32 %v964, %v1012
      %1014 = vmatmul.bf16.gmra.mxu0 %v398
      %v1015 = vpop.f32.mrf.mxu0
      %v1016 = vadd.f32 %v967, %v1015
      %v1017 = vpop.f32.mrf.mxu0
      %v1018 = vadd.f32 %v969, %v1017
      %1019 = vmatmul.bf16.gmra.mxu0 %v401
      %v1020 = vpop.f32.mrf.mxu0
      %v1021 = vadd.f32 %v972, %v1020
      %v1022 = vpop.f32.mrf.mxu0
      %v1023 = vadd.f32 %v974, %v1022
      %1024 = vmatmul.bf16.gmra.mxu0 %v404
      %v1025 = vpop.f32.mrf.mxu0
      %v1026 = vadd.f32 %v977, %v1025
      %v1027 = vpop.f32.mrf.mxu0
      %v1028 = vadd.f32 %v979, %v1027
      %1029 = vdwg.mxu0
      %v1030 = vld [vmem:[%s165 + $0x30] sm:$0xff]
      %v1031 = vld [vmem:[%s165 + $0x38] sm:$0xf]
      %v1032 = vld [vmem:[%s165 + $0x3c] sm:$0xff]
      %v1033 = vld [vmem:[%s165 + $0x44] sm:$0xf]
      %v1034 = vld [vmem:[%s165 + $0x48] sm:$0xff]
      %v1035 = vld [vmem:[%s165 + $0x50] sm:$0xf]
      %v1036 = vld [vmem:[%s165 + $0x54] sm:$0xff]
      %v1037 = vld [vmem:[%s165 + $0x5c] sm:$0xf]
      %v1038 = vld [vmem:[%s165 + $0x60] sm:$0xff]
      %v1039 = vld [vmem:[%s165 + $0x68] sm:$0xf]
      %v1040 = vld [vmem:[%s165 + $0x6c] sm:$0xff]
      %v1041 = vld [vmem:[%s165 + $0x74] sm:$0xf]
      %v1042 = vld [vmem:[%s165 + $0x78] sm:$0xff]
      %v1043 = vld [vmem:[%s165 + $0x80] sm:$0xf]
      %v1044 = vld [vmem:[%s165 + $0x84] sm:$0xff]
      %v1045 = vld [vmem:[%s165 + $0x8c] sm:$0xf]
      %v1046 = vld [vmem:[%s165 + $0x90] sm:$0xff]
      %v1047 = vld [vmem:[%s165 + $0x98] sm:$0xf]
      %v1048 = vld [vmem:[%s165 + $0x9c] sm:$0xff]
      %v1049 = vld [vmem:[%s165 + $0xa4] sm:$0xf]
      %v1050 = vld [vmem:[%s165 + $0xa8] sm:$0xff]
      %v1051 = vld [vmem:[%s165 + $0xb0] sm:$0xf]
      %v1052 = vld [vmem:[%s165 + $0xb4] sm:$0xff]
      %v1053 = vld [vmem:[%s165 + $0xbc] sm:$0xf]
      %v1054 = vld [vmem:[%s165 + $0xc0] sm:$0xff]
      %v1055 = vld [vmem:[%s165 + $0xc8] sm:$0xf]
      %v1056 = vld [vmem:[%s165 + $0xcc] sm:$0xff]
      %v1057 = vld [vmem:[%s165 + $0xd4] sm:$0xf]
      %v1058 = vld [vmem:[%s165 + $0xd8] sm:$0xff]
      %v1059 = vld [vmem:[%s165 + $0xe0] sm:$0xf]
      %v1060 = vld [vmem:[%s165 + $0xe4] sm:$0xff]
      %v1061 = vld [vmem:[%s165 + $0xec] sm:$0xf]
      %s1062 = scalar_lea.vmem %s1, 384
      %v1063 = vld [vmem:[%s1062] sm:$0xf]
      %v1064 = vld [vmem:[%s1062 + $0x4] sm:$0xf]
      %v1065 = vld [vmem:[%s1062 + $0x8] sm:$0xf]
      %v1066 = vld [vmem:[%s1062 + $0xc] sm:$0xf]
      %v1067 = vld [vmem:[%s1062 + $0x10] sm:$0xf]
      %v1068 = vld [vmem:[%s1062 + $0x14] sm:$0xf]
      %v1069 = vld [vmem:[%s1062 + $0x18] sm:$0xf]
      %v1070 = vld [vmem:[%s1062 + $0x1c] sm:$0xf]
      %v1071 = vld [vmem:[%s1062 + $0x20] sm:$0xf]
      %v1072 = vld [vmem:[%s1062 + $0x24] sm:$0xf]
      %v1073 = vld [vmem:[%s1062 + $0x28] sm:$0xf]
      %v1074 = vld [vmem:[%s1062 + $0x2c] sm:$0xf]
      %v1075 = vld [vmem:[%s1062 + $0x30] sm:$0xf]
      %v1076 = vld [vmem:[%s1062 + $0x34] sm:$0xf]
      %v1077 = vld [vmem:[%s1062 + $0x38] sm:$0xf]
      %v1078 = vld [vmem:[%s1062 + $0x3c] sm:$0xf]
      %v1079 = vld [vmem:[%s1062 + $0x40] sm:$0xf]
      %v1080 = vld [vmem:[%s1062 + $0x44] sm:$0xf]
      %v1081 = vld [vmem:[%s1062 + $0x48] sm:$0xf]
      %v1082 = vld [vmem:[%s1062 + $0x4c] sm:$0xf]
      %v1083 = vld [vmem:[%s1062 + $0x50] sm:$0xf]
      %v1084 = vld [vmem:[%s1062 + $0x54] sm:$0xf]
      %v1085 = vld [vmem:[%s1062 + $0x58] sm:$0xf]
      %v1086 = vld [vmem:[%s1062 + $0x5c] sm:$0xf]
      %v1087 = vld [vmem:[%s1062 + $0x60] sm:$0xf]
      %v1088 = vld [vmem:[%s1062 + $0x64] sm:$0xf]
      %v1089 = vld [vmem:[%s1062 + $0x68] sm:$0xf]
      %v1090 = vld [vmem:[%s1062 + $0x6c] sm:$0xf]
      %v1091 = vld [vmem:[%s1062 + $0x70] sm:$0xf]
      %v1092 = vld [vmem:[%s1062 + $0x74] sm:$0xf]
      %v1093 = vld [vmem:[%s1062 + $0x78] sm:$0xf]
      %v1094 = vld [vmem:[%s1062 + $0x7c] sm:$0xf]
      %v1095 = vld [vmem:[%s1062 + $0x80] sm:$0xf]
      %v1096 = vld [vmem:[%s1062 + $0x84] sm:$0xf]
      %v1097 = vld [vmem:[%s1062 + $0x88] sm:$0xf]
      %v1098 = vld [vmem:[%s1062 + $0x8c] sm:$0xf]
      %v1099 = vld [vmem:[%s1062 + $0x90] sm:$0xf]
      %v1100 = vld [vmem:[%s1062 + $0x94] sm:$0xf]
      %v1101 = vld [vmem:[%s1062 + $0x98] sm:$0xf]
      %v1102 = vld [vmem:[%s1062 + $0x9c] sm:$0xf]
      %v1103 = vld [vmem:[%s1062 + $0xa0] sm:$0xf]
      %v1104 = vld [vmem:[%s1062 + $0xa4] sm:$0xf]
      %v1105 = vld [vmem:[%s1062 + $0xa8] sm:$0xf]
      %v1106 = vld [vmem:[%s1062 + $0xac] sm:$0xf]
      %v1107 = vld [vmem:[%s1062 + $0xb0] sm:$0xf]
      %v1108 = vld [vmem:[%s1062 + $0xb4] sm:$0xf]
      %v1109 = vld [vmem:[%s1062 + $0xb8] sm:$0xf]
      %v1110 = vld [vmem:[%s1062 + $0xbc] sm:$0xf]
      %v1143 = vunpack.c.l.b16 %v1030
      %v1144 = vunpack.c.h.b16 %v1030
      %v1145 = vunpack.c.l.b16 %v1031
      %v1146 = vunpack.c.l.b16 %v1032
      %v1147 = vunpack.c.h.b16 %v1032
      %v1148 = vunpack.c.l.b16 %v1033
      %v1149 = vunpack.c.l.b16 %v1034
      %v1150 = vunpack.c.h.b16 %v1034
      %v1151 = vunpack.c.l.b16 %v1035
      %v1152 = vunpack.c.l.b16 %v1036
      %v1153 = vunpack.c.h.b16 %v1036
      %v1154 = vunpack.c.l.b16 %v1037
      %v1155 = vunpack.c.l.b16 %v1038
      %v1156 = vunpack.c.h.b16 %v1038
      %v1157 = vunpack.c.l.b16 %v1039
      %v1158 = vunpack.c.l.b16 %v1040
      %v1159 = vunpack.c.h.b16 %v1040
      %v1160 = vunpack.c.l.b16 %v1041
      %v1161 = vunpack.c.l.b16 %v1042
      %v1162 = vunpack.c.h.b16 %v1042
      %v1163 = vunpack.c.l.b16 %v1043
      %v1164 = vunpack.c.l.b16 %v1044
      %v1165 = vunpack.c.h.b16 %v1044
      %v1166 = vunpack.c.l.b16 %v1045
      %v1167 = vunpack.c.l.b16 %v1046
      %v1168 = vunpack.c.h.b16 %v1046
      %v1169 = vunpack.c.l.b16 %v1047
      %v1170 = vunpack.c.l.b16 %v1048
      %v1171 = vunpack.c.h.b16 %v1048
      %v1172 = vunpack.c.l.b16 %v1049
      %v1173 = vunpack.c.l.b16 %v1050
      %v1174 = vunpack.c.h.b16 %v1050
      %v1175 = vunpack.c.l.b16 %v1051
      %v1176 = vunpack.c.l.b16 %v1052
      %v1177 = vunpack.c.h.b16 %v1052
      %v1178 = vunpack.c.l.b16 %v1053
      %v1179 = vunpack.c.l.b16 %v1054
      %v1180 = vunpack.c.h.b16 %v1054
      %v1181 = vunpack.c.l.b16 %v1055
      %v1182 = vunpack.c.l.b16 %v1056
      %v1183 = vunpack.c.h.b16 %v1056
      %v1184 = vunpack.c.l.b16 %v1057
      %v1185 = vunpack.c.l.b16 %v1058
      %v1186 = vunpack.c.h.b16 %v1058
      %v1187 = vunpack.c.l.b16 %v1059
      %v1188 = vunpack.c.l.b16 %v1060
      %v1189 = vunpack.c.h.b16 %v1060
      %v1190 = vunpack.c.l.b16 %v1061
      %v1191 = vpack.c.b16 %v1146, %v1143
      %v1192 = vpack.c.b16 %v1147, %v1144
      %v1193 = vpack.c.b16 %v1148, %v1145
      %v1194 = vpack.c.b16 %v1152, %v1149
      %v1195 = vpack.c.b16 %v1153, %v1150
      %v1196 = vpack.c.b16 %v1154, %v1151
      %v1197 = vpack.c.b16 %v1158, %v1155
      %v1198 = vpack.c.b16 %v1159, %v1156
      %v1199 = vpack.c.b16 %v1160, %v1157
      %v1200 = vpack.c.b16 %v1164, %v1161
      %v1201 = vpack.c.b16 %v1165, %v1162
      %v1202 = vpack.c.b16 %v1166, %v1163
      %v1203 = vpack.c.b16 %v1170, %v1167
      %v1204 = vpack.c.b16 %v1171, %v1168
      %v1205 = vpack.c.b16 %v1172, %v1169
      %v1206 = vpack.c.b16 %v1176, %v1173
      %v1207 = vpack.c.b16 %v1177, %v1174
      %v1208 = vpack.c.b16 %v1178, %v1175
      %v1209 = vpack.c.b16 %v1182, %v1179
      %v1210 = vpack.c.b16 %v1183, %v1180
      %v1211 = vpack.c.b16 %v1184, %v1181
      %v1212 = vpack.c.b16 %v1188, %v1185
      %v1213 = vpack.c.b16 %v1189, %v1186
      %v1214 = vpack.c.b16 %v1190, %v1187
      %v1287 = vunpack.c.l.b16 %v1063
      %v1288 = vunpack.c.l.b16 %v1064
      %v1289 = vunpack.c.l.b16 %v1065
      %v1290 = vunpack.c.l.b16 %v1066
      %v1291 = vunpack.c.l.b16 %v1067
      %v1292 = vunpack.c.l.b16 %v1068
      %v1293 = vunpack.c.l.b16 %v1069
      %v1294 = vunpack.c.l.b16 %v1070
      %v1295 = vunpack.c.l.b16 %v1071
      %v1296 = vunpack.c.l.b16 %v1072
      %v1297 = vunpack.c.l.b16 %v1073
      %v1298 = vunpack.c.l.b16 %v1074
      %v1299 = vunpack.c.l.b16 %v1075
      %v1300 = vunpack.c.l.b16 %v1076
      %v1301 = vunpack.c.l.b16 %v1077
      %v1302 = vunpack.c.l.b16 %v1078
      %v1303 = vunpack.c.l.b16 %v1079
      %v1304 = vunpack.c.l.b16 %v1080
      %v1305 = vunpack.c.l.b16 %v1081
      %v1306 = vunpack.c.l.b16 %v1082
      %v1307 = vunpack.c.l.b16 %v1083
      %v1308 = vunpack.c.l.b16 %v1084
      %v1309 = vunpack.c.l.b16 %v1085
      %v1310 = vunpack.c.l.b16 %v1086
      %v1311 = vunpack.c.l.b16 %v1087
      %v1312 = vunpack.c.l.b16 %v1088
      %v1313 = vunpack.c.l.b16 %v1089
      %v1314 = vunpack.c.l.b16 %v1090
      %v1315 = vunpack.c.l.b16 %v1091
      %v1316 = vunpack.c.l.b16 %v1092
      %v1317 = vunpack.c.l.b16 %v1093
      %v1318 = vunpack.c.l.b16 %v1094
      %v1319 = vunpack.c.l.b16 %v1095
      %v1320 = vunpack.c.l.b16 %v1096
      %v1321 = vunpack.c.l.b16 %v1097
      %v1322 = vunpack.c.l.b16 %v1098
      %v1323 = vunpack.c.l.b16 %v1099
      %v1324 = vunpack.c.l.b16 %v1100
      %v1325 = vunpack.c.l.b16 %v1101
      %v1326 = vunpack.c.l.b16 %v1102
      %v1327 = vunpack.c.l.b16 %v1103
      %v1328 = vunpack.c.l.b16 %v1104
      %v1329 = vunpack.c.l.b16 %v1105
      %v1330 = vunpack.c.l.b16 %v1106
      %v1331 = vunpack.c.l.b16 %v1107
      %v1332 = vunpack.c.l.b16 %v1108
      %v1333 = vunpack.c.l.b16 %v1109
      %v1334 = vunpack.c.l.b16 %v1110
      %v1335 = vpack.c.b16 %v1288, %v1287
      %v1336 = vpack.c.b16 %v1290, %v1289
      %v1337 = vpack.c.b16 %v1292, %v1291
      %v1338 = vpack.c.b16 %v1294, %v1293
      %v1339 = vpack.c.b16 %v1296, %v1295
      %v1340 = vpack.c.b16 %v1298, %v1297
      %v1341 = vpack.c.b16 %v1300, %v1299
      %v1342 = vpack.c.b16 %v1302, %v1301
      %v1343 = vpack.c.b16 %v1304, %v1303
      %v1344 = vpack.c.b16 %v1306, %v1305
      %v1345 = vpack.c.b16 %v1308, %v1307
      %v1346 = vpack.c.b16 %v1310, %v1309
      %v1347 = vpack.c.b16 %v1312, %v1311
      %v1348 = vpack.c.b16 %v1314, %v1313
      %v1349 = vpack.c.b16 %v1316, %v1315
      %v1350 = vpack.c.b16 %v1318, %v1317
      %v1351 = vpack.c.b16 %v1320, %v1319
      %v1352 = vpack.c.b16 %v1322, %v1321
      %v1353 = vpack.c.b16 %v1324, %v1323
      %v1354 = vpack.c.b16 %v1326, %v1325
      %v1355 = vpack.c.b16 %v1328, %v1327
      %v1356 = vpack.c.b16 %v1330, %v1329
      %v1357 = vpack.c.b16 %v1332, %v1331
      %v1358 = vpack.c.b16 %v1334, %v1333
      %1383 = vmatpush.bf16.msra.mxu0 %v1342
      %1384 = vmatpush.bf16.msra.mxu0 %v1341
      %1385 = vmatpush.bf16.msra.mxu0 %v1340
      %1386 = vmatpush.bf16.msra.mxu0 %v1339
      %1387 = vmatpush.bf16.msra.mxu0 %v1338
      %1388 = vmatpush.bf16.msra.mxu0 %v1337
      %1389 = vmatpush.bf16.msra.mxu0 %v1336
      %1390 = vmatpush.bf16.msra.mxu0 %v1335
      %1391 = vmatmul.bf16.gmra.mxu0 %v1191
      %v1392 = vpop.f32.mrf.mxu0
      %v1393 = vadd.f32 0.0, %v1392
      %v1394 = vpop.f32.mrf.mxu0
      %v1395 = vadd.f32 0.0, %v1394
      %1396 = vmatmul.bf16.gmra.mxu0 %v1194
      %v1397 = vpop.f32.mrf.mxu0
      %v1398 = vadd.f32 0.0, %v1397
      %v1399 = vpop.f32.mrf.mxu0
      %v1400 = vadd.f32 0.0, %v1399
      %1401 = vmatmul.bf16.gmra.mxu0 %v1197
      %v1402 = vpop.f32.mrf.mxu0
      %v1403 = vadd.f32 0.0, %v1402
      %v1404 = vpop.f32.mrf.mxu0
      %v1405 = vadd.f32 0.0, %v1404
      %1406 = vmatmul.bf16.gmra.mxu0 %v1200
      %v1407 = vpop.f32.mrf.mxu0
      %v1408 = vadd.f32 0.0, %v1407
      %v1409 = vpop.f32.mrf.mxu0
      %v1410 = vadd.f32 0.0, %v1409
      %1411 = vmatmul.bf16.gmra.mxu0 %v1203
      %v1412 = vpop.f32.mrf.mxu0
      %v1413 = vadd.f32 0.0, %v1412
      %v1414 = vpop.f32.mrf.mxu0
      %v1415 = vadd.f32 0.0, %v1414
      %1416 = vmatmul.bf16.gmra.mxu0 %v1206
      %v1417 = vpop.f32.mrf.mxu0
      %v1418 = vadd.f32 0.0, %v1417
      %v1419 = vpop.f32.mrf.mxu0
      %v1420 = vadd.f32 0.0, %v1419
      %1421 = vmatmul.bf16.gmra.mxu0 %v1209
      %v1422 = vpop.f32.mrf.mxu0
      %v1423 = vadd.f32 0.0, %v1422
      %v1424 = vpop.f32.mrf.mxu0
      %v1425 = vadd.f32 0.0, %v1424
      %1426 = vmatmul.bf16.gmra.mxu0 %v1212
      %v1427 = vpop.f32.mrf.mxu0
      %v1428 = vadd.f32 0.0, %v1427
      %v1429 = vpop.f32.mrf.mxu0
      %v1430 = vadd.f32 0.0, %v1429
      %1431 = vdwg.mxu0
      %1432 = vmatpush.bf16.msra.mxu0 %v1350
      %1433 = vmatpush.bf16.msra.mxu0 %v1349
      %1434 = vmatpush.bf16.msra.mxu0 %v1348
      %1435 = vmatpush.bf16.msra.mxu0 %v1347
      %1436 = vmatpush.bf16.msra.mxu0 %v1346
      %1437 = vmatpush.bf16.msra.mxu0 %v1345
      %1438 = vmatpush.bf16.msra.mxu0 %v1344
      %1439 = vmatpush.bf16.msra.mxu0 %v1343
      %1440 = vmatmul.bf16.gmra.mxu0 %v1192
      %v1441 = vpop.f32.mrf.mxu0
      %v1442 = vadd.f32 %v1393, %v1441
      %v1443 = vpop.f32.mrf.mxu0
      %v1444 = vadd.f32 %v1395, %v1443
      %1445 = vmatmul.bf16.gmra.mxu0 %v1195
      %v1446 = vpop.f32.mrf.mxu0
      %v1447 = vadd.f32 %v1398, %v1446
      %v1448 = vpop.f32.mrf.mxu0
      %v1449 = vadd.f32 %v1400, %v1448
      %1450 = vmatmul.bf16.gmra.mxu0 %v1198
      %v1451 = vpop.f32.mrf.mxu0
      %v1452 = vadd.f32 %v1403, %v1451
      %v1453 = vpop.f32.mrf.mxu0
      %v1454 = vadd.f32 %v1405, %v1453
      %1455 = vmatmul.bf16.gmra.mxu0 %v1201
      %v1456 = vpop.f32.mrf.mxu0
      %v1457 = vadd.f32 %v1408, %v1456
      %v1458 = vpop.f32.mrf.mxu0
      %v1459 = vadd.f32 %v1410, %v1458
      %1460 = vmatmul.bf16.gmra.mxu0 %v1204
      %v1461 = vpop.f32.mrf.mxu0
      %v1462 = vadd.f32 %v1413, %v1461
      %v1463 = vpop.f32.mrf.mxu0
      %v1464 = vadd.f32 %v1415, %v1463
      %1465 = vmatmul.bf16.gmra.mxu0 %v1207
      %v1466 = vpop.f32.mrf.mxu0
      %v1467 = vadd.f32 %v1418, %v1466
      %v1468 = vpop.f32.mrf.mxu0
      %v1469 = vadd.f32 %v1420, %v1468
      %1470 = vmatmul.bf16.gmra.mxu0 %v1210
      %v1471 = vpop.f32.mrf.mxu0
      %v1472 = vadd.f32 %v1423, %v1471
      %v1473 = vpop.f32.mrf.mxu0
      %v1474 = vadd.f32 %v1425, %v1473
      %1475 = vmatmul.bf16.gmra.mxu0 %v1213
      %v1476 = vpop.f32.mrf.mxu0
      %v1477 = vadd.f32 %v1428, %v1476
      %v1478 = vpop.f32.mrf.mxu0
      %v1479 = vadd.f32 %v1430, %v1478
      %1480 = vdwg.mxu0
      %1481 = vmatpush.bf16.msra.mxu0 %v1358
      %1482 = vmatpush.bf16.msra.mxu0 %v1357
      %1483 = vmatpush.bf16.msra.mxu0 %v1356
      %1484 = vmatpush.bf16.msra.mxu0 %v1355
      %1485 = vmatpush.bf16.msra.mxu0 %v1354
      %1486 = vmatpush.bf16.msra.mxu0 %v1353
      %1487 = vmatpush.bf16.msra.mxu0 %v1352
      %1488 = vmatpush.bf16.msra.mxu0 %v1351
      %1489 = vmatmul.bf16.gmra.mxu0 %v1193
      %v1490 = vpop.f32.mrf.mxu0
      %v1491 = vadd.f32 %v1442, %v1490
      %v1492 = vpop.f32.mrf.mxu0
      %v1493 = vadd.f32 %v1444, %v1492
      %1494 = vmatmul.bf16.gmra.mxu0 %v1196
      %v1495 = vpop.f32.mrf.mxu0
      %v1496 = vadd.f32 %v1447, %v1495
      %v1497 = vpop.f32.mrf.mxu0
      %v1498 = vadd.f32 %v1449, %v1497
      %1499 = vmatmul.bf16.gmra.mxu0 %v1199
      %v1500 = vpop.f32.mrf.mxu0
      %v1501 = vadd.f32 %v1452, %v1500
      %v1502 = vpop.f32.mrf.mxu0
      %v1503 = vadd.f32 %v1454, %v1502
      %1504 = vmatmul.bf16.gmra.mxu0 %v1202
      %v1505 = vpop.f32.mrf.mxu0
      %v1506 = vadd.f32 %v1457, %v1505
      %v1507 = vpop.f32.mrf.mxu0
      %v1508 = vadd.f32 %v1459, %v1507
      %1509 = vmatmul.bf16.gmra.mxu0 %v1205
      %v1510 = vpop.f32.mrf.mxu0
      %v1511 = vadd.f32 %v1462, %v1510
      %v1512 = vpop.f32.mrf.mxu0
      %v1513 = vadd.f32 %v1464, %v1512
      %1514 = vmatmul.bf16.gmra.mxu0 %v1208
      %v1515 = vpop.f32.mrf.mxu0
      %v1516 = vadd.f32 %v1467, %v1515
      %v1517 = vpop.f32.mrf.mxu0
      %v1518 = vadd.f32 %v1469, %v1517
      %1519 = vmatmul.bf16.gmra.mxu0 %v1211
      %v1520 = vpop.f32.mrf.mxu0
      %v1521 = vadd.f32 %v1472, %v1520
      %v1522 = vpop.f32.mrf.mxu0
      %v1523 = vadd.f32 %v1474, %v1522
      %1524 = vmatmul.bf16.gmra.mxu0 %v1214
      %v1525 = vpop.f32.mrf.mxu0
      %v1526 = vadd.f32 %v1477, %v1525
      %v1527 = vpop.f32.mrf.mxu0
      %v1528 = vadd.f32 %v1479, %v1527
      %1529 = vdwg.mxu0
      %v1530 = vadd.f32 %v991, %v1491
      %v1531 = vadd.f32 %v993, %v1493
      %v1532 = vadd.f32 %v996, %v1496
      %v1533 = vadd.f32 %v998, %v1498
      %v1534 = vadd.f32 %v1001, %v1501
      %v1535 = vadd.f32 %v1003, %v1503
      %v1536 = vadd.f32 %v1006, %v1506
      %v1537 = vadd.f32 %v1008, %v1508
      %v1538 = vadd.f32 %v1011, %v1511
      %v1539 = vadd.f32 %v1013, %v1513
      %v1540 = vadd.f32 %v1016, %v1516
      %v1541 = vadd.f32 %v1018, %v1518
      %v1542 = vadd.f32 %v1021, %v1521
      %v1543 = vadd.f32 %v1023, %v1523
      %v1544 = vadd.f32 %v1026, %v1526
      %v1545 = vadd.f32 %v1028, %v1528
      %v1546 = vld [vmem:[%s2] sm:$0x1]
      %v1548 = vperm.slane %v1546, 0
      %v1550 = vadd.f32 %v1530, %v1548
      %v1551 = vadd.f32 %v1531, %v1548
      %v1552 = vadd.f32 %v1532, %v1548
      %v1553 = vadd.f32 %v1533, %v1548
      %v1554 = vadd.f32 %v1534, %v1548
      %v1555 = vadd.f32 %v1535, %v1548
      %v1556 = vadd.f32 %v1536, %v1548
      %v1557 = vadd.f32 %v1537, %v1548
      %v1558 = vadd.f32 %v1538, %v1548
      %v1559 = vadd.f32 %v1539, %v1548
      %v1560 = vadd.f32 %v1540, %v1548
      %v1561 = vadd.f32 %v1541, %v1548
      %v1562 = vadd.f32 %v1542, %v1548
      %v1563 = vadd.f32 %v1543, %v1548
      %v1564 = vadd.f32 %v1544, %v1548
      %v1565 = vadd.f32 %v1545, %v1548
      %v1566 = vpack.c.bf16 %v1550, %v1550
      %v1567 = vpack.c.bf16 %v1551, %v1551
      %v1568 = vpack.c.bf16 %v1552, %v1552
      %v1569 = vpack.c.bf16 %v1553, %v1553
      %v1570 = vpack.c.bf16 %v1554, %v1554
      %v1571 = vpack.c.bf16 %v1555, %v1555
      %v1572 = vpack.c.bf16 %v1556, %v1556
      %v1573 = vpack.c.bf16 %v1557, %v1557
      %v1574 = vpack.c.bf16 %v1558, %v1558
      %v1575 = vpack.c.bf16 %v1559, %v1559
      %v1576 = vpack.c.bf16 %v1560, %v1560
      %v1577 = vpack.c.bf16 %v1561, %v1561
      %v1578 = vpack.c.bf16 %v1562, %v1562
      %v1579 = vpack.c.bf16 %v1563, %v1563
      %v1580 = vpack.c.bf16 %v1564, %v1564
      %v1581 = vpack.c.bf16 %v1565, %v1565
      %1582 = vst [vmem:[%s170] sm:$0xf] %v1566
      %1583 = vst [vmem:[%s170 + $0x4] sm:$0xf] %v1567
      %1584 = vst [vmem:[%s170 + $0x8] sm:$0xf] %v1568
      %1585 = vst [vmem:[%s170 + $0xc] sm:$0xf] %v1569
      %1586 = vst [vmem:[%s170 + $0x10] sm:$0xf] %v1570
      %1587 = vst [vmem:[%s170 + $0x14] sm:$0xf] %v1571
      %1588 = vst [vmem:[%s170 + $0x18] sm:$0xf] %v1572
      %1589 = vst [vmem:[%s170 + $0x1c] sm:$0xf] %v1573
      %1590 = vst [vmem:[%s170 + $0x20] sm:$0xf] %v1574
      %1591 = vst [vmem:[%s170 + $0x24] sm:$0xf] %v1575
      %1592 = vst [vmem:[%s170 + $0x28] sm:$0xf] %v1576
      %1593 = vst [vmem:[%s170 + $0x2c] sm:$0xf] %v1577
      %1594 = vst [vmem:[%s170 + $0x30] sm:$0xf] %v1578
      %1595 = vst [vmem:[%s170 + $0x34] sm:$0xf] %v1579
      %1596 = vst [vmem:[%s170 + $0x38] sm:$0xf] %v1580
      %1597 = vst [vmem:[%s170 + $0x3c] sm:$0xf] %v1581
      %p1598 = scmp.lt.s32.totalorder %s14, 1
      %s1599 = scalar_select %p1598, %s14, 1
      %s1600 = smul.addr %s1599, 16
      %s1601 = smul.addr %s1600, 4
      %s1602 = scalar_lea.vmem %s3, %s1601
      // Predicated region
      $region33: #{detector_backbone_with_fpn_forward.17} parent=31 // pred_check
        %p1603 = pneg %p100
      $region34: #{detector_backbone_with_fpn_forward.17} parent=31 // pred_check_branch
        %1605 = sbr.rel (%p1603) target = $region36
      $region35: #{detector_backbone_with_fpn_forward.17} parent=31 // pred_region
        _
      $region36: #{detector_backbone_with_fpn_forward.17} parent=31 // pred_fallthru
        _
    $region32: #{detector_backbone_with_fpn_forward.17} parent=5 // pred_fallthru
      _
    %p1606 = scmp.le.s32.totalorder 2, %s9
    // Predicated region
    $region37: #{detector_backbone_with_fpn_forward.17} parent=5 // pred_check
      %p1607 = pneg %p1606
    $region38: #{detector_backbone_with_fpn_forward.17} parent=5 // pred_check_branch
      %1609 = sbr.rel (%p1607) target = $region40
    $region39: #{detector_backbone_with_fpn_forward.17} parent=5 // pred_region
      %s1610 = ssub.s32 %s9, 2
      // Predicated region
      $region41: #{detector_backbone_with_fpn_forward.17} parent=39 // pred_check
        %p1611 = pneg %p106
      $region42: #{detector_backbone_with_fpn_forward.17} parent=39 // pred_check_branch
        %1613 = sbr.rel (%p1611) target = $region44
      $region43: #{detector_backbone_with_fpn_forward.17} parent=39 // pred_region
        %p1614 = scmp.lt.s32.totalorder %s15, 1
        %s1615 = scalar_select %p1614, %s15, 1
        %s1616 = smul.addr %s1615, 16
        %s1617 = smul.addr %s1616, 4
        %s1618 = scalar_lea.vmem %s3, %s1617
      $region44: #{detector_backbone_with_fpn_forward.17} parent=39 // pred_fallthru
        _
    $region40: #{detector_backbone_with_fpn_forward.17} parent=5 // pred_fallthru
      _
  $region6: #{detector_backbone_with_fpn_forward.17} parent=0 // loop_footer
    %s13 = sadd.s32 1, %s9
  $region7: #{detector_backbone_with_fpn_forward.17} parent=0 // loop_footer_branch
    %8 = sbr.rel target = $region3
  $region8: #{detector_backbone_with_fpn_forward.17} parent=0 // loop_exit
    _

</llo_original>
